<compile_context>
chip_gen: v7x
topology: tpu7x:2x2x1
jax: 0.10.0
libtpu: 0.0.40
codegen_flags: <defaults>
</compile_context>

<pallas_src>
import functools
import math

import jax
import jax.numpy as jnp
from jax import lax
from jax.experimental import pallas as pl
from jax.experimental.pallas import tpu as pltpu

_LN_EPS = 1e-5  # PyTorch nn.LayerNorm default eps


# ---------------------------------------------------------------------------
# Kernel
# ---------------------------------------------------------------------------
def _attention_kernel(x_ref, g_ref, b_ref, wqkv_ref, bqkv_ref, wo_ref, bo_ref,
                      o_ref, *, num_heads, seq_len):
    tm, d = x_ref.shape                      # tm = tile_b * seq_len (static)
    tb = tm // seq_len
    hd = d // num_heads

    x = x_ref[...].astype(jnp.float32)       # (TM, D)

    # ---- LayerNorm (f32 on VPU/XLU; only MXU operands go bf16) -------------
    mu = jnp.mean(x, axis=-1, keepdims=True)
    var = jnp.mean(jnp.square(x - mu), axis=-1, keepdims=True)
    ln = (x - mu) * lax.rsqrt(var + _LN_EPS) * g_ref[...] + b_ref[...]
    ln_bf = ln.astype(jnp.bfloat16)

    # ---- Fused full-width QKV projection: one (TM,D)@(D,3D) MXU matmul -----
    # The softmax scale hd**-0.5 is already folded into the Q columns of
    # wqkv/bqkv by the wrapper, so no per-score multiply is needed below.
    qkv = (jnp.dot(ln_bf, wqkv_ref[...], preferred_element_type=jnp.float32)
           + bqkv_ref[...])                                    # (TM, 3D) f32

    # q/k/v split at lane offsets 0, D, 2D (vreg-aligned when D % 128 == 0);
    # the (TM,D)->(TB,N,D) reshape only splits the sublane axis.
    q3 = qkv[:, :d].astype(jnp.bfloat16).reshape(tb, seq_len, d)
    k3 = qkv[:, d:2 * d].astype(jnp.bfloat16).reshape(tb, seq_len, d)
    v3 = qkv[:, 2 * d:].astype(jnp.bfloat16).reshape(tb, seq_len, d)

    # ---- Per-head attention (static unroll is fine for small H) ------------
    # TODO(synk): for large num_heads switch to lax.fori_loop(unroll=True) to
    # bound live ranges; with H<=4 the unroll keeps LLO scheduler visibility.
    out_heads = []
    for h in range(num_heads):
        sl = slice(h * hd, (h + 1) * hd)     # 32-lane slice -> XLU relayout,
        q_h, k_h, v_h = q3[..., sl], k3[..., sl], v3[..., sl]  # co-issues w/ MXU

        dots = jnp.einsum("bnk,bmk->bnm", q_h, k_h,
                          preferred_element_type=jnp.float32)   # (TB, N, N)
        dots = dots - jnp.max(dots, axis=-1, keepdims=True)
        e = jnp.exp(dots)                                       # f32 EUP (v5e-safe)
        attn = e * pl.reciprocal(jnp.sum(e, axis=-1, keepdims=True), approx=True)

        out_h = jnp.einsum("bnm,bmk->bnk", attn.astype(jnp.bfloat16), v_h,
                           preferred_element_type=jnp.float32)  # (TB, N, hd)
        out_heads.append(out_h.astype(jnp.bfloat16).reshape(tm, hd))

    # ---- Fused output projection: one (TM,D)@(D,D) matmul, K = D -----------
    out_all = jnp.concatenate(out_heads, axis=-1)               # (TM, D) bf16
    y = jnp.dot(out_all, wo_ref[...], preferred_element_type=jnp.float32)
    o_ref[...] = (y + bo_ref[...]).astype(o_ref.dtype)


# ---------------------------------------------------------------------------
# Tile / VMEM budgeting
# ---------------------------------------------------------------------------
def _tpu_vmem_capacity_bytes():
    try:
        return int(pltpu.get_tpu_info().vmem_capacity_bytes)
    except Exception:
        return 64 * 1024 * 1024   # conservative: v7x per-TC VMEM


def _estimate_bytes_per_row(dim, seq, num_heads):
    """Rough f32/bf16 live-set bytes per tile row (see kernel body):
       x + out blocks (double-buffered by the Pallas pipeline), ln f32+bf16,
       qkv f32 + q/k/v bf16, per-head score temporaries (unrolled -> all heads
       counted), per-head bf16 outputs + the concatenated copy."""
    return (2 * (2 * dim * 4)          # x / out, 2-deep pipeline each
            + dim * 4 + dim * 2        # ln f32 + bf16
            + 3 * dim * 4 + 3 * dim * 2  # qkv f32 + q/k/v bf16
            + num_heads * 2 * seq * 4  # dots / attn f32 per head
            + 2 * dim * 2)             # head outputs + concat, bf16


def _choose_tile_b(batch, seq, dim, num_heads, vmem_budget):
    """Largest batch tile with (a) tile rows % 8 == 0, (b) a VMEM live-set that
    fits the budget, and (c) a preference for an even grid-step count (v7x has
    2 TCs sharing the 'parallel' batch axis) when it costs <= 2x tile shrink."""
    cap_rows = max(8, vmem_budget // _estimate_bytes_per_row(dim, seq, num_heads))
    m0 = 8 // math.gcd(seq, 8)                       # granularity for TM % 8 == 0
    max_tb = max(m0, -(-batch // m0) * m0)
    cands = [tb for tb in range(m0, max_tb + 1, m0) if tb * seq <= cap_rows]
    if not cands:
        return m0

    def steps(tb):
        return -(-batch // tb)

    best = max(cands)                                # v5e/v6e: biggest tile wins
    even = [tb for tb in cands if steps(tb) % 2 == 0]
    if even:
        tb_even = min(even, key=lambda tb: (steps(tb) * tb, -tb))  # least padding, then biggest
        if tb_even * 2 >= best:
            return tb_even
    return best


# ---------------------------------------------------------------------------
# Wrapper
# ---------------------------------------------------------------------------
def attention_forward(x, params, *, num_heads=4, tile_b=None):
    """Pallas-TPU fused equivalent of Attention.forward(x) (qkv_bias=True)."""
    B, N, D = x.shape
    assert D % num_heads == 0, "dim must be divisible by num_heads"
    hd = D // num_heads
    scale = float(hd) ** -0.5

    vmem_cap = _tpu_vmem_capacity_bytes()
    if tile_b is None:
        tile_b = _choose_tile_b(B, N, D, num_heads, vmem_budget=int(vmem_cap * 0.40))
    assert (tile_b * N) % 8 == 0, "tile rows must be a multiple of 8"

    # Tail handling: pad the batch (zero rows are numerically safe through LN/softmax).
    Bp = -(-B // tile_b) * tile_b
    x2 = x.reshape(B * N, D)                 # free, layout-preserving reshape
    if Bp != B:
        x2 = jnp.pad(x2, ((0, (Bp - B) * N), (0, 0)))
    tile_rows = tile_b * N
    grid = (Bp // tile_b,)

    # --- one-time weight re-layout (tiny, host/XLA side) ---------------------
    # PyTorch layouts: w_qkv (3D, D) rows = [q; k; v]; w_out (D, D); biases flat.
    w_qkv, b_qkv = params["w_qkv"], params["b_qkv"]
    w_out, b_out = params["w_out"], params["b_out"]

    wqkv = jnp.transpose(w_qkv).astype(jnp.float32)          # (D, 3D), cols [q|k|v]
    bqkv = b_qkv.reshape(1, 3 * D).astype(jnp.float32)
    # Fold the softmax scale into the Q columns / Q bias (pure constant rework).
    q_col_scale = jnp.concatenate(
        [jnp.full((D,), scale, jnp.float32), jnp.ones((2 * D,), jnp.float32)])
    wqkv = (wqkv * q_col_scale[None, :]).astype(jnp.bfloat16)
    bqkv = bqkv * q_col_scale[None, :]

    wo = jnp.transpose(w_out).astype(jnp.bfloat16)           # (D, D)
    bo = b_out.reshape(1, D).astype(jnp.float32)
    g_2 = params["gamma"].reshape(1, D).astype(jnp.float32)
    be_2 = params["beta"].reshape(1, D).astype(jnp.float32)

    kernel = functools.partial(_attention_kernel, num_heads=num_heads, seq_len=N)
    full2 = lambda i: (0, 0)

    out2 = pl.pallas_call(
        kernel,
        out_shape=jax.ShapeDtypeStruct((Bp * N, D), x.dtype),
        grid_spec=pltpu.PrefetchScalarGridSpec(
            num_scalar_prefetch=0,
            grid=grid,
            in_specs=[
                pl.BlockSpec((tile_rows, D), lambda i: (i, 0)),   # x (tokens)
                pl.BlockSpec((1, D), full2),                      # LN gamma
                pl.BlockSpec((1, D), full2),                      # LN beta
                pl.BlockSpec((D, 3 * D), full2),                  # fused QKV weight
                pl.BlockSpec((1, 3 * D), full2),                  # fused QKV bias
                pl.BlockSpec((D, D), full2),                      # W_out^T
                pl.BlockSpec((1, D), full2),                      # out bias
            ],
            out_specs=pl.BlockSpec((tile_rows, D), lambda i: (i, 0)),
        ),
        compiler_params=pltpu.CompilerParams(
            dimension_semantics=("parallel",),
            vmem_limit_bytes=int(vmem_cap * 0.75),
        ),
    )(x2, g_2, be_2, wqkv, bqkv, wo, bo)

    out = out2.reshape(Bp, N, D)
    return out if Bp == B else out[:B]


# ---------------------------------------------------------------------------
# Deterministic parameter init (PyTorch Linear/LayerNorm shapes, qkv_bias=True)
# ---------------------------------------------------------------------------
def init_params(rng, dim):
    ks = jax.random.split(rng, 6)
    lim = 1.0 / math.sqrt(dim)
    u = lambda k, shape: jax.random.uniform(k, shape, jnp.float32, -lim, lim)
    return {
        "gamma": 1.0 + 0.1 * jax.random.normal(ks[0], (dim,), jnp.float32),
        "beta": 0.1 * jax.random.normal(ks[1], (dim,), jnp.float32),
        "w_qkv": u(ks[2], (3 * dim, dim)),   # PyTorch Linear layout (out, in)
        "b_qkv": u(ks[3], (3 * dim,)),
        "w_out": u(ks[4], (dim, dim)),
        "b_out": u(ks[5], (dim,)),
    }


# ---------------------------------------------------------------------------
# Pure-JAX reference (mirrors the PyTorch forward exactly, f32)
# ---------------------------------------------------------------------------
def attention_ref(x, params, *, num_heads=4):
    B, N, D = x.shape
    hd = D // num_heads
    mu = jnp.mean(x, axis=-1, keepdims=True)
    var = jnp.mean((x - mu) ** 2, axis=-1, keepdims=True)
    ln = (x - mu) / jnp.sqrt(var + _LN_EPS) * params["gamma"] + params["beta"]
    qkv = ln @ params["w_qkv"].T + params["b_qkv"]
    q, k, v = jnp.split(qkv, 3, axis=-1)

    def to_heads(t):  # 'b n (h d) -> b h n d'
        return t.reshape(B, N, num_heads, hd).transpose(0, 2, 1, 3)

    q, k, v = to_heads(q), to_heads(k), to_heads(v)
    dots = jnp.einsum("bhnd,bhmd->bhnm", q, k) * hd ** -0.5
    attn = jax.nn.softmax(dots, axis=-1)
    out = jnp.einsum("bhnm,bhmd->bhnd", attn, v)
    out = out.transpose(0, 2, 1, 3).reshape(B, N, D)   # 'b h n d -> b n (h d)'
    return out @ params["w_out"].T + params["b_out"]


if __name__ == "__main__":
    root = jax.random.PRNGKey(0)
    kx, kp = jax.random.split(root)

    B, N, D, H = 8, 128, 128, 4          # dim=128, 4 heads -> head_dim=32
    x = jax.random.normal(kx, (B, N, D), jnp.float32)
    params = init_params(kp, D)

    out = attention_forward(x, params, num_heads=H)
    out = jax.block_until_ready(out)
    assert out.shape == (B, N, D), out.shape

    ref = attention_ref(x, params, num_heads=H)
    max_err = float(jnp.max(jnp.abs(out - ref)))
    rel_err = float(jnp.linalg.norm(out - ref) / jnp.linalg.norm(ref))
    if max_err > 5e-2 or rel_err > 5e-2:
        raise AssertionError(
            f"kernel/reference mismatch: max_abs={max_err:.3e} rel={rel_err:.3e}")

    print("KERNEL_OK")
</pallas_src>

<mosaic_0001>
module attributes {stable_mosaic.version = 11 : i64} {
  func.func @_attention_kernel(%arg0: i32, %arg1: memref<512x128xf32, #tpu.memory_space<vmem>>, %arg2: memref<1x128xf32, #tpu.memory_space<vmem>>, %arg3: memref<1x128xf32, #tpu.memory_space<vmem>>, %arg4: memref<128x384xbf16, #tpu.memory_space<vmem>>, %arg5: memref<1x384xf32, #tpu.memory_space<vmem>>, %arg6: memref<128x128xbf16, #tpu.memory_space<vmem>>, %arg7: memref<1x128xf32, #tpu.memory_space<vmem>>, %arg8: memref<512x128xf32, #tpu.memory_space<vmem>>) attributes {dimension_semantics = [#tpu.dimension_semantics<parallel>], iteration_bounds = array<i64: 2>, scalar_prefetch = 0 : i64, scratch_operands = 0 : i64, tpu.core_type = #tpu.core_type<tc>, window_params = [{transform_indices = @transform_0, window_bounds = array<i64: 512, 128>}, {pipeline_mode = #tpu.pipeline_mode<synchronous>, transform_indices = @transform_1, window_bounds = array<i64: 1, 128>}, {pipeline_mode = #tpu.pipeline_mode<synchronous>, transform_indices = @transform_2, window_bounds = array<i64: 1, 128>}, {pipeline_mode = #tpu.pipeline_mode<synchronous>, transform_indices = @transform_3, window_bounds = array<i64: 128, 384>}, {pipeline_mode = #tpu.pipeline_mode<synchronous>, transform_indices = @transform_4, window_bounds = array<i64: 1, 384>}, {pipeline_mode = #tpu.pipeline_mode<synchronous>, transform_indices = @transform_5, window_bounds = array<i64: 128, 128>}, {pipeline_mode = #tpu.pipeline_mode<synchronous>, transform_indices = @transform_6, window_bounds = array<i64: 1, 128>}, {transform_indices = @transform_7, window_bounds = array<i64: 512, 128>}]} {
    %c0 = arith.constant 0 : index
    %c0_0 = arith.constant 0 : index
    %0 = vector.load %arg1[%c0, %c0_0] : memref<512x128xf32, #tpu.memory_space<vmem>>, vector<512x128xf32>
    %cst = arith.constant dense<0.000000e+00> : vector<512xf32>
    %1 = vector.multi_reduction <add>, %0, %cst [1] : vector<512x128xf32> to vector<512xf32>
    %2 = vector.shape_cast %1 : vector<512xf32> to vector<512x1xf32>
    %cst_1 = arith.constant 1.280000e+02 : f32
    %3 = vector.broadcast %cst_1 : f32 to vector<512x1xf32>
    %4 = arith.divf %2, %3 : vector<512x1xf32>
    %5 = vector.broadcast %4 : vector<512x1xf32> to vector<512x128xf32>
    %6 = arith.subf %0, %5 : vector<512x128xf32>
    %7 = arith.mulf %6, %6 : vector<512x128xf32>
    %cst_2 = arith.constant dense<0.000000e+00> : vector<512xf32>
    %8 = vector.multi_reduction <add>, %7, %cst_2 [1] : vector<512x128xf32> to vector<512xf32>
    %9 = vector.shape_cast %8 : vector<512xf32> to vector<512x1xf32>
    %cst_3 = arith.constant 1.280000e+02 : f32
    %10 = vector.broadcast %cst_3 : f32 to vector<512x1xf32>
    %11 = arith.divf %9, %10 : vector<512x1xf32>
    %12 = vector.broadcast %4 : vector<512x1xf32> to vector<512x128xf32>
    %13 = arith.subf %0, %12 : vector<512x128xf32>
    %cst_4 = arith.constant 9.99999974E-6 : f32
    %14 = vector.broadcast %cst_4 : f32 to vector<512x1xf32>
    %15 = arith.addf %11, %14 : vector<512x1xf32>
    %16 = math.rsqrt %15 : vector<512x1xf32>
    %17 = vector.broadcast %16 : vector<512x1xf32> to vector<512x128xf32>
    %18 = arith.mulf %13, %17 : vector<512x128xf32>
    %c0_5 = arith.constant 0 : index
    %c0_6 = arith.constant 0 : index
    %19 = vector.load %arg2[%c0_5, %c0_6] : memref<1x128xf32, #tpu.memory_space<vmem>>, vector<1x128xf32>
    %20 = vector.broadcast %19 : vector<1x128xf32> to vector<512x128xf32>
    %21 = arith.mulf %18, %20 : vector<512x128xf32>
    %c0_7 = arith.constant 0 : index
    %c0_8 = arith.constant 0 : index
    %22 = vector.load %arg3[%c0_7, %c0_8] : memref<1x128xf32, #tpu.memory_space<vmem>>, vector<1x128xf32>
    %23 = vector.broadcast %22 : vector<1x128xf32> to vector<512x128xf32>
    %24 = arith.addf %21, %23 : vector<512x128xf32>
    %25 = arith.truncf %24 : vector<512x128xf32> to vector<512x128xbf16>
    %c0_9 = arith.constant 0 : index
    %c0_10 = arith.constant 0 : index
    %26 = vector.load %arg4[%c0_9, %c0_10] : memref<128x384xbf16, #tpu.memory_space<vmem>>, vector<128x384xbf16>
    %cst_11 = arith.constant dense<0.000000e+00> : vector<512x384xf32>
    %27 = tpu.matmul %25, %26, %cst_11 {dimension_numbers = #tpu.dot_dimension_numbers<[1], [0], [0], [1], [0, 0, 1, 1], [], []>} : vector<512x128xbf16>, vector<128x384xbf16>, vector<512x384xf32> -> vector<512x384xf32>
    %c0_12 = arith.constant 0 : index
    %c0_13 = arith.constant 0 : index
    %28 = vector.load %arg5[%c0_12, %c0_13] : memref<1x384xf32, #tpu.memory_space<vmem>>, vector<1x384xf32>
    %29 = vector.broadcast %28 : vector<1x384xf32> to vector<512x384xf32>
    %30 = arith.addf %27, %29 : vector<512x384xf32>
    %31 = vector.extract_strided_slice %30 {offsets = [0, 0], sizes = [512, 128], strides = [1, 1]} : vector<512x384xf32> to vector<512x128xf32>
    %32 = arith.truncf %31 : vector<512x128xf32> to vector<512x128xbf16>
    %33 = vector.shape_cast %32 : vector<512x128xbf16> to vector<4x128x128xbf16>
    %34 = vector.extract_strided_slice %30 {offsets = [0, 128], sizes = [512, 128], strides = [1, 1]} : vector<512x384xf32> to vector<512x128xf32>
    %35 = arith.truncf %34 : vector<512x128xf32> to vector<512x128xbf16>
    %36 = vector.shape_cast %35 : vector<512x128xbf16> to vector<4x128x128xbf16>
    %37 = vector.extract_strided_slice %30 {offsets = [0, 256], sizes = [512, 128], strides = [1, 1]} : vector<512x384xf32> to vector<512x128xf32>
    %38 = arith.truncf %37 : vector<512x128xf32> to vector<512x128xbf16>
    %39 = vector.shape_cast %38 : vector<512x128xbf16> to vector<4x128x128xbf16>
    %40 = vector.extract_strided_slice %33 {offsets = [0, 0, 0], sizes = [4, 128, 32], strides = [1, 1, 1]} : vector<4x128x128xbf16> to vector<4x128x32xbf16>
    %41 = vector.extract_strided_slice %36 {offsets = [0, 0, 0], sizes = [4, 128, 32], strides = [1, 1, 1]} : vector<4x128x128xbf16> to vector<4x128x32xbf16>
    %42 = vector.extract_strided_slice %39 {offsets = [0, 0, 0], sizes = [4, 128, 32], strides = [1, 1, 1]} : vector<4x128x128xbf16> to vector<4x128x32xbf16>
    "tpu.trace_start"() <{level = 10 : i32, message = "bnk,bmk->bnm"}> : () -> ()
    %cst_14 = arith.constant dense<0.000000e+00> : vector<4x128x128xf32>
    %43 = tpu.matmul %40, %41, %cst_14 {dimension_numbers = #tpu.dot_dimension_numbers<[2], [2], [1], [1], [0, 0, 0, 1, 1, 1], [0], [0]>} : vector<4x128x32xbf16>, vector<4x128x32xbf16>, vector<4x128x128xf32> -> vector<4x128x128xf32>
    "tpu.trace_stop"() : () -> ()
    %cst_15 = arith.constant dense<0xFF800000> : vector<4x128xf32>
    %44 = vector.multi_reduction <maximumf>, %43, %cst_15 [2] : vector<4x128x128xf32> to vector<4x128xf32>
    %45 = vector.shape_cast %44 : vector<4x128xf32> to vector<4x128x1xf32>
    %46 = vector.broadcast %45 : vector<4x128x1xf32> to vector<4x128x128xf32>
    %47 = arith.subf %43, %46 : vector<4x128x128xf32>
    %48 = math.exp %47 : vector<4x128x128xf32>
    %cst_16 = arith.constant dense<0.000000e+00> : vector<4x128xf32>
    %49 = vector.multi_reduction <add>, %48, %cst_16 [2] : vector<4x128x128xf32> to vector<4x128xf32>
    %50 = vector.shape_cast %49 : vector<4x128xf32> to vector<4x128x1xf32>
    %51 = tpu.reciprocal %50 {approx = true} : vector<4x128x1xf32> -> vector<4x128x1xf32>
    %52 = vector.broadcast %51 : vector<4x128x1xf32> to vector<4x128x128xf32>
    %53 = arith.mulf %48, %52 : vector<4x128x128xf32>
    %54 = arith.truncf %53 : vector<4x128x128xf32> to vector<4x128x128xbf16>
    "tpu.trace_start"() <{level = 10 : i32, message = "bnm,bmk->bnk"}> : () -> ()
    %cst_17 = arith.constant dense<0.000000e+00> : vector<4x128x32xf32>
    %55 = tpu.matmul %54, %42, %cst_17 {dimension_numbers = #tpu.dot_dimension_numbers<[2], [1], [1], [2], [0, 0, 0, 1, 1, 2], [0], [0]>} : vector<4x128x128xbf16>, vector<4x128x32xbf16>, vector<4x128x32xf32> -> vector<4x128x32xf32>
    "tpu.trace_stop"() : () -> ()
    %56 = arith.truncf %55 : vector<4x128x32xf32> to vector<4x128x32xbf16>
    %57 = vector.shape_cast %56 : vector<4x128x32xbf16> to vector<512x32xbf16>
    %58 = vector.extract_strided_slice %33 {offsets = [0, 0, 32], sizes = [4, 128, 32], strides = [1, 1, 1]} : vector<4x128x128xbf16> to vector<4x128x32xbf16>
    %59 = vector.extract_strided_slice %36 {offsets = [0, 0, 32], sizes = [4, 128, 32], strides = [1, 1, 1]} : vector<4x128x128xbf16> to vector<4x128x32xbf16>
    %60 = vector.extract_strided_slice %39 {offsets = [0, 0, 32], sizes = [4, 128, 32], strides = [1, 1, 1]} : vector<4x128x128xbf16> to vector<4x128x32xbf16>
    "tpu.trace_start"() <{level = 10 : i32, message = "bnk,bmk->bnm"}> : () -> ()
    %cst_18 = arith.constant dense<0.000000e+00> : vector<4x128x128xf32>
    %61 = tpu.matmul %58, %59, %cst_18 {dimension_numbers = #tpu.dot_dimension_numbers<[2], [2], [1], [1], [0, 0, 0, 1, 1, 1], [0], [0]>} : vector<4x128x32xbf16>, vector<4x128x32xbf16>, vector<4x128x128xf32> -> vector<4x128x128xf32>
    "tpu.trace_stop"() : () -> ()
    %cst_19 = arith.constant dense<0xFF800000> : vector<4x128xf32>
    %62 = vector.multi_reduction <maximumf>, %61, %cst_19 [2] : vector<4x128x128xf32> to vector<4x128xf32>
    %63 = vector.shape_cast %62 : vector<4x128xf32> to vector<4x128x1xf32>
    %64 = vector.broadcast %63 : vector<4x128x1xf32> to vector<4x128x128xf32>
    %65 = arith.subf %61, %64 : vector<4x128x128xf32>
    %66 = math.exp %65 : vector<4x128x128xf32>
    %cst_20 = arith.constant dense<0.000000e+00> : vector<4x128xf32>
    %67 = vector.multi_reduction <add>, %66, %cst_20 [2] : vector<4x128x128xf32> to vector<4x128xf32>
    %68 = vector.shape_cast %67 : vector<4x128xf32> to vector<4x128x1xf32>
    %69 = tpu.reciprocal %68 {approx = true} : vector<4x128x1xf32> -> vector<4x128x1xf32>
    %70 = vector.broadcast %69 : vector<4x128x1xf32> to vector<4x128x128xf32>
    %71 = arith.mulf %66, %70 : vector<4x128x128xf32>
    %72 = arith.truncf %71 : vector<4x128x128xf32> to vector<4x128x128xbf16>
    "tpu.trace_start"() <{level = 10 : i32, message = "bnm,bmk->bnk"}> : () -> ()
    %cst_21 = arith.constant dense<0.000000e+00> : vector<4x128x32xf32>
    %73 = tpu.matmul %72, %60, %cst_21 {dimension_numbers = #tpu.dot_dimension_numbers<[2], [1], [1], [2], [0, 0, 0, 1, 1, 2], [0], [0]>} : vector<4x128x128xbf16>, vector<4x128x32xbf16>, vector<4x128x32xf32> -> vector<4x128x32xf32>
    "tpu.trace_stop"() : () -> ()
    %74 = arith.truncf %73 : vector<4x128x32xf32> to vector<4x128x32xbf16>
    %75 = vector.shape_cast %74 : vector<4x128x32xbf16> to vector<512x32xbf16>
    %76 = vector.extract_strided_slice %33 {offsets = [0, 0, 64], sizes = [4, 128, 32], strides = [1, 1, 1]} : vector<4x128x128xbf16> to vector<4x128x32xbf16>
    %77 = vector.extract_strided_slice %36 {offsets = [0, 0, 64], sizes = [4, 128, 32], strides = [1, 1, 1]} : vector<4x128x128xbf16> to vector<4x128x32xbf16>
    %78 = vector.extract_strided_slice %39 {offsets = [0, 0, 64], sizes = [4, 128, 32], strides = [1, 1, 1]} : vector<4x128x128xbf16> to vector<4x128x32xbf16>
    "tpu.trace_start"() <{level = 10 : i32, message = "bnk,bmk->bnm"}> : () -> ()
    %cst_22 = arith.constant dense<0.000000e+00> : vector<4x128x128xf32>
    %79 = tpu.matmul %76, %77, %cst_22 {dimension_numbers = #tpu.dot_dimension_numbers<[2], [2], [1], [1], [0, 0, 0, 1, 1, 1], [0], [0]>} : vector<4x128x32xbf16>, vector<4x128x32xbf16>, vector<4x128x128xf32> -> vector<4x128x128xf32>
    "tpu.trace_stop"() : () -> ()
    %cst_23 = arith.constant dense<0xFF800000> : vector<4x128xf32>
    %80 = vector.multi_reduction <maximumf>, %79, %cst_23 [2] : vector<4x128x128xf32> to vector<4x128xf32>
    %81 = vector.shape_cast %80 : vector<4x128xf32> to vector<4x128x1xf32>
    %82 = vector.broadcast %81 : vector<4x128x1xf32> to vector<4x128x128xf32>
    %83 = arith.subf %79, %82 : vector<4x128x128xf32>
    %84 = math.exp %83 : vector<4x128x128xf32>
    %cst_24 = arith.constant dense<0.000000e+00> : vector<4x128xf32>
    %85 = vector.multi_reduction <add>, %84, %cst_24 [2] : vector<4x128x128xf32> to vector<4x128xf32>
    %86 = vector.shape_cast %85 : vector<4x128xf32> to vector<4x128x1xf32>
    %87 = tpu.reciprocal %86 {approx = true} : vector<4x128x1xf32> -> vector<4x128x1xf32>
    %88 = vector.broadcast %87 : vector<4x128x1xf32> to vector<4x128x128xf32>
    %89 = arith.mulf %84, %88 : vector<4x128x128xf32>
    %90 = arith.truncf %89 : vector<4x128x128xf32> to vector<4x128x128xbf16>
    "tpu.trace_start"() <{level = 10 : i32, message = "bnm,bmk->bnk"}> : () -> ()
    %cst_25 = arith.constant dense<0.000000e+00> : vector<4x128x32xf32>
    %91 = tpu.matmul %90, %78, %cst_25 {dimension_numbers = #tpu.dot_dimension_numbers<[2], [1], [1], [2], [0, 0, 0, 1, 1, 2], [0], [0]>} : vector<4x128x128xbf16>, vector<4x128x32xbf16>, vector<4x128x32xf32> -> vector<4x128x32xf32>
    "tpu.trace_stop"() : () -> ()
    %92 = arith.truncf %91 : vector<4x128x32xf32> to vector<4x128x32xbf16>
    %93 = vector.shape_cast %92 : vector<4x128x32xbf16> to vector<512x32xbf16>
    %94 = vector.extract_strided_slice %33 {offsets = [0, 0, 96], sizes = [4, 128, 32], strides = [1, 1, 1]} : vector<4x128x128xbf16> to vector<4x128x32xbf16>
    %95 = vector.extract_strided_slice %36 {offsets = [0, 0, 96], sizes = [4, 128, 32], strides = [1, 1, 1]} : vector<4x128x128xbf16> to vector<4x128x32xbf16>
    %96 = vector.extract_strided_slice %39 {offsets = [0, 0, 96], sizes = [4, 128, 32], strides = [1, 1, 1]} : vector<4x128x128xbf16> to vector<4x128x32xbf16>
    "tpu.trace_start"() <{level = 10 : i32, message = "bnk,bmk->bnm"}> : () -> ()
    %cst_26 = arith.constant dense<0.000000e+00> : vector<4x128x128xf32>
    %97 = tpu.matmul %94, %95, %cst_26 {dimension_numbers = #tpu.dot_dimension_numbers<[2], [2], [1], [1], [0, 0, 0, 1, 1, 1], [0], [0]>} : vector<4x128x32xbf16>, vector<4x128x32xbf16>, vector<4x128x128xf32> -> vector<4x128x128xf32>
    "tpu.trace_stop"() : () -> ()
    %cst_27 = arith.constant dense<0xFF800000> : vector<4x128xf32>
    %98 = vector.multi_reduction <maximumf>, %97, %cst_27 [2] : vector<4x128x128xf32> to vector<4x128xf32>
    %99 = vector.shape_cast %98 : vector<4x128xf32> to vector<4x128x1xf32>
    %100 = vector.broadcast %99 : vector<4x128x1xf32> to vector<4x128x128xf32>
    %101 = arith.subf %97, %100 : vector<4x128x128xf32>
    %102 = math.exp %101 : vector<4x128x128xf32>
    %cst_28 = arith.constant dense<0.000000e+00> : vector<4x128xf32>
    %103 = vector.multi_reduction <add>, %102, %cst_28 [2] : vector<4x128x128xf32> to vector<4x128xf32>
    %104 = vector.shape_cast %103 : vector<4x128xf32> to vector<4x128x1xf32>
    %105 = tpu.reciprocal %104 {approx = true} : vector<4x128x1xf32> -> vector<4x128x1xf32>
    %106 = vector.broadcast %105 : vector<4x128x1xf32> to vector<4x128x128xf32>
    %107 = arith.mulf %102, %106 : vector<4x128x128xf32>
    %108 = arith.truncf %107 : vector<4x128x128xf32> to vector<4x128x128xbf16>
    "tpu.trace_start"() <{level = 10 : i32, message = "bnm,bmk->bnk"}> : () -> ()
    %cst_29 = arith.constant dense<0.000000e+00> : vector<4x128x32xf32>
    %109 = tpu.matmul %108, %96, %cst_29 {dimension_numbers = #tpu.dot_dimension_numbers<[2], [1], [1], [2], [0, 0, 0, 1, 1, 2], [0], [0]>} : vector<4x128x128xbf16>, vector<4x128x32xbf16>, vector<4x128x32xf32> -> vector<4x128x32xf32>
    "tpu.trace_stop"() : () -> ()
    %110 = arith.truncf %109 : vector<4x128x32xf32> to vector<4x128x32xbf16>
    %111 = vector.shape_cast %110 : vector<4x128x32xbf16> to vector<512x32xbf16>
    %112 = tpu.concatenate %57, %75, %93, %111 in 1 : vector<512x32xbf16>, vector<512x32xbf16>, vector<512x32xbf16>, vector<512x32xbf16> -> vector<512x128xbf16>
    %c0_30 = arith.constant 0 : index
    %c0_31 = arith.constant 0 : index
    %113 = vector.load %arg6[%c0_30, %c0_31] : memref<128x128xbf16, #tpu.memory_space<vmem>>, vector<128x128xbf16>
    %cst_32 = arith.constant dense<0.000000e+00> : vector<512x128xf32>
    %114 = tpu.matmul %112, %113, %cst_32 {dimension_numbers = #tpu.dot_dimension_numbers<[1], [0], [0], [1], [0, 0, 1, 1], [], []>} : vector<512x128xbf16>, vector<128x128xbf16>, vector<512x128xf32> -> vector<512x128xf32>
    %c0_33 = arith.constant 0 : index
    %c0_34 = arith.constant 0 : index
    %115 = vector.load %arg7[%c0_33, %c0_34] : memref<1x128xf32, #tpu.memory_space<vmem>>, vector<1x128xf32>
    %116 = vector.broadcast %115 : vector<1x128xf32> to vector<512x128xf32>
    %117 = arith.addf %114, %116 : vector<512x128xf32>
    %c0_35 = arith.constant 0 : index
    %c0_36 = arith.constant 0 : index
    %118 = vector.load %arg8[%c0_35, %c0_36] : memref<512x128xf32, #tpu.memory_space<vmem>>, vector<512x128xf32>
    tpu.vector_store %arg8[%c0_35, %c0_36], %117 {strides = array<i32>} : memref<512x128xf32, #tpu.memory_space<vmem>>, vector<512x128xf32>,
    return
  }
  func.func @transform_0(%arg0: i32) -> (i32, i32) {
    %c0_i32 = arith.constant 0 : i32
    %c0_i32_0 = arith.constant 0 : i32
    return %arg0, %c0_i32 : i32, i32
  }
  func.func @transform_1(%arg0: i32) -> (i32, i32) {
    %c0_i32 = arith.constant 0 : i32
    %c0_i32_0 = arith.constant 0 : i32
    %c0_i32_1 = arith.constant 0 : i32
    return %c0_i32, %c0_i32_0 : i32, i32
  }
  func.func @transform_2(%arg0: i32) -> (i32, i32) {
    %c0_i32 = arith.constant 0 : i32
    %c0_i32_0 = arith.constant 0 : i32
    %c0_i32_1 = arith.constant 0 : i32
    return %c0_i32, %c0_i32_0 : i32, i32
  }
  func.func @transform_3(%arg0: i32) -> (i32, i32) {
    %c0_i32 = arith.constant 0 : i32
    %c0_i32_0 = arith.constant 0 : i32
    %c0_i32_1 = arith.constant 0 : i32
    return %c0_i32, %c0_i32_0 : i32, i32
  }
  func.func @transform_4(%arg0: i32) -> (i32, i32) {
    %c0_i32 = arith.constant 0 : i32
    %c0_i32_0 = arith.constant 0 : i32
    %c0_i32_1 = arith.constant 0 : i32
    return %c0_i32, %c0_i32_0 : i32, i32
  }
  func.func @transform_5(%arg0: i32) -> (i32, i32) {
    %c0_i32 = arith.constant 0 : i32
    %c0_i32_0 = arith.constant 0 : i32
    %c0_i32_1 = arith.constant 0 : i32
    return %c0_i32, %c0_i32_0 : i32, i32
  }
  func.func @transform_6(%arg0: i32) -> (i32, i32) {
    %c0_i32 = arith.constant 0 : i32
    %c0_i32_0 = arith.constant 0 : i32
    %c0_i32_1 = arith.constant 0 : i32
    return %c0_i32, %c0_i32_0 : i32, i32
  }
  func.func @transform_7(%arg0: i32) -> (i32, i32) {
    %c0_i32 = arith.constant 0 : i32
    %c0_i32_0 = arith.constant 0 : i32
    return %arg0, %c0_i32 : i32, i32
  }
}

</mosaic_0001>

<llo_original>
// kernel: tpu_custom_call.1
$region0: #{tpu_custom_call.1}
  #allocation0 [shape = 'u32[]', space=smem, size = 0x4, offset = 0x4, fixed_abs, tag = 'smem constant byte address 0x4 - core index']
  #allocation1 [shape = 'u32[144,128]{1,0:T(1,128)}', space=vmem, size = 0x12000, scoped, tag = 'internal scratch']
  %s0 = inlined_call_operand.hbm [shape: f32[1024,128], index: 0, kind: input, shape index: {}]
  %s1 = inlined_call_operand.vmem [shape: f32[1,128], index: 1, kind: input, shape index: {}]
  %s2 = inlined_call_operand.vmem [shape: f32[1,128], index: 2, kind: input, shape index: {}]
  %s3 = inlined_call_operand.hbm [shape: bf16[128,384], index: 3, kind: input, shape index: {}]
  %s4 = inlined_call_operand.vmem [shape: f32[1,384], index: 4, kind: input, shape index: {}]
  %s5 = inlined_call_operand.hbm [shape: bf16[128,128], index: 5, kind: input, shape index: {}]
  %s6 = inlined_call_operand.vmem [shape: f32[1,128], index: 6, kind: input, shape index: {}]
  %s7 = inlined_call_operand.hbm [shape: f32[1024,128], index: 7, kind: output, shape index: {}]
  %s8 = sld [smem:[#allocation0]]
  $region73: #{tpu_custom_call.1} parent=0
    _
  %s10 = ssub.s32 1, %s8
  %s11 = scalar_select 0, %s10, %s8
  $region1: #{tpu_custom_call.1} parent=0
    #allocation2 [shape = 'u8[524288]{0}', space=vmem, size = 0x80000, scoped, tag = 'input window, operand 0']
    #allocation3 [shape = 's32[2]{0}', space=sflag, size = 0x8, scoped, tag = 'scoped memory for tpu_custom_call.1']
    #allocation4 [shape = 's32[2]{0}', space=sflag, size = 0x8, scoped, tag = 'scoped memory for tpu_custom_call.1']
    #allocation5 [shape = 'u8[98304]{0}', space=vmem, size = 0x18000, scoped, tag = 'input window, operand 3, single buffered']
    #allocation6 [shape = 's32[1]{0}', space=sflag, size = 0x4, scoped, tag = 'scoped memory for tpu_custom_call.1']
    #allocation7 [shape = 'u8[32768]{0}', space=vmem, size = 0x8000, scoped, tag = 'input window, operand 5, single buffered']
    #allocation8 [shape = 'u8[524288]{0}', space=vmem, size = 0x80000, scoped, tag = 'output window, operand 0']
    %12 = vsyncpa [#allocation3], 0
    %s13 = scalar_lea.sflag [#allocation3], 1
    %14 = vsyncpa %s13, 0
    %15 = vsyncpa [#allocation6], 0
    %16 = vsyncpa [#allocation4], 0
    %s17 = scalar_lea.sflag [#allocation4], 1
    %18 = vsyncpa %s17, 0
    loop: start=0, step=1, limit=4
    $region2: #{tpu_custom_call.1} parent=1 // loop_pre_header
      _
    $region3: #{tpu_custom_call.1} parent=1 // loop_header
      %s20 = sphi 0, %s24
      %p21 = scmp.ge.s32.totalorder %s20, 4
      %s30 = sphi 0, %s32
      %s33 = sphi 0, %s30
      %s34 = sphi 0, %s33
      %s50 = sphi 0, %s34
      %s54 = sphi 0, %s54
      %s56 = sphi 0, %s54
      %s57 = sphi 0, %s56
      %s71 = sphi 0, %s57
      %s75 = sphi 0, %s75
      %s77 = sphi 0, %s75
      %s78 = sphi 0, %s77
      %s92 = sphi 0, %s78
      %s96 = sphi 0, %s96
      %s98 = sphi 0, %s96
      %s99 = sphi 0, %s98
      %s113 = sphi 0, %s99
      %s117 = sphi 0, %s117
      %s119 = sphi 0, %s117
      %s120 = sphi 0, %s119
      %s134 = sphi 0, %s120
      %s138 = sphi 0, %s138
      %s140 = sphi 0, %s138
      %s141 = sphi 0, %s140
      %s155 = sphi 0, %s141
      %s159 = sphi 0, %s159
      %s161 = sphi 0, %s159
      %s162 = sphi 0, %s161
      %s176 = sphi 0, %s162
      %s182 = sphi 0, %s184
      %s185 = sphi 0, %s182
      %s186 = sphi 0, %s185
      %s202 = sphi 0, %s186
    $region4: #{tpu_custom_call.1} parent=1 // loop_header_branch
      %23 = sbr.rel (%p21) target = $region8
    $region5: #{tpu_custom_call.1} parent=1 // loop_body
      %s25 = ssub.s32 %s20, 1
      %s26 = ssub.s32 %s20, 2
      %s27 = sadd.s32 %s20, 1
      %s28 = ssub.s32 %s20, %s27
      %p29 = scmp.eq.s32.totalorder %s28, 0
      %s31 = sadd.s32 %s30, 1
      %s32 = scalar_select %p29, %s30, %s31
      %p35 = pneg %p29
      %p36 = scmp.eq.s32.totalorder %s20, 1
      %p37 = por %p35, %p36
      %p38 = scmp.ne.s32.totalorder %s30, %s33
      %p39 = scmp.eq.s32.totalorder %s20, 0
      %p40 = por %p38, %p39
      %p41 = scmp.ne.s32.totalorder %s30, %s33
      %p42 = scmp.eq.s32.totalorder %s25, 1
      %p43 = por %p41, %p42
      %p44 = scmp.ne.s32.totalorder %s33, %s34
      %p45 = scmp.eq.s32.totalorder %s25, 0
      %p46 = por %p44, %p45
      %p47 = scmp.ne.s32.totalorder %s33, %s34
      %p48 = scmp.eq.s32.totalorder %s26, 1
      %p49 = por %p47, %p48
      %p51 = scmp.ne.s32.totalorder %s34, %s50
      %p52 = scmp.eq.s32.totalorder %s26, 0
      %p53 = por %p51, %p52
      %s55 = sadd.s32 %s54, 1
      %p58 = scmp.eq.s32.totalorder %s20, 1
      %p59 = scmp.ne.s32.totalorder %s54, %s56
      %p60 = scmp.eq.s32.totalorder %s20, 0
      %p61 = por %p59, %p60
      %p62 = scmp.ne.s32.totalorder %s54, %s56
      %p63 = scmp.eq.s32.totalorder %s25, 1
      %p64 = por %p62, %p63
      %p65 = scmp.ne.s32.totalorder %s56, %s57
      %p66 = scmp.eq.s32.totalorder %s25, 0
      %p67 = por %p65, %p66
      %p68 = scmp.ne.s32.totalorder %s56, %s57
      %p69 = scmp.eq.s32.totalorder %s26, 1
      %p70 = por %p68, %p69
      %p72 = scmp.ne.s32.totalorder %s57, %s71
      %p73 = scmp.eq.s32.totalorder %s26, 0
      %p74 = por %p72, %p73
      %s76 = sadd.s32 %s75, 1
      %p79 = scmp.eq.s32.totalorder %s20, 1
      %p80 = scmp.ne.s32.totalorder %s75, %s77
      %p81 = scmp.eq.s32.totalorder %s20, 0
      %p82 = por %p80, %p81
      %p83 = scmp.ne.s32.totalorder %s75, %s77
      %p84 = scmp.eq.s32.totalorder %s25, 1
      %p85 = por %p83, %p84
      %p86 = scmp.ne.s32.totalorder %s77, %s78
      %p87 = scmp.eq.s32.totalorder %s25, 0
      %p88 = por %p86, %p87
      %p89 = scmp.ne.s32.totalorder %s77, %s78
      %p90 = scmp.eq.s32.totalorder %s26, 1
      %p91 = por %p89, %p90
      %p93 = scmp.ne.s32.totalorder %s78, %s92
      %p94 = scmp.eq.s32.totalorder %s26, 0
      %p95 = por %p93, %p94
      %s97 = sadd.s32 %s96, 1
      %p100 = scmp.eq.s32.totalorder %s20, 1
      %p101 = scmp.ne.s32.totalorder %s96, %s98
      %p102 = scmp.eq.s32.totalorder %s20, 0
      %p103 = por %p101, %p102
      %p104 = scmp.ne.s32.totalorder %s96, %s98
      %p105 = scmp.eq.s32.totalorder %s25, 1
      %p106 = por %p104, %p105
      %p107 = scmp.ne.s32.totalorder %s98, %s99
      %p108 = scmp.eq.s32.totalorder %s25, 0
      %p109 = por %p107, %p108
      %p110 = scmp.ne.s32.totalorder %s98, %s99
      %p111 = scmp.eq.s32.totalorder %s26, 1
      %p112 = por %p110, %p111
      %p114 = scmp.ne.s32.totalorder %s99, %s113
      %p115 = scmp.eq.s32.totalorder %s26, 0
      %p116 = por %p114, %p115
      %s118 = sadd.s32 %s117, 1
      %p121 = scmp.eq.s32.totalorder %s20, 1
      %p122 = scmp.ne.s32.totalorder %s117, %s119
      %p123 = scmp.eq.s32.totalorder %s20, 0
      %p124 = por %p122, %p123
      %p125 = scmp.ne.s32.totalorder %s117, %s119
      %p126 = scmp.eq.s32.totalorder %s25, 1
      %p127 = por %p125, %p126
      %p128 = scmp.ne.s32.totalorder %s119, %s120
      %p129 = scmp.eq.s32.totalorder %s25, 0
      %p130 = por %p128, %p129
      %p131 = scmp.ne.s32.totalorder %s119, %s120
      %p132 = scmp.eq.s32.totalorder %s26, 1
      %p133 = por %p131, %p132
      %p135 = scmp.ne.s32.totalorder %s120, %s134
      %p136 = scmp.eq.s32.totalorder %s26, 0
      %p137 = por %p135, %p136
      %s139 = sadd.s32 %s138, 1
      %p142 = scmp.eq.s32.totalorder %s20, 1
      %p143 = scmp.ne.s32.totalorder %s138, %s140
      %p144 = scmp.eq.s32.totalorder %s20, 0
      %p145 = por %p143, %p144
      %p146 = scmp.ne.s32.totalorder %s138, %s140
      %p147 = scmp.eq.s32.totalorder %s25, 1
      %p148 = por %p146, %p147
      %p149 = scmp.ne.s32.totalorder %s140, %s141
      %p150 = scmp.eq.s32.totalorder %s25, 0
      %p151 = por %p149, %p150
      %p152 = scmp.ne.s32.totalorder %s140, %s141
      %p153 = scmp.eq.s32.totalorder %s26, 1
      %p154 = por %p152, %p153
      %p156 = scmp.ne.s32.totalorder %s141, %s155
      %p157 = scmp.eq.s32.totalorder %s26, 0
      %p158 = por %p156, %p157
      %s160 = sadd.s32 %s159, 1
      %p163 = scmp.eq.s32.totalorder %s20, 1
      %p164 = scmp.ne.s32.totalorder %s159, %s161
      %p165 = scmp.eq.s32.totalorder %s20, 0
      %p166 = por %p164, %p165
      %p167 = scmp.ne.s32.totalorder %s159, %s161
      %p168 = scmp.eq.s32.totalorder %s25, 1
      %p169 = por %p167, %p168
      %p170 = scmp.ne.s32.totalorder %s161, %s162
      %p171 = scmp.eq.s32.totalorder %s25, 0
      %p172 = por %p170, %p171
      %p173 = scmp.ne.s32.totalorder %s161, %s162
      %p174 = scmp.eq.s32.totalorder %s26, 1
      %p175 = por %p173, %p174
      %p177 = scmp.ne.s32.totalorder %s162, %s176
      %p178 = scmp.eq.s32.totalorder %s26, 0
      %p179 = por %p177, %p178
      %s180 = ssub.s32 %s20, %s27
      %p181 = scmp.eq.s32.totalorder %s180, 0
      %s183 = sadd.s32 %s182, 1
      %s184 = scalar_select %p181, %s182, %s183
      %p187 = pneg %p181
      %p188 = scmp.eq.s32.totalorder %s20, 1
      %p189 = por %p187, %p188
      %p190 = scmp.ne.s32.totalorder %s182, %s185
      %p191 = scmp.eq.s32.totalorder %s20, 0
      %p192 = por %p190, %p191
      %p193 = scmp.ne.s32.totalorder %s182, %s185
      %p194 = scmp.eq.s32.totalorder %s25, 1
      %p195 = por %p193, %p194
      %p196 = scmp.ne.s32.totalorder %s185, %s186
      %p197 = scmp.eq.s32.totalorder %s25, 0
      %p198 = por %p196, %p197
      %p199 = scmp.ne.s32.totalorder %s185, %s186
      %p200 = scmp.eq.s32.totalorder %s26, 1
      %p201 = por %p199, %p200
      %p203 = scmp.ne.s32.totalorder %s186, %s202
      %p204 = scmp.eq.s32.totalorder %s26, 0
      %p205 = por %p203, %p204
      %p206 = scmp.le.s32.totalorder 1, %s20
      %p207 = scmp.lt.s32.totalorder %s20, 3
      %p208 = pnand %p206, %p207
      %p209 = pneg %p208
      // Predicated region
      $region9: #{tpu_custom_call.1} parent=5 // pred_check
        _
      $region10: #{tpu_custom_call.1} parent=5 // pred_check_branch
        %211 = sbr.rel (%p208) target = $region12
      $region11: #{tpu_custom_call.1} parent=5 // pred_region
        %s212 = ssub.s32 %s20, 1
        // Predicated region
        $region13: #{tpu_custom_call.1} parent=11 // pred_check
          %p213 = pneg %p67
        $region14: #{tpu_custom_call.1} parent=11 // pred_check_branch
          %215 = sbr.rel (%p213) target = $region16
        $region15: #{tpu_custom_call.1} parent=11 // pred_region
          _
        $region16: #{tpu_custom_call.1} parent=11 // pred_fallthru
          _
        // Predicated region
        $region17: #{tpu_custom_call.1} parent=11 // pred_check
          %p216 = pneg %p88
        $region18: #{tpu_custom_call.1} parent=11 // pred_check_branch
          %218 = sbr.rel (%p216) target = $region20
        $region19: #{tpu_custom_call.1} parent=11 // pred_region
          _
        $region20: #{tpu_custom_call.1} parent=11 // pred_fallthru
          _
        // Predicated region
        $region21: #{tpu_custom_call.1} parent=11 // pred_check
          %p219 = pneg %p109
        $region22: #{tpu_custom_call.1} parent=11 // pred_check_branch
          %221 = sbr.rel (%p219) target = $region24
        $region23: #{tpu_custom_call.1} parent=11 // pred_region
          %s223 = ssub.s32 3072, 3072
          %224 = vsyncadd [#allocation6], %s223
          %s225 = sshll.u32 [#allocation5], 4
          %s226 = int_to_ptr.vmem [resolvable:$true] %s225
          %231 = dma.hbm_to_vmem [thread:$0]  %s3, 3072, %s226, [#allocation6], 192, 192, 12
        $region24: #{tpu_custom_call.1} parent=11 // pred_fallthru
          _
        // Predicated region
        $region25: #{tpu_custom_call.1} parent=11 // pred_check
          %p232 = pneg %p130
        $region26: #{tpu_custom_call.1} parent=11 // pred_check_branch
          %234 = sbr.rel (%p232) target = $region28
        $region27: #{tpu_custom_call.1} parent=11 // pred_region
          _
        $region28: #{tpu_custom_call.1} parent=11 // pred_fallthru
          _
        // Predicated region
        $region29: #{tpu_custom_call.1} parent=11 // pred_check
          %p235 = pneg %p151
        $region30: #{tpu_custom_call.1} parent=11 // pred_check_branch
          %237 = sbr.rel (%p235) target = $region32
        $region31: #{tpu_custom_call.1} parent=11 // pred_region
          %s239 = ssub.s32 1024, 1024
          %240 = vsyncadd [#allocation6], %s239
          %s241 = sshll.u32 [#allocation7], 4
          %s242 = int_to_ptr.vmem [resolvable:$true] %s241
          %247 = dma.hbm_to_vmem [thread:$0]  %s5, 1024, %s242, [#allocation6], 64, 64, 4
        $region32: #{tpu_custom_call.1} parent=11 // pred_fallthru
          _
        // Predicated region
        $region33: #{tpu_custom_call.1} parent=11 // pred_check
          %p248 = pneg %p172
        $region34: #{tpu_custom_call.1} parent=11 // pred_check_branch
          %250 = sbr.rel (%p248) target = $region36
        $region35: #{tpu_custom_call.1} parent=11 // pred_region
          _
        $region36: #{tpu_custom_call.1} parent=11 // pred_fallthru
          _
      $region12: #{tpu_custom_call.1} parent=5 // pred_fallthru
        _
      %p251 = scmp.lt.s32.totalorder %s20, 2
      // Predicated region
      $region37: #{tpu_custom_call.1} parent=5 // pred_check
        %p252 = pneg %p251
      $region38: #{tpu_custom_call.1} parent=5 // pred_check_branch
        %254 = sbr.rel (%p252) target = $region40
      $region39: #{tpu_custom_call.1} parent=5 // pred_region
        // Predicated region
        $region41: #{tpu_custom_call.1} parent=39 // pred_check
          %p255 = pneg %p40
        $region42: #{tpu_custom_call.1} parent=39 // pred_check_branch
          %257 = sbr.rel (%p255) target = $region44
        $region43: #{tpu_custom_call.1} parent=39 // pred_region
          %s258 = sand.u32 %s30, 1
          %s259 = scalar_lea.sflag [#allocation3], %s258
          %s260 = sand.u32 %s30, 1
          %s261 = smul.addr %s260, 512
          %s262 = scalar_lea.vmem [#allocation2], %s261
          %s263 = smul.u32 64, %s20
          %s265 = ssub.s32 8192, 8192
          %266 = vsyncadd %s259, %s265
          %s267 = smul.addr %s263, 128
          %s268 = scalar_lea.hbm %s0, %s267
          %s269 = sshll.u32 %s262, 4
          %s270 = int_to_ptr.vmem [resolvable:$true] %s269
          %275 = dma.hbm_to_vmem [thread:$0]  %s268, 8192, %s270, %s259, 128, 128, 8
        $region44: #{tpu_custom_call.1} parent=39 // pred_fallthru
          _
      $region40: #{tpu_custom_call.1} parent=5 // pred_fallthru
        _
      %p276 = scmp.le.s32.totalorder 1, %s20
      %p277 = scmp.lt.s32.totalorder %s20, 3
      %p278 = pnand %p276, %p277
      %p279 = pneg %p278
      // Predicated region
      $region45: #{tpu_custom_call.1} parent=5 // pred_check
        _
      $region46: #{tpu_custom_call.1} parent=5 // pred_check_branch
        %281 = sbr.rel (%p278) target = $region48
      $region47: #{tpu_custom_call.1} parent=5 // pred_region
        %s282 = ssub.s32 %s20, 1
        %s283 = sand.u32 %s33, 1
        %s284 = scalar_lea.sflag [#allocation3], %s283
        %s285 = sand.u32 %s33, 1
        %s286 = smul.addr %s285, 512
        %s287 = scalar_lea.vmem [#allocation2], %s286
        // Predicated region
        $region49: #{tpu_custom_call.1} parent=47 // pred_check
          %p288 = pneg %p46
        $region50: #{tpu_custom_call.1} parent=47 // pred_check_branch
          %290 = sbr.rel (%p288) target = $region52
        $region51: #{tpu_custom_call.1} parent=47 // pred_region
          %291 = dma.done %s284, 8192
        $region52: #{tpu_custom_call.1} parent=47 // pred_fallthru
          _
        // Predicated region
        $region53: #{tpu_custom_call.1} parent=47 // pred_check
          %p292 = pneg %p109
        $region54: #{tpu_custom_call.1} parent=47 // pred_check_branch
          %294 = sbr.rel (%p292) target = $region56
        $region55: #{tpu_custom_call.1} parent=47 // pred_region
          %295 = dma.done [#allocation6], 3072
        $region56: #{tpu_custom_call.1} parent=47 // pred_fallthru
          _
        // Predicated region
        $region57: #{tpu_custom_call.1} parent=47 // pred_check
          %p296 = pneg %p151
        $region58: #{tpu_custom_call.1} parent=47 // pred_check_branch
          %298 = sbr.rel (%p296) target = $region60
        $region59: #{tpu_custom_call.1} parent=47 // pred_region
          %299 = dma.done [#allocation6], 1024
        $region60: #{tpu_custom_call.1} parent=47 // pred_fallthru
          _
        %s300 = sand.u32 %s33, 1
        %s301 = scalar_lea.sflag [#allocation3], %s300
        %s302 = sand.u32 %s33, 1
        %s303 = smul.addr %s302, 512
        %s304 = scalar_lea.vmem [#allocation2], %s303
        %p305 = pneg %p46
        %p306 = pneg %p43
        %p307 = pneg %p67
        %p308 = pneg %p64
        %p309 = pneg %p88
        %p310 = pneg %p85
        %p311 = pneg %p109
        %p312 = pneg %p106
        %p313 = pneg %p130
        %p314 = pneg %p127
        %p315 = pneg %p151
        %p316 = pneg %p148
        %p317 = pneg %p172
        %p318 = pneg %p169
        %p319 = pneg %p198
        %p320 = pneg %p195
        %s321 = sand.u32 %s185, 1
        %s322 = scalar_lea.sflag [#allocation4], %s321
        %s323 = sand.u32 %s185, 1
        %s324 = smul.addr %s323, 512
        %s325 = scalar_lea.vmem [#allocation8], %s324
        %s326 = smul.u32 64, %s25
        %s327 = smul.u32 64, %s25
        %v329 = vld [vmem:[%s287] sm:$0xff]
        %v330 = vld [vmem:[%s287 + $0x8] sm:$0xff]
        %v331 = vld [vmem:[%s287 + $0x10] sm:$0xff]
        %v332 = vld [vmem:[%s287 + $0x18] sm:$0xff]
        %v333 = vld [vmem:[%s287 + $0x20] sm:$0xff]
        %v334 = vld [vmem:[%s287 + $0x28] sm:$0xff]
        %v335 = vld [vmem:[%s287 + $0x30] sm:$0xff]
        %v336 = vld [vmem:[%s287 + $0x38] sm:$0xff]
        %v337 = vld [vmem:[%s287 + $0x40] sm:$0xff]
        %v338 = vld [vmem:[%s287 + $0x48] sm:$0xff]
        %v339 = vld [vmem:[%s287 + $0x50] sm:$0xff]
        %v340 = vld [vmem:[%s287 + $0x58] sm:$0xff]
        %v341 = vld [vmem:[%s287 + $0x60] sm:$0xff]
        %v342 = vld [vmem:[%s287 + $0x68] sm:$0xff]
        %v343 = vld [vmem:[%s287 + $0x70] sm:$0xff]
        %v344 = vld [vmem:[%s287 + $0x78] sm:$0xff]
        %v345 = vld [vmem:[%s287 + $0x80] sm:$0xff]
        %v346 = vld [vmem:[%s287 + $0x88] sm:$0xff]
        %v347 = vld [vmem:[%s287 + $0x90] sm:$0xff]
        %v348 = vld [vmem:[%s287 + $0x98] sm:$0xff]
        %v349 = vld [vmem:[%s287 + $0xa0] sm:$0xff]
        %v350 = vld [vmem:[%s287 + $0xa8] sm:$0xff]
        %v351 = vld [vmem:[%s287 + $0xb0] sm:$0xff]
        %v352 = vld [vmem:[%s287 + $0xb8] sm:$0xff]
        %v353 = vld [vmem:[%s287 + $0xc0] sm:$0xff]
        %v354 = vld [vmem:[%s287 + $0xc8] sm:$0xff]
        %v355 = vld [vmem:[%s287 + $0xd0] sm:$0xff]
        %v356 = vld [vmem:[%s287 + $0xd8] sm:$0xff]
        %v357 = vld [vmem:[%s287 + $0xe0] sm:$0xff]
        %v358 = vld [vmem:[%s287 + $0xe8] sm:$0xff]
        %v359 = vld [vmem:[%s287 + $0xf0] sm:$0xff]
        %v360 = vld [vmem:[%s287 + $0xf8] sm:$0xff]
        %v361 = vld [vmem:[%s287 + $0x100] sm:$0xff]
        %v362 = vld [vmem:[%s287 + $0x108] sm:$0xff]
        %v363 = vld [vmem:[%s287 + $0x110] sm:$0xff]
        %v364 = vld [vmem:[%s287 + $0x118] sm:$0xff]
        %v365 = vld [vmem:[%s287 + $0x120] sm:$0xff]
        %v366 = vld [vmem:[%s287 + $0x128] sm:$0xff]
        %v367 = vld [vmem:[%s287 + $0x130] sm:$0xff]
        %v368 = vld [vmem:[%s287 + $0x138] sm:$0xff]
        %v369 = vld [vmem:[%s287 + $0x140] sm:$0xff]
        %v370 = vld [vmem:[%s287 + $0x148] sm:$0xff]
        %v371 = vld [vmem:[%s287 + $0x150] sm:$0xff]
        %v372 = vld [vmem:[%s287 + $0x158] sm:$0xff]
        %v373 = vld [vmem:[%s287 + $0x160] sm:$0xff]
        %v374 = vld [vmem:[%s287 + $0x168] sm:$0xff]
        %v375 = vld [vmem:[%s287 + $0x170] sm:$0xff]
        %v376 = vld [vmem:[%s287 + $0x178] sm:$0xff]
        %v377 = vld [vmem:[%s287 + $0x180] sm:$0xff]
        %v378 = vld [vmem:[%s287 + $0x188] sm:$0xff]
        %v379 = vld [vmem:[%s287 + $0x190] sm:$0xff]
        %v380 = vld [vmem:[%s287 + $0x198] sm:$0xff]
        %v381 = vld [vmem:[%s287 + $0x1a0] sm:$0xff]
        %v382 = vld [vmem:[%s287 + $0x1a8] sm:$0xff]
        %v383 = vld [vmem:[%s287 + $0x1b0] sm:$0xff]
        %v384 = vld [vmem:[%s287 + $0x1b8] sm:$0xff]
        %v385 = vld [vmem:[%s287 + $0x1c0] sm:$0xff]
        %v386 = vld [vmem:[%s287 + $0x1c8] sm:$0xff]
        %v387 = vld [vmem:[%s287 + $0x1d0] sm:$0xff]
        %v388 = vld [vmem:[%s287 + $0x1d8] sm:$0xff]
        %v389 = vld [vmem:[%s287 + $0x1e0] sm:$0xff]
        %v390 = vld [vmem:[%s287 + $0x1e8] sm:$0xff]
        %v391 = vld [vmem:[%s287 + $0x1f0] sm:$0xff]
        %v392 = vld [vmem:[%s287 + $0x1f8] sm:$0xff]
        %393 = vadd.xlane.f32.xlu0 %v329
        %v394 = vpop.xlane.xlu0 %393
        %395 = vadd.xlane.f32.xlu0 %v330
        %v396 = vpop.xlane.xlu0 %395
        %397 = vadd.xlane.f32.xlu0 %v331
        %v398 = vpop.xlane.xlu0 %397
        %399 = vadd.xlane.f32.xlu0 %v332
        %v400 = vpop.xlane.xlu0 %399
        %401 = vadd.xlane.f32.xlu0 %v333
        %v402 = vpop.xlane.xlu0 %401
        %403 = vadd.xlane.f32.xlu0 %v334
        %v404 = vpop.xlane.xlu0 %403
        %405 = vadd.xlane.f32.xlu0 %v335
        %v406 = vpop.xlane.xlu0 %405
        %407 = vadd.xlane.f32.xlu0 %v336
        %v408 = vpop.xlane.xlu0 %407
        %409 = vadd.xlane.f32.xlu0 %v337
        %v410 = vpop.xlane.xlu0 %409
        %411 = vadd.xlane.f32.xlu0 %v338
        %v412 = vpop.xlane.xlu0 %411
        %413 = vadd.xlane.f32.xlu0 %v339
        %v414 = vpop.xlane.xlu0 %413
        %415 = vadd.xlane.f32.xlu0 %v340
        %v416 = vpop.xlane.xlu0 %415
        %417 = vadd.xlane.f32.xlu0 %v341
        %v418 = vpop.xlane.xlu0 %417
        %419 = vadd.xlane.f32.xlu0 %v342
        %v420 = vpop.xlane.xlu0 %419
        %421 = vadd.xlane.f32.xlu0 %v343
        %v422 = vpop.xlane.xlu0 %421
        %423 = vadd.xlane.f32.xlu0 %v344
        %v424 = vpop.xlane.xlu0 %423
        %425 = vadd.xlane.f32.xlu0 %v345
        %v426 = vpop.xlane.xlu0 %425
        %427 = vadd.xlane.f32.xlu0 %v346
        %v428 = vpop.xlane.xlu0 %427
        %429 = vadd.xlane.f32.xlu0 %v347
        %v430 = vpop.xlane.xlu0 %429
        %431 = vadd.xlane.f32.xlu0 %v348
        %v432 = vpop.xlane.xlu0 %431
        %433 = vadd.xlane.f32.xlu0 %v349
        %v434 = vpop.xlane.xlu0 %433
        %435 = vadd.xlane.f32.xlu0 %v350
        %v436 = vpop.xlane.xlu0 %435
        %437 = vadd.xlane.f32.xlu0 %v351
        %v438 = vpop.xlane.xlu0 %437
        %439 = vadd.xlane.f32.xlu0 %v352
        %v440 = vpop.xlane.xlu0 %439
        %441 = vadd.xlane.f32.xlu0 %v353
        %v442 = vpop.xlane.xlu0 %441
        %443 = vadd.xlane.f32.xlu0 %v354
        %v444 = vpop.xlane.xlu0 %443
        %445 = vadd.xlane.f32.xlu0 %v355
        %v446 = vpop.xlane.xlu0 %445
        %447 = vadd.xlane.f32.xlu0 %v356
        %v448 = vpop.xlane.xlu0 %447
        %449 = vadd.xlane.f32.xlu0 %v357
        %v450 = vpop.xlane.xlu0 %449
        %451 = vadd.xlane.f32.xlu0 %v358
        %v452 = vpop.xlane.xlu0 %451
        %453 = vadd.xlane.f32.xlu0 %v359
        %v454 = vpop.xlane.xlu0 %453
        %455 = vadd.xlane.f32.xlu0 %v360
        %v456 = vpop.xlane.xlu0 %455
        %457 = vadd.xlane.f32.xlu0 %v361
        %v458 = vpop.xlane.xlu0 %457
        %459 = vadd.xlane.f32.xlu0 %v362
        %v460 = vpop.xlane.xlu0 %459
        %461 = vadd.xlane.f32.xlu0 %v363
        %v462 = vpop.xlane.xlu0 %461
        %463 = vadd.xlane.f32.xlu0 %v364
        %v464 = vpop.xlane.xlu0 %463
        %465 = vadd.xlane.f32.xlu0 %v365
        %v466 = vpop.xlane.xlu0 %465
        %467 = vadd.xlane.f32.xlu0 %v366
        %v468 = vpop.xlane.xlu0 %467
        %469 = vadd.xlane.f32.xlu0 %v367
        %v470 = vpop.xlane.xlu0 %469
        %471 = vadd.xlane.f32.xlu0 %v368
        %v472 = vpop.xlane.xlu0 %471
        %473 = vadd.xlane.f32.xlu0 %v369
        %v474 = vpop.xlane.xlu0 %473
        %475 = vadd.xlane.f32.xlu0 %v370
        %v476 = vpop.xlane.xlu0 %475
        %477 = vadd.xlane.f32.xlu0 %v371
        %v478 = vpop.xlane.xlu0 %477
        %479 = vadd.xlane.f32.xlu0 %v372
        %v480 = vpop.xlane.xlu0 %479
        %481 = vadd.xlane.f32.xlu0 %v373
        %v482 = vpop.xlane.xlu0 %481
        %483 = vadd.xlane.f32.xlu0 %v374
        %v484 = vpop.xlane.xlu0 %483
        %485 = vadd.xlane.f32.xlu0 %v375
        %v486 = vpop.xlane.xlu0 %485
        %487 = vadd.xlane.f32.xlu0 %v376
        %v488 = vpop.xlane.xlu0 %487
        %489 = vadd.xlane.f32.xlu0 %v377
        %v490 = vpop.xlane.xlu0 %489
        %491 = vadd.xlane.f32.xlu0 %v378
        %v492 = vpop.xlane.xlu0 %491
        %493 = vadd.xlane.f32.xlu0 %v379
        %v494 = vpop.xlane.xlu0 %493
        %495 = vadd.xlane.f32.xlu0 %v380
        %v496 = vpop.xlane.xlu0 %495
        %497 = vadd.xlane.f32.xlu0 %v381
        %v498 = vpop.xlane.xlu0 %497
        %499 = vadd.xlane.f32.xlu0 %v382
        %v500 = vpop.xlane.xlu0 %499
        %501 = vadd.xlane.f32.xlu0 %v383
        %v502 = vpop.xlane.xlu0 %501
        %503 = vadd.xlane.f32.xlu0 %v384
        %v504 = vpop.xlane.xlu0 %503
        %505 = vadd.xlane.f32.xlu0 %v385
        %v506 = vpop.xlane.xlu0 %505
        %507 = vadd.xlane.f32.xlu0 %v386
        %v508 = vpop.xlane.xlu0 %507
        %509 = vadd.xlane.f32.xlu0 %v387
        %v510 = vpop.xlane.xlu0 %509
        %511 = vadd.xlane.f32.xlu0 %v388
        %v512 = vpop.xlane.xlu0 %511
        %513 = vadd.xlane.f32.xlu0 %v389
        %v514 = vpop.xlane.xlu0 %513
        %515 = vadd.xlane.f32.xlu0 %v390
        %v516 = vpop.xlane.xlu0 %515
        %517 = vadd.xlane.f32.xlu0 %v391
        %v518 = vpop.xlane.xlu0 %517
        %519 = vadd.xlane.f32.xlu0 %v392
        %v520 = vpop.xlane.xlu0 %519
        %v521 = vrcp.pop 128.0
        %v522 = vmul.f32 %v394, %v521
        %v523 = vmul.f32 %v396, %v521
        %v524 = vmul.f32 %v398, %v521
        %v525 = vmul.f32 %v400, %v521
        %v526 = vmul.f32 %v402, %v521
        %v527 = vmul.f32 %v404, %v521
        %v528 = vmul.f32 %v406, %v521
        %v529 = vmul.f32 %v408, %v521
        %v530 = vmul.f32 %v410, %v521
        %v531 = vmul.f32 %v412, %v521
        %v532 = vmul.f32 %v414, %v521
        %v533 = vmul.f32 %v416, %v521
        %v534 = vmul.f32 %v418, %v521
        %v535 = vmul.f32 %v420, %v521
        %v536 = vmul.f32 %v422, %v521
        %v537 = vmul.f32 %v424, %v521
        %v538 = vmul.f32 %v426, %v521
        %v539 = vmul.f32 %v428, %v521
        %v540 = vmul.f32 %v430, %v521
        %v541 = vmul.f32 %v432, %v521
        %v542 = vmul.f32 %v434, %v521
        %v543 = vmul.f32 %v436, %v521
        %v544 = vmul.f32 %v438, %v521
        %v545 = vmul.f32 %v440, %v521
        %v546 = vmul.f32 %v442, %v521
        %v547 = vmul.f32 %v444, %v521
        %v548 = vmul.f32 %v446, %v521
        %v549 = vmul.f32 %v448, %v521
        %v550 = vmul.f32 %v450, %v521
        %v551 = vmul.f32 %v452, %v521
        %v552 = vmul.f32 %v454, %v521
        %v553 = vmul.f32 %v456, %v521
        %v554 = vmul.f32 %v458, %v521
        %v555 = vmul.f32 %v460, %v521
        %v556 = vmul.f32 %v462, %v521
        %v557 = vmul.f32 %v464, %v521
        %v558 = vmul.f32 %v466, %v521
        %v559 = vmul.f32 %v468, %v521
        %v560 = vmul.f32 %v470, %v521
        %v561 = vmul.f32 %v472, %v521
        %v562 = vmul.f32 %v474, %v521
        %v563 = vmul.f32 %v476, %v521
        %v564 = vmul.f32 %v478, %v521
        %v565 = vmul.f32 %v480, %v521
        %v566 = vmul.f32 %v482, %v521
        %v567 = vmul.f32 %v484, %v521
        %v568 = vmul.f32 %v486, %v521
        %v569 = vmul.f32 %v488, %v521
        %v570 = vmul.f32 %v490, %v521
        %v571 = vmul.f32 %v492, %v521
        %v572 = vmul.f32 %v494, %v521
        %v573 = vmul.f32 %v496, %v521
        %v574 = vmul.f32 %v498, %v521
        %v575 = vmul.f32 %v500, %v521
        %v576 = vmul.f32 %v502, %v521
        %v577 = vmul.f32 %v504, %v521
        %v578 = vmul.f32 %v506, %v521
        %v579 = vmul.f32 %v508, %v521
        %v580 = vmul.f32 %v510, %v521
        %v581 = vmul.f32 %v512, %v521
        %v582 = vmul.f32 %v514, %v521
        %v583 = vmul.f32 %v516, %v521
        %v584 = vmul.f32 %v518, %v521
        %v585 = vmul.f32 %v520, %v521
        %v586 = vsub.f32 %v329, %v522
        %v587 = vsub.f32 %v330, %v523
        %v588 = vsub.f32 %v331, %v524
        %v589 = vsub.f32 %v332, %v525
        %v590 = vsub.f32 %v333, %v526
        %v591 = vsub.f32 %v334, %v527
        %v592 = vsub.f32 %v335, %v528
        %v593 = vsub.f32 %v336, %v529
        %v594 = vsub.f32 %v337, %v530
        %v595 = vsub.f32 %v338, %v531
        %v596 = vsub.f32 %v339, %v532
        %v597 = vsub.f32 %v340, %v533
        %v598 = vsub.f32 %v341, %v534
        %v599 = vsub.f32 %v342, %v535
        %v600 = vsub.f32 %v343, %v536
        %v601 = vsub.f32 %v344, %v537
        %v602 = vsub.f32 %v345, %v538
        %v603 = vsub.f32 %v346, %v539
        %v604 = vsub.f32 %v347, %v540
        %v605 = vsub.f32 %v348, %v541
        %v606 = vsub.f32 %v349, %v542
        %v607 = vsub.f32 %v350, %v543
        %v608 = vsub.f32 %v351, %v544
        %v609 = vsub.f32 %v352, %v545
        %v610 = vsub.f32 %v353, %v546
        %v611 = vsub.f32 %v354, %v547
        %v612 = vsub.f32 %v355, %v548
        %v613 = vsub.f32 %v356, %v549
        %v614 = vsub.f32 %v357, %v550
        %v615 = vsub.f32 %v358, %v551
        %v616 = vsub.f32 %v359, %v552
        %v617 = vsub.f32 %v360, %v553
        %v618 = vsub.f32 %v361, %v554
        %v619 = vsub.f32 %v362, %v555
        %v620 = vsub.f32 %v363, %v556
        %v621 = vsub.f32 %v364, %v557
        %v622 = vsub.f32 %v365, %v558
        %v623 = vsub.f32 %v366, %v559
        %v624 = vsub.f32 %v367, %v560
        %v625 = vsub.f32 %v368, %v561
        %v626 = vsub.f32 %v369, %v562
        %v627 = vsub.f32 %v370, %v563
        %v628 = vsub.f32 %v371, %v564
        %v629 = vsub.f32 %v372, %v565
        %v630 = vsub.f32 %v373, %v566
        %v631 = vsub.f32 %v374, %v567
        %v632 = vsub.f32 %v375, %v568
        %v633 = vsub.f32 %v376, %v569
        %v634 = vsub.f32 %v377, %v570
        %v635 = vsub.f32 %v378, %v571
        %v636 = vsub.f32 %v379, %v572
        %v637 = vsub.f32 %v380, %v573
        %v638 = vsub.f32 %v381, %v574
        %v639 = vsub.f32 %v382, %v575
        %v640 = vsub.f32 %v383, %v576
        %v641 = vsub.f32 %v384, %v577
        %v642 = vsub.f32 %v385, %v578
        %v643 = vsub.f32 %v386, %v579
        %v644 = vsub.f32 %v387, %v580
        %v645 = vsub.f32 %v388, %v581
        %v646 = vsub.f32 %v389, %v582
        %v647 = vsub.f32 %v390, %v583
        %v648 = vsub.f32 %v391, %v584
        %v649 = vsub.f32 %v392, %v585
        %v650 = vmul.f32 %v586, %v586
        %v651 = vmul.f32 %v587, %v587
        %v652 = vmul.f32 %v588, %v588
        %v653 = vmul.f32 %v589, %v589
        %v654 = vmul.f32 %v590, %v590
        %v655 = vmul.f32 %v591, %v591
        %v656 = vmul.f32 %v592, %v592
        %v657 = vmul.f32 %v593, %v593
        %v658 = vmul.f32 %v594, %v594
        %v659 = vmul.f32 %v595, %v595
        %v660 = vmul.f32 %v596, %v596
        %v661 = vmul.f32 %v597, %v597
        %v662 = vmul.f32 %v598, %v598
        %v663 = vmul.f32 %v599, %v599
        %v664 = vmul.f32 %v600, %v600
        %v665 = vmul.f32 %v601, %v601
        %v666 = vmul.f32 %v602, %v602
        %v667 = vmul.f32 %v603, %v603
        %v668 = vmul.f32 %v604, %v604
        %v669 = vmul.f32 %v605, %v605
        %v670 = vmul.f32 %v606, %v606
        %v671 = vmul.f32 %v607, %v607
        %v672 = vmul.f32 %v608, %v608
        %v673 = vmul.f32 %v609, %v609
        %v674 = vmul.f32 %v610, %v610
        %v675 = vmul.f32 %v611, %v611
        %v676 = vmul.f32 %v612, %v612
        %v677 = vmul.f32 %v613, %v613
        %v678 = vmul.f32 %v614, %v614
        %v679 = vmul.f32 %v615, %v615
        %v680 = vmul.f32 %v616, %v616
        %v681 = vmul.f32 %v617, %v617
        %v682 = vmul.f32 %v618, %v618
        %v683 = vmul.f32 %v619, %v619
        %v684 = vmul.f32 %v620, %v620
        %v685 = vmul.f32 %v621, %v621
        %v686 = vmul.f32 %v622, %v622
        %v687 = vmul.f32 %v623, %v623
        %v688 = vmul.f32 %v624, %v624
        %v689 = vmul.f32 %v625, %v625
        %v690 = vmul.f32 %v626, %v626
        %v691 = vmul.f32 %v627, %v627
        %v692 = vmul.f32 %v628, %v628
        %v693 = vmul.f32 %v629, %v629
        %v694 = vmul.f32 %v630, %v630
        %v695 = vmul.f32 %v631, %v631
        %v696 = vmul.f32 %v632, %v632
        %v697 = vmul.f32 %v633, %v633
        %v698 = vmul.f32 %v634, %v634
        %v699 = vmul.f32 %v635, %v635
        %v700 = vmul.f32 %v636, %v636
        %v701 = vmul.f32 %v637, %v637
        %v702 = vmul.f32 %v638, %v638
        %v703 = vmul.f32 %v639, %v639
        %v704 = vmul.f32 %v640, %v640
        %v705 = vmul.f32 %v641, %v641
        %v706 = vmul.f32 %v642, %v642
        %v707 = vmul.f32 %v643, %v643
        %v708 = vmul.f32 %v644, %v644
        %v709 = vmul.f32 %v645, %v645
        %v710 = vmul.f32 %v646, %v646
        %v711 = vmul.f32 %v647, %v647
        %v712 = vmul.f32 %v648, %v648
        %v713 = vmul.f32 %v649, %v649
        %714 = vadd.xlane.f32.xlu0 %v650
        %v715 = vpop.xlane.xlu0 %714
        %716 = vadd.xlane.f32.xlu0 %v651
        %v717 = vpop.xlane.xlu0 %716
        %718 = vadd.xlane.f32.xlu0 %v652
        %v719 = vpop.xlane.xlu0 %718
        %720 = vadd.xlane.f32.xlu0 %v653
        %v721 = vpop.xlane.xlu0 %720
        %722 = vadd.xlane.f32.xlu0 %v654
        %v723 = vpop.xlane.xlu0 %722
        %724 = vadd.xlane.f32.xlu0 %v655
        %v725 = vpop.xlane.xlu0 %724
        %726 = vadd.xlane.f32.xlu0 %v656
        %v727 = vpop.xlane.xlu0 %726
        %728 = vadd.xlane.f32.xlu0 %v657
        %v729 = vpop.xlane.xlu0 %728
        %730 = vadd.xlane.f32.xlu0 %v658
        %v731 = vpop.xlane.xlu0 %730
        %732 = vadd.xlane.f32.xlu0 %v659
        %v733 = vpop.xlane.xlu0 %732
        %734 = vadd.xlane.f32.xlu0 %v660
        %v735 = vpop.xlane.xlu0 %734
        %736 = vadd.xlane.f32.xlu0 %v661
        %v737 = vpop.xlane.xlu0 %736
        %738 = vadd.xlane.f32.xlu0 %v662
        %v739 = vpop.xlane.xlu0 %738
        %740 = vadd.xlane.f32.xlu0 %v663
        %v741 = vpop.xlane.xlu0 %740
        %742 = vadd.xlane.f32.xlu0 %v664
        %v743 = vpop.xlane.xlu0 %742
        %744 = vadd.xlane.f32.xlu0 %v665
        %v745 = vpop.xlane.xlu0 %744
        %746 = vadd.xlane.f32.xlu0 %v666
        %v747 = vpop.xlane.xlu0 %746
        %748 = vadd.xlane.f32.xlu0 %v667
        %v749 = vpop.xlane.xlu0 %748
        %750 = vadd.xlane.f32.xlu0 %v668
        %v751 = vpop.xlane.xlu0 %750
        %752 = vadd.xlane.f32.xlu0 %v669
        %v753 = vpop.xlane.xlu0 %752
        %754 = vadd.xlane.f32.xlu0 %v670
        %v755 = vpop.xlane.xlu0 %754
        %756 = vadd.xlane.f32.xlu0 %v671
        %v757 = vpop.xlane.xlu0 %756
        %758 = vadd.xlane.f32.xlu0 %v672
        %v759 = vpop.xlane.xlu0 %758
        %760 = vadd.xlane.f32.xlu0 %v673
        %v761 = vpop.xlane.xlu0 %760
        %762 = vadd.xlane.f32.xlu0 %v674
        %v763 = vpop.xlane.xlu0 %762
        %764 = vadd.xlane.f32.xlu0 %v675
        %v765 = vpop.xlane.xlu0 %764
        %766 = vadd.xlane.f32.xlu0 %v676
        %v767 = vpop.xlane.xlu0 %766
        %768 = vadd.xlane.f32.xlu0 %v677
        %v769 = vpop.xlane.xlu0 %768
        %770 = vadd.xlane.f32.xlu0 %v678
        %v771 = vpop.xlane.xlu0 %770
        %772 = vadd.xlane.f32.xlu0 %v679
        %v773 = vpop.xlane.xlu0 %772
        %774 = vadd.xlane.f32.xlu0 %v680
        %v775 = vpop.xlane.xlu0 %774
        %776 = vadd.xlane.f32.xlu0 %v681
        %v777 = vpop.xlane.xlu0 %776
        %778 = vadd.xlane.f32.xlu0 %v682
        %v779 = vpop.xlane.xlu0 %778
        %780 = vadd.xlane.f32.xlu0 %v683
        %v781 = vpop.xlane.xlu0 %780
        %782 = vadd.xlane.f32.xlu0 %v684
        %v783 = vpop.xlane.xlu0 %782
        %784 = vadd.xlane.f32.xlu0 %v685
        %v785 = vpop.xlane.xlu0 %784
        %786 = vadd.xlane.f32.xlu0 %v686
        %v787 = vpop.xlane.xlu0 %786
        %788 = vadd.xlane.f32.xlu0 %v687
        %v789 = vpop.xlane.xlu0 %788
        %790 = vadd.xlane.f32.xlu0 %v688
        %v791 = vpop.xlane.xlu0 %790
        %792 = vadd.xlane.f32.xlu0 %v689
        %v793 = vpop.xlane.xlu0 %792
        %794 = vadd.xlane.f32.xlu0 %v690
        %v795 = vpop.xlane.xlu0 %794
        %796 = vadd.xlane.f32.xlu0 %v691
        %v797 = vpop.xlane.xlu0 %796
        %798 = vadd.xlane.f32.xlu0 %v692
        %v799 = vpop.xlane.xlu0 %798
        %800 = vadd.xlane.f32.xlu0 %v693
        %v801 = vpop.xlane.xlu0 %800
        %802 = vadd.xlane.f32.xlu0 %v694
        %v803 = vpop.xlane.xlu0 %802
        %804 = vadd.xlane.f32.xlu0 %v695
        %v805 = vpop.xlane.xlu0 %804
        %806 = vadd.xlane.f32.xlu0 %v696
        %v807 = vpop.xlane.xlu0 %806
        %808 = vadd.xlane.f32.xlu0 %v697
        %v809 = vpop.xlane.xlu0 %808
        %810 = vadd.xlane.f32.xlu0 %v698
        %v811 = vpop.xlane.xlu0 %810
        %812 = vadd.xlane.f32.xlu0 %v699
        %v813 = vpop.xlane.xlu0 %812
        %814 = vadd.xlane.f32.xlu0 %v700
        %v815 = vpop.xlane.xlu0 %814
        %816 = vadd.xlane.f32.xlu0 %v701
        %v817 = vpop.xlane.xlu0 %816
        %818 = vadd.xlane.f32.xlu0 %v702
        %v819 = vpop.xlane.xlu0 %818
        %820 = vadd.xlane.f32.xlu0 %v703
        %v821 = vpop.xlane.xlu0 %820
        %822 = vadd.xlane.f32.xlu0 %v704
        %v823 = vpop.xlane.xlu0 %822
        %824 = vadd.xlane.f32.xlu0 %v705
        %v825 = vpop.xlane.xlu0 %824
        %826 = vadd.xlane.f32.xlu0 %v706
        %v827 = vpop.xlane.xlu0 %826
        %828 = vadd.xlane.f32.xlu0 %v707
        %v829 = vpop.xlane.xlu0 %828
        %830 = vadd.xlane.f32.xlu0 %v708
        %v831 = vpop.xlane.xlu0 %830
        %832 = vadd.xlane.f32.xlu0 %v709
        %v833 = vpop.xlane.xlu0 %832
        %834 = vadd.xlane.f32.xlu0 %v710
        %v835 = vpop.xlane.xlu0 %834
        %836 = vadd.xlane.f32.xlu0 %v711
        %v837 = vpop.xlane.xlu0 %836
        %838 = vadd.xlane.f32.xlu0 %v712
        %v839 = vpop.xlane.xlu0 %838
        %840 = vadd.xlane.f32.xlu0 %v713
        %v841 = vpop.xlane.xlu0 %840
        %v842 = vmul.f32 %v715, %v521
        %v843 = vmul.f32 %v717, %v521
        %v844 = vmul.f32 %v719, %v521
        %v845 = vmul.f32 %v721, %v521
        %v846 = vmul.f32 %v723, %v521
        %v847 = vmul.f32 %v725, %v521
        %v848 = vmul.f32 %v727, %v521
        %v849 = vmul.f32 %v729, %v521
        %v850 = vmul.f32 %v731, %v521
        %v851 = vmul.f32 %v733, %v521
        %v852 = vmul.f32 %v735, %v521
        %v853 = vmul.f32 %v737, %v521
        %v854 = vmul.f32 %v739, %v521
        %v855 = vmul.f32 %v741, %v521
        %v856 = vmul.f32 %v743, %v521
        %v857 = vmul.f32 %v745, %v521
        %v858 = vmul.f32 %v747, %v521
        %v859 = vmul.f32 %v749, %v521
        %v860 = vmul.f32 %v751, %v521
        %v861 = vmul.f32 %v753, %v521
        %v862 = vmul.f32 %v755, %v521
        %v863 = vmul.f32 %v757, %v521
        %v864 = vmul.f32 %v759, %v521
        %v865 = vmul.f32 %v761, %v521
        %v866 = vmul.f32 %v763, %v521
        %v867 = vmul.f32 %v765, %v521
        %v868 = vmul.f32 %v767, %v521
        %v869 = vmul.f32 %v769, %v521
        %v870 = vmul.f32 %v771, %v521
        %v871 = vmul.f32 %v773, %v521
        %v872 = vmul.f32 %v775, %v521
        %v873 = vmul.f32 %v777, %v521
        %v874 = vmul.f32 %v779, %v521
        %v875 = vmul.f32 %v781, %v521
        %v876 = vmul.f32 %v783, %v521
        %v877 = vmul.f32 %v785, %v521
        %v878 = vmul.f32 %v787, %v521
        %v879 = vmul.f32 %v789, %v521
        %v880 = vmul.f32 %v791, %v521
        %v881 = vmul.f32 %v793, %v521
        %v882 = vmul.f32 %v795, %v521
        %v883 = vmul.f32 %v797, %v521
        %v884 = vmul.f32 %v799, %v521
        %v885 = vmul.f32 %v801, %v521
        %v886 = vmul.f32 %v803, %v521
        %v887 = vmul.f32 %v805, %v521
        %v888 = vmul.f32 %v807, %v521
        %v889 = vmul.f32 %v809, %v521
        %v890 = vmul.f32 %v811, %v521
        %v891 = vmul.f32 %v813, %v521
        %v892 = vmul.f32 %v815, %v521
        %v893 = vmul.f32 %v817, %v521
        %v894 = vmul.f32 %v819, %v521
        %v895 = vmul.f32 %v821, %v521
        %v896 = vmul.f32 %v823, %v521
        %v897 = vmul.f32 %v825, %v521
        %v898 = vmul.f32 %v827, %v521
        %v899 = vmul.f32 %v829, %v521
        %v900 = vmul.f32 %v831, %v521
        %v901 = vmul.f32 %v833, %v521
        %v902 = vmul.f32 %v835, %v521
        %v903 = vmul.f32 %v837, %v521
        %v904 = vmul.f32 %v839, %v521
        %v905 = vmul.f32 %v841, %v521
        %v906 = vadd.f32 %v842, 1e-05
        %v907 = vadd.f32 %v843, 1e-05
        %v908 = vadd.f32 %v844, 1e-05
        %v909 = vadd.f32 %v845, 1e-05
        %v910 = vadd.f32 %v846, 1e-05
        %v911 = vadd.f32 %v847, 1e-05
        %v912 = vadd.f32 %v848, 1e-05
        %v913 = vadd.f32 %v849, 1e-05
        %v914 = vadd.f32 %v850, 1e-05
        %v915 = vadd.f32 %v851, 1e-05
        %v916 = vadd.f32 %v852, 1e-05
        %v917 = vadd.f32 %v853, 1e-05
        %v918 = vadd.f32 %v854, 1e-05
        %v919 = vadd.f32 %v855, 1e-05
        %v920 = vadd.f32 %v856, 1e-05
        %v921 = vadd.f32 %v857, 1e-05
        %v922 = vadd.f32 %v858, 1e-05
        %v923 = vadd.f32 %v859, 1e-05
        %v924 = vadd.f32 %v860, 1e-05
        %v925 = vadd.f32 %v861, 1e-05
        %v926 = vadd.f32 %v862, 1e-05
        %v927 = vadd.f32 %v863, 1e-05
        %v928 = vadd.f32 %v864, 1e-05
        %v929 = vadd.f32 %v865, 1e-05
        %v930 = vadd.f32 %v866, 1e-05
        %v931 = vadd.f32 %v867, 1e-05
        %v932 = vadd.f32 %v868, 1e-05
        %v933 = vadd.f32 %v869, 1e-05
        %v934 = vadd.f32 %v870, 1e-05
        %v935 = vadd.f32 %v871, 1e-05
        %v936 = vadd.f32 %v872, 1e-05
        %v937 = vadd.f32 %v873, 1e-05
        %v938 = vadd.f32 %v874, 1e-05
        %v939 = vadd.f32 %v875, 1e-05
        %v940 = vadd.f32 %v876, 1e-05
        %v941 = vadd.f32 %v877, 1e-05
        %v942 = vadd.f32 %v878, 1e-05
        %v943 = vadd.f32 %v879, 1e-05
        %v944 = vadd.f32 %v880, 1e-05
        %v945 = vadd.f32 %v881, 1e-05
        %v946 = vadd.f32 %v882, 1e-05
        %v947 = vadd.f32 %v883, 1e-05
        %v948 = vadd.f32 %v884, 1e-05
        %v949 = vadd.f32 %v885, 1e-05
        %v950 = vadd.f32 %v886, 1e-05
        %v951 = vadd.f32 %v887, 1e-05
        %v952 = vadd.f32 %v888, 1e-05
        %v953 = vadd.f32 %v889, 1e-05
        %v954 = vadd.f32 %v890, 1e-05
        %v955 = vadd.f32 %v891, 1e-05
        %v956 = vadd.f32 %v892, 1e-05
        %v957 = vadd.f32 %v893, 1e-05
        %v958 = vadd.f32 %v894, 1e-05
        %v959 = vadd.f32 %v895, 1e-05
        %v960 = vadd.f32 %v896, 1e-05
        %v961 = vadd.f32 %v897, 1e-05
        %v962 = vadd.f32 %v898, 1e-05
        %v963 = vadd.f32 %v899, 1e-05
        %v964 = vadd.f32 %v900, 1e-05
        %v965 = vadd.f32 %v901, 1e-05
        %v966 = vadd.f32 %v902, 1e-05
        %v967 = vadd.f32 %v903, 1e-05
        %v968 = vadd.f32 %v904, 1e-05
        %v969 = vadd.f32 %v905, 1e-05
        %v970 = vrsqrt.pop %v906
        %v971 = vrsqrt.pop %v907
        %v972 = vrsqrt.pop %v908
        %v973 = vrsqrt.pop %v909
        %v974 = vrsqrt.pop %v910
        %v975 = vrsqrt.pop %v911
        %v976 = vrsqrt.pop %v912
        %v977 = vrsqrt.pop %v913
        %v978 = vrsqrt.pop %v914
        %v979 = vrsqrt.pop %v915
        %v980 = vrsqrt.pop %v916
        %v981 = vrsqrt.pop %v917
        %v982 = vrsqrt.pop %v918
        %v983 = vrsqrt.pop %v919
        %v984 = vrsqrt.pop %v920
        %v985 = vrsqrt.pop %v921
        %v986 = vrsqrt.pop %v922
        %v987 = vrsqrt.pop %v923
        %v988 = vrsqrt.pop %v924
        %v989 = vrsqrt.pop %v925
        %v990 = vrsqrt.pop %v926
        %v991 = vrsqrt.pop %v927
        %v992 = vrsqrt.pop %v928
        %v993 = vrsqrt.pop %v929
        %v994 = vrsqrt.pop %v930
        %v995 = vrsqrt.pop %v931
        %v996 = vrsqrt.pop %v932
        %v997 = vrsqrt.pop %v933
        %v998 = vrsqrt.pop %v934
        %v999 = vrsqrt.pop %v935
        %v1000 = vrsqrt.pop %v936
        %v1001 = vrsqrt.pop %v937
        %v1002 = vrsqrt.pop %v938
        %v1003 = vrsqrt.pop %v939
        %v1004 = vrsqrt.pop %v940
        %v1005 = vrsqrt.pop %v941
        %v1006 = vrsqrt.pop %v942
        %v1007 = vrsqrt.pop %v943
        %v1008 = vrsqrt.pop %v944
        %v1009 = vrsqrt.pop %v945
        %v1010 = vrsqrt.pop %v946
        %v1011 = vrsqrt.pop %v947
        %v1012 = vrsqrt.pop %v948
        %v1013 = vrsqrt.pop %v949
        %v1014 = vrsqrt.pop %v950
        %v1015 = vrsqrt.pop %v951
        %v1016 = vrsqrt.pop %v952
        %v1017 = vrsqrt.pop %v953
        %v1018 = vrsqrt.pop %v954
        %v1019 = vrsqrt.pop %v955
        %v1020 = vrsqrt.pop %v956
        %v1021 = vrsqrt.pop %v957
        %v1022 = vrsqrt.pop %v958
        %v1023 = vrsqrt.pop %v959
        %v1024 = vrsqrt.pop %v960
        %v1025 = vrsqrt.pop %v961
        %v1026 = vrsqrt.pop %v962
        %v1027 = vrsqrt.pop %v963
        %v1028 = vrsqrt.pop %v964
        %v1029 = vrsqrt.pop %v965
        %v1030 = vrsqrt.pop %v966
        %v1031 = vrsqrt.pop %v967
        %v1032 = vrsqrt.pop %v968
        %v1033 = vrsqrt.pop %v969
        %v1034 = vmul.f32 %v586, %v970
        %v1035 = vmul.f32 %v587, %v971
        %v1036 = vmul.f32 %v588, %v972
        %v1037 = vmul.f32 %v589, %v973
        %v1038 = vmul.f32 %v590, %v974
        %v1039 = vmul.f32 %v591, %v975
        %v1040 = vmul.f32 %v592, %v976
        %v1041 = vmul.f32 %v593, %v977
        %v1042 = vmul.f32 %v594, %v978
        %v1043 = vmul.f32 %v595, %v979
        %v1044 = vmul.f32 %v596, %v980
        %v1045 = vmul.f32 %v597, %v981
        %v1046 = vmul.f32 %v598, %v982
        %v1047 = vmul.f32 %v599, %v983
        %v1048 = vmul.f32 %v600, %v984
        %v1049 = vmul.f32 %v601, %v985
        %v1050 = vmul.f32 %v602, %v986
        %v1051 = vmul.f32 %v603, %v987
        %v1052 = vmul.f32 %v604, %v988
        %v1053 = vmul.f32 %v605, %v989
        %v1054 = vmul.f32 %v606, %v990
        %v1055 = vmul.f32 %v607, %v991
        %v1056 = vmul.f32 %v608, %v992
        %v1057 = vmul.f32 %v609, %v993
        %v1058 = vmul.f32 %v610, %v994
        %v1059 = vmul.f32 %v611, %v995
        %v1060 = vmul.f32 %v612, %v996
        %v1061 = vmul.f32 %v613, %v997
        %v1062 = vmul.f32 %v614, %v998
        %v1063 = vmul.f32 %v615, %v999
        %v1064 = vmul.f32 %v616, %v1000
        %v1065 = vmul.f32 %v617, %v1001
        %v1066 = vmul.f32 %v618, %v1002
        %v1067 = vmul.f32 %v619, %v1003
        %v1068 = vmul.f32 %v620, %v1004
        %v1069 = vmul.f32 %v621, %v1005
        %v1070 = vmul.f32 %v622, %v1006
        %v1071 = vmul.f32 %v623, %v1007
        %v1072 = vmul.f32 %v624, %v1008
        %v1073 = vmul.f32 %v625, %v1009
        %v1074 = vmul.f32 %v626, %v1010
        %v1075 = vmul.f32 %v627, %v1011
        %v1076 = vmul.f32 %v628, %v1012
        %v1077 = vmul.f32 %v629, %v1013
        %v1078 = vmul.f32 %v630, %v1014
        %v1079 = vmul.f32 %v631, %v1015
        %v1080 = vmul.f32 %v632, %v1016
        %v1081 = vmul.f32 %v633, %v1017
        %v1082 = vmul.f32 %v634, %v1018
        %v1083 = vmul.f32 %v635, %v1019
        %v1084 = vmul.f32 %v636, %v1020
        %v1085 = vmul.f32 %v637, %v1021
        %v1086 = vmul.f32 %v638, %v1022
        %v1087 = vmul.f32 %v639, %v1023
        %v1088 = vmul.f32 %v640, %v1024
        %v1089 = vmul.f32 %v641, %v1025
        %v1090 = vmul.f32 %v642, %v1026
        %v1091 = vmul.f32 %v643, %v1027
        %v1092 = vmul.f32 %v644, %v1028
        %v1093 = vmul.f32 %v645, %v1029
        %v1094 = vmul.f32 %v646, %v1030
        %v1095 = vmul.f32 %v647, %v1031
        %v1096 = vmul.f32 %v648, %v1032
        %v1097 = vmul.f32 %v649, %v1033
        %v1098 = vld [vmem:[%s1] sm:$0x1]
        %v1100 = vlaneseq
        %v1101 = vshrl.u32 %v1100, 7
        %v1102 = vsub.s32 0, %v1101
        %v1103 = vrot.slane %v1098, %v1102
        %v1105 = vmul.f32 %v1034, %v1103
        %v1106 = vmul.f32 %v1035, %v1103
        %v1107 = vmul.f32 %v1036, %v1103
        %v1108 = vmul.f32 %v1037, %v1103
        %v1109 = vmul.f32 %v1038, %v1103
        %v1110 = vmul.f32 %v1039, %v1103
        %v1111 = vmul.f32 %v1040, %v1103
        %v1112 = vmul.f32 %v1041, %v1103
        %v1113 = vmul.f32 %v1042, %v1103
        %v1114 = vmul.f32 %v1043, %v1103
        %v1115 = vmul.f32 %v1044, %v1103
        %v1116 = vmul.f32 %v1045, %v1103
        %v1117 = vmul.f32 %v1046, %v1103
        %v1118 = vmul.f32 %v1047, %v1103
        %v1119 = vmul.f32 %v1048, %v1103
        %v1120 = vmul.f32 %v1049, %v1103
        %v1121 = vmul.f32 %v1050, %v1103
        %v1122 = vmul.f32 %v1051, %v1103
        %v1123 = vmul.f32 %v1052, %v1103
        %v1124 = vmul.f32 %v1053, %v1103
        %v1125 = vmul.f32 %v1054, %v1103
        %v1126 = vmul.f32 %v1055, %v1103
        %v1127 = vmul.f32 %v1056, %v1103
        %v1128 = vmul.f32 %v1057, %v1103
        %v1129 = vmul.f32 %v1058, %v1103
        %v1130 = vmul.f32 %v1059, %v1103
        %v1131 = vmul.f32 %v1060, %v1103
        %v1132 = vmul.f32 %v1061, %v1103
        %v1133 = vmul.f32 %v1062, %v1103
        %v1134 = vmul.f32 %v1063, %v1103
        %v1135 = vmul.f32 %v1064, %v1103
        %v1136 = vmul.f32 %v1065, %v1103
        %v1137 = vmul.f32 %v1066, %v1103
        %v1138 = vmul.f32 %v1067, %v1103
        %v1139 = vmul.f32 %v1068, %v1103
        %v1140 = vmul.f32 %v1069, %v1103
        %v1141 = vmul.f32 %v1070, %v1103
        %v1142 = vmul.f32 %v1071, %v1103
        %v1143 = vmul.f32 %v1072, %v1103
        %v1144 = vmul.f32 %v1073, %v1103
        %v1145 = vmul.f32 %v1074, %v1103
        %v1146 = vmul.f32 %v1075, %v1103
        %v1147 = vmul.f32 %v1076, %v1103
        %v1148 = vmul.f32 %v1077, %v1103
        %v1149 = vmul.f32 %v1078, %v1103
        %v1150 = vmul.f32 %v1079, %v1103
        %v1151 = vmul.f32 %v1080, %v1103
        %v1152 = vmul.f32 %v1081, %v1103
        %v1153 = vmul.f32 %v1082, %v1103
        %v1154 = vmul.f32 %v1083, %v1103
        %v1155 = vmul.f32 %v1084, %v1103
        %v1156 = vmul.f32 %v1085, %v1103
        %v1157 = vmul.f32 %v1086, %v1103
        %v1158 = vmul.f32 %v1087, %v1103
        %v1159 = vmul.f32 %v1088, %v1103
        %v1160 = vmul.f32 %v1089, %v1103
        %v1161 = vmul.f32 %v1090, %v1103
        %v1162 = vmul.f32 %v1091, %v1103
        %v1163 = vmul.f32 %v1092, %v1103
        %v1164 = vmul.f32 %v1093, %v1103
        %v1165 = vmul.f32 %v1094, %v1103
        %v1166 = vmul.f32 %v1095, %v1103
        %v1167 = vmul.f32 %v1096, %v1103
        %v1168 = vmul.f32 %v1097, %v1103
        %v1169 = vld [vmem:[%s2] sm:$0x1]
        %v1171 = vlaneseq
        %v1172 = vshrl.u32 %v1171, 7
        %v1173 = vsub.s32 0, %v1172
        %v1174 = vrot.slane %v1169, %v1173
        %v1176 = vadd.f32 %v1105, %v1174
        %v1177 = vadd.f32 %v1106, %v1174
        %v1178 = vadd.f32 %v1107, %v1174
        %v1179 = vadd.f32 %v1108, %v1174
        %v1180 = vadd.f32 %v1109, %v1174
        %v1181 = vadd.f32 %v1110, %v1174
        %v1182 = vadd.f32 %v1111, %v1174
        %v1183 = vadd.f32 %v1112, %v1174
        %v1184 = vadd.f32 %v1113, %v1174
        %v1185 = vadd.f32 %v1114, %v1174
        %v1186 = vadd.f32 %v1115, %v1174
        %v1187 = vadd.f32 %v1116, %v1174
        %v1188 = vadd.f32 %v1117, %v1174
        %v1189 = vadd.f32 %v1118, %v1174
        %v1190 = vadd.f32 %v1119, %v1174
        %v1191 = vadd.f32 %v1120, %v1174
        %v1192 = vadd.f32 %v1121, %v1174
        %v1193 = vadd.f32 %v1122, %v1174
        %v1194 = vadd.f32 %v1123, %v1174
        %v1195 = vadd.f32 %v1124, %v1174
        %v1196 = vadd.f32 %v1125, %v1174
        %v1197 = vadd.f32 %v1126, %v1174
        %v1198 = vadd.f32 %v1127, %v1174
        %v1199 = vadd.f32 %v1128, %v1174
        %v1200 = vadd.f32 %v1129, %v1174
        %v1201 = vadd.f32 %v1130, %v1174
        %v1202 = vadd.f32 %v1131, %v1174
        %v1203 = vadd.f32 %v1132, %v1174
        %v1204 = vadd.f32 %v1133, %v1174
        %v1205 = vadd.f32 %v1134, %v1174
        %v1206 = vadd.f32 %v1135, %v1174
        %v1207 = vadd.f32 %v1136, %v1174
        %v1208 = vadd.f32 %v1137, %v1174
        %v1209 = vadd.f32 %v1138, %v1174
        %v1210 = vadd.f32 %v1139, %v1174
        %v1211 = vadd.f32 %v1140, %v1174
        %v1212 = vadd.f32 %v1141, %v1174
        %v1213 = vadd.f32 %v1142, %v1174
        %v1214 = vadd.f32 %v1143, %v1174
        %v1215 = vadd.f32 %v1144, %v1174
        %v1216 = vadd.f32 %v1145, %v1174
        %v1217 = vadd.f32 %v1146, %v1174
        %v1218 = vadd.f32 %v1147, %v1174
        %v1219 = vadd.f32 %v1148, %v1174
        %v1220 = vadd.f32 %v1149, %v1174
        %v1221 = vadd.f32 %v1150, %v1174
        %v1222 = vadd.f32 %v1151, %v1174
        %v1223 = vadd.f32 %v1152, %v1174
        %v1224 = vadd.f32 %v1153, %v1174
        %v1225 = vadd.f32 %v1154, %v1174
        %v1226 = vadd.f32 %v1155, %v1174
        %v1227 = vadd.f32 %v1156, %v1174
        %v1228 = vadd.f32 %v1157, %v1174
        %v1229 = vadd.f32 %v1158, %v1174
        %v1230 = vadd.f32 %v1159, %v1174
        %v1231 = vadd.f32 %v1160, %v1174
        %v1232 = vadd.f32 %v1161, %v1174
        %v1233 = vadd.f32 %v1162, %v1174
        %v1234 = vadd.f32 %v1163, %v1174
        %v1235 = vadd.f32 %v1164, %v1174
        %v1236 = vadd.f32 %v1165, %v1174
        %v1237 = vadd.f32 %v1166, %v1174
        %v1238 = vadd.f32 %v1167, %v1174
        %v1239 = vadd.f32 %v1168, %v1174
        %v1240 = vpack.c.bf16 %v1177, %v1176
        %v1241 = vpack.c.bf16 %v1179, %v1178
        %v1242 = vpack.c.bf16 %v1181, %v1180
        %v1243 = vpack.c.bf16 %v1183, %v1182
        %v1244 = vpack.c.bf16 %v1185, %v1184
        %v1245 = vpack.c.bf16 %v1187, %v1186
        %v1246 = vpack.c.bf16 %v1189, %v1188
        %v1247 = vpack.c.bf16 %v1191, %v1190
        %v1248 = vpack.c.bf16 %v1193, %v1192
        %v1249 = vpack.c.bf16 %v1195, %v1194
        %v1250 = vpack.c.bf16 %v1197, %v1196
        %v1251 = vpack.c.bf16 %v1199, %v1198
        %v1252 = vpack.c.bf16 %v1201, %v1200
        %v1253 = vpack.c.bf16 %v1203, %v1202
        %v1254 = vpack.c.bf16 %v1205, %v1204
        %v1255 = vpack.c.bf16 %v1207, %v1206
        %v1256 = vpack.c.bf16 %v1209, %v1208
        %v1257 = vpack.c.bf16 %v1211, %v1210
        %v1258 = vpack.c.bf16 %v1213, %v1212
        %v1259 = vpack.c.bf16 %v1215, %v1214
        %v1260 = vpack.c.bf16 %v1217, %v1216
        %v1261 = vpack.c.bf16 %v1219, %v1218
        %v1262 = vpack.c.bf16 %v1221, %v1220
        %v1263 = vpack.c.bf16 %v1223, %v1222
        %v1264 = vpack.c.bf16 %v1225, %v1224
        %v1265 = vpack.c.bf16 %v1227, %v1226
        %v1266 = vpack.c.bf16 %v1229, %v1228
        %v1267 = vpack.c.bf16 %v1231, %v1230
        %v1268 = vpack.c.bf16 %v1233, %v1232
        %v1269 = vpack.c.bf16 %v1235, %v1234
        %v1270 = vpack.c.bf16 %v1237, %v1236
        %v1271 = vpack.c.bf16 %v1239, %v1238
        %v1272 = vld [vmem:[#allocation5] sm:$0xff]
        %v1273 = vld [vmem:[#allocation5 + $0x8] sm:$0xf]
        %v1274 = vld [vmem:[#allocation5 + $0xc] sm:$0xff]
        %v1275 = vld [vmem:[#allocation5 + $0x14] sm:$0xf]
        %v1276 = vld [vmem:[#allocation5 + $0x18] sm:$0xff]
        %v1277 = vld [vmem:[#allocation5 + $0x20] sm:$0xf]
        %v1278 = vld [vmem:[#allocation5 + $0x24] sm:$0xff]
        %v1279 = vld [vmem:[#allocation5 + $0x2c] sm:$0xf]
        %v1280 = vld [vmem:[#allocation5 + $0x30] sm:$0xff]
        %v1281 = vld [vmem:[#allocation5 + $0x38] sm:$0xf]
        %v1282 = vld [vmem:[#allocation5 + $0x3c] sm:$0xff]
        %v1283 = vld [vmem:[#allocation5 + $0x44] sm:$0xf]
        %v1284 = vld [vmem:[#allocation5 + $0x48] sm:$0xff]
        %v1285 = vld [vmem:[#allocation5 + $0x50] sm:$0xf]
        %v1286 = vld [vmem:[#allocation5 + $0x54] sm:$0xff]
        %v1287 = vld [vmem:[#allocation5 + $0x5c] sm:$0xf]
        %v1288 = vld [vmem:[#allocation5 + $0x60] sm:$0xff]
        %v1289 = vld [vmem:[#allocation5 + $0x68] sm:$0xf]
        %v1290 = vld [vmem:[#allocation5 + $0x6c] sm:$0xff]
        %v1291 = vld [vmem:[#allocation5 + $0x74] sm:$0xf]
        %v1292 = vld [vmem:[#allocation5 + $0x78] sm:$0xff]
        %v1293 = vld [vmem:[#allocation5 + $0x80] sm:$0xf]
        %v1294 = vld [vmem:[#allocation5 + $0x84] sm:$0xff]
        %v1295 = vld [vmem:[#allocation5 + $0x8c] sm:$0xf]
        %v1296 = vld [vmem:[#allocation5 + $0x90] sm:$0xff]
        %v1297 = vld [vmem:[#allocation5 + $0x98] sm:$0xf]
        %v1298 = vld [vmem:[#allocation5 + $0x9c] sm:$0xff]
        %v1299 = vld [vmem:[#allocation5 + $0xa4] sm:$0xf]
        %v1300 = vld [vmem:[#allocation5 + $0xa8] sm:$0xff]
        %v1301 = vld [vmem:[#allocation5 + $0xb0] sm:$0xf]
        %v1302 = vld [vmem:[#allocation5 + $0xb4] sm:$0xff]
        %v1303 = vld [vmem:[#allocation5 + $0xbc] sm:$0xf]
        %v1304 = vld [vmem:[%s4] sm:$0x7]
        %v1306 = vlaneseq
        %v1307 = vshrl.u32 %v1306, 7
        %v1308 = vsub.s32 0, %v1307
        %v1309 = vrot.slane %v1304, %v1308
        %v1310 = vlaneseq
        %v1311 = vshrl.u32 %v1310, 7
        %v1312 = vsub.s32 1, %v1311
        %v1313 = vrot.slane %v1304, %v1312
        %v1314 = vlaneseq
        %v1315 = vshrl.u32 %v1314, 7
        %v1316 = vsub.s32 2, %v1315
        %v1317 = vrot.slane %v1304, %v1316
        %v1353 = vunpack.c.l.b16 %v1272
        %v1354 = vunpack.c.h.b16 %v1272
        %v1355 = vunpack.c.l.b16 %v1273
        %v1356 = vunpack.c.l.b16 %v1274
        %v1357 = vunpack.c.h.b16 %v1274
        %v1358 = vunpack.c.l.b16 %v1275
        %v1359 = vunpack.c.l.b16 %v1276
        %v1360 = vunpack.c.h.b16 %v1276
        %v1361 = vunpack.c.l.b16 %v1277
        %v1362 = vunpack.c.l.b16 %v1278
        %v1363 = vunpack.c.h.b16 %v1278
        %v1364 = vunpack.c.l.b16 %v1279
        %v1365 = vunpack.c.l.b16 %v1280
        %v1366 = vunpack.c.h.b16 %v1280
        %v1367 = vunpack.c.l.b16 %v1281
        %v1368 = vunpack.c.l.b16 %v1282
        %v1369 = vunpack.c.h.b16 %v1282
        %v1370 = vunpack.c.l.b16 %v1283
        %v1371 = vunpack.c.l.b16 %v1284
        %v1372 = vunpack.c.h.b16 %v1284
        %v1373 = vunpack.c.l.b16 %v1285
        %v1374 = vunpack.c.l.b16 %v1286
        %v1375 = vunpack.c.h.b16 %v1286
        %v1376 = vunpack.c.l.b16 %v1287
        %v1377 = vunpack.c.l.b16 %v1288
        %v1378 = vunpack.c.h.b16 %v1288
        %v1379 = vunpack.c.l.b16 %v1289
        %v1380 = vunpack.c.l.b16 %v1290
        %v1381 = vunpack.c.h.b16 %v1290
        %v1382 = vunpack.c.l.b16 %v1291
        %v1383 = vunpack.c.l.b16 %v1292
        %v1384 = vunpack.c.h.b16 %v1292
        %v1385 = vunpack.c.l.b16 %v1293
        %v1386 = vunpack.c.l.b16 %v1294
        %v1387 = vunpack.c.h.b16 %v1294
        %v1388 = vunpack.c.l.b16 %v1295
        %v1389 = vunpack.c.l.b16 %v1296
        %v1390 = vunpack.c.h.b16 %v1296
        %v1391 = vunpack.c.l.b16 %v1297
        %v1392 = vunpack.c.l.b16 %v1298
        %v1393 = vunpack.c.h.b16 %v1298
        %v1394 = vunpack.c.l.b16 %v1299
        %v1395 = vunpack.c.l.b16 %v1300
        %v1396 = vunpack.c.h.b16 %v1300
        %v1397 = vunpack.c.l.b16 %v1301
        %v1398 = vunpack.c.l.b16 %v1302
        %v1399 = vunpack.c.h.b16 %v1302
        %v1400 = vunpack.c.l.b16 %v1303
        %v1401 = vpack.c.b16 %v1356, %v1353
        %v1402 = vpack.c.b16 %v1357, %v1354
        %v1403 = vpack.c.b16 %v1358, %v1355
        %v1404 = vpack.c.b16 %v1362, %v1359
        %v1405 = vpack.c.b16 %v1363, %v1360
        %v1406 = vpack.c.b16 %v1364, %v1361
        %v1407 = vpack.c.b16 %v1368, %v1365
        %v1408 = vpack.c.b16 %v1369, %v1366
        %v1409 = vpack.c.b16 %v1370, %v1367
        %v1410 = vpack.c.b16 %v1374, %v1371
        %v1411 = vpack.c.b16 %v1375, %v1372
        %v1412 = vpack.c.b16 %v1376, %v1373
        %v1413 = vpack.c.b16 %v1380, %v1377
        %v1414 = vpack.c.b16 %v1381, %v1378
        %v1415 = vpack.c.b16 %v1382, %v1379
        %v1416 = vpack.c.b16 %v1386, %v1383
        %v1417 = vpack.c.b16 %v1387, %v1384
        %v1418 = vpack.c.b16 %v1388, %v1385
        %v1419 = vpack.c.b16 %v1392, %v1389
        %v1420 = vpack.c.b16 %v1393, %v1390
        %v1421 = vpack.c.b16 %v1394, %v1391
        %v1422 = vpack.c.b16 %v1398, %v1395
        %v1423 = vpack.c.b16 %v1399, %v1396
        %v1424 = vpack.c.b16 %v1400, %v1397
        %1449 = vmatprep.subr.bf16.mxu0 %v1402
        %1450 = vmatpush1.bf16.msra.mxu0 %v1401
        %1451 = vmatprep.subr.bf16.mxu0 %v1405
        %1452 = vmatpush1.bf16.msra.mxu0 %v1404
        %1453 = vmatprep.subr.bf16.mxu0 %v1408
        %1454 = vmatpush1.bf16.msra.mxu0 %v1407
        %1455 = vmatprep.subr.bf16.mxu0 %v1411
        %1456 = vmatpush1.bf16.msra.mxu0 %v1410
        %1457 = vmatprep.subr.bf16.mxu0 %v1414
        %1458 = vmatpush1.bf16.msra.mxu0 %v1413
        %1459 = vmatprep.subr.bf16.mxu0 %v1417
        %1460 = vmatpush1.bf16.msra.mxu0 %v1416
        %1461 = vmatprep.subr.bf16.mxu0 %v1420
        %1462 = vmatpush1.bf16.msra.mxu0 %v1419
        %1463 = vmatprep.subr.bf16.mxu0 %v1423
        %1464 = vmatpush1.bf16.msra.mxu0 %v1422
        %1465 = vmatprep.subr.bf16.mxu0 0
        %1466 = vmatpush1.bf16.msra.mxu0 0
        %1467 = vmatprep.subr.bf16.mxu0 0
        %1468 = vmatpush1.bf16.msra.mxu0 0
        %1469 = vmatprep.subr.bf16.mxu0 0
        %1470 = vmatpush1.bf16.msra.mxu0 0
        %1471 = vmatprep.subr.bf16.mxu0 0
        %1472 = vmatpush1.bf16.msra.mxu0 0
        %1473 = vmatprep.subr.bf16.mxu0 0
        %1474 = vmatpush1.bf16.msra.mxu0 0
        %1475 = vmatprep.subr.bf16.mxu0 0
        %1476 = vmatpush1.bf16.msra.mxu0 0
        %1477 = vmatprep.subr.bf16.mxu0 0
        %1478 = vmatpush1.bf16.msra.mxu0 0
        %1479 = vmatprep.subr.bf16.mxu0 0
        %1480 = vmatpush1.bf16.msra.mxu0 0
        %1481 = vmatprep.mubr.bf16.mxu0 0
        %1482 = vmatmul.mubr.bf16.gmra.mrb[0].mxu0 %v1240
        %v1483 = vpop.f32.mrb[0].mxu0
        %v1484 = vadd.f32 %v1309, %v1483
        %v1485 = vpop.f32.mrb[0].mxu0
        %v1486 = vadd.f32 %v1313, %v1485
        %v1487 = vpop.f32.mrb[0].mxu0
        %v1488 = vadd.f32 %v1309, %v1487
        %v1489 = vpop.f32.mrb[0].mxu0
        %v1490 = vadd.f32 %v1313, %v1489
        %1491 = vmatprep.mubr.bf16.mxu0 0
        %1492 = vmatmul.mubr.bf16.gmra.mrb[0].mxu0 %v1241
        %v1493 = vpop.f32.mrb[0].mxu0
        %v1494 = vadd.f32 %v1309, %v1493
        %v1495 = vpop.f32.mrb[0].mxu0
        %v1496 = vadd.f32 %v1313, %v1495
        %v1497 = vpop.f32.mrb[0].mxu0
        %v1498 = vadd.f32 %v1309, %v1497
        %v1499 = vpop.f32.mrb[0].mxu0
        %v1500 = vadd.f32 %v1313, %v1499
        %1501 = vmatprep.mubr.bf16.mxu0 0
        %1502 = vmatmul.mubr.bf16.gmra.mrb[0].mxu0 %v1242
        %v1503 = vpop.f32.mrb[0].mxu0
        %v1504 = vadd.f32 %v1309, %v1503
        %v1505 = vpop.f32.mrb[0].mxu0
        %v1506 = vadd.f32 %v1313, %v1505
        %v1507 = vpop.f32.mrb[0].mxu0
        %v1508 = vadd.f32 %v1309, %v1507
        %v1509 = vpop.f32.mrb[0].mxu0
        %v1510 = vadd.f32 %v1313, %v1509
        %1511 = vmatprep.mubr.bf16.mxu0 0
        %1512 = vmatmul.mubr.bf16.gmra.mrb[0].mxu0 %v1243
        %v1513 = vpop.f32.mrb[0].mxu0
        %v1514 = vadd.f32 %v1309, %v1513
        %v1515 = vpop.f32.mrb[0].mxu0
        %v1516 = vadd.f32 %v1313, %v1515
        %v1517 = vpop.f32.mrb[0].mxu0
        %v1518 = vadd.f32 %v1309, %v1517
        %v1519 = vpop.f32.mrb[0].mxu0
        %v1520 = vadd.f32 %v1313, %v1519
        %1521 = vmatprep.mubr.bf16.mxu0 0
        %1522 = vmatmul.mubr.bf16.gmra.mrb[0].mxu0 %v1244
        %v1523 = vpop.f32.mrb[0].mxu0
        %v1524 = vadd.f32 %v1309, %v1523
        %v1525 = vpop.f32.mrb[0].mxu0
        %v1526 = vadd.f32 %v1313, %v1525
        %v1527 = vpop.f32.mrb[0].mxu0
        %v1528 = vadd.f32 %v1309, %v1527
        %v1529 = vpop.f32.mrb[0].mxu0
        %v1530 = vadd.f32 %v1313, %v1529
        %1531 = vmatprep.mubr.bf16.mxu0 0
        %1532 = vmatmul.mubr.bf16.gmra.mrb[0].mxu0 %v1245
        %v1533 = vpop.f32.mrb[0].mxu0
        %v1534 = vadd.f32 %v1309, %v1533
        %v1535 = vpop.f32.mrb[0].mxu0
        %v1536 = vadd.f32 %v1313, %v1535
        %v1537 = vpop.f32.mrb[0].mxu0
        %v1538 = vadd.f32 %v1309, %v1537
        %v1539 = vpop.f32.mrb[0].mxu0
        %v1540 = vadd.f32 %v1313, %v1539
        %1541 = vmatprep.mubr.bf16.mxu0 0
        %1542 = vmatmul.mubr.bf16.gmra.mrb[0].mxu0 %v1246
        %v1543 = vpop.f32.mrb[0].mxu0
        %v1544 = vadd.f32 %v1309, %v1543
        %v1545 = vpop.f32.mrb[0].mxu0
        %v1546 = vadd.f32 %v1313, %v1545
        %v1547 = vpop.f32.mrb[0].mxu0
        %v1548 = vadd.f32 %v1309, %v1547
        %v1549 = vpop.f32.mrb[0].mxu0
        %v1550 = vadd.f32 %v1313, %v1549
        %1551 = vmatprep.mubr.bf16.mxu0 0
        %1552 = vmatmul.mubr.bf16.gmra.mrb[0].mxu0 %v1247
        %v1553 = vpop.f32.mrb[0].mxu0
        %v1554 = vadd.f32 %v1309, %v1553
        %v1555 = vpop.f32.mrb[0].mxu0
        %v1556 = vadd.f32 %v1313, %v1555
        %v1557 = vpop.f32.mrb[0].mxu0
        %v1558 = vadd.f32 %v1309, %v1557
        %v1559 = vpop.f32.mrb[0].mxu0
        %v1560 = vadd.f32 %v1313, %v1559
        %1561 = vmatprep.mubr.bf16.mxu0 0
        %1562 = vmatmul.mubr.bf16.gmra.mrb[0].mxu0 %v1248
        %v1563 = vpop.f32.mrb[0].mxu0
        %v1564 = vadd.f32 %v1309, %v1563
        %v1565 = vpop.f32.mrb[0].mxu0
        %v1566 = vadd.f32 %v1313, %v1565
        %v1567 = vpop.f32.mrb[0].mxu0
        %v1568 = vadd.f32 %v1309, %v1567
        %v1569 = vpop.f32.mrb[0].mxu0
        %v1570 = vadd.f32 %v1313, %v1569
        %1571 = vmatprep.mubr.bf16.mxu0 0
        %1572 = vmatmul.mubr.bf16.gmra.mrb[0].mxu0 %v1249
        %v1573 = vpop.f32.mrb[0].mxu0
        %v1574 = vadd.f32 %v1309, %v1573
        %v1575 = vpop.f32.mrb[0].mxu0
        %v1576 = vadd.f32 %v1313, %v1575
        %v1577 = vpop.f32.mrb[0].mxu0
        %v1578 = vadd.f32 %v1309, %v1577
        %v1579 = vpop.f32.mrb[0].mxu0
        %v1580 = vadd.f32 %v1313, %v1579
        %1581 = vmatprep.mubr.bf16.mxu0 0
        %1582 = vmatmul.mubr.bf16.gmra.mrb[0].mxu0 %v1250
        %v1583 = vpop.f32.mrb[0].mxu0
        %v1584 = vadd.f32 %v1309, %v1583
        %v1585 = vpop.f32.mrb[0].mxu0
        %v1586 = vadd.f32 %v1313, %v1585
        %v1587 = vpop.f32.mrb[0].mxu0
        %v1588 = vadd.f32 %v1309, %v1587
        %v1589 = vpop.f32.mrb[0].mxu0
        %v1590 = vadd.f32 %v1313, %v1589
        %1591 = vmatprep.mubr.bf16.mxu0 0
        %1592 = vmatmul.mubr.bf16.gmra.mrb[0].mxu0 %v1251
        %v1593 = vpop.f32.mrb[0].mxu0
        %v1594 = vadd.f32 %v1309, %v1593
        %v1595 = vpop.f32.mrb[0].mxu0
        %v1596 = vadd.f32 %v1313, %v1595
        %v1597 = vpop.f32.mrb[0].mxu0
        %v1598 = vadd.f32 %v1309, %v1597
        %v1599 = vpop.f32.mrb[0].mxu0
        %v1600 = vadd.f32 %v1313, %v1599
        %1601 = vmatprep.mubr.bf16.mxu0 0
        %1602 = vmatmul.mubr.bf16.gmra.mrb[0].mxu0 %v1252
        %v1603 = vpop.f32.mrb[0].mxu0
        %v1604 = vadd.f32 %v1309, %v1603
        %v1605 = vpop.f32.mrb[0].mxu0
        %v1606 = vadd.f32 %v1313, %v1605
        %v1607 = vpop.f32.mrb[0].mxu0
        %v1608 = vadd.f32 %v1309, %v1607
        %v1609 = vpop.f32.mrb[0].mxu0
        %v1610 = vadd.f32 %v1313, %v1609
        %1611 = vmatprep.mubr.bf16.mxu0 0
        %1612 = vmatmul.mubr.bf16.gmra.mrb[0].mxu0 %v1253
        %v1613 = vpop.f32.mrb[0].mxu0
        %v1614 = vadd.f32 %v1309, %v1613
        %v1615 = vpop.f32.mrb[0].mxu0
        %v1616 = vadd.f32 %v1313, %v1615
        %v1617 = vpop.f32.mrb[0].mxu0
        %v1618 = vadd.f32 %v1309, %v1617
        %v1619 = vpop.f32.mrb[0].mxu0
        %v1620 = vadd.f32 %v1313, %v1619
        %1621 = vmatprep.mubr.bf16.mxu0 0
        %1622 = vmatmul.mubr.bf16.gmra.mrb[0].mxu0 %v1254
        %v1623 = vpop.f32.mrb[0].mxu0
        %v1624 = vadd.f32 %v1309, %v1623
        %v1625 = vpop.f32.mrb[0].mxu0
        %v1626 = vadd.f32 %v1313, %v1625
        %v1627 = vpop.f32.mrb[0].mxu0
        %v1628 = vadd.f32 %v1309, %v1627
        %v1629 = vpop.f32.mrb[0].mxu0
        %v1630 = vadd.f32 %v1313, %v1629
        %1631 = vmatprep.mubr.bf16.mxu0 0
        %1632 = vmatmul.mubr.bf16.gmra.mrb[0].mxu0 %v1255
        %v1633 = vpop.f32.mrb[0].mxu0
        %v1634 = vadd.f32 %v1309, %v1633
        %v1635 = vpop.f32.mrb[0].mxu0
        %v1636 = vadd.f32 %v1313, %v1635
        %v1637 = vpop.f32.mrb[0].mxu0
        %v1638 = vadd.f32 %v1309, %v1637
        %v1639 = vpop.f32.mrb[0].mxu0
        %v1640 = vadd.f32 %v1313, %v1639
        %1641 = vmatprep.mubr.bf16.mxu0 0
        %1642 = vmatmul.mubr.bf16.gmra.mrb[0].mxu0 %v1256
        %v1643 = vpop.f32.mrb[0].mxu0
        %v1644 = vadd.f32 %v1309, %v1643
        %v1645 = vpop.f32.mrb[0].mxu0
        %v1646 = vadd.f32 %v1313, %v1645
        %v1647 = vpop.f32.mrb[0].mxu0
        %v1648 = vadd.f32 %v1309, %v1647
        %v1649 = vpop.f32.mrb[0].mxu0
        %v1650 = vadd.f32 %v1313, %v1649
        %1651 = vmatprep.mubr.bf16.mxu0 0
        %1652 = vmatmul.mubr.bf16.gmra.mrb[0].mxu0 %v1257
        %v1653 = vpop.f32.mrb[0].mxu0
        %v1654 = vadd.f32 %v1309, %v1653
        %v1655 = vpop.f32.mrb[0].mxu0
        %v1656 = vadd.f32 %v1313, %v1655
        %v1657 = vpop.f32.mrb[0].mxu0
        %v1658 = vadd.f32 %v1309, %v1657
        %v1659 = vpop.f32.mrb[0].mxu0
        %v1660 = vadd.f32 %v1313, %v1659
        %1661 = vmatprep.mubr.bf16.mxu0 0
        %1662 = vmatmul.mubr.bf16.gmra.mrb[0].mxu0 %v1258
        %v1663 = vpop.f32.mrb[0].mxu0
        %v1664 = vadd.f32 %v1309, %v1663
        %v1665 = vpop.f32.mrb[0].mxu0
        %v1666 = vadd.f32 %v1313, %v1665
        %v1667 = vpop.f32.mrb[0].mxu0
        %v1668 = vadd.f32 %v1309, %v1667
        %v1669 = vpop.f32.mrb[0].mxu0
        %v1670 = vadd.f32 %v1313, %v1669
        %1671 = vmatprep.mubr.bf16.mxu0 0
        %1672 = vmatmul.mubr.bf16.gmra.mrb[0].mxu0 %v1259
        %v1673 = vpop.f32.mrb[0].mxu0
        %v1674 = vadd.f32 %v1309, %v1673
        %v1675 = vpop.f32.mrb[0].mxu0
        %v1676 = vadd.f32 %v1313, %v1675
        %v1677 = vpop.f32.mrb[0].mxu0
        %v1678 = vadd.f32 %v1309, %v1677
        %v1679 = vpop.f32.mrb[0].mxu0
        %v1680 = vadd.f32 %v1313, %v1679
        %1681 = vmatprep.mubr.bf16.mxu0 0
        %1682 = vmatmul.mubr.bf16.gmra.mrb[0].mxu0 %v1260
        %v1683 = vpop.f32.mrb[0].mxu0
        %v1684 = vadd.f32 %v1309, %v1683
        %v1685 = vpop.f32.mrb[0].mxu0
        %v1686 = vadd.f32 %v1313, %v1685
        %v1687 = vpop.f32.mrb[0].mxu0
        %v1688 = vadd.f32 %v1309, %v1687
        %v1689 = vpop.f32.mrb[0].mxu0
        %v1690 = vadd.f32 %v1313, %v1689
        %1691 = vmatprep.mubr.bf16.mxu0 0
        %1692 = vmatmul.mubr.bf16.gmra.mrb[0].mxu0 %v1261
        %v1693 = vpop.f32.mrb[0].mxu0
        %v1694 = vadd.f32 %v1309, %v1693
        %v1695 = vpop.f32.mrb[0].mxu0
        %v1696 = vadd.f32 %v1313, %v1695
        %v1697 = vpop.f32.mrb[0].mxu0
        %v1698 = vadd.f32 %v1309, %v1697
        %v1699 = vpop.f32.mrb[0].mxu0
        %v1700 = vadd.f32 %v1313, %v1699
        %1701 = vmatprep.mubr.bf16.mxu0 0
        %1702 = vmatmul.mubr.bf16.gmra.mrb[0].mxu0 %v1262
        %v1703 = vpop.f32.mrb[0].mxu0
        %v1704 = vadd.f32 %v1309, %v1703
        %v1705 = vpop.f32.mrb[0].mxu0
        %v1706 = vadd.f32 %v1313, %v1705
        %v1707 = vpop.f32.mrb[0].mxu0
        %v1708 = vadd.f32 %v1309, %v1707
        %v1709 = vpop.f32.mrb[0].mxu0
        %v1710 = vadd.f32 %v1313, %v1709
        %1711 = vmatprep.mubr.bf16.mxu0 0
        %1712 = vmatmul.mubr.bf16.gmra.mrb[0].mxu0 %v1263
        %v1713 = vpop.f32.mrb[0].mxu0
        %v1714 = vadd.f32 %v1309, %v1713
        %v1715 = vpop.f32.mrb[0].mxu0
        %v1716 = vadd.f32 %v1313, %v1715
        %v1717 = vpop.f32.mrb[0].mxu0
        %v1718 = vadd.f32 %v1309, %v1717
        %v1719 = vpop.f32.mrb[0].mxu0
        %v1720 = vadd.f32 %v1313, %v1719
        %1721 = vmatprep.mubr.bf16.mxu0 0
        %1722 = vmatmul.mubr.bf16.gmra.mrb[0].mxu0 %v1264
        %v1723 = vpop.f32.mrb[0].mxu0
        %v1724 = vadd.f32 %v1309, %v1723
        %v1725 = vpop.f32.mrb[0].mxu0
        %v1726 = vadd.f32 %v1313, %v1725
        %v1727 = vpop.f32.mrb[0].mxu0
        %v1728 = vadd.f32 %v1309, %v1727
        %v1729 = vpop.f32.mrb[0].mxu0
        %v1730 = vadd.f32 %v1313, %v1729
        %1731 = vmatprep.mubr.bf16.mxu0 0
        %1732 = vmatmul.mubr.bf16.gmra.mrb[0].mxu0 %v1265
        %v1733 = vpop.f32.mrb[0].mxu0
        %v1734 = vadd.f32 %v1309, %v1733
        %v1735 = vpop.f32.mrb[0].mxu0
        %v1736 = vadd.f32 %v1313, %v1735
        %v1737 = vpop.f32.mrb[0].mxu0
        %v1738 = vadd.f32 %v1309, %v1737
        %v1739 = vpop.f32.mrb[0].mxu0
        %v1740 = vadd.f32 %v1313, %v1739
        %1741 = vmatprep.mubr.bf16.mxu0 0
        %1742 = vmatmul.mubr.bf16.gmra.mrb[0].mxu0 %v1266
        %v1743 = vpop.f32.mrb[0].mxu0
        %v1744 = vadd.f32 %v1309, %v1743
        %v1745 = vpop.f32.mrb[0].mxu0
        %v1746 = vadd.f32 %v1313, %v1745
        %v1747 = vpop.f32.mrb[0].mxu0
        %v1748 = vadd.f32 %v1309, %v1747
        %v1749 = vpop.f32.mrb[0].mxu0
        %v1750 = vadd.f32 %v1313, %v1749
        %1751 = vmatprep.mubr.bf16.mxu0 0
        %1752 = vmatmul.mubr.bf16.gmra.mrb[0].mxu0 %v1267
        %v1753 = vpop.f32.mrb[0].mxu0
        %v1754 = vadd.f32 %v1309, %v1753
        %v1755 = vpop.f32.mrb[0].mxu0
        %v1756 = vadd.f32 %v1313, %v1755
        %v1757 = vpop.f32.mrb[0].mxu0
        %v1758 = vadd.f32 %v1309, %v1757
        %v1759 = vpop.f32.mrb[0].mxu0
        %v1760 = vadd.f32 %v1313, %v1759
        %1761 = vmatprep.mubr.bf16.mxu0 0
        %1762 = vmatmul.mubr.bf16.gmra.mrb[0].mxu0 %v1268
        %v1763 = vpop.f32.mrb[0].mxu0
        %v1764 = vadd.f32 %v1309, %v1763
        %v1765 = vpop.f32.mrb[0].mxu0
        %v1766 = vadd.f32 %v1313, %v1765
        %v1767 = vpop.f32.mrb[0].mxu0
        %v1768 = vadd.f32 %v1309, %v1767
        %v1769 = vpop.f32.mrb[0].mxu0
        %v1770 = vadd.f32 %v1313, %v1769
        %1771 = vmatprep.mubr.bf16.mxu0 0
        %1772 = vmatmul.mubr.bf16.gmra.mrb[0].mxu0 %v1269
        %v1773 = vpop.f32.mrb[0].mxu0
        %v1774 = vadd.f32 %v1309, %v1773
        %v1775 = vpop.f32.mrb[0].mxu0
        %v1776 = vadd.f32 %v1313, %v1775
        %v1777 = vpop.f32.mrb[0].mxu0
        %v1778 = vadd.f32 %v1309, %v1777
        %v1779 = vpop.f32.mrb[0].mxu0
        %v1780 = vadd.f32 %v1313, %v1779
        %1781 = vmatprep.mubr.bf16.mxu0 0
        %1782 = vmatmul.mubr.bf16.gmra.mrb[0].mxu0 %v1270
        %v1783 = vpop.f32.mrb[0].mxu0
        %v1784 = vadd.f32 %v1309, %v1783
        %v1785 = vpop.f32.mrb[0].mxu0
        %v1786 = vadd.f32 %v1313, %v1785
        %v1787 = vpop.f32.mrb[0].mxu0
        %v1788 = vadd.f32 %v1309, %v1787
        %v1789 = vpop.f32.mrb[0].mxu0
        %v1790 = vadd.f32 %v1313, %v1789
        %1791 = vmatprep.mubr.bf16.mxu0 0
        %1792 = vmatmul.mubr.bf16.gmra.mrb[0].mxu0 %v1271
        %v1793 = vpop.f32.mrb[0].mxu0
        %v1794 = vadd.f32 %v1309, %v1793
        %v1795 = vpop.f32.mrb[0].mxu0
        %v1796 = vadd.f32 %v1313, %v1795
        %v1797 = vpop.f32.mrb[0].mxu0
        %v1798 = vadd.f32 %v1309, %v1797
        %v1799 = vpop.f32.mrb[0].mxu0
        %v1800 = vadd.f32 %v1313, %v1799
        %1801 = vdwg.mxu0
        %1802 = vmatprep.subr.bf16.mxu0 0
        %1803 = vmatpush1.bf16.msra.mxu0 %v1403
        %1804 = vmatprep.subr.bf16.mxu0 0
        %1805 = vmatpush1.bf16.msra.mxu0 %v1406
        %1806 = vmatprep.subr.bf16.mxu0 0
        %1807 = vmatpush1.bf16.msra.mxu0 %v1409
        %1808 = vmatprep.subr.bf16.mxu0 0
        %1809 = vmatpush1.bf16.msra.mxu0 %v1412
        %1810 = vmatprep.subr.bf16.mxu0 0
        %1811 = vmatpush1.bf16.msra.mxu0 %v1415
        %1812 = vmatprep.subr.bf16.mxu0 0
        %1813 = vmatpush1.bf16.msra.mxu0 %v1418
        %1814 = vmatprep.subr.bf16.mxu0 0
        %1815 = vmatpush1.bf16.msra.mxu0 %v1421
        %1816 = vmatprep.subr.bf16.mxu0 0
        %1817 = vmatpush1.bf16.msra.mxu0 %v1424
        %1818 = vmatprep.subr.bf16.mxu0 0
        %1819 = vmatpush1.bf16.msra.mxu0 0
        %1820 = vmatprep.subr.bf16.mxu0 0
        %1821 = vmatpush1.bf16.msra.mxu0 0
        %1822 = vmatprep.subr.bf16.mxu0 0
        %1823 = vmatpush1.bf16.msra.mxu0 0
        %1824 = vmatprep.subr.bf16.mxu0 0
        %1825 = vmatpush1.bf16.msra.mxu0 0
        %1826 = vmatprep.subr.bf16.mxu0 0
        %1827 = vmatpush1.bf16.msra.mxu0 0
        %1828 = vmatprep.subr.bf16.mxu0 0
        %1829 = vmatpush1.bf16.msra.mxu0 0
        %1830 = vmatprep.subr.bf16.mxu0 0
        %1831 = vmatpush1.bf16.msra.mxu0 0
        %1832 = vmatprep.subr.bf16.mxu0 0
        %1833 = vmatpush1.bf16.msra.mxu0 0
        %1834 = vmatprep.mubr.bf16.mxu0 0
        %1835 = vmatmul.mubr.bf16.gmra.mrb[0].mxu0 %v1240
        %v1836 = vpop.f32.mrb[0].mxu0
        %v1837 = vadd.f32 %v1317, %v1836
        %v1838 = vpop.f32.mrb[0].mxu0
        %v1839 = vpop.f32.mrb[0].mxu0
        %v1840 = vadd.f32 %v1317, %v1839
        %v1841 = vpop.f32.mrb[0].mxu0
        %1842 = vmatprep.mubr.bf16.mxu0 0
        %1843 = vmatmul.mubr.bf16.gmra.mrb[0].mxu0 %v1241
        %v1844 = vpop.f32.mrb[0].mxu0
        %v1845 = vadd.f32 %v1317, %v1844
        %v1846 = vpop.f32.mrb[0].mxu0
        %v1847 = vpop.f32.mrb[0].mxu0
        %v1848 = vadd.f32 %v1317, %v1847
        %v1849 = vpop.f32.mrb[0].mxu0
        %1850 = vmatprep.mubr.bf16.mxu0 0
        %1851 = vmatmul.mubr.bf16.gmra.mrb[0].mxu0 %v1242
        %v1852 = vpop.f32.mrb[0].mxu0
        %v1853 = vadd.f32 %v1317, %v1852
        %v1854 = vpop.f32.mrb[0].mxu0
        %v1855 = vpop.f32.mrb[0].mxu0
        %v1856 = vadd.f32 %v1317, %v1855
        %v1857 = vpop.f32.mrb[0].mxu0
        %1858 = vmatprep.mubr.bf16.mxu0 0
        %1859 = vmatmul.mubr.bf16.gmra.mrb[0].mxu0 %v1243
        %v1860 = vpop.f32.mrb[0].mxu0
        %v1861 = vadd.f32 %v1317, %v1860
        %v1862 = vpop.f32.mrb[0].mxu0
        %v1863 = vpop.f32.mrb[0].mxu0
        %v1864 = vadd.f32 %v1317, %v1863
        %v1865 = vpop.f32.mrb[0].mxu0
        %1866 = vmatprep.mubr.bf16.mxu0 0
        %1867 = vmatmul.mubr.bf16.gmra.mrb[0].mxu0 %v1244
        %v1868 = vpop.f32.mrb[0].mxu0
        %v1869 = vadd.f32 %v1317, %v1868
        %v1870 = vpop.f32.mrb[0].mxu0
        %v1871 = vpop.f32.mrb[0].mxu0
        %v1872 = vadd.f32 %v1317, %v1871
        %v1873 = vpop.f32.mrb[0].mxu0
        %1874 = vmatprep.mubr.bf16.mxu0 0
        %1875 = vmatmul.mubr.bf16.gmra.mrb[0].mxu0 %v1245
        %v1876 = vpop.f32.mrb[0].mxu0
        %v1877 = vadd.f32 %v1317, %v1876
        %v1878 = vpop.f32.mrb[0].mxu0
        %v1879 = vpop.f32.mrb[0].mxu0
        %v1880 = vadd.f32 %v1317, %v1879
        %v1881 = vpop.f32.mrb[0].mxu0
        %1882 = vmatprep.mubr.bf16.mxu0 0
        %1883 = vmatmul.mubr.bf16.gmra.mrb[0].mxu0 %v1246
        %v1884 = vpop.f32.mrb[0].mxu0
        %v1885 = vadd.f32 %v1317, %v1884
        %v1886 = vpop.f32.mrb[0].mxu0
        %v1887 = vpop.f32.mrb[0].mxu0
        %v1888 = vadd.f32 %v1317, %v1887
        %v1889 = vpop.f32.mrb[0].mxu0
        %1890 = vmatprep.mubr.bf16.mxu0 0
        %1891 = vmatmul.mubr.bf16.gmra.mrb[0].mxu0 %v1247
        %v1892 = vpop.f32.mrb[0].mxu0
        %v1893 = vadd.f32 %v1317, %v1892
        %v1894 = vpop.f32.mrb[0].mxu0
        %v1895 = vpop.f32.mrb[0].mxu0
        %v1896 = vadd.f32 %v1317, %v1895
        %v1897 = vpop.f32.mrb[0].mxu0
        %1898 = vmatprep.mubr.bf16.mxu0 0
        %1899 = vmatmul.mubr.bf16.gmra.mrb[0].mxu0 %v1248
        %v1900 = vpop.f32.mrb[0].mxu0
        %v1901 = vadd.f32 %v1317, %v1900
        %v1902 = vpop.f32.mrb[0].mxu0
        %v1903 = vpop.f32.mrb[0].mxu0
        %v1904 = vadd.f32 %v1317, %v1903
        %v1905 = vpop.f32.mrb[0].mxu0
        %1906 = vmatprep.mubr.bf16.mxu0 0
        %1907 = vmatmul.mubr.bf16.gmra.mrb[0].mxu0 %v1249
        %v1908 = vpop.f32.mrb[0].mxu0
        %v1909 = vadd.f32 %v1317, %v1908
        %v1910 = vpop.f32.mrb[0].mxu0
        %v1911 = vpop.f32.mrb[0].mxu0
        %v1912 = vadd.f32 %v1317, %v1911
        %v1913 = vpop.f32.mrb[0].mxu0
        %1914 = vmatprep.mubr.bf16.mxu0 0
        %1915 = vmatmul.mubr.bf16.gmra.mrb[0].mxu0 %v1250
        %v1916 = vpop.f32.mrb[0].mxu0
        %v1917 = vadd.f32 %v1317, %v1916
        %v1918 = vpop.f32.mrb[0].mxu0
        %v1919 = vpop.f32.mrb[0].mxu0
        %v1920 = vadd.f32 %v1317, %v1919
        %v1921 = vpop.f32.mrb[0].mxu0
        %1922 = vmatprep.mubr.bf16.mxu0 0
        %1923 = vmatmul.mubr.bf16.gmra.mrb[0].mxu0 %v1251
        %v1924 = vpop.f32.mrb[0].mxu0
        %v1925 = vadd.f32 %v1317, %v1924
        %v1926 = vpop.f32.mrb[0].mxu0
        %v1927 = vpop.f32.mrb[0].mxu0
        %v1928 = vadd.f32 %v1317, %v1927
        %v1929 = vpop.f32.mrb[0].mxu0
        %1930 = vmatprep.mubr.bf16.mxu0 0
        %1931 = vmatmul.mubr.bf16.gmra.mrb[0].mxu0 %v1252
        %v1932 = vpop.f32.mrb[0].mxu0
        %v1933 = vadd.f32 %v1317, %v1932
        %v1934 = vpop.f32.mrb[0].mxu0
        %v1935 = vpop.f32.mrb[0].mxu0
        %v1936 = vadd.f32 %v1317, %v1935
        %v1937 = vpop.f32.mrb[0].mxu0
        %1938 = vmatprep.mubr.bf16.mxu0 0
        %1939 = vmatmul.mubr.bf16.gmra.mrb[0].mxu0 %v1253
        %v1940 = vpop.f32.mrb[0].mxu0
        %v1941 = vadd.f32 %v1317, %v1940
        %v1942 = vpop.f32.mrb[0].mxu0
        %v1943 = vpop.f32.mrb[0].mxu0
        %v1944 = vadd.f32 %v1317, %v1943
        %v1945 = vpop.f32.mrb[0].mxu0
        %1946 = vmatprep.mubr.bf16.mxu0 0
        %1947 = vmatmul.mubr.bf16.gmra.mrb[0].mxu0 %v1254
        %v1948 = vpop.f32.mrb[0].mxu0
        %v1949 = vadd.f32 %v1317, %v1948
        %v1950 = vpop.f32.mrb[0].mxu0
        %v1951 = vpop.f32.mrb[0].mxu0
        %v1952 = vadd.f32 %v1317, %v1951
        %v1953 = vpop.f32.mrb[0].mxu0
        %1954 = vmatprep.mubr.bf16.mxu0 0
        %1955 = vmatmul.mubr.bf16.gmra.mrb[0].mxu0 %v1255
        %v1956 = vpop.f32.mrb[0].mxu0
        %v1957 = vadd.f32 %v1317, %v1956
        %v1958 = vpop.f32.mrb[0].mxu0
        %v1959 = vpop.f32.mrb[0].mxu0
        %v1960 = vadd.f32 %v1317, %v1959
        %v1961 = vpop.f32.mrb[0].mxu0
        %1962 = vmatprep.mubr.bf16.mxu0 0
        %1963 = vmatmul.mubr.bf16.gmra.mrb[0].mxu0 %v1256
        %v1964 = vpop.f32.mrb[0].mxu0
        %v1965 = vadd.f32 %v1317, %v1964
        %v1966 = vpop.f32.mrb[0].mxu0
        %v1967 = vpop.f32.mrb[0].mxu0
        %v1968 = vadd.f32 %v1317, %v1967
        %v1969 = vpop.f32.mrb[0].mxu0
        %1970 = vmatprep.mubr.bf16.mxu0 0
        %1971 = vmatmul.mubr.bf16.gmra.mrb[0].mxu0 %v1257
        %v1972 = vpop.f32.mrb[0].mxu0
        %v1973 = vadd.f32 %v1317, %v1972
        %v1974 = vpop.f32.mrb[0].mxu0
        %v1975 = vpop.f32.mrb[0].mxu0
        %v1976 = vadd.f32 %v1317, %v1975
        %v1977 = vpop.f32.mrb[0].mxu0
        %1978 = vmatprep.mubr.bf16.mxu0 0
        %1979 = vmatmul.mubr.bf16.gmra.mrb[0].mxu0 %v1258
        %v1980 = vpop.f32.mrb[0].mxu0
        %v1981 = vadd.f32 %v1317, %v1980
        %v1982 = vpop.f32.mrb[0].mxu0
        %v1983 = vpop.f32.mrb[0].mxu0
        %v1984 = vadd.f32 %v1317, %v1983
        %v1985 = vpop.f32.mrb[0].mxu0
        %1986 = vmatprep.mubr.bf16.mxu0 0
        %1987 = vmatmul.mubr.bf16.gmra.mrb[0].mxu0 %v1259
        %v1988 = vpop.f32.mrb[0].mxu0
        %v1989 = vadd.f32 %v1317, %v1988
        %v1990 = vpop.f32.mrb[0].mxu0
        %v1991 = vpop.f32.mrb[0].mxu0
        %v1992 = vadd.f32 %v1317, %v1991
        %v1993 = vpop.f32.mrb[0].mxu0
        %1994 = vmatprep.mubr.bf16.mxu0 0
        %1995 = vmatmul.mubr.bf16.gmra.mrb[0].mxu0 %v1260
        %v1996 = vpop.f32.mrb[0].mxu0
        %v1997 = vadd.f32 %v1317, %v1996
        %v1998 = vpop.f32.mrb[0].mxu0
        %v1999 = vpop.f32.mrb[0].mxu0
        %v2000 = vadd.f32 %v1317, %v1999
        %v2001 = vpop.f32.mrb[0].mxu0
        %2002 = vmatprep.mubr.bf16.mxu0 0
        %2003 = vmatmul.mubr.bf16.gmra.mrb[0].mxu0 %v1261
        %v2004 = vpop.f32.mrb[0].mxu0
        %v2005 = vadd.f32 %v1317, %v2004
        %v2006 = vpop.f32.mrb[0].mxu0
        %v2007 = vpop.f32.mrb[0].mxu0
        %v2008 = vadd.f32 %v1317, %v2007
        %v2009 = vpop.f32.mrb[0].mxu0
        %2010 = vmatprep.mubr.bf16.mxu0 0
        %2011 = vmatmul.mubr.bf16.gmra.mrb[0].mxu0 %v1262
        %v2012 = vpop.f32.mrb[0].mxu0
        %v2013 = vadd.f32 %v1317, %v2012
        %v2014 = vpop.f32.mrb[0].mxu0
        %v2015 = vpop.f32.mrb[0].mxu0
        %v2016 = vadd.f32 %v1317, %v2015
        %v2017 = vpop.f32.mrb[0].mxu0
        %2018 = vmatprep.mubr.bf16.mxu0 0
        %2019 = vmatmul.mubr.bf16.gmra.mrb[0].mxu0 %v1263
        %v2020 = vpop.f32.mrb[0].mxu0
        %v2021 = vadd.f32 %v1317, %v2020
        %v2022 = vpop.f32.mrb[0].mxu0
        %v2023 = vpop.f32.mrb[0].mxu0
        %v2024 = vadd.f32 %v1317, %v2023
        %v2025 = vpop.f32.mrb[0].mxu0
        %2026 = vmatprep.mubr.bf16.mxu0 0
        %2027 = vmatmul.mubr.bf16.gmra.mrb[0].mxu0 %v1264
        %v2028 = vpop.f32.mrb[0].mxu0
        %v2029 = vadd.f32 %v1317, %v2028
        %v2030 = vpop.f32.mrb[0].mxu0
        %v2031 = vpop.f32.mrb[0].mxu0
        %v2032 = vadd.f32 %v1317, %v2031
        %v2033 = vpop.f32.mrb[0].mxu0
        %2034 = vmatprep.mubr.bf16.mxu0 0
        %2035 = vmatmul.mubr.bf16.gmra.mrb[0].mxu0 %v1265
        %v2036 = vpop.f32.mrb[0].mxu0
        %v2037 = vadd.f32 %v1317, %v2036
        %v2038 = vpop.f32.mrb[0].mxu0
        %v2039 = vpop.f32.mrb[0].mxu0
        %v2040 = vadd.f32 %v1317, %v2039
        %v2041 = vpop.f32.mrb[0].mxu0
        %2042 = vmatprep.mubr.bf16.mxu0 0
        %2043 = vmatmul.mubr.bf16.gmra.mrb[0].mxu0 %v1266
        %v2044 = vpop.f32.mrb[0].mxu0
        %v2045 = vadd.f32 %v1317, %v2044
        %v2046 = vpop.f32.mrb[0].mxu0
        %v2047 = vpop.f32.mrb[0].mxu0
        %v2048 = vadd.f32 %v1317, %v2047
        %v2049 = vpop.f32.mrb[0].mxu0
        %2050 = vmatprep.mubr.bf16.mxu0 0
        %2051 = vmatmul.mubr.bf16.gmra.mrb[0].mxu0 %v1267
        %v2052 = vpop.f32.mrb[0].mxu0
        %v2053 = vadd.f32 %v1317, %v2052
        %v2054 = vpop.f32.mrb[0].mxu0
        %v2055 = vpop.f32.mrb[0].mxu0
        %v2056 = vadd.f32 %v1317, %v2055
        %v2057 = vpop.f32.mrb[0].mxu0
        %2058 = vmatprep.mubr.bf16.mxu0 0
        %2059 = vmatmul.mubr.bf16.gmra.mrb[0].mxu0 %v1268
        %v2060 = vpop.f32.mrb[0].mxu0
        %v2061 = vadd.f32 %v1317, %v2060
        %v2062 = vpop.f32.mrb[0].mxu0
        %v2063 = vpop.f32.mrb[0].mxu0
        %v2064 = vadd.f32 %v1317, %v2063
        %v2065 = vpop.f32.mrb[0].mxu0
        %2066 = vmatprep.mubr.bf16.mxu0 0
        %2067 = vmatmul.mubr.bf16.gmra.mrb[0].mxu0 %v1269
        %v2068 = vpop.f32.mrb[0].mxu0
        %v2069 = vadd.f32 %v1317, %v2068
        %v2070 = vpop.f32.mrb[0].mxu0
        %v2071 = vpop.f32.mrb[0].mxu0
        %v2072 = vadd.f32 %v1317, %v2071
        %v2073 = vpop.f32.mrb[0].mxu0
        %2074 = vmatprep.mubr.bf16.mxu0 0
        %2075 = vmatmul.mubr.bf16.gmra.mrb[0].mxu0 %v1270
        %v2076 = vpop.f32.mrb[0].mxu0
        %v2077 = vadd.f32 %v1317, %v2076
        %v2078 = vpop.f32.mrb[0].mxu0
        %v2079 = vpop.f32.mrb[0].mxu0
        %v2080 = vadd.f32 %v1317, %v2079
        %v2081 = vpop.f32.mrb[0].mxu0
        %2082 = vmatprep.mubr.bf16.mxu0 0
        %2083 = vmatmul.mubr.bf16.gmra.mrb[0].mxu0 %v1271
        %v2084 = vpop.f32.mrb[0].mxu0
        %v2085 = vadd.f32 %v1317, %v2084
        %v2086 = vpop.f32.mrb[0].mxu0
        %v2087 = vpop.f32.mrb[0].mxu0
        %v2088 = vadd.f32 %v1317, %v2087
        %v2089 = vpop.f32.mrb[0].mxu0
        %2090 = vdwg.mxu0
        %v2091 = vpack.c.bf16 %v1488, %v1484
        %v2092 = vpack.c.bf16 %v1498, %v1494
        %v2093 = vpack.c.bf16 %v1508, %v1504
        %v2094 = vpack.c.bf16 %v1518, %v1514
        %v2095 = vpack.c.bf16 %v1528, %v1524
        %v2096 = vpack.c.bf16 %v1538, %v1534
        %v2097 = vpack.c.bf16 %v1548, %v1544
        %v2098 = vpack.c.bf16 %v1558, %v1554
        %v2099 = vpack.c.bf16 %v1568, %v1564
        %v2100 = vpack.c.bf16 %v1578, %v1574
        %v2101 = vpack.c.bf16 %v1588, %v1584
        %v2102 = vpack.c.bf16 %v1598, %v1594
        %v2103 = vpack.c.bf16 %v1608, %v1604
        %v2104 = vpack.c.bf16 %v1618, %v1614
        %v2105 = vpack.c.bf16 %v1628, %v1624
        %v2106 = vpack.c.bf16 %v1638, %v1634
        %v2107 = vpack.c.bf16 %v1648, %v1644
        %v2108 = vpack.c.bf16 %v1658, %v1654
        %v2109 = vpack.c.bf16 %v1668, %v1664
        %v2110 = vpack.c.bf16 %v1678, %v1674
        %v2111 = vpack.c.bf16 %v1688, %v1684
        %v2112 = vpack.c.bf16 %v1698, %v1694
        %v2113 = vpack.c.bf16 %v1708, %v1704
        %v2114 = vpack.c.bf16 %v1718, %v1714
        %v2115 = vpack.c.bf16 %v1728, %v1724
        %v2116 = vpack.c.bf16 %v1738, %v1734
        %v2117 = vpack.c.bf16 %v1748, %v1744
        %v2118 = vpack.c.bf16 %v1758, %v1754
        %v2119 = vpack.c.bf16 %v1768, %v1764
        %v2120 = vpack.c.bf16 %v1778, %v1774
        %v2121 = vpack.c.bf16 %v1788, %v1784
        %v2122 = vpack.c.bf16 %v1798, %v1794
        %v2123 = vpack.c.bf16 %v1490, %v1486
        %v2124 = vpack.c.bf16 %v1500, %v1496
        %v2125 = vpack.c.bf16 %v1510, %v1506
        %v2126 = vpack.c.bf16 %v1520, %v1516
        %v2127 = vpack.c.bf16 %v1530, %v1526
        %v2128 = vpack.c.bf16 %v1540, %v1536
        %v2129 = vpack.c.bf16 %v1550, %v1546
        %v2130 = vpack.c.bf16 %v1560, %v1556
        %v2131 = vpack.c.bf16 %v1570, %v1566
        %v2132 = vpack.c.bf16 %v1580, %v1576
        %v2133 = vpack.c.bf16 %v1590, %v1586
        %v2134 = vpack.c.bf16 %v1600, %v1596
        %v2135 = vpack.c.bf16 %v1610, %v1606
        %v2136 = vpack.c.bf16 %v1620, %v1616
        %v2137 = vpack.c.bf16 %v1630, %v1626
        %v2138 = vpack.c.bf16 %v1640, %v1636
        %v2139 = vpack.c.bf16 %v1650, %v1646
        %v2140 = vpack.c.bf16 %v1660, %v1656
        %v2141 = vpack.c.bf16 %v1670, %v1666
        %v2142 = vpack.c.bf16 %v1680, %v1676
        %v2143 = vpack.c.bf16 %v1690, %v1686
        %v2144 = vpack.c.bf16 %v1700, %v1696
        %v2145 = vpack.c.bf16 %v1710, %v1706
        %v2146 = vpack.c.bf16 %v1720, %v1716
        %v2147 = vpack.c.bf16 %v1730, %v1726
        %v2148 = vpack.c.bf16 %v1740, %v1736
        %v2149 = vpack.c.bf16 %v1750, %v1746
        %v2150 = vpack.c.bf16 %v1760, %v1756
        %v2151 = vpack.c.bf16 %v1770, %v1766
        %v2152 = vpack.c.bf16 %v1780, %v1776
        %v2153 = vpack.c.bf16 %v1790, %v1786
        %v2154 = vpack.c.bf16 %v1800, %v1796
        %v2155 = vpack.c.bf16 %v1840, %v1837
        %v2156 = vpack.c.bf16 %v1848, %v1845
        %v2157 = vpack.c.bf16 %v1856, %v1853
        %v2158 = vpack.c.bf16 %v1864, %v1861
        %v2159 = vpack.c.bf16 %v1872, %v1869
        %v2160 = vpack.c.bf16 %v1880, %v1877
        %v2161 = vpack.c.bf16 %v1888, %v1885
        %v2162 = vpack.c.bf16 %v1896, %v1893
        %v2163 = vpack.c.bf16 %v1904, %v1901
        %v2164 = vpack.c.bf16 %v1912, %v1909
        %v2165 = vpack.c.bf16 %v1920, %v1917
        %v2166 = vpack.c.bf16 %v1928, %v1925
        %v2167 = vpack.c.bf16 %v1936, %v1933
        %v2168 = vpack.c.bf16 %v1944, %v1941
        %v2169 = vpack.c.bf16 %v1952, %v1949
        %v2170 = vpack.c.bf16 %v1960, %v1957
        %v2171 = vpack.c.bf16 %v1968, %v1965
        %v2172 = vpack.c.bf16 %v1976, %v1973
        %v2173 = vpack.c.bf16 %v1984, %v1981
        %v2174 = vpack.c.bf16 %v1992, %v1989
        %v2175 = vpack.c.bf16 %v2000, %v1997
        %v2176 = vpack.c.bf16 %v2008, %v2005
        %v2177 = vpack.c.bf16 %v2016, %v2013
        %v2178 = vpack.c.bf16 %v2024, %v2021
        %v2179 = vpack.c.bf16 %v2032, %v2029
        %v2180 = vpack.c.bf16 %v2040, %v2037
        %v2181 = vpack.c.bf16 %v2048, %v2045
        %v2182 = vpack.c.bf16 %v2056, %v2053
        %v2183 = vpack.c.bf16 %v2064, %v2061
        %v2184 = vpack.c.bf16 %v2072, %v2069
        %v2185 = vpack.c.bf16 %v2080, %v2077
        %v2186 = vpack.c.bf16 %v2088, %v2085
        %vm2187 = vcmask 261120
        %v2189 = vsel %vm2187, %v2091, 0
        %v2192 = vsel %vm2187, %v2092, 0
        %v2195 = vsel %vm2187, %v2093, 0
        %v2198 = vsel %vm2187, %v2094, 0
        %v2201 = vsel %vm2187, %v2095, 0
        %v2204 = vsel %vm2187, %v2096, 0
        %v2207 = vsel %vm2187, %v2097, 0
        %v2210 = vsel %vm2187, %v2098, 0
        %v2213 = vsel %vm2187, %v2123, 0
        %v2216 = vsel %vm2187, %v2124, 0
        %v2219 = vsel %vm2187, %v2125, 0
        %v2222 = vsel %vm2187, %v2126, 0
        %v2225 = vsel %vm2187, %v2127, 0
        %v2228 = vsel %vm2187, %v2128, 0
        %v2231 = vsel %vm2187, %v2129, 0
        %v2234 = vsel %vm2187, %v2130, 0
        %2236 = vmatprep.subr.bf16.mxu0 0
        %2237 = vmatpush1.bf16.xpose.msra.mxu0 %v2213
        %2238 = vmatprep.subr.bf16.mxu0 0
        %2239 = vmatpush1.bf16.xpose.msra.mxu0 %v2216
        %2240 = vmatprep.subr.bf16.mxu0 0
        %2241 = vmatpush1.bf16.xpose.msra.mxu0 %v2219
        %2242 = vmatprep.subr.bf16.mxu0 0
        %2243 = vmatpush1.bf16.xpose.msra.mxu0 %v2222
        %2244 = vmatprep.subr.bf16.mxu0 0
        %2245 = vmatpush1.bf16.xpose.msra.mxu0 %v2225
        %2246 = vmatprep.subr.bf16.mxu0 0
        %2247 = vmatpush1.bf16.xpose.msra.mxu0 %v2228
        %2248 = vmatprep.subr.bf16.mxu0 0
        %2249 = vmatpush1.bf16.xpose.msra.mxu0 %v2231
        %2250 = vmatprep.subr.bf16.mxu0 0
        %2251 = vmatpush1.bf16.xpose.msra.mxu0 %v2234
        %2252 = vmatprep.subr.bf16.mxu0 0
        %2253 = vmatpush1.bf16.xpose.msra.mxu0 0
        %2254 = vmatprep.subr.bf16.mxu0 0
        %2255 = vmatpush1.bf16.xpose.msra.mxu0 0
        %2256 = vmatprep.subr.bf16.mxu0 0
        %2257 = vmatpush1.bf16.xpose.msra.mxu0 0
        %2258 = vmatprep.subr.bf16.mxu0 0
        %2259 = vmatpush1.bf16.xpose.msra.mxu0 0
        %2260 = vmatprep.subr.bf16.mxu0 0
        %2261 = vmatpush1.bf16.xpose.msra.mxu0 0
        %2262 = vmatprep.subr.bf16.mxu0 0
        %2263 = vmatpush1.bf16.xpose.msra.mxu0 0
        %2264 = vmatprep.subr.bf16.mxu0 0
        %2265 = vmatpush1.bf16.xpose.msra.mxu0 0
        %2266 = vmatprep.subr.bf16.mxu0 0
        %2267 = vmatpush1.bf16.xpose.msra.mxu0 0
        %2268 = vmatprep.mubr.bf16.mxu0 0
        %2269 = vmatmul.mubr.bf16.gmra.mrb[0].mxu0 %v2189
        %v2270 = vpop.f32.mrb[0].mxu0
        %v2271 = vadd.f32 0.0, %v2270
        %v2272 = vpop.f32.mrb[0].mxu0
        %v2273 = vpop.f32.mrb[0].mxu0
        %v2274 = vadd.f32 0.0, %v2273
        %v2275 = vpop.f32.mrb[0].mxu0
        %2276 = vmatprep.mubr.bf16.mxu0 0
        %2277 = vmatmul.mubr.bf16.gmra.mrb[0].mxu0 %v2192
        %v2278 = vpop.f32.mrb[0].mxu0
        %v2279 = vadd.f32 0.0, %v2278
        %v2280 = vpop.f32.mrb[0].mxu0
        %v2281 = vpop.f32.mrb[0].mxu0
        %v2282 = vadd.f32 0.0, %v2281
        %v2283 = vpop.f32.mrb[0].mxu0
        %2284 = vmatprep.mubr.bf16.mxu0 0
        %2285 = vmatmul.mubr.bf16.gmra.mrb[0].mxu0 %v2195
        %v2286 = vpop.f32.mrb[0].mxu0
        %v2287 = vadd.f32 0.0, %v2286
        %v2288 = vpop.f32.mrb[0].mxu0
        %v2289 = vpop.f32.mrb[0].mxu0
        %v2290 = vadd.f32 0.0, %v2289
        %v2291 = vpop.f32.mrb[0].mxu0
        %2292 = vmatprep.mubr.bf16.mxu0 0
        %2293 = vmatmul.mubr.bf16.gmra.mrb[0].mxu0 %v2198
        %v2294 = vpop.f32.mrb[0].mxu0
        %v2295 = vadd.f32 0.0, %v2294
        %v2296 = vpop.f32.mrb[0].mxu0
        %v2297 = vpop.f32.mrb[0].mxu0
        %v2298 = vadd.f32 0.0, %v2297
        %v2299 = vpop.f32.mrb[0].mxu0
        %2300 = vmatprep.mubr.bf16.mxu0 0
        %2301 = vmatmul.mubr.bf16.gmra.mrb[0].mxu0 %v2201
        %v2302 = vpop.f32.mrb[0].mxu0
        %v2303 = vadd.f32 0.0, %v2302
        %v2304 = vpop.f32.mrb[0].mxu0
        %v2305 = vpop.f32.mrb[0].mxu0
        %v2306 = vadd.f32 0.0, %v2305
        %v2307 = vpop.f32.mrb[0].mxu0
        %2308 = vmatprep.mubr.bf16.mxu0 0
        %2309 = vmatmul.mubr.bf16.gmra.mrb[0].mxu0 %v2204
        %v2310 = vpop.f32.mrb[0].mxu0
        %v2311 = vadd.f32 0.0, %v2310
        %v2312 = vpop.f32.mrb[0].mxu0
        %v2313 = vpop.f32.mrb[0].mxu0
        %v2314 = vadd.f32 0.0, %v2313
        %v2315 = vpop.f32.mrb[0].mxu0
        %2316 = vmatprep.mubr.bf16.mxu0 0
        %2317 = vmatmul.mubr.bf16.gmra.mrb[0].mxu0 %v2207
        %v2318 = vpop.f32.mrb[0].mxu0
        %v2319 = vadd.f32 0.0, %v2318
        %v2320 = vpop.f32.mrb[0].mxu0
        %v2321 = vpop.f32.mrb[0].mxu0
        %v2322 = vadd.f32 0.0, %v2321
        %v2323 = vpop.f32.mrb[0].mxu0
        %2324 = vmatprep.mubr.bf16.mxu0 0
        %2325 = vmatmul.mubr.bf16.gmra.mrb[0].mxu0 %v2210
        %v2326 = vpop.f32.mrb[0].mxu0
        %v2327 = vadd.f32 0.0, %v2326
        %v2328 = vpop.f32.mrb[0].mxu0
        %v2329 = vpop.f32.mrb[0].mxu0
        %v2330 = vadd.f32 0.0, %v2329
        %v2331 = vpop.f32.mrb[0].mxu0
        %2332 = vdwg.mxu0
        %v2334 = vsel %vm2187, %v2099, 0
        %v2337 = vsel %vm2187, %v2100, 0
        %v2340 = vsel %vm2187, %v2101, 0
        %v2343 = vsel %vm2187, %v2102, 0
        %v2346 = vsel %vm2187, %v2103, 0
        %v2349 = vsel %vm2187, %v2104, 0
        %v2352 = vsel %vm2187, %v2105, 0
        %v2355 = vsel %vm2187, %v2106, 0
        %v2358 = vsel %vm2187, %v2131, 0
        %v2361 = vsel %vm2187, %v2132, 0
        %v2364 = vsel %vm2187, %v2133, 0
        %v2367 = vsel %vm2187, %v2134, 0
        %v2370 = vsel %vm2187, %v2135, 0
        %v2373 = vsel %vm2187, %v2136, 0
        %v2376 = vsel %vm2187, %v2137, 0
        %v2379 = vsel %vm2187, %v2138, 0
        %2381 = vmatprep.subr.bf16.mxu0 0
        %2382 = vmatpush1.bf16.xpose.msra.mxu0 %v2358
        %2383 = vmatprep.subr.bf16.mxu0 0
        %2384 = vmatpush1.bf16.xpose.msra.mxu0 %v2361
        %2385 = vmatprep.subr.bf16.mxu0 0
        %2386 = vmatpush1.bf16.xpose.msra.mxu0 %v2364
        %2387 = vmatprep.subr.bf16.mxu0 0
        %2388 = vmatpush1.bf16.xpose.msra.mxu0 %v2367
        %2389 = vmatprep.subr.bf16.mxu0 0
        %2390 = vmatpush1.bf16.xpose.msra.mxu0 %v2370
        %2391 = vmatprep.subr.bf16.mxu0 0
        %2392 = vmatpush1.bf16.xpose.msra.mxu0 %v2373
        %2393 = vmatprep.subr.bf16.mxu0 0
        %2394 = vmatpush1.bf16.xpose.msra.mxu0 %v2376
        %2395 = vmatprep.subr.bf16.mxu0 0
        %2396 = vmatpush1.bf16.xpose.msra.mxu0 %v2379
        %2397 = vmatprep.subr.bf16.mxu0 0
        %2398 = vmatpush1.bf16.xpose.msra.mxu0 0
        %2399 = vmatprep.subr.bf16.mxu0 0
        %2400 = vmatpush1.bf16.xpose.msra.mxu0 0
        %2401 = vmatprep.subr.bf16.mxu0 0
        %2402 = vmatpush1.bf16.xpose.msra.mxu0 0
        %2403 = vmatprep.subr.bf16.mxu0 0
        %2404 = vmatpush1.bf16.xpose.msra.mxu0 0
        %2405 = vmatprep.subr.bf16.mxu0 0
        %2406 = vmatpush1.bf16.xpose.msra.mxu0 0
        %2407 = vmatprep.subr.bf16.mxu0 0
        %2408 = vmatpush1.bf16.xpose.msra.mxu0 0
        %2409 = vmatprep.subr.bf16.mxu0 0
        %2410 = vmatpush1.bf16.xpose.msra.mxu0 0
        %2411 = vmatprep.subr.bf16.mxu0 0
        %2412 = vmatpush1.bf16.xpose.msra.mxu0 0
        %2413 = vmatprep.mubr.bf16.mxu0 0
        %2414 = vmatmul.mubr.bf16.gmra.mrb[0].mxu0 %v2334
        %v2415 = vpop.f32.mrb[0].mxu0
        %v2416 = vadd.f32 0.0, %v2415
        %v2417 = vpop.f32.mrb[0].mxu0
        %v2418 = vpop.f32.mrb[0].mxu0
        %v2419 = vadd.f32 0.0, %v2418
        %v2420 = vpop.f32.mrb[0].mxu0
        %2421 = vmatprep.mubr.bf16.mxu0 0
        %2422 = vmatmul.mubr.bf16.gmra.mrb[0].mxu0 %v2337
        %v2423 = vpop.f32.mrb[0].mxu0
        %v2424 = vadd.f32 0.0, %v2423
        %v2425 = vpop.f32.mrb[0].mxu0
        %v2426 = vpop.f32.mrb[0].mxu0
        %v2427 = vadd.f32 0.0, %v2426
        %v2428 = vpop.f32.mrb[0].mxu0
        %2429 = vmatprep.mubr.bf16.mxu0 0
        %2430 = vmatmul.mubr.bf16.gmra.mrb[0].mxu0 %v2340
        %v2431 = vpop.f32.mrb[0].mxu0
        %v2432 = vadd.f32 0.0, %v2431
        %v2433 = vpop.f32.mrb[0].mxu0
        %v2434 = vpop.f32.mrb[0].mxu0
        %v2435 = vadd.f32 0.0, %v2434
        %v2436 = vpop.f32.mrb[0].mxu0
        %2437 = vmatprep.mubr.bf16.mxu0 0
        %2438 = vmatmul.mubr.bf16.gmra.mrb[0].mxu0 %v2343
        %v2439 = vpop.f32.mrb[0].mxu0
        %v2440 = vadd.f32 0.0, %v2439
        %v2441 = vpop.f32.mrb[0].mxu0
        %v2442 = vpop.f32.mrb[0].mxu0
        %v2443 = vadd.f32 0.0, %v2442
        %v2444 = vpop.f32.mrb[0].mxu0
        %2445 = vmatprep.mubr.bf16.mxu0 0
        %2446 = vmatmul.mubr.bf16.gmra.mrb[0].mxu0 %v2346
        %v2447 = vpop.f32.mrb[0].mxu0
        %v2448 = vadd.f32 0.0, %v2447
        %v2449 = vpop.f32.mrb[0].mxu0
        %v2450 = vpop.f32.mrb[0].mxu0
        %v2451 = vadd.f32 0.0, %v2450
        %v2452 = vpop.f32.mrb[0].mxu0
        %2453 = vmatprep.mubr.bf16.mxu0 0
        %2454 = vmatmul.mubr.bf16.gmra.mrb[0].mxu0 %v2349
        %v2455 = vpop.f32.mrb[0].mxu0
        %v2456 = vadd.f32 0.0, %v2455
        %v2457 = vpop.f32.mrb[0].mxu0
        %v2458 = vpop.f32.mrb[0].mxu0
        %v2459 = vadd.f32 0.0, %v2458
        %v2460 = vpop.f32.mrb[0].mxu0
        %2461 = vmatprep.mubr.bf16.mxu0 0
        %2462 = vmatmul.mubr.bf16.gmra.mrb[0].mxu0 %v2352
        %v2463 = vpop.f32.mrb[0].mxu0
        %v2464 = vadd.f32 0.0, %v2463
        %v2465 = vpop.f32.mrb[0].mxu0
        %v2466 = vpop.f32.mrb[0].mxu0
        %v2467 = vadd.f32 0.0, %v2466
        %v2468 = vpop.f32.mrb[0].mxu0
        %2469 = vmatprep.mubr.bf16.mxu0 0
        %2470 = vmatmul.mubr.bf16.gmra.mrb[0].mxu0 %v2355
        %v2471 = vpop.f32.mrb[0].mxu0
        %v2472 = vadd.f32 0.0, %v2471
        %v2473 = vpop.f32.mrb[0].mxu0
        %v2474 = vpop.f32.mrb[0].mxu0
        %v2475 = vadd.f32 0.0, %v2474
        %v2476 = vpop.f32.mrb[0].mxu0
        %2477 = vdwg.mxu0
        %v2479 = vsel %vm2187, %v2107, 0
        %v2482 = vsel %vm2187, %v2108, 0
        %v2485 = vsel %vm2187, %v2109, 0
        %v2488 = vsel %vm2187, %v2110, 0
        %v2491 = vsel %vm2187, %v2111, 0
        %v2494 = vsel %vm2187, %v2112, 0
        %v2497 = vsel %vm2187, %v2113, 0
        %v2500 = vsel %vm2187, %v2114, 0
        %v2503 = vsel %vm2187, %v2139, 0
        %v2506 = vsel %vm2187, %v2140, 0
        %v2509 = vsel %vm2187, %v2141, 0
        %v2512 = vsel %vm2187, %v2142, 0
        %v2515 = vsel %vm2187, %v2143, 0
        %v2518 = vsel %vm2187, %v2144, 0
        %v2521 = vsel %vm2187, %v2145, 0
        %v2524 = vsel %vm2187, %v2146, 0
        %2526 = vmatprep.subr.bf16.mxu0 0
        %2527 = vmatpush1.bf16.xpose.msra.mxu0 %v2503
        %2528 = vmatprep.subr.bf16.mxu0 0
        %2529 = vmatpush1.bf16.xpose.msra.mxu0 %v2506
        %2530 = vmatprep.subr.bf16.mxu0 0
        %2531 = vmatpush1.bf16.xpose.msra.mxu0 %v2509
        %2532 = vmatprep.subr.bf16.mxu0 0
        %2533 = vmatpush1.bf16.xpose.msra.mxu0 %v2512
        %2534 = vmatprep.subr.bf16.mxu0 0
        %2535 = vmatpush1.bf16.xpose.msra.mxu0 %v2515
        %2536 = vmatprep.subr.bf16.mxu0 0
        %2537 = vmatpush1.bf16.xpose.msra.mxu0 %v2518
        %2538 = vmatprep.subr.bf16.mxu0 0
        %2539 = vmatpush1.bf16.xpose.msra.mxu0 %v2521
        %2540 = vmatprep.subr.bf16.mxu0 0
        %2541 = vmatpush1.bf16.xpose.msra.mxu0 %v2524
        %2542 = vmatprep.subr.bf16.mxu0 0
        %2543 = vmatpush1.bf16.xpose.msra.mxu0 0
        %2544 = vmatprep.subr.bf16.mxu0 0
        %2545 = vmatpush1.bf16.xpose.msra.mxu0 0
        %2546 = vmatprep.subr.bf16.mxu0 0
        %2547 = vmatpush1.bf16.xpose.msra.mxu0 0
        %2548 = vmatprep.subr.bf16.mxu0 0
        %2549 = vmatpush1.bf16.xpose.msra.mxu0 0
        %2550 = vmatprep.subr.bf16.mxu0 0
        %2551 = vmatpush1.bf16.xpose.msra.mxu0 0
        %2552 = vmatprep.subr.bf16.mxu0 0
        %2553 = vmatpush1.bf16.xpose.msra.mxu0 0
        %2554 = vmatprep.subr.bf16.mxu0 0
        %2555 = vmatpush1.bf16.xpose.msra.mxu0 0
        %2556 = vmatprep.subr.bf16.mxu0 0
        %2557 = vmatpush1.bf16.xpose.msra.mxu0 0
        %2558 = vmatprep.mubr.bf16.mxu0 0
        %2559 = vmatmul.mubr.bf16.gmra.mrb[0].mxu0 %v2479
        %v2560 = vpop.f32.mrb[0].mxu0
        %v2561 = vadd.f32 0.0, %v2560
        %v2562 = vpop.f32.mrb[0].mxu0
        %v2563 = vpop.f32.mrb[0].mxu0
        %v2564 = vadd.f32 0.0, %v2563
        %v2565 = vpop.f32.mrb[0].mxu0
        %2566 = vmatprep.mubr.bf16.mxu0 0
        %2567 = vmatmul.mubr.bf16.gmra.mrb[0].mxu0 %v2482
        %v2568 = vpop.f32.mrb[0].mxu0
        %v2569 = vadd.f32 0.0, %v2568
        %v2570 = vpop.f32.mrb[0].mxu0
        %v2571 = vpop.f32.mrb[0].mxu0
        %v2572 = vadd.f32 0.0, %v2571
        %v2573 = vpop.f32.mrb[0].mxu0
        %2574 = vmatprep.mubr.bf16.mxu0 0
        %2575 = vmatmul.mubr.bf16.gmra.mrb[0].mxu0 %v2485
        %v2576 = vpop.f32.mrb[0].mxu0
        %v2577 = vadd.f32 0.0, %v2576
        %v2578 = vpop.f32.mrb[0].mxu0
        %v2579 = vpop.f32.mrb[0].mxu0
        %v2580 = vadd.f32 0.0, %v2579
        %v2581 = vpop.f32.mrb[0].mxu0
        %2582 = vmatprep.mubr.bf16.mxu0 0
        %2583 = vmatmul.mubr.bf16.gmra.mrb[0].mxu0 %v2488
        %v2584 = vpop.f32.mrb[0].mxu0
        %v2585 = vadd.f32 0.0, %v2584
        %v2586 = vpop.f32.mrb[0].mxu0
        %v2587 = vpop.f32.mrb[0].mxu0
        %v2588 = vadd.f32 0.0, %v2587
        %v2589 = vpop.f32.mrb[0].mxu0
        %2590 = vmatprep.mubr.bf16.mxu0 0
        %2591 = vmatmul.mubr.bf16.gmra.mrb[0].mxu0 %v2491
        %v2592 = vpop.f32.mrb[0].mxu0
        %v2593 = vadd.f32 0.0, %v2592
        %v2594 = vpop.f32.mrb[0].mxu0
        %v2595 = vpop.f32.mrb[0].mxu0
        %v2596 = vadd.f32 0.0, %v2595
        %v2597 = vpop.f32.mrb[0].mxu0
        %2598 = vmatprep.mubr.bf16.mxu0 0
        %2599 = vmatmul.mubr.bf16.gmra.mrb[0].mxu0 %v2494
        %v2600 = vpop.f32.mrb[0].mxu0
        %v2601 = vadd.f32 0.0, %v2600
        %v2602 = vpop.f32.mrb[0].mxu0
        %v2603 = vpop.f32.mrb[0].mxu0
        %v2604 = vadd.f32 0.0, %v2603
        %v2605 = vpop.f32.mrb[0].mxu0
        %2606 = vmatprep.mubr.bf16.mxu0 0
        %2607 = vmatmul.mubr.bf16.gmra.mrb[0].mxu0 %v2497
        %v2608 = vpop.f32.mrb[0].mxu0
        %v2609 = vadd.f32 0.0, %v2608
        %v2610 = vpop.f32.mrb[0].mxu0
        %v2611 = vpop.f32.mrb[0].mxu0
        %v2612 = vadd.f32 0.0, %v2611
        %v2613 = vpop.f32.mrb[0].mxu0
        %2614 = vmatprep.mubr.bf16.mxu0 0
        %2615 = vmatmul.mubr.bf16.gmra.mrb[0].mxu0 %v2500
        %v2616 = vpop.f32.mrb[0].mxu0
        %v2617 = vadd.f32 0.0, %v2616
        %v2618 = vpop.f32.mrb[0].mxu0
        %v2619 = vpop.f32.mrb[0].mxu0
        %v2620 = vadd.f32 0.0, %v2619
        %v2621 = vpop.f32.mrb[0].mxu0
        %2622 = vdwg.mxu0
        %v2624 = vsel %vm2187, %v2115, 0
        %v2627 = vsel %vm2187, %v2116, 0
        %v2630 = vsel %vm2187, %v2117, 0
        %v2633 = vsel %vm2187, %v2118, 0
        %v2636 = vsel %vm2187, %v2119, 0
        %v2639 = vsel %vm2187, %v2120, 0
        %v2642 = vsel %vm2187, %v2121, 0
        %v2645 = vsel %vm2187, %v2122, 0
        %v2648 = vsel %vm2187, %v2147, 0
        %v2651 = vsel %vm2187, %v2148, 0
        %v2654 = vsel %vm2187, %v2149, 0
        %v2657 = vsel %vm2187, %v2150, 0
        %v2660 = vsel %vm2187, %v2151, 0
        %v2663 = vsel %vm2187, %v2152, 0
        %v2666 = vsel %vm2187, %v2153, 0
        %v2669 = vsel %vm2187, %v2154, 0
        %2671 = vmatprep.subr.bf16.mxu0 0
        %2672 = vmatpush1.bf16.xpose.msra.mxu0 %v2648
        %2673 = vmatprep.subr.bf16.mxu0 0
        %2674 = vmatpush1.bf16.xpose.msra.mxu0 %v2651
        %2675 = vmatprep.subr.bf16.mxu0 0
        %2676 = vmatpush1.bf16.xpose.msra.mxu0 %v2654
        %2677 = vmatprep.subr.bf16.mxu0 0
        %2678 = vmatpush1.bf16.xpose.msra.mxu0 %v2657
        %2679 = vmatprep.subr.bf16.mxu0 0
        %2680 = vmatpush1.bf16.xpose.msra.mxu0 %v2660
        %2681 = vmatprep.subr.bf16.mxu0 0
        %2682 = vmatpush1.bf16.xpose.msra.mxu0 %v2663
        %2683 = vmatprep.subr.bf16.mxu0 0
        %2684 = vmatpush1.bf16.xpose.msra.mxu0 %v2666
        %2685 = vmatprep.subr.bf16.mxu0 0
        %2686 = vmatpush1.bf16.xpose.msra.mxu0 %v2669
        %2687 = vmatprep.subr.bf16.mxu0 0
        %2688 = vmatpush1.bf16.xpose.msra.mxu0 0
        %2689 = vmatprep.subr.bf16.mxu0 0
        %2690 = vmatpush1.bf16.xpose.msra.mxu0 0
        %2691 = vmatprep.subr.bf16.mxu0 0
        %2692 = vmatpush1.bf16.xpose.msra.mxu0 0
        %2693 = vmatprep.subr.bf16.mxu0 0
        %2694 = vmatpush1.bf16.xpose.msra.mxu0 0
        %2695 = vmatprep.subr.bf16.mxu0 0
        %2696 = vmatpush1.bf16.xpose.msra.mxu0 0
        %2697 = vmatprep.subr.bf16.mxu0 0
        %2698 = vmatpush1.bf16.xpose.msra.mxu0 0
        %2699 = vmatprep.subr.bf16.mxu0 0
        %2700 = vmatpush1.bf16.xpose.msra.mxu0 0
        %2701 = vmatprep.subr.bf16.mxu0 0
        %2702 = vmatpush1.bf16.xpose.msra.mxu0 0
        %2703 = vmatprep.mubr.bf16.mxu0 0
        %2704 = vmatmul.mubr.bf16.gmra.mrb[0].mxu0 %v2624
        %v2705 = vpop.f32.mrb[0].mxu0
        %v2706 = vadd.f32 0.0, %v2705
        %v2707 = vpop.f32.mrb[0].mxu0
        %v2708 = vpop.f32.mrb[0].mxu0
        %v2709 = vadd.f32 0.0, %v2708
        %v2710 = vpop.f32.mrb[0].mxu0
        %2711 = vmatprep.mubr.bf16.mxu0 0
        %2712 = vmatmul.mubr.bf16.gmra.mrb[0].mxu0 %v2627
        %v2713 = vpop.f32.mrb[0].mxu0
        %v2714 = vadd.f32 0.0, %v2713
        %v2715 = vpop.f32.mrb[0].mxu0
        %v2716 = vpop.f32.mrb[0].mxu0
        %v2717 = vadd.f32 0.0, %v2716
        %v2718 = vpop.f32.mrb[0].mxu0
        %2719 = vmatprep.mubr.bf16.mxu0 0
        %2720 = vmatmul.mubr.bf16.gmra.mrb[0].mxu0 %v2630
        %v2721 = vpop.f32.mrb[0].mxu0
        %v2722 = vadd.f32 0.0, %v2721
        %v2723 = vpop.f32.mrb[0].mxu0
        %v2724 = vpop.f32.mrb[0].mxu0
        %v2725 = vadd.f32 0.0, %v2724
        %v2726 = vpop.f32.mrb[0].mxu0
        %2727 = vmatprep.mubr.bf16.mxu0 0
        %2728 = vmatmul.mubr.bf16.gmra.mrb[0].mxu0 %v2633
        %v2729 = vpop.f32.mrb[0].mxu0
        %v2730 = vadd.f32 0.0, %v2729
        %v2731 = vpop.f32.mrb[0].mxu0
        %v2732 = vpop.f32.mrb[0].mxu0
        %v2733 = vadd.f32 0.0, %v2732
        %v2734 = vpop.f32.mrb[0].mxu0
        %2735 = vmatprep.mubr.bf16.mxu0 0
        %2736 = vmatmul.mubr.bf16.gmra.mrb[0].mxu0 %v2636
        %v2737 = vpop.f32.mrb[0].mxu0
        %v2738 = vadd.f32 0.0, %v2737
        %v2739 = vpop.f32.mrb[0].mxu0
        %v2740 = vpop.f32.mrb[0].mxu0
        %v2741 = vadd.f32 0.0, %v2740
        %v2742 = vpop.f32.mrb[0].mxu0
        %2743 = vmatprep.mubr.bf16.mxu0 0
        %2744 = vmatmul.mubr.bf16.gmra.mrb[0].mxu0 %v2639
        %v2745 = vpop.f32.mrb[0].mxu0
        %v2746 = vadd.f32 0.0, %v2745
        %v2747 = vpop.f32.mrb[0].mxu0
        %v2748 = vpop.f32.mrb[0].mxu0
        %v2749 = vadd.f32 0.0, %v2748
        %v2750 = vpop.f32.mrb[0].mxu0
        %2751 = vmatprep.mubr.bf16.mxu0 0
        %2752 = vmatmul.mubr.bf16.gmra.mrb[0].mxu0 %v2642
        %v2753 = vpop.f32.mrb[0].mxu0
        %v2754 = vadd.f32 0.0, %v2753
        %v2755 = vpop.f32.mrb[0].mxu0
        %v2756 = vpop.f32.mrb[0].mxu0
        %v2757 = vadd.f32 0.0, %v2756
        %v2758 = vpop.f32.mrb[0].mxu0
        %2759 = vmatprep.mubr.bf16.mxu0 0
        %2760 = vmatmul.mubr.bf16.gmra.mrb[0].mxu0 %v2645
        %v2761 = vpop.f32.mrb[0].mxu0
        %v2762 = vadd.f32 0.0, %v2761
        %v2763 = vpop.f32.mrb[0].mxu0
        %v2764 = vpop.f32.mrb[0].mxu0
        %v2765 = vadd.f32 0.0, %v2764
        %v2766 = vpop.f32.mrb[0].mxu0
        %2767 = vdwg.mxu0
        %2768 = vmax.xlane.f32.xlu0 %v2271
        %v2769 = vpop.xlane.xlu0 %2768
        %2770 = vmax.xlane.f32.xlu0 %v2274
        %v2771 = vpop.xlane.xlu0 %2770
        %2772 = vmax.xlane.f32.xlu0 %v2279
        %v2773 = vpop.xlane.xlu0 %2772
        %2774 = vmax.xlane.f32.xlu0 %v2282
        %v2775 = vpop.xlane.xlu0 %2774
        %2776 = vmax.xlane.f32.xlu0 %v2287
        %v2777 = vpop.xlane.xlu0 %2776
        %2778 = vmax.xlane.f32.xlu0 %v2290
        %v2779 = vpop.xlane.xlu0 %2778
        %2780 = vmax.xlane.f32.xlu0 %v2295
        %v2781 = vpop.xlane.xlu0 %2780
        %2782 = vmax.xlane.f32.xlu0 %v2298
        %v2783 = vpop.xlane.xlu0 %2782
        %2784 = vmax.xlane.f32.xlu0 %v2303
        %v2785 = vpop.xlane.xlu0 %2784
        %2786 = vmax.xlane.f32.xlu0 %v2306
        %v2787 = vpop.xlane.xlu0 %2786
        %2788 = vmax.xlane.f32.xlu0 %v2311
        %v2789 = vpop.xlane.xlu0 %2788
        %2790 = vmax.xlane.f32.xlu0 %v2314
        %v2791 = vpop.xlane.xlu0 %2790
        %2792 = vmax.xlane.f32.xlu0 %v2319
        %v2793 = vpop.xlane.xlu0 %2792
        %2794 = vmax.xlane.f32.xlu0 %v2322
        %v2795 = vpop.xlane.xlu0 %2794
        %2796 = vmax.xlane.f32.xlu0 %v2327
        %v2797 = vpop.xlane.xlu0 %2796
        %2798 = vmax.xlane.f32.xlu0 %v2330
        %v2799 = vpop.xlane.xlu0 %2798
        %2800 = vmax.xlane.f32.xlu0 %v2416
        %v2801 = vpop.xlane.xlu0 %2800
        %2802 = vmax.xlane.f32.xlu0 %v2419
        %v2803 = vpop.xlane.xlu0 %2802
        %2804 = vmax.xlane.f32.xlu0 %v2424
        %v2805 = vpop.xlane.xlu0 %2804
        %2806 = vmax.xlane.f32.xlu0 %v2427
        %v2807 = vpop.xlane.xlu0 %2806
        %2808 = vmax.xlane.f32.xlu0 %v2432
        %v2809 = vpop.xlane.xlu0 %2808
        %2810 = vmax.xlane.f32.xlu0 %v2435
        %v2811 = vpop.xlane.xlu0 %2810
        %2812 = vmax.xlane.f32.xlu0 %v2440
        %v2813 = vpop.xlane.xlu0 %2812
        %2814 = vmax.xlane.f32.xlu0 %v2443
        %v2815 = vpop.xlane.xlu0 %2814
        %2816 = vmax.xlane.f32.xlu0 %v2448
        %v2817 = vpop.xlane.xlu0 %2816
        %2818 = vmax.xlane.f32.xlu0 %v2451
        %v2819 = vpop.xlane.xlu0 %2818
        %2820 = vmax.xlane.f32.xlu0 %v2456
        %v2821 = vpop.xlane.xlu0 %2820
        %2822 = vmax.xlane.f32.xlu0 %v2459
        %v2823 = vpop.xlane.xlu0 %2822
        %2824 = vmax.xlane.f32.xlu0 %v2464
        %v2825 = vpop.xlane.xlu0 %2824
        %2826 = vmax.xlane.f32.xlu0 %v2467
        %v2827 = vpop.xlane.xlu0 %2826
        %2828 = vmax.xlane.f32.xlu0 %v2472
        %v2829 = vpop.xlane.xlu0 %2828
        %2830 = vmax.xlane.f32.xlu0 %v2475
        %v2831 = vpop.xlane.xlu0 %2830
        %2832 = vmax.xlane.f32.xlu0 %v2561
        %v2833 = vpop.xlane.xlu0 %2832
        %2834 = vmax.xlane.f32.xlu0 %v2564
        %v2835 = vpop.xlane.xlu0 %2834
        %2836 = vmax.xlane.f32.xlu0 %v2569
        %v2837 = vpop.xlane.xlu0 %2836
        %2838 = vmax.xlane.f32.xlu0 %v2572
        %v2839 = vpop.xlane.xlu0 %2838
        %2840 = vmax.xlane.f32.xlu0 %v2577
        %v2841 = vpop.xlane.xlu0 %2840
        %2842 = vmax.xlane.f32.xlu0 %v2580
        %v2843 = vpop.xlane.xlu0 %2842
        %2844 = vmax.xlane.f32.xlu0 %v2585
        %v2845 = vpop.xlane.xlu0 %2844
        %2846 = vmax.xlane.f32.xlu0 %v2588
        %v2847 = vpop.xlane.xlu0 %2846
        %2848 = vmax.xlane.f32.xlu0 %v2593
        %v2849 = vpop.xlane.xlu0 %2848
        %2850 = vmax.xlane.f32.xlu0 %v2596
        %v2851 = vpop.xlane.xlu0 %2850
        %2852 = vmax.xlane.f32.xlu0 %v2601
        %v2853 = vpop.xlane.xlu0 %2852
        %2854 = vmax.xlane.f32.xlu0 %v2604
        %v2855 = vpop.xlane.xlu0 %2854
        %2856 = vmax.xlane.f32.xlu0 %v2609
        %v2857 = vpop.xlane.xlu0 %2856
        %2858 = vmax.xlane.f32.xlu0 %v2612
        %v2859 = vpop.xlane.xlu0 %2858
        %2860 = vmax.xlane.f32.xlu0 %v2617
        %v2861 = vpop.xlane.xlu0 %2860
        %2862 = vmax.xlane.f32.xlu0 %v2620
        %v2863 = vpop.xlane.xlu0 %2862
        %2864 = vmax.xlane.f32.xlu0 %v2706
        %v2865 = vpop.xlane.xlu0 %2864
        %2866 = vmax.xlane.f32.xlu0 %v2709
        %v2867 = vpop.xlane.xlu0 %2866
        %2868 = vmax.xlane.f32.xlu0 %v2714
        %v2869 = vpop.xlane.xlu0 %2868
        %2870 = vmax.xlane.f32.xlu0 %v2717
        %v2871 = vpop.xlane.xlu0 %2870
        %2872 = vmax.xlane.f32.xlu0 %v2722
        %v2873 = vpop.xlane.xlu0 %2872
        %2874 = vmax.xlane.f32.xlu0 %v2725
        %v2875 = vpop.xlane.xlu0 %2874
        %2876 = vmax.xlane.f32.xlu0 %v2730
        %v2877 = vpop.xlane.xlu0 %2876
        %2878 = vmax.xlane.f32.xlu0 %v2733
        %v2879 = vpop.xlane.xlu0 %2878
        %2880 = vmax.xlane.f32.xlu0 %v2738
        %v2881 = vpop.xlane.xlu0 %2880
        %2882 = vmax.xlane.f32.xlu0 %v2741
        %v2883 = vpop.xlane.xlu0 %2882
        %2884 = vmax.xlane.f32.xlu0 %v2746
        %v2885 = vpop.xlane.xlu0 %2884
        %2886 = vmax.xlane.f32.xlu0 %v2749
        %v2887 = vpop.xlane.xlu0 %2886
        %2888 = vmax.xlane.f32.xlu0 %v2754
        %v2889 = vpop.xlane.xlu0 %2888
        %2890 = vmax.xlane.f32.xlu0 %v2757
        %v2891 = vpop.xlane.xlu0 %2890
        %2892 = vmax.xlane.f32.xlu0 %v2762
        %v2893 = vpop.xlane.xlu0 %2892
        %2894 = vmax.xlane.f32.xlu0 %v2765
        %v2895 = vpop.xlane.xlu0 %2894
        %v2896 = vsub.f32 %v2271, %v2769
        %v2897 = vsub.f32 %v2274, %v2771
        %v2898 = vsub.f32 %v2279, %v2773
        %v2899 = vsub.f32 %v2282, %v2775
        %v2900 = vsub.f32 %v2287, %v2777
        %v2901 = vsub.f32 %v2290, %v2779
        %v2902 = vsub.f32 %v2295, %v2781
        %v2903 = vsub.f32 %v2298, %v2783
        %v2904 = vsub.f32 %v2303, %v2785
        %v2905 = vsub.f32 %v2306, %v2787
        %v2906 = vsub.f32 %v2311, %v2789
        %v2907 = vsub.f32 %v2314, %v2791
        %v2908 = vsub.f32 %v2319, %v2793
        %v2909 = vsub.f32 %v2322, %v2795
        %v2910 = vsub.f32 %v2327, %v2797
        %v2911 = vsub.f32 %v2330, %v2799
        %v2912 = vsub.f32 %v2416, %v2801
        %v2913 = vsub.f32 %v2419, %v2803
        %v2914 = vsub.f32 %v2424, %v2805
        %v2915 = vsub.f32 %v2427, %v2807
        %v2916 = vsub.f32 %v2432, %v2809
        %v2917 = vsub.f32 %v2435, %v2811
        %v2918 = vsub.f32 %v2440, %v2813
        %v2919 = vsub.f32 %v2443, %v2815
        %v2920 = vsub.f32 %v2448, %v2817
        %v2921 = vsub.f32 %v2451, %v2819
        %v2922 = vsub.f32 %v2456, %v2821
        %v2923 = vsub.f32 %v2459, %v2823
        %v2924 = vsub.f32 %v2464, %v2825
        %v2925 = vsub.f32 %v2467, %v2827
        %v2926 = vsub.f32 %v2472, %v2829
        %v2927 = vsub.f32 %v2475, %v2831
        %v2928 = vsub.f32 %v2561, %v2833
        %v2929 = vsub.f32 %v2564, %v2835
        %v2930 = vsub.f32 %v2569, %v2837
        %v2931 = vsub.f32 %v2572, %v2839
        %v2932 = vsub.f32 %v2577, %v2841
        %v2933 = vsub.f32 %v2580, %v2843
        %v2934 = vsub.f32 %v2585, %v2845
        %v2935 = vsub.f32 %v2588, %v2847
        %v2936 = vsub.f32 %v2593, %v2849
        %v2937 = vsub.f32 %v2596, %v2851
        %v2938 = vsub.f32 %v2601, %v2853
        %v2939 = vsub.f32 %v2604, %v2855
        %v2940 = vsub.f32 %v2609, %v2857
        %v2941 = vsub.f32 %v2612, %v2859
        %v2942 = vsub.f32 %v2617, %v2861
        %v2943 = vsub.f32 %v2620, %v2863
        %v2944 = vsub.f32 %v2706, %v2865
        %v2945 = vsub.f32 %v2709, %v2867
        %v2946 = vsub.f32 %v2714, %v2869
        %v2947 = vsub.f32 %v2717, %v2871
        %v2948 = vsub.f32 %v2722, %v2873
        %v2949 = vsub.f32 %v2725, %v2875
        %v2950 = vsub.f32 %v2730, %v2877
        %v2951 = vsub.f32 %v2733, %v2879
        %v2952 = vsub.f32 %v2738, %v2881
        %v2953 = vsub.f32 %v2741, %v2883
        %v2954 = vsub.f32 %v2746, %v2885
        %v2955 = vsub.f32 %v2749, %v2887
        %v2956 = vsub.f32 %v2754, %v2889
        %v2957 = vsub.f32 %v2757, %v2891
        %v2958 = vsub.f32 %v2762, %v2893
        %v2959 = vsub.f32 %v2765, %v2895
        %v2960 = vmul.f32 %v2896, 1.442695
        %v2961 = vpow.pop %v2960
        %v2962 = vmul.f32 %v2897, 1.442695
        %v2963 = vpow.pop %v2962
        %v2964 = vmul.f32 %v2898, 1.442695
        %v2965 = vpow.pop %v2964
        %v2966 = vmul.f32 %v2899, 1.442695
        %v2967 = vpow.pop %v2966
        %v2968 = vmul.f32 %v2900, 1.442695
        %v2969 = vpow.pop %v2968
        %v2970 = vmul.f32 %v2901, 1.442695
        %v2971 = vpow.pop %v2970
        %v2972 = vmul.f32 %v2902, 1.442695
        %v2973 = vpow.pop %v2972
        %v2974 = vmul.f32 %v2903, 1.442695
        %v2975 = vpow.pop %v2974
        %v2976 = vmul.f32 %v2904, 1.442695
        %v2977 = vpow.pop %v2976
        %v2978 = vmul.f32 %v2905, 1.442695
        %v2979 = vpow.pop %v2978
        %v2980 = vmul.f32 %v2906, 1.442695
        %v2981 = vpow.pop %v2980
        %v2982 = vmul.f32 %v2907, 1.442695
        %v2983 = vpow.pop %v2982
        %v2984 = vmul.f32 %v2908, 1.442695
        %v2985 = vpow.pop %v2984
        %v2986 = vmul.f32 %v2909, 1.442695
        %v2987 = vpow.pop %v2986
        %v2988 = vmul.f32 %v2910, 1.442695
        %v2989 = vpow.pop %v2988
        %v2990 = vmul.f32 %v2911, 1.442695
        %v2991 = vpow.pop %v2990
        %v2992 = vmul.f32 %v2912, 1.442695
        %v2993 = vpow.pop %v2992
        %v2994 = vmul.f32 %v2913, 1.442695
        %v2995 = vpow.pop %v2994
        %v2996 = vmul.f32 %v2914, 1.442695
        %v2997 = vpow.pop %v2996
        %v2998 = vmul.f32 %v2915, 1.442695
        %v2999 = vpow.pop %v2998
        %v3000 = vmul.f32 %v2916, 1.442695
        %v3001 = vpow.pop %v3000
        %v3002 = vmul.f32 %v2917, 1.442695
        %v3003 = vpow.pop %v3002
        %v3004 = vmul.f32 %v2918, 1.442695
        %v3005 = vpow.pop %v3004
        %v3006 = vmul.f32 %v2919, 1.442695
        %v3007 = vpow.pop %v3006
        %v3008 = vmul.f32 %v2920, 1.442695
        %v3009 = vpow.pop %v3008
        %v3010 = vmul.f32 %v2921, 1.442695
        %v3011 = vpow.pop %v3010
        %v3012 = vmul.f32 %v2922, 1.442695
        %v3013 = vpow.pop %v3012
        %v3014 = vmul.f32 %v2923, 1.442695
        %v3015 = vpow.pop %v3014
        %v3016 = vmul.f32 %v2924, 1.442695
        %v3017 = vpow.pop %v3016
        %v3018 = vmul.f32 %v2925, 1.442695
        %v3019 = vpow.pop %v3018
        %v3020 = vmul.f32 %v2926, 1.442695
        %v3021 = vpow.pop %v3020
        %v3022 = vmul.f32 %v2927, 1.442695
        %v3023 = vpow.pop %v3022
        %v3024 = vmul.f32 %v2928, 1.442695
        %v3025 = vpow.pop %v3024
        %v3026 = vmul.f32 %v2929, 1.442695
        %v3027 = vpow.pop %v3026
        %v3028 = vmul.f32 %v2930, 1.442695
        %v3029 = vpow.pop %v3028
        %v3030 = vmul.f32 %v2931, 1.442695
        %v3031 = vpow.pop %v3030
        %v3032 = vmul.f32 %v2932, 1.442695
        %v3033 = vpow.pop %v3032
        %v3034 = vmul.f32 %v2933, 1.442695
        %v3035 = vpow.pop %v3034
        %v3036 = vmul.f32 %v2934, 1.442695
        %v3037 = vpow.pop %v3036
        %v3038 = vmul.f32 %v2935, 1.442695
        %v3039 = vpow.pop %v3038
        %v3040 = vmul.f32 %v2936, 1.442695
        %v3041 = vpow.pop %v3040
        %v3042 = vmul.f32 %v2937, 1.442695
        %v3043 = vpow.pop %v3042
        %v3044 = vmul.f32 %v2938, 1.442695
        %v3045 = vpow.pop %v3044
        %v3046 = vmul.f32 %v2939, 1.442695
        %v3047 = vpow.pop %v3046
        %v3048 = vmul.f32 %v2940, 1.442695
        %v3049 = vpow.pop %v3048
        %v3050 = vmul.f32 %v2941, 1.442695
        %v3051 = vpow.pop %v3050
        %v3052 = vmul.f32 %v2942, 1.442695
        %v3053 = vpow.pop %v3052
        %v3054 = vmul.f32 %v2943, 1.442695
        %v3055 = vpow.pop %v3054
        %v3056 = vmul.f32 %v2944, 1.442695
        %v3057 = vpow.pop %v3056
        %v3058 = vmul.f32 %v2945, 1.442695
        %v3059 = vpow.pop %v3058
        %v3060 = vmul.f32 %v2946, 1.442695
        %v3061 = vpow.pop %v3060
        %v3062 = vmul.f32 %v2947, 1.442695
        %v3063 = vpow.pop %v3062
        %v3064 = vmul.f32 %v2948, 1.442695
        %v3065 = vpow.pop %v3064
        %v3066 = vmul.f32 %v2949, 1.442695
        %v3067 = vpow.pop %v3066
        %v3068 = vmul.f32 %v2950, 1.442695
        %v3069 = vpow.pop %v3068
        %v3070 = vmul.f32 %v2951, 1.442695
        %v3071 = vpow.pop %v3070
        %v3072 = vmul.f32 %v2952, 1.442695
        %v3073 = vpow.pop %v3072
        %v3074 = vmul.f32 %v2953, 1.442695
        %v3075 = vpow.pop %v3074
        %v3076 = vmul.f32 %v2954, 1.442695
        %v3077 = vpow.pop %v3076
        %v3078 = vmul.f32 %v2955, 1.442695
        %v3079 = vpow.pop %v3078
        %v3080 = vmul.f32 %v2956, 1.442695
        %v3081 = vpow.pop %v3080
        %v3082 = vmul.f32 %v2957, 1.442695
        %v3083 = vpow.pop %v3082
        %v3084 = vmul.f32 %v2958, 1.442695
        %v3085 = vpow.pop %v3084
        %v3086 = vmul.f32 %v2959, 1.442695
        %v3087 = vpow.pop %v3086
        %3088 = vadd.xlane.f32.xlu0 %v2961
        %v3089 = vpop.xlane.xlu0 %3088
        %3090 = vadd.xlane.f32.xlu0 %v2963
        %v3091 = vpop.xlane.xlu0 %3090
        %3092 = vadd.xlane.f32.xlu0 %v2965
        %v3093 = vpop.xlane.xlu0 %3092
        %3094 = vadd.xlane.f32.xlu0 %v2967
        %v3095 = vpop.xlane.xlu0 %3094
        %3096 = vadd.xlane.f32.xlu0 %v2969
        %v3097 = vpop.xlane.xlu0 %3096
        %3098 = vadd.xlane.f32.xlu0 %v2971
        %v3099 = vpop.xlane.xlu0 %3098
        %3100 = vadd.xlane.f32.xlu0 %v2973
        %v3101 = vpop.xlane.xlu0 %3100
        %3102 = vadd.xlane.f32.xlu0 %v2975
        %v3103 = vpop.xlane.xlu0 %3102
        %3104 = vadd.xlane.f32.xlu0 %v2977
        %v3105 = vpop.xlane.xlu0 %3104
        %3106 = vadd.xlane.f32.xlu0 %v2979
        %v3107 = vpop.xlane.xlu0 %3106
        %3108 = vadd.xlane.f32.xlu0 %v2981
        %v3109 = vpop.xlane.xlu0 %3108
        %3110 = vadd.xlane.f32.xlu0 %v2983
        %v3111 = vpop.xlane.xlu0 %3110
        %3112 = vadd.xlane.f32.xlu0 %v2985
        %v3113 = vpop.xlane.xlu0 %3112
        %3114 = vadd.xlane.f32.xlu0 %v2987
        %v3115 = vpop.xlane.xlu0 %3114
        %3116 = vadd.xlane.f32.xlu0 %v2989
        %v3117 = vpop.xlane.xlu0 %3116
        %3118 = vadd.xlane.f32.xlu0 %v2991
        %v3119 = vpop.xlane.xlu0 %3118
        %3120 = vadd.xlane.f32.xlu0 %v2993
        %v3121 = vpop.xlane.xlu0 %3120
        %3122 = vadd.xlane.f32.xlu0 %v2995
        %v3123 = vpop.xlane.xlu0 %3122
        %3124 = vadd.xlane.f32.xlu0 %v2997
        %v3125 = vpop.xlane.xlu0 %3124
        %3126 = vadd.xlane.f32.xlu0 %v2999
        %v3127 = vpop.xlane.xlu0 %3126
        %3128 = vadd.xlane.f32.xlu0 %v3001
        %v3129 = vpop.xlane.xlu0 %3128
        %3130 = vadd.xlane.f32.xlu0 %v3003
        %v3131 = vpop.xlane.xlu0 %3130
        %3132 = vadd.xlane.f32.xlu0 %v3005
        %v3133 = vpop.xlane.xlu0 %3132
        %3134 = vadd.xlane.f32.xlu0 %v3007
        %v3135 = vpop.xlane.xlu0 %3134
        %3136 = vadd.xlane.f32.xlu0 %v3009
        %v3137 = vpop.xlane.xlu0 %3136
        %3138 = vadd.xlane.f32.xlu0 %v3011
        %v3139 = vpop.xlane.xlu0 %3138
        %3140 = vadd.xlane.f32.xlu0 %v3013
        %v3141 = vpop.xlane.xlu0 %3140
        %3142 = vadd.xlane.f32.xlu0 %v3015
        %v3143 = vpop.xlane.xlu0 %3142
        %3144 = vadd.xlane.f32.xlu0 %v3017
        %v3145 = vpop.xlane.xlu0 %3144
        %3146 = vadd.xlane.f32.xlu0 %v3019
        %v3147 = vpop.xlane.xlu0 %3146
        %3148 = vadd.xlane.f32.xlu0 %v3021
        %v3149 = vpop.xlane.xlu0 %3148
        %3150 = vadd.xlane.f32.xlu0 %v3023
        %v3151 = vpop.xlane.xlu0 %3150
        %3152 = vadd.xlane.f32.xlu0 %v3025
        %v3153 = vpop.xlane.xlu0 %3152
        %3154 = vadd.xlane.f32.xlu0 %v3027
        %v3155 = vpop.xlane.xlu0 %3154
        %3156 = vadd.xlane.f32.xlu0 %v3029
        %v3157 = vpop.xlane.xlu0 %3156
        %3158 = vadd.xlane.f32.xlu0 %v3031
        %v3159 = vpop.xlane.xlu0 %3158
        %3160 = vadd.xlane.f32.xlu0 %v3033
        %v3161 = vpop.xlane.xlu0 %3160
        %3162 = vadd.xlane.f32.xlu0 %v3035
        %v3163 = vpop.xlane.xlu0 %3162
        %3164 = vadd.xlane.f32.xlu0 %v3037
        %v3165 = vpop.xlane.xlu0 %3164
        %3166 = vadd.xlane.f32.xlu0 %v3039
        %v3167 = vpop.xlane.xlu0 %3166
        %3168 = vadd.xlane.f32.xlu0 %v3041
        %v3169 = vpop.xlane.xlu0 %3168
        %3170 = vadd.xlane.f32.xlu0 %v3043
        %v3171 = vpop.xlane.xlu0 %3170
        %3172 = vadd.xlane.f32.xlu0 %v3045
        %v3173 = vpop.xlane.xlu0 %3172
        %3174 = vadd.xlane.f32.xlu0 %v3047
        %v3175 = vpop.xlane.xlu0 %3174
        %3176 = vadd.xlane.f32.xlu0 %v3049
        %v3177 = vpop.xlane.xlu0 %3176
        %3178 = vadd.xlane.f32.xlu0 %v3051
        %v3179 = vpop.xlane.xlu0 %3178
        %3180 = vadd.xlane.f32.xlu0 %v3053
        %v3181 = vpop.xlane.xlu0 %3180
        %3182 = vadd.xlane.f32.xlu0 %v3055
        %v3183 = vpop.xlane.xlu0 %3182
        %3184 = vadd.xlane.f32.xlu0 %v3057
        %v3185 = vpop.xlane.xlu0 %3184
        %3186 = vadd.xlane.f32.xlu0 %v3059
        %v3187 = vpop.xlane.xlu0 %3186
        %3188 = vadd.xlane.f32.xlu0 %v3061
        %v3189 = vpop.xlane.xlu0 %3188
        %3190 = vadd.xlane.f32.xlu0 %v3063
        %v3191 = vpop.xlane.xlu0 %3190
        %3192 = vadd.xlane.f32.xlu0 %v3065
        %v3193 = vpop.xlane.xlu0 %3192
        %3194 = vadd.xlane.f32.xlu0 %v3067
        %v3195 = vpop.xlane.xlu0 %3194
        %3196 = vadd.xlane.f32.xlu0 %v3069
        %v3197 = vpop.xlane.xlu0 %3196
        %3198 = vadd.xlane.f32.xlu0 %v3071
        %v3199 = vpop.xlane.xlu0 %3198
        %3200 = vadd.xlane.f32.xlu0 %v3073
        %v3201 = vpop.xlane.xlu0 %3200
        %3202 = vadd.xlane.f32.xlu0 %v3075
        %v3203 = vpop.xlane.xlu0 %3202
        %3204 = vadd.xlane.f32.xlu0 %v3077
        %v3205 = vpop.xlane.xlu0 %3204
        %3206 = vadd.xlane.f32.xlu0 %v3079
        %v3207 = vpop.xlane.xlu0 %3206
        %3208 = vadd.xlane.f32.xlu0 %v3081
        %v3209 = vpop.xlane.xlu0 %3208
        %3210 = vadd.xlane.f32.xlu0 %v3083
        %v3211 = vpop.xlane.xlu0 %3210
        %3212 = vadd.xlane.f32.xlu0 %v3085
        %v3213 = vpop.xlane.xlu0 %3212
        %3214 = vadd.xlane.f32.xlu0 %v3087
        %v3215 = vpop.xlane.xlu0 %3214
        %v3216 = vrcp.pop %v3089
        %v3217 = vrcp.pop %v3091
        %v3218 = vrcp.pop %v3093
        %v3219 = vrcp.pop %v3095
        %v3220 = vrcp.pop %v3097
        %v3221 = vrcp.pop %v3099
        %v3222 = vrcp.pop %v3101
        %v3223 = vrcp.pop %v3103
        %v3224 = vrcp.pop %v3105
        %v3225 = vrcp.pop %v3107
        %v3226 = vrcp.pop %v3109
        %v3227 = vrcp.pop %v3111
        %v3228 = vrcp.pop %v3113
        %v3229 = vrcp.pop %v3115
        %v3230 = vrcp.pop %v3117
        %v3231 = vrcp.pop %v3119
        %v3232 = vrcp.pop %v3121
        %v3233 = vrcp.pop %v3123
        %v3234 = vrcp.pop %v3125
        %v3235 = vrcp.pop %v3127
        %v3236 = vrcp.pop %v3129
        %v3237 = vrcp.pop %v3131
        %v3238 = vrcp.pop %v3133
        %v3239 = vrcp.pop %v3135
        %v3240 = vrcp.pop %v3137
        %v3241 = vrcp.pop %v3139
        %v3242 = vrcp.pop %v3141
        %v3243 = vrcp.pop %v3143
        %v3244 = vrcp.pop %v3145
        %v3245 = vrcp.pop %v3147
        %v3246 = vrcp.pop %v3149
        %v3247 = vrcp.pop %v3151
        %v3248 = vrcp.pop %v3153
        %v3249 = vrcp.pop %v3155
        %v3250 = vrcp.pop %v3157
        %v3251 = vrcp.pop %v3159
        %v3252 = vrcp.pop %v3161
        %v3253 = vrcp.pop %v3163
        %v3254 = vrcp.pop %v3165
        %v3255 = vrcp.pop %v3167
        %v3256 = vrcp.pop %v3169
        %v3257 = vrcp.pop %v3171
        %v3258 = vrcp.pop %v3173
        %v3259 = vrcp.pop %v3175
        %v3260 = vrcp.pop %v3177
        %v3261 = vrcp.pop %v3179
        %v3262 = vrcp.pop %v3181
        %v3263 = vrcp.pop %v3183
        %v3264 = vrcp.pop %v3185
        %v3265 = vrcp.pop %v3187
        %v3266 = vrcp.pop %v3189
        %v3267 = vrcp.pop %v3191
        %v3268 = vrcp.pop %v3193
        %v3269 = vrcp.pop %v3195
        %v3270 = vrcp.pop %v3197
        %v3271 = vrcp.pop %v3199
        %v3272 = vrcp.pop %v3201
        %v3273 = vrcp.pop %v3203
        %v3274 = vrcp.pop %v3205
        %v3275 = vrcp.pop %v3207
        %v3276 = vrcp.pop %v3209
        %v3277 = vrcp.pop %v3211
        %v3278 = vrcp.pop %v3213
        %v3279 = vrcp.pop %v3215
        %v3280 = vmul.f32 %v2961, %v3216
        %v3281 = vmul.f32 %v2963, %v3217
        %v3282 = vmul.f32 %v2965, %v3218
        %v3283 = vmul.f32 %v2967, %v3219
        %v3284 = vmul.f32 %v2969, %v3220
        %v3285 = vmul.f32 %v2971, %v3221
        %v3286 = vmul.f32 %v2973, %v3222
        %v3287 = vmul.f32 %v2975, %v3223
        %v3288 = vmul.f32 %v2977, %v3224
        %v3289 = vmul.f32 %v2979, %v3225
        %v3290 = vmul.f32 %v2981, %v3226
        %v3291 = vmul.f32 %v2983, %v3227
        %v3292 = vmul.f32 %v2985, %v3228
        %v3293 = vmul.f32 %v2987, %v3229
        %v3294 = vmul.f32 %v2989, %v3230
        %v3295 = vmul.f32 %v2991, %v3231
        %v3296 = vmul.f32 %v2993, %v3232
        %v3297 = vmul.f32 %v2995, %v3233
        %v3298 = vmul.f32 %v2997, %v3234
        %v3299 = vmul.f32 %v2999, %v3235
        %v3300 = vmul.f32 %v3001, %v3236
        %v3301 = vmul.f32 %v3003, %v3237
        %v3302 = vmul.f32 %v3005, %v3238
        %v3303 = vmul.f32 %v3007, %v3239
        %v3304 = vmul.f32 %v3009, %v3240
        %v3305 = vmul.f32 %v3011, %v3241
        %v3306 = vmul.f32 %v3013, %v3242
        %v3307 = vmul.f32 %v3015, %v3243
        %v3308 = vmul.f32 %v3017, %v3244
        %v3309 = vmul.f32 %v3019, %v3245
        %v3310 = vmul.f32 %v3021, %v3246
        %v3311 = vmul.f32 %v3023, %v3247
        %v3312 = vmul.f32 %v3025, %v3248
        %v3313 = vmul.f32 %v3027, %v3249
        %v3314 = vmul.f32 %v3029, %v3250
        %v3315 = vmul.f32 %v3031, %v3251
        %v3316 = vmul.f32 %v3033, %v3252
        %v3317 = vmul.f32 %v3035, %v3253
        %v3318 = vmul.f32 %v3037, %v3254
        %v3319 = vmul.f32 %v3039, %v3255
        %v3320 = vmul.f32 %v3041, %v3256
        %v3321 = vmul.f32 %v3043, %v3257
        %v3322 = vmul.f32 %v3045, %v3258
        %v3323 = vmul.f32 %v3047, %v3259
        %v3324 = vmul.f32 %v3049, %v3260
        %v3325 = vmul.f32 %v3051, %v3261
        %v3326 = vmul.f32 %v3053, %v3262
        %v3327 = vmul.f32 %v3055, %v3263
        %v3328 = vmul.f32 %v3057, %v3264
        %v3329 = vmul.f32 %v3059, %v3265
        %v3330 = vmul.f32 %v3061, %v3266
        %v3331 = vmul.f32 %v3063, %v3267
        %v3332 = vmul.f32 %v3065, %v3268
        %v3333 = vmul.f32 %v3067, %v3269
        %v3334 = vmul.f32 %v3069, %v3270
        %v3335 = vmul.f32 %v3071, %v3271
        %v3336 = vmul.f32 %v3073, %v3272
        %v3337 = vmul.f32 %v3075, %v3273
        %v3338 = vmul.f32 %v3077, %v3274
        %v3339 = vmul.f32 %v3079, %v3275
        %v3340 = vmul.f32 %v3081, %v3276
        %v3341 = vmul.f32 %v3083, %v3277
        %v3342 = vmul.f32 %v3085, %v3278
        %v3343 = vmul.f32 %v3087, %v3279
        %v3344 = vpack.c.bf16 %v3281, %v3280
        %v3345 = vpack.c.bf16 %v3283, %v3282
        %v3346 = vpack.c.bf16 %v3285, %v3284
        %v3347 = vpack.c.bf16 %v3287, %v3286
        %v3348 = vpack.c.bf16 %v3289, %v3288
        %v3349 = vpack.c.bf16 %v3291, %v3290
        %v3350 = vpack.c.bf16 %v3293, %v3292
        %v3351 = vpack.c.bf16 %v3295, %v3294
        %v3352 = vpack.c.bf16 %v3297, %v3296
        %v3353 = vpack.c.bf16 %v3299, %v3298
        %v3354 = vpack.c.bf16 %v3301, %v3300
        %v3355 = vpack.c.bf16 %v3303, %v3302
        %v3356 = vpack.c.bf16 %v3305, %v3304
        %v3357 = vpack.c.bf16 %v3307, %v3306
        %v3358 = vpack.c.bf16 %v3309, %v3308
        %v3359 = vpack.c.bf16 %v3311, %v3310
        %v3360 = vpack.c.bf16 %v3313, %v3312
        %v3361 = vpack.c.bf16 %v3315, %v3314
        %v3362 = vpack.c.bf16 %v3317, %v3316
        %v3363 = vpack.c.bf16 %v3319, %v3318
        %v3364 = vpack.c.bf16 %v3321, %v3320
        %v3365 = vpack.c.bf16 %v3323, %v3322
        %v3366 = vpack.c.bf16 %v3325, %v3324
        %v3367 = vpack.c.bf16 %v3327, %v3326
        %v3368 = vpack.c.bf16 %v3329, %v3328
        %v3369 = vpack.c.bf16 %v3331, %v3330
        %v3370 = vpack.c.bf16 %v3333, %v3332
        %v3371 = vpack.c.bf16 %v3335, %v3334
        %v3372 = vpack.c.bf16 %v3337, %v3336
        %v3373 = vpack.c.bf16 %v3339, %v3338
        %v3374 = vpack.c.bf16 %v3341, %v3340
        %v3375 = vpack.c.bf16 %v3343, %v3342
        %3376 = vmatprep.subr.bf16.mxu0 0
        %3377 = vmatpush1.bf16.msra.mxu0 %v2155
        %3378 = vmatprep.subr.bf16.mxu0 0
        %3379 = vmatpush1.bf16.msra.mxu0 %v2156
        %3380 = vmatprep.subr.bf16.mxu0 0
        %3381 = vmatpush1.bf16.msra.mxu0 %v2157
        %3382 = vmatprep.subr.bf16.mxu0 0
        %3383 = vmatpush1.bf16.msra.mxu0 %v2158
        %3384 = vmatprep.subr.bf16.mxu0 0
        %3385 = vmatpush1.bf16.msra.mxu0 %v2159
        %3386 = vmatprep.subr.bf16.mxu0 0
        %3387 = vmatpush1.bf16.msra.mxu0 %v2160
        %3388 = vmatprep.subr.bf16.mxu0 0
        %3389 = vmatpush1.bf16.msra.mxu0 %v2161
        %3390 = vmatprep.subr.bf16.mxu0 0
        %3391 = vmatpush1.bf16.msra.mxu0 %v2162
        %3392 = vmatprep.subr.bf16.mxu0 0
        %3393 = vmatpush1.bf16.msra.mxu0 0
        %3394 = vmatprep.subr.bf16.mxu0 0
        %3395 = vmatpush1.bf16.msra.mxu0 0
        %3396 = vmatprep.subr.bf16.mxu0 0
        %3397 = vmatpush1.bf16.msra.mxu0 0
        %3398 = vmatprep.subr.bf16.mxu0 0
        %3399 = vmatpush1.bf16.msra.mxu0 0
        %3400 = vmatprep.subr.bf16.mxu0 0
        %3401 = vmatpush1.bf16.msra.mxu0 0
        %3402 = vmatprep.subr.bf16.mxu0 0
        %3403 = vmatpush1.bf16.msra.mxu0 0
        %3404 = vmatprep.subr.bf16.mxu0 0
        %3405 = vmatpush1.bf16.msra.mxu0 0
        %3406 = vmatprep.subr.bf16.mxu0 0
        %3407 = vmatpush1.bf16.msra.mxu0 0
        %3408 = vmatprep.mubr.bf16.mxu0 0
        %3409 = vmatmul.mubr.bf16.gmra.mrb[0].mxu0 %v3344
        %v3410 = vpop.f32.mrb[0].mxu0
        %v3411 = vadd.f32 0.0, %v3410
        %v3412 = vpop.f32.mrb[0].mxu0
        %v3413 = vpop.f32.mrb[0].mxu0
        %v3414 = vadd.f32 0.0, %v3413
        %v3415 = vpop.f32.mrb[0].mxu0
        %3416 = vmatprep.mubr.bf16.mxu0 0
        %3417 = vmatmul.mubr.bf16.gmra.mrb[0].mxu0 %v3345
        %v3418 = vpop.f32.mrb[0].mxu0
        %v3419 = vadd.f32 0.0, %v3418
        %v3420 = vpop.f32.mrb[0].mxu0
        %v3421 = vpop.f32.mrb[0].mxu0
        %v3422 = vadd.f32 0.0, %v3421
        %v3423 = vpop.f32.mrb[0].mxu0
        %3424 = vmatprep.mubr.bf16.mxu0 0
        %3425 = vmatmul.mubr.bf16.gmra.mrb[0].mxu0 %v3346
        %v3426 = vpop.f32.mrb[0].mxu0
        %v3427 = vadd.f32 0.0, %v3426
        %v3428 = vpop.f32.mrb[0].mxu0
        %v3429 = vpop.f32.mrb[0].mxu0
        %v3430 = vadd.f32 0.0, %v3429
        %v3431 = vpop.f32.mrb[0].mxu0
        %3432 = vmatprep.mubr.bf16.mxu0 0
        %3433 = vmatmul.mubr.bf16.gmra.mrb[0].mxu0 %v3347
        %v3434 = vpop.f32.mrb[0].mxu0
        %v3435 = vadd.f32 0.0, %v3434
        %v3436 = vpop.f32.mrb[0].mxu0
        %v3437 = vpop.f32.mrb[0].mxu0
        %v3438 = vadd.f32 0.0, %v3437
        %v3439 = vpop.f32.mrb[0].mxu0
        %3440 = vmatprep.mubr.bf16.mxu0 0
        %3441 = vmatmul.mubr.bf16.gmra.mrb[0].mxu0 %v3348
        %v3442 = vpop.f32.mrb[0].mxu0
        %v3443 = vadd.f32 0.0, %v3442
        %v3444 = vpop.f32.mrb[0].mxu0
        %v3445 = vpop.f32.mrb[0].mxu0
        %v3446 = vadd.f32 0.0, %v3445
        %v3447 = vpop.f32.mrb[0].mxu0
        %3448 = vmatprep.mubr.bf16.mxu0 0
        %3449 = vmatmul.mubr.bf16.gmra.mrb[0].mxu0 %v3349
        %v3450 = vpop.f32.mrb[0].mxu0
        %v3451 = vadd.f32 0.0, %v3450
        %v3452 = vpop.f32.mrb[0].mxu0
        %v3453 = vpop.f32.mrb[0].mxu0
        %v3454 = vadd.f32 0.0, %v3453
        %v3455 = vpop.f32.mrb[0].mxu0
        %3456 = vmatprep.mubr.bf16.mxu0 0
        %3457 = vmatmul.mubr.bf16.gmra.mrb[0].mxu0 %v3350
        %v3458 = vpop.f32.mrb[0].mxu0
        %v3459 = vadd.f32 0.0, %v3458
        %v3460 = vpop.f32.mrb[0].mxu0
        %v3461 = vpop.f32.mrb[0].mxu0
        %v3462 = vadd.f32 0.0, %v3461
        %v3463 = vpop.f32.mrb[0].mxu0
        %3464 = vmatprep.mubr.bf16.mxu0 0
        %3465 = vmatmul.mubr.bf16.gmra.mrb[0].mxu0 %v3351
        %v3466 = vpop.f32.mrb[0].mxu0
        %v3467 = vadd.f32 0.0, %v3466
        %v3468 = vpop.f32.mrb[0].mxu0
        %v3469 = vpop.f32.mrb[0].mxu0
        %v3470 = vadd.f32 0.0, %v3469
        %v3471 = vpop.f32.mrb[0].mxu0
        %3472 = vdwg.mxu0
        %3473 = vmatprep.subr.bf16.mxu0 0
        %3474 = vmatpush1.bf16.msra.mxu0 %v2163
        %3475 = vmatprep.subr.bf16.mxu0 0
        %3476 = vmatpush1.bf16.msra.mxu0 %v2164
        %3477 = vmatprep.subr.bf16.mxu0 0
        %3478 = vmatpush1.bf16.msra.mxu0 %v2165
        %3479 = vmatprep.subr.bf16.mxu0 0
        %3480 = vmatpush1.bf16.msra.mxu0 %v2166
        %3481 = vmatprep.subr.bf16.mxu0 0
        %3482 = vmatpush1.bf16.msra.mxu0 %v2167
        %3483 = vmatprep.subr.bf16.mxu0 0
        %3484 = vmatpush1.bf16.msra.mxu0 %v2168
        %3485 = vmatprep.subr.bf16.mxu0 0
        %3486 = vmatpush1.bf16.msra.mxu0 %v2169
        %3487 = vmatprep.subr.bf16.mxu0 0
        %3488 = vmatpush1.bf16.msra.mxu0 %v2170
        %3489 = vmatprep.subr.bf16.mxu0 0
        %3490 = vmatpush1.bf16.msra.mxu0 0
        %3491 = vmatprep.subr.bf16.mxu0 0
        %3492 = vmatpush1.bf16.msra.mxu0 0
        %3493 = vmatprep.subr.bf16.mxu0 0
        %3494 = vmatpush1.bf16.msra.mxu0 0
        %3495 = vmatprep.subr.bf16.mxu0 0
        %3496 = vmatpush1.bf16.msra.mxu0 0
        %3497 = vmatprep.subr.bf16.mxu0 0
        %3498 = vmatpush1.bf16.msra.mxu0 0
        %3499 = vmatprep.subr.bf16.mxu0 0
        %3500 = vmatpush1.bf16.msra.mxu0 0
        %3501 = vmatprep.subr.bf16.mxu0 0
        %3502 = vmatpush1.bf16.msra.mxu0 0
        %3503 = vmatprep.subr.bf16.mxu0 0
        %3504 = vmatpush1.bf16.msra.mxu0 0
        %3505 = vmatprep.mubr.bf16.mxu0 0
        %3506 = vmatmul.mubr.bf16.gmra.mrb[0].mxu0 %v3352
        %v3507 = vpop.f32.mrb[0].mxu0
        %v3508 = vadd.f32 0.0, %v3507
        %v3509 = vpop.f32.mrb[0].mxu0
        %v3510 = vpop.f32.mrb[0].mxu0
        %v3511 = vadd.f32 0.0, %v3510
        %v3512 = vpop.f32.mrb[0].mxu0
        %3513 = vmatprep.mubr.bf16.mxu0 0
        %3514 = vmatmul.mubr.bf16.gmra.mrb[0].mxu0 %v3353
        %v3515 = vpop.f32.mrb[0].mxu0
        %v3516 = vadd.f32 0.0, %v3515
        %v3517 = vpop.f32.mrb[0].mxu0
        %v3518 = vpop.f32.mrb[0].mxu0
        %v3519 = vadd.f32 0.0, %v3518
        %v3520 = vpop.f32.mrb[0].mxu0
        %3521 = vmatprep.mubr.bf16.mxu0 0
        %3522 = vmatmul.mubr.bf16.gmra.mrb[0].mxu0 %v3354
        %v3523 = vpop.f32.mrb[0].mxu0
        %v3524 = vadd.f32 0.0, %v3523
        %v3525 = vpop.f32.mrb[0].mxu0
        %v3526 = vpop.f32.mrb[0].mxu0
        %v3527 = vadd.f32 0.0, %v3526
        %v3528 = vpop.f32.mrb[0].mxu0
        %3529 = vmatprep.mubr.bf16.mxu0 0
        %3530 = vmatmul.mubr.bf16.gmra.mrb[0].mxu0 %v3355
        %v3531 = vpop.f32.mrb[0].mxu0
        %v3532 = vadd.f32 0.0, %v3531
        %v3533 = vpop.f32.mrb[0].mxu0
        %v3534 = vpop.f32.mrb[0].mxu0
        %v3535 = vadd.f32 0.0, %v3534
        %v3536 = vpop.f32.mrb[0].mxu0
        %3537 = vmatprep.mubr.bf16.mxu0 0
        %3538 = vmatmul.mubr.bf16.gmra.mrb[0].mxu0 %v3356
        %v3539 = vpop.f32.mrb[0].mxu0
        %v3540 = vadd.f32 0.0, %v3539
        %v3541 = vpop.f32.mrb[0].mxu0
        %v3542 = vpop.f32.mrb[0].mxu0
        %v3543 = vadd.f32 0.0, %v3542
        %v3544 = vpop.f32.mrb[0].mxu0
        %3545 = vmatprep.mubr.bf16.mxu0 0
        %3546 = vmatmul.mubr.bf16.gmra.mrb[0].mxu0 %v3357
        %v3547 = vpop.f32.mrb[0].mxu0
        %v3548 = vadd.f32 0.0, %v3547
        %v3549 = vpop.f32.mrb[0].mxu0
        %v3550 = vpop.f32.mrb[0].mxu0
        %v3551 = vadd.f32 0.0, %v3550
        %v3552 = vpop.f32.mrb[0].mxu0
        %3553 = vmatprep.mubr.bf16.mxu0 0
        %3554 = vmatmul.mubr.bf16.gmra.mrb[0].mxu0 %v3358
        %v3555 = vpop.f32.mrb[0].mxu0
        %v3556 = vadd.f32 0.0, %v3555
        %v3557 = vpop.f32.mrb[0].mxu0
        %v3558 = vpop.f32.mrb[0].mxu0
        %v3559 = vadd.f32 0.0, %v3558
        %v3560 = vpop.f32.mrb[0].mxu0
        %3561 = vmatprep.mubr.bf16.mxu0 0
        %3562 = vmatmul.mubr.bf16.gmra.mrb[0].mxu0 %v3359
        %v3563 = vpop.f32.mrb[0].mxu0
        %v3564 = vadd.f32 0.0, %v3563
        %v3565 = vpop.f32.mrb[0].mxu0
        %v3566 = vpop.f32.mrb[0].mxu0
        %v3567 = vadd.f32 0.0, %v3566
        %v3568 = vpop.f32.mrb[0].mxu0
        %3569 = vdwg.mxu0
        %3570 = vmatprep.subr.bf16.mxu0 0
        %3571 = vmatpush1.bf16.msra.mxu0 %v2171
        %3572 = vmatprep.subr.bf16.mxu0 0
        %3573 = vmatpush1.bf16.msra.mxu0 %v2172
        %3574 = vmatprep.subr.bf16.mxu0 0
        %3575 = vmatpush1.bf16.msra.mxu0 %v2173
        %3576 = vmatprep.subr.bf16.mxu0 0
        %3577 = vmatpush1.bf16.msra.mxu0 %v2174
        %3578 = vmatprep.subr.bf16.mxu0 0
        %3579 = vmatpush1.bf16.msra.mxu0 %v2175
        %3580 = vmatprep.subr.bf16.mxu0 0
        %3581 = vmatpush1.bf16.msra.mxu0 %v2176
        %3582 = vmatprep.subr.bf16.mxu0 0
        %3583 = vmatpush1.bf16.msra.mxu0 %v2177
        %3584 = vmatprep.subr.bf16.mxu0 0
        %3585 = vmatpush1.bf16.msra.mxu0 %v2178
        %3586 = vmatprep.subr.bf16.mxu0 0
        %3587 = vmatpush1.bf16.msra.mxu0 0
        %3588 = vmatprep.subr.bf16.mxu0 0
        %3589 = vmatpush1.bf16.msra.mxu0 0
        %3590 = vmatprep.subr.bf16.mxu0 0
        %3591 = vmatpush1.bf16.msra.mxu0 0
        %3592 = vmatprep.subr.bf16.mxu0 0
        %3593 = vmatpush1.bf16.msra.mxu0 0
        %3594 = vmatprep.subr.bf16.mxu0 0
        %3595 = vmatpush1.bf16.msra.mxu0 0
        %3596 = vmatprep.subr.bf16.mxu0 0
        %3597 = vmatpush1.bf16.msra.mxu0 0
        %3598 = vmatprep.subr.bf16.mxu0 0
        %3599 = vmatpush1.bf16.msra.mxu0 0
        %3600 = vmatprep.subr.bf16.mxu0 0
        %3601 = vmatpush1.bf16.msra.mxu0 0
        %3602 = vmatprep.mubr.bf16.mxu0 0
        %3603 = vmatmul.mubr.bf16.gmra.mrb[0].mxu0 %v3360
        %v3604 = vpop.f32.mrb[0].mxu0
        %v3605 = vadd.f32 0.0, %v3604
        %v3606 = vpop.f32.mrb[0].mxu0
        %v3607 = vpop.f32.mrb[0].mxu0
        %v3608 = vadd.f32 0.0, %v3607
        %v3609 = vpop.f32.mrb[0].mxu0
        %3610 = vmatprep.mubr.bf16.mxu0 0
        %3611 = vmatmul.mubr.bf16.gmra.mrb[0].mxu0 %v3361
        %v3612 = vpop.f32.mrb[0].mxu0
        %v3613 = vadd.f32 0.0, %v3612
        %v3614 = vpop.f32.mrb[0].mxu0
        %v3615 = vpop.f32.mrb[0].mxu0
        %v3616 = vadd.f32 0.0, %v3615
        %v3617 = vpop.f32.mrb[0].mxu0
        %3618 = vmatprep.mubr.bf16.mxu0 0
        %3619 = vmatmul.mubr.bf16.gmra.mrb[0].mxu0 %v3362
        %v3620 = vpop.f32.mrb[0].mxu0
        %v3621 = vadd.f32 0.0, %v3620
        %v3622 = vpop.f32.mrb[0].mxu0
        %v3623 = vpop.f32.mrb[0].mxu0
        %v3624 = vadd.f32 0.0, %v3623
        %v3625 = vpop.f32.mrb[0].mxu0
        %3626 = vmatprep.mubr.bf16.mxu0 0
        %3627 = vmatmul.mubr.bf16.gmra.mrb[0].mxu0 %v3363
        %v3628 = vpop.f32.mrb[0].mxu0
        %v3629 = vadd.f32 0.0, %v3628
        %v3630 = vpop.f32.mrb[0].mxu0
        %v3631 = vpop.f32.mrb[0].mxu0
        %v3632 = vadd.f32 0.0, %v3631
        %v3633 = vpop.f32.mrb[0].mxu0
        %3634 = vmatprep.mubr.bf16.mxu0 0
        %3635 = vmatmul.mubr.bf16.gmra.mrb[0].mxu0 %v3364
        %v3636 = vpop.f32.mrb[0].mxu0
        %v3637 = vadd.f32 0.0, %v3636
        %v3638 = vpop.f32.mrb[0].mxu0
        %v3639 = vpop.f32.mrb[0].mxu0
        %v3640 = vadd.f32 0.0, %v3639
        %v3641 = vpop.f32.mrb[0].mxu0
        %3642 = vmatprep.mubr.bf16.mxu0 0
        %3643 = vmatmul.mubr.bf16.gmra.mrb[0].mxu0 %v3365
        %v3644 = vpop.f32.mrb[0].mxu0
        %v3645 = vadd.f32 0.0, %v3644
        %v3646 = vpop.f32.mrb[0].mxu0
        %v3647 = vpop.f32.mrb[0].mxu0
        %v3648 = vadd.f32 0.0, %v3647
        %v3649 = vpop.f32.mrb[0].mxu0
        %3650 = vmatprep.mubr.bf16.mxu0 0
        %3651 = vmatmul.mubr.bf16.gmra.mrb[0].mxu0 %v3366
        %v3652 = vpop.f32.mrb[0].mxu0
        %v3653 = vadd.f32 0.0, %v3652
        %v3654 = vpop.f32.mrb[0].mxu0
        %v3655 = vpop.f32.mrb[0].mxu0
        %v3656 = vadd.f32 0.0, %v3655
        %v3657 = vpop.f32.mrb[0].mxu0
        %3658 = vmatprep.mubr.bf16.mxu0 0
        %3659 = vmatmul.mubr.bf16.gmra.mrb[0].mxu0 %v3367
        %v3660 = vpop.f32.mrb[0].mxu0
        %v3661 = vadd.f32 0.0, %v3660
        %v3662 = vpop.f32.mrb[0].mxu0
        %v3663 = vpop.f32.mrb[0].mxu0
        %v3664 = vadd.f32 0.0, %v3663
        %v3665 = vpop.f32.mrb[0].mxu0
        %3666 = vdwg.mxu0
        %3667 = vmatprep.subr.bf16.mxu0 0
        %3668 = vmatpush1.bf16.msra.mxu0 %v2179
        %3669 = vmatprep.subr.bf16.mxu0 0
        %3670 = vmatpush1.bf16.msra.mxu0 %v2180
        %3671 = vmatprep.subr.bf16.mxu0 0
        %3672 = vmatpush1.bf16.msra.mxu0 %v2181
        %3673 = vmatprep.subr.bf16.mxu0 0
        %3674 = vmatpush1.bf16.msra.mxu0 %v2182
        %3675 = vmatprep.subr.bf16.mxu0 0
        %3676 = vmatpush1.bf16.msra.mxu0 %v2183
        %3677 = vmatprep.subr.bf16.mxu0 0
        %3678 = vmatpush1.bf16.msra.mxu0 %v2184
        %3679 = vmatprep.subr.bf16.mxu0 0
        %3680 = vmatpush1.bf16.msra.mxu0 %v2185
        %3681 = vmatprep.subr.bf16.mxu0 0
        %3682 = vmatpush1.bf16.msra.mxu0 %v2186
        %3683 = vmatprep.subr.bf16.mxu0 0
        %3684 = vmatpush1.bf16.msra.mxu0 0
        %3685 = vmatprep.subr.bf16.mxu0 0
        %3686 = vmatpush1.bf16.msra.mxu0 0
        %3687 = vmatprep.subr.bf16.mxu0 0
        %3688 = vmatpush1.bf16.msra.mxu0 0
        %3689 = vmatprep.subr.bf16.mxu0 0
        %3690 = vmatpush1.bf16.msra.mxu0 0
        %3691 = vmatprep.subr.bf16.mxu0 0
        %3692 = vmatpush1.bf16.msra.mxu0 0
        %3693 = vmatprep.subr.bf16.mxu0 0
        %3694 = vmatpush1.bf16.msra.mxu0 0
        %3695 = vmatprep.subr.bf16.mxu0 0
        %3696 = vmatpush1.bf16.msra.mxu0 0
        %3697 = vmatprep.subr.bf16.mxu0 0
        %3698 = vmatpush1.bf16.msra.mxu0 0
        %3699 = vmatprep.mubr.bf16.mxu0 0
        %3700 = vmatmul.mubr.bf16.gmra.mrb[0].mxu0 %v3368
        %v3701 = vpop.f32.mrb[0].mxu0
        %v3702 = vadd.f32 0.0, %v3701
        %v3703 = vpop.f32.mrb[0].mxu0
        %v3704 = vpop.f32.mrb[0].mxu0
        %v3705 = vadd.f32 0.0, %v3704
        %v3706 = vpop.f32.mrb[0].mxu0
        %3707 = vmatprep.mubr.bf16.mxu0 0
        %3708 = vmatmul.mubr.bf16.gmra.mrb[0].mxu0 %v3369
        %v3709 = vpop.f32.mrb[0].mxu0
        %v3710 = vadd.f32 0.0, %v3709
        %v3711 = vpop.f32.mrb[0].mxu0
        %v3712 = vpop.f32.mrb[0].mxu0
        %v3713 = vadd.f32 0.0, %v3712
        %v3714 = vpop.f32.mrb[0].mxu0
        %3715 = vmatprep.mubr.bf16.mxu0 0
        %3716 = vmatmul.mubr.bf16.gmra.mrb[0].mxu0 %v3370
        %v3717 = vpop.f32.mrb[0].mxu0
        %v3718 = vadd.f32 0.0, %v3717
        %v3719 = vpop.f32.mrb[0].mxu0
        %v3720 = vpop.f32.mrb[0].mxu0
        %v3721 = vadd.f32 0.0, %v3720
        %v3722 = vpop.f32.mrb[0].mxu0
        %3723 = vmatprep.mubr.bf16.mxu0 0
        %3724 = vmatmul.mubr.bf16.gmra.mrb[0].mxu0 %v3371
        %v3725 = vpop.f32.mrb[0].mxu0
        %v3726 = vadd.f32 0.0, %v3725
        %v3727 = vpop.f32.mrb[0].mxu0
        %v3728 = vpop.f32.mrb[0].mxu0
        %v3729 = vadd.f32 0.0, %v3728
        %v3730 = vpop.f32.mrb[0].mxu0
        %3731 = vmatprep.mubr.bf16.mxu0 0
        %3732 = vmatmul.mubr.bf16.gmra.mrb[0].mxu0 %v3372
        %v3733 = vpop.f32.mrb[0].mxu0
        %v3734 = vadd.f32 0.0, %v3733
        %v3735 = vpop.f32.mrb[0].mxu0
        %v3736 = vpop.f32.mrb[0].mxu0
        %v3737 = vadd.f32 0.0, %v3736
        %v3738 = vpop.f32.mrb[0].mxu0
        %3739 = vmatprep.mubr.bf16.mxu0 0
        %3740 = vmatmul.mubr.bf16.gmra.mrb[0].mxu0 %v3373
        %v3741 = vpop.f32.mrb[0].mxu0
        %v3742 = vadd.f32 0.0, %v3741
        %v3743 = vpop.f32.mrb[0].mxu0
        %v3744 = vpop.f32.mrb[0].mxu0
        %v3745 = vadd.f32 0.0, %v3744
        %v3746 = vpop.f32.mrb[0].mxu0
        %3747 = vmatprep.mubr.bf16.mxu0 0
        %3748 = vmatmul.mubr.bf16.gmra.mrb[0].mxu0 %v3374
        %v3749 = vpop.f32.mrb[0].mxu0
        %v3750 = vadd.f32 0.0, %v3749
        %v3751 = vpop.f32.mrb[0].mxu0
        %v3752 = vpop.f32.mrb[0].mxu0
        %v3753 = vadd.f32 0.0, %v3752
        %v3754 = vpop.f32.mrb[0].mxu0
        %3755 = vmatprep.mubr.bf16.mxu0 0
        %3756 = vmatmul.mubr.bf16.gmra.mrb[0].mxu0 %v3375
        %v3757 = vpop.f32.mrb[0].mxu0
        %v3758 = vadd.f32 0.0, %v3757
        %v3759 = vpop.f32.mrb[0].mxu0
        %v3760 = vpop.f32.mrb[0].mxu0
        %v3761 = vadd.f32 0.0, %v3760
        %v3762 = vpop.f32.mrb[0].mxu0
        %3763 = vdwg.mxu0
        %v3764 = vpack.c.bf16 %v3414, %v3411
        %v3765 = vpack.c.bf16 %v3422, %v3419
        %v3766 = vpack.c.bf16 %v3430, %v3427
        %v3767 = vpack.c.bf16 %v3438, %v3435
        %v3768 = vpack.c.bf16 %v3446, %v3443
        %v3769 = vpack.c.bf16 %v3454, %v3451
        %v3770 = vpack.c.bf16 %v3462, %v3459
        %v3771 = vpack.c.bf16 %v3470, %v3467
        %v3772 = vpack.c.bf16 %v3511, %v3508
        %v3773 = vpack.c.bf16 %v3519, %v3516
        %v3774 = vpack.c.bf16 %v3527, %v3524
        %v3775 = vpack.c.bf16 %v3535, %v3532
        %v3776 = vpack.c.bf16 %v3543, %v3540
        %v3777 = vpack.c.bf16 %v3551, %v3548
        %v3778 = vpack.c.bf16 %v3559, %v3556
        %v3779 = vpack.c.bf16 %v3567, %v3564
        %v3780 = vpack.c.bf16 %v3608, %v3605
        %v3781 = vpack.c.bf16 %v3616, %v3613
        %v3782 = vpack.c.bf16 %v3624, %v3621
        %v3783 = vpack.c.bf16 %v3632, %v3629
        %v3784 = vpack.c.bf16 %v3640, %v3637
        %v3785 = vpack.c.bf16 %v3648, %v3645
        %v3786 = vpack.c.bf16 %v3656, %v3653
        %v3787 = vpack.c.bf16 %v3664, %v3661
        %v3788 = vpack.c.bf16 %v3705, %v3702
        %v3789 = vpack.c.bf16 %v3713, %v3710
        %v3790 = vpack.c.bf16 %v3721, %v3718
        %v3791 = vpack.c.bf16 %v3729, %v3726
        %v3792 = vpack.c.bf16 %v3737, %v3734
        %v3793 = vpack.c.bf16 %v3745, %v3742
        %v3794 = vpack.c.bf16 %v3753, %v3750
        %v3795 = vpack.c.bf16 %v3761, %v3758
        %3804 = vrot.lane.b32.xlu0 %v2091, 96
        %v3805 = vpop.permute.xlu0 %3804
        %3806 = vrot.lane.b32.xlu0 %v2092, 96
        %v3807 = vpop.permute.xlu0 %3806
        %3808 = vrot.lane.b32.xlu0 %v2093, 96
        %v3809 = vpop.permute.xlu0 %3808
        %3810 = vrot.lane.b32.xlu0 %v2094, 96
        %v3811 = vpop.permute.xlu0 %3810
        %3812 = vrot.lane.b32.xlu0 %v2095, 96
        %v3813 = vpop.permute.xlu0 %3812
        %3814 = vrot.lane.b32.xlu0 %v2096, 96
        %v3815 = vpop.permute.xlu0 %3814
        %3816 = vrot.lane.b32.xlu0 %v2097, 96
        %v3817 = vpop.permute.xlu0 %3816
        %3818 = vrot.lane.b32.xlu0 %v2098, 96
        %v3819 = vpop.permute.xlu0 %3818
        %3828 = vrot.lane.b32.xlu0 %v2123, 96
        %v3829 = vpop.permute.xlu0 %3828
        %3830 = vrot.lane.b32.xlu0 %v2124, 96
        %v3831 = vpop.permute.xlu0 %3830
        %3832 = vrot.lane.b32.xlu0 %v2125, 96
        %v3833 = vpop.permute.xlu0 %3832
        %3834 = vrot.lane.b32.xlu0 %v2126, 96
        %v3835 = vpop.permute.xlu0 %3834
        %3836 = vrot.lane.b32.xlu0 %v2127, 96
        %v3837 = vpop.permute.xlu0 %3836
        %3838 = vrot.lane.b32.xlu0 %v2128, 96
        %v3839 = vpop.permute.xlu0 %3838
        %3840 = vrot.lane.b32.xlu0 %v2129, 96
        %v3841 = vpop.permute.xlu0 %3840
        %3842 = vrot.lane.b32.xlu0 %v2130, 96
        %v3843 = vpop.permute.xlu0 %3842
        %v3845 = vsel %vm2187, %v3805, 0
        %v3848 = vsel %vm2187, %v3807, 0
        %v3851 = vsel %vm2187, %v3809, 0
        %v3854 = vsel %vm2187, %v3811, 0
        %v3857 = vsel %vm2187, %v3813, 0
        %v3860 = vsel %vm2187, %v3815, 0
        %v3863 = vsel %vm2187, %v3817, 0
        %v3866 = vsel %vm2187, %v3819, 0
        %v3869 = vsel %vm2187, %v3829, 0
        %v3872 = vsel %vm2187, %v3831, 0
        %v3875 = vsel %vm2187, %v3833, 0
        %v3878 = vsel %vm2187, %v3835, 0
        %v3881 = vsel %vm2187, %v3837, 0
        %v3884 = vsel %vm2187, %v3839, 0
        %v3887 = vsel %vm2187, %v3841, 0
        %v3890 = vsel %vm2187, %v3843, 0
        %3892 = vmatprep.subr.bf16.mxu0 0
        %3893 = vmatpush1.bf16.xpose.msra.mxu0 %v3869
        %3894 = vmatprep.subr.bf16.mxu0 0
        %3895 = vmatpush1.bf16.xpose.msra.mxu0 %v3872
        %3896 = vmatprep.subr.bf16.mxu0 0
        %3897 = vmatpush1.bf16.xpose.msra.mxu0 %v3875
        %3898 = vmatprep.subr.bf16.mxu0 0
        %3899 = vmatpush1.bf16.xpose.msra.mxu0 %v3878
        %3900 = vmatprep.subr.bf16.mxu0 0
        %3901 = vmatpush1.bf16.xpose.msra.mxu0 %v3881
        %3902 = vmatprep.subr.bf16.mxu0 0
        %3903 = vmatpush1.bf16.xpose.msra.mxu0 %v3884
        %3904 = vmatprep.subr.bf16.mxu0 0
        %3905 = vmatpush1.bf16.xpose.msra.mxu0 %v3887
        %3906 = vmatprep.subr.bf16.mxu0 0
        %3907 = vmatpush1.bf16.xpose.msra.mxu0 %v3890
        %3908 = vmatprep.subr.bf16.mxu0 0
        %3909 = vmatpush1.bf16.xpose.msra.mxu0 0
        %3910 = vmatprep.subr.bf16.mxu0 0
        %3911 = vmatpush1.bf16.xpose.msra.mxu0 0
        %3912 = vmatprep.subr.bf16.mxu0 0
        %3913 = vmatpush1.bf16.xpose.msra.mxu0 0
        %3914 = vmatprep.subr.bf16.mxu0 0
        %3915 = vmatpush1.bf16.xpose.msra.mxu0 0
        %3916 = vmatprep.subr.bf16.mxu0 0
        %3917 = vmatpush1.bf16.xpose.msra.mxu0 0
        %3918 = vmatprep.subr.bf16.mxu0 0
        %3919 = vmatpush1.bf16.xpose.msra.mxu0 0
        %3920 = vmatprep.subr.bf16.mxu0 0
        %3921 = vmatpush1.bf16.xpose.msra.mxu0 0
        %3922 = vmatprep.subr.bf16.mxu0 0
        %3923 = vmatpush1.bf16.xpose.msra.mxu0 0
        %3924 = vmatprep.mubr.bf16.mxu0 0
        %3925 = vmatmul.mubr.bf16.gmra.mrb[0].mxu0 %v3845
        %v3926 = vpop.f32.mrb[0].mxu0
        %v3927 = vadd.f32 0.0, %v3926
        %v3928 = vpop.f32.mrb[0].mxu0
        %v3929 = vpop.f32.mrb[0].mxu0
        %v3930 = vadd.f32 0.0, %v3929
        %v3931 = vpop.f32.mrb[0].mxu0
        %3932 = vmatprep.mubr.bf16.mxu0 0
        %3933 = vmatmul.mubr.bf16.gmra.mrb[0].mxu0 %v3848
        %v3934 = vpop.f32.mrb[0].mxu0
        %v3935 = vadd.f32 0.0, %v3934
        %v3936 = vpop.f32.mrb[0].mxu0
        %v3937 = vpop.f32.mrb[0].mxu0
        %v3938 = vadd.f32 0.0, %v3937
        %v3939 = vpop.f32.mrb[0].mxu0
        %3940 = vmatprep.mubr.bf16.mxu0 0
        %3941 = vmatmul.mubr.bf16.gmra.mrb[0].mxu0 %v3851
        %v3942 = vpop.f32.mrb[0].mxu0
        %v3943 = vadd.f32 0.0, %v3942
        %v3944 = vpop.f32.mrb[0].mxu0
        %v3945 = vpop.f32.mrb[0].mxu0
        %v3946 = vadd.f32 0.0, %v3945
        %v3947 = vpop.f32.mrb[0].mxu0
        %3948 = vmatprep.mubr.bf16.mxu0 0
        %3949 = vmatmul.mubr.bf16.gmra.mrb[0].mxu0 %v3854
        %v3950 = vpop.f32.mrb[0].mxu0
        %v3951 = vadd.f32 0.0, %v3950
        %v3952 = vpop.f32.mrb[0].mxu0
        %v3953 = vpop.f32.mrb[0].mxu0
        %v3954 = vadd.f32 0.0, %v3953
        %v3955 = vpop.f32.mrb[0].mxu0
        %3956 = vmatprep.mubr.bf16.mxu0 0
        %3957 = vmatmul.mubr.bf16.gmra.mrb[0].mxu0 %v3857
        %v3958 = vpop.f32.mrb[0].mxu0
        %v3959 = vadd.f32 0.0, %v3958
        %v3960 = vpop.f32.mrb[0].mxu0
        %v3961 = vpop.f32.mrb[0].mxu0
        %v3962 = vadd.f32 0.0, %v3961
        %v3963 = vpop.f32.mrb[0].mxu0
        %3964 = vmatprep.mubr.bf16.mxu0 0
        %3965 = vmatmul.mubr.bf16.gmra.mrb[0].mxu0 %v3860
        %v3966 = vpop.f32.mrb[0].mxu0
        %v3967 = vadd.f32 0.0, %v3966
        %v3968 = vpop.f32.mrb[0].mxu0
        %v3969 = vpop.f32.mrb[0].mxu0
        %v3970 = vadd.f32 0.0, %v3969
        %v3971 = vpop.f32.mrb[0].mxu0
        %3972 = vmatprep.mubr.bf16.mxu0 0
        %3973 = vmatmul.mubr.bf16.gmra.mrb[0].mxu0 %v3863
        %v3974 = vpop.f32.mrb[0].mxu0
        %v3975 = vadd.f32 0.0, %v3974
        %v3976 = vpop.f32.mrb[0].mxu0
        %v3977 = vpop.f32.mrb[0].mxu0
        %v3978 = vadd.f32 0.0, %v3977
        %v3979 = vpop.f32.mrb[0].mxu0
        %3980 = vmatprep.mubr.bf16.mxu0 0
        %3981 = vmatmul.mubr.bf16.gmra.mrb[0].mxu0 %v3866
        %v3982 = vpop.f32.mrb[0].mxu0
        %v3983 = vadd.f32 0.0, %v3982
        %v3984 = vpop.f32.mrb[0].mxu0
        %v3985 = vpop.f32.mrb[0].mxu0
        %v3986 = vadd.f32 0.0, %v3985
        %v3987 = vpop.f32.mrb[0].mxu0
        %3988 = vdwg.mxu0
        %3997 = vrot.lane.b32.xlu0 %v2099, 96
        %v3998 = vpop.permute.xlu0 %3997
        %3999 = vrot.lane.b32.xlu0 %v2100, 96
        %v4000 = vpop.permute.xlu0 %3999
        %4001 = vrot.lane.b32.xlu0 %v2101, 96
        %v4002 = vpop.permute.xlu0 %4001
        %4003 = vrot.lane.b32.xlu0 %v2102, 96
        %v4004 = vpop.permute.xlu0 %4003
        %4005 = vrot.lane.b32.xlu0 %v2103, 96
        %v4006 = vpop.permute.xlu0 %4005
        %4007 = vrot.lane.b32.xlu0 %v2104, 96
        %v4008 = vpop.permute.xlu0 %4007
        %4009 = vrot.lane.b32.xlu0 %v2105, 96
        %v4010 = vpop.permute.xlu0 %4009
        %4011 = vrot.lane.b32.xlu0 %v2106, 96
        %v4012 = vpop.permute.xlu0 %4011
        %4021 = vrot.lane.b32.xlu0 %v2131, 96
        %v4022 = vpop.permute.xlu0 %4021
        %4023 = vrot.lane.b32.xlu0 %v2132, 96
        %v4024 = vpop.permute.xlu0 %4023
        %4025 = vrot.lane.b32.xlu0 %v2133, 96
        %v4026 = vpop.permute.xlu0 %4025
        %4027 = vrot.lane.b32.xlu0 %v2134, 96
        %v4028 = vpop.permute.xlu0 %4027
        %4029 = vrot.lane.b32.xlu0 %v2135, 96
        %v4030 = vpop.permute.xlu0 %4029
        %4031 = vrot.lane.b32.xlu0 %v2136, 96
        %v4032 = vpop.permute.xlu0 %4031
        %4033 = vrot.lane.b32.xlu0 %v2137, 96
        %v4034 = vpop.permute.xlu0 %4033
        %4035 = vrot.lane.b32.xlu0 %v2138, 96
        %v4036 = vpop.permute.xlu0 %4035
        %v4038 = vsel %vm2187, %v3998, 0
        %v4041 = vsel %vm2187, %v4000, 0
        %v4044 = vsel %vm2187, %v4002, 0
        %v4047 = vsel %vm2187, %v4004, 0
        %v4050 = vsel %vm2187, %v4006, 0
        %v4053 = vsel %vm2187, %v4008, 0
        %v4056 = vsel %vm2187, %v4010, 0
        %v4059 = vsel %vm2187, %v4012, 0
        %v4062 = vsel %vm2187, %v4022, 0
        %v4065 = vsel %vm2187, %v4024, 0
        %v4068 = vsel %vm2187, %v4026, 0
        %v4071 = vsel %vm2187, %v4028, 0
        %v4074 = vsel %vm2187, %v4030, 0
        %v4077 = vsel %vm2187, %v4032, 0
        %v4080 = vsel %vm2187, %v4034, 0
        %v4083 = vsel %vm2187, %v4036, 0
        %4085 = vmatprep.subr.bf16.mxu0 0
        %4086 = vmatpush1.bf16.xpose.msra.mxu0 %v4062
        %4087 = vmatprep.subr.bf16.mxu0 0
        %4088 = vmatpush1.bf16.xpose.msra.mxu0 %v4065
        %4089 = vmatprep.subr.bf16.mxu0 0
        %4090 = vmatpush1.bf16.xpose.msra.mxu0 %v4068
        %4091 = vmatprep.subr.bf16.mxu0 0
        %4092 = vmatpush1.bf16.xpose.msra.mxu0 %v4071
        %4093 = vmatprep.subr.bf16.mxu0 0
        %4094 = vmatpush1.bf16.xpose.msra.mxu0 %v4074
        %4095 = vmatprep.subr.bf16.mxu0 0
        %4096 = vmatpush1.bf16.xpose.msra.mxu0 %v4077
        %4097 = vmatprep.subr.bf16.mxu0 0
        %4098 = vmatpush1.bf16.xpose.msra.mxu0 %v4080
        %4099 = vmatprep.subr.bf16.mxu0 0
        %4100 = vmatpush1.bf16.xpose.msra.mxu0 %v4083
        %4101 = vmatprep.subr.bf16.mxu0 0
        %4102 = vmatpush1.bf16.xpose.msra.mxu0 0
        %4103 = vmatprep.subr.bf16.mxu0 0
        %4104 = vmatpush1.bf16.xpose.msra.mxu0 0
        %4105 = vmatprep.subr.bf16.mxu0 0
        %4106 = vmatpush1.bf16.xpose.msra.mxu0 0
        %4107 = vmatprep.subr.bf16.mxu0 0
        %4108 = vmatpush1.bf16.xpose.msra.mxu0 0
        %4109 = vmatprep.subr.bf16.mxu0 0
        %4110 = vmatpush1.bf16.xpose.msra.mxu0 0
        %4111 = vmatprep.subr.bf16.mxu0 0
        %4112 = vmatpush1.bf16.xpose.msra.mxu0 0
        %4113 = vmatprep.subr.bf16.mxu0 0
        %4114 = vmatpush1.bf16.xpose.msra.mxu0 0
        %4115 = vmatprep.subr.bf16.mxu0 0
        %4116 = vmatpush1.bf16.xpose.msra.mxu0 0
        %4117 = vmatprep.mubr.bf16.mxu0 0
        %4118 = vmatmul.mubr.bf16.gmra.mrb[0].mxu0 %v4038
        %v4119 = vpop.f32.mrb[0].mxu0
        %v4120 = vadd.f32 0.0, %v4119
        %v4121 = vpop.f32.mrb[0].mxu0
        %v4122 = vpop.f32.mrb[0].mxu0
        %v4123 = vadd.f32 0.0, %v4122
        %v4124 = vpop.f32.mrb[0].mxu0
        %4125 = vmatprep.mubr.bf16.mxu0 0
        %4126 = vmatmul.mubr.bf16.gmra.mrb[0].mxu0 %v4041
        %v4127 = vpop.f32.mrb[0].mxu0
        %v4128 = vadd.f32 0.0, %v4127
        %v4129 = vpop.f32.mrb[0].mxu0
        %v4130 = vpop.f32.mrb[0].mxu0
        %v4131 = vadd.f32 0.0, %v4130
        %v4132 = vpop.f32.mrb[0].mxu0
        %4133 = vmatprep.mubr.bf16.mxu0 0
        %4134 = vmatmul.mubr.bf16.gmra.mrb[0].mxu0 %v4044
        %v4135 = vpop.f32.mrb[0].mxu0
        %v4136 = vadd.f32 0.0, %v4135
        %v4137 = vpop.f32.mrb[0].mxu0
        %v4138 = vpop.f32.mrb[0].mxu0
        %v4139 = vadd.f32 0.0, %v4138
        %v4140 = vpop.f32.mrb[0].mxu0
        %4141 = vmatprep.mubr.bf16.mxu0 0
        %4142 = vmatmul.mubr.bf16.gmra.mrb[0].mxu0 %v4047
        %v4143 = vpop.f32.mrb[0].mxu0
        %v4144 = vadd.f32 0.0, %v4143
        %v4145 = vpop.f32.mrb[0].mxu0
        %v4146 = vpop.f32.mrb[0].mxu0
        %v4147 = vadd.f32 0.0, %v4146
        %v4148 = vpop.f32.mrb[0].mxu0
        %4149 = vmatprep.mubr.bf16.mxu0 0
        %4150 = vmatmul.mubr.bf16.gmra.mrb[0].mxu0 %v4050
        %v4151 = vpop.f32.mrb[0].mxu0
        %v4152 = vadd.f32 0.0, %v4151
        %v4153 = vpop.f32.mrb[0].mxu0
        %v4154 = vpop.f32.mrb[0].mxu0
        %v4155 = vadd.f32 0.0, %v4154
        %v4156 = vpop.f32.mrb[0].mxu0
        %4157 = vmatprep.mubr.bf16.mxu0 0
        %4158 = vmatmul.mubr.bf16.gmra.mrb[0].mxu0 %v4053
        %v4159 = vpop.f32.mrb[0].mxu0
        %v4160 = vadd.f32 0.0, %v4159
        %v4161 = vpop.f32.mrb[0].mxu0
        %v4162 = vpop.f32.mrb[0].mxu0
        %v4163 = vadd.f32 0.0, %v4162
        %v4164 = vpop.f32.mrb[0].mxu0
        %4165 = vmatprep.mubr.bf16.mxu0 0
        %4166 = vmatmul.mubr.bf16.gmra.mrb[0].mxu0 %v4056
        %v4167 = vpop.f32.mrb[0].mxu0
        %v4168 = vadd.f32 0.0, %v4167
        %v4169 = vpop.f32.mrb[0].mxu0
        %v4170 = vpop.f32.mrb[0].mxu0
        %v4171 = vadd.f32 0.0, %v4170
        %v4172 = vpop.f32.mrb[0].mxu0
        %4173 = vmatprep.mubr.bf16.mxu0 0
        %4174 = vmatmul.mubr.bf16.gmra.mrb[0].mxu0 %v4059
        %v4175 = vpop.f32.mrb[0].mxu0
        %v4176 = vadd.f32 0.0, %v4175
        %v4177 = vpop.f32.mrb[0].mxu0
        %v4178 = vpop.f32.mrb[0].mxu0
        %v4179 = vadd.f32 0.0, %v4178
        %v4180 = vpop.f32.mrb[0].mxu0
        %4181 = vdwg.mxu0
        %4190 = vrot.lane.b32.xlu0 %v2107, 96
        %v4191 = vpop.permute.xlu0 %4190
        %4192 = vrot.lane.b32.xlu0 %v2108, 96
        %v4193 = vpop.permute.xlu0 %4192
        %4194 = vrot.lane.b32.xlu0 %v2109, 96
        %v4195 = vpop.permute.xlu0 %4194
        %4196 = vrot.lane.b32.xlu0 %v2110, 96
        %v4197 = vpop.permute.xlu0 %4196
        %4198 = vrot.lane.b32.xlu0 %v2111, 96
        %v4199 = vpop.permute.xlu0 %4198
        %4200 = vrot.lane.b32.xlu0 %v2112, 96
        %v4201 = vpop.permute.xlu0 %4200
        %4202 = vrot.lane.b32.xlu0 %v2113, 96
        %v4203 = vpop.permute.xlu0 %4202
        %4204 = vrot.lane.b32.xlu0 %v2114, 96
        %v4205 = vpop.permute.xlu0 %4204
        %4214 = vrot.lane.b32.xlu0 %v2139, 96
        %v4215 = vpop.permute.xlu0 %4214
        %4216 = vrot.lane.b32.xlu0 %v2140, 96
        %v4217 = vpop.permute.xlu0 %4216
        %4218 = vrot.lane.b32.xlu0 %v2141, 96
        %v4219 = vpop.permute.xlu0 %4218
        %4220 = vrot.lane.b32.xlu0 %v2142, 96
        %v4221 = vpop.permute.xlu0 %4220
        %4222 = vrot.lane.b32.xlu0 %v2143, 96
        %v4223 = vpop.permute.xlu0 %4222
        %4224 = vrot.lane.b32.xlu0 %v2144, 96
        %v4225 = vpop.permute.xlu0 %4224
        %4226 = vrot.lane.b32.xlu0 %v2145, 96
        %v4227 = vpop.permute.xlu0 %4226
        %4228 = vrot.lane.b32.xlu0 %v2146, 96
        %v4229 = vpop.permute.xlu0 %4228
        %v4231 = vsel %vm2187, %v4191, 0
        %v4234 = vsel %vm2187, %v4193, 0
        %v4237 = vsel %vm2187, %v4195, 0
        %v4240 = vsel %vm2187, %v4197, 0
        %v4243 = vsel %vm2187, %v4199, 0
        %v4246 = vsel %vm2187, %v4201, 0
        %v4249 = vsel %vm2187, %v4203, 0
        %v4252 = vsel %vm2187, %v4205, 0
        %v4255 = vsel %vm2187, %v4215, 0
        %v4258 = vsel %vm2187, %v4217, 0
        %v4261 = vsel %vm2187, %v4219, 0
        %v4264 = vsel %vm2187, %v4221, 0
        %v4267 = vsel %vm2187, %v4223, 0
        %v4270 = vsel %vm2187, %v4225, 0
        %v4273 = vsel %vm2187, %v4227, 0
        %v4276 = vsel %vm2187, %v4229, 0
        %4278 = vmatprep.subr.bf16.mxu0 0
        %4279 = vmatpush1.bf16.xpose.msra.mxu0 %v4255
        %4280 = vmatprep.subr.bf16.mxu0 0
        %4281 = vmatpush1.bf16.xpose.msra.mxu0 %v4258
        %4282 = vmatprep.subr.bf16.mxu0 0
        %4283 = vmatpush1.bf16.xpose.msra.mxu0 %v4261
        %4284 = vmatprep.subr.bf16.mxu0 0
        %4285 = vmatpush1.bf16.xpose.msra.mxu0 %v4264
        %4286 = vmatprep.subr.bf16.mxu0 0
        %4287 = vmatpush1.bf16.xpose.msra.mxu0 %v4267
        %4288 = vmatprep.subr.bf16.mxu0 0
        %4289 = vmatpush1.bf16.xpose.msra.mxu0 %v4270
        %4290 = vmatprep.subr.bf16.mxu0 0
        %4291 = vmatpush1.bf16.xpose.msra.mxu0 %v4273
        %4292 = vmatprep.subr.bf16.mxu0 0
        %4293 = vmatpush1.bf16.xpose.msra.mxu0 %v4276
        %4294 = vmatprep.subr.bf16.mxu0 0
        %4295 = vmatpush1.bf16.xpose.msra.mxu0 0
        %4296 = vmatprep.subr.bf16.mxu0 0
        %4297 = vmatpush1.bf16.xpose.msra.mxu0 0
        %4298 = vmatprep.subr.bf16.mxu0 0
        %4299 = vmatpush1.bf16.xpose.msra.mxu0 0
        %4300 = vmatprep.subr.bf16.mxu0 0
        %4301 = vmatpush1.bf16.xpose.msra.mxu0 0
        %4302 = vmatprep.subr.bf16.mxu0 0
        %4303 = vmatpush1.bf16.xpose.msra.mxu0 0
        %4304 = vmatprep.subr.bf16.mxu0 0
        %4305 = vmatpush1.bf16.xpose.msra.mxu0 0
        %4306 = vmatprep.subr.bf16.mxu0 0
        %4307 = vmatpush1.bf16.xpose.msra.mxu0 0
        %4308 = vmatprep.subr.bf16.mxu0 0
        %4309 = vmatpush1.bf16.xpose.msra.mxu0 0
        %4310 = vmatprep.mubr.bf16.mxu0 0
        %4311 = vmatmul.mubr.bf16.gmra.mrb[0].mxu0 %v4231
        %v4312 = vpop.f32.mrb[0].mxu0
        %v4313 = vadd.f32 0.0, %v4312
        %v4314 = vpop.f32.mrb[0].mxu0
        %v4315 = vpop.f32.mrb[0].mxu0
        %v4316 = vadd.f32 0.0, %v4315
        %v4317 = vpop.f32.mrb[0].mxu0
        %4318 = vmatprep.mubr.bf16.mxu0 0
        %4319 = vmatmul.mubr.bf16.gmra.mrb[0].mxu0 %v4234
        %v4320 = vpop.f32.mrb[0].mxu0
        %v4321 = vadd.f32 0.0, %v4320
        %v4322 = vpop.f32.mrb[0].mxu0
        %v4323 = vpop.f32.mrb[0].mxu0
        %v4324 = vadd.f32 0.0, %v4323
        %v4325 = vpop.f32.mrb[0].mxu0
        %4326 = vmatprep.mubr.bf16.mxu0 0
        %4327 = vmatmul.mubr.bf16.gmra.mrb[0].mxu0 %v4237
        %v4328 = vpop.f32.mrb[0].mxu0
        %v4329 = vadd.f32 0.0, %v4328
        %v4330 = vpop.f32.mrb[0].mxu0
        %v4331 = vpop.f32.mrb[0].mxu0
        %v4332 = vadd.f32 0.0, %v4331
        %v4333 = vpop.f32.mrb[0].mxu0
        %4334 = vmatprep.mubr.bf16.mxu0 0
        %4335 = vmatmul.mubr.bf16.gmra.mrb[0].mxu0 %v4240
        %v4336 = vpop.f32.mrb[0].mxu0
        %v4337 = vadd.f32 0.0, %v4336
        %v4338 = vpop.f32.mrb[0].mxu0
        %v4339 = vpop.f32.mrb[0].mxu0
        %v4340 = vadd.f32 0.0, %v4339
        %v4341 = vpop.f32.mrb[0].mxu0
        %4342 = vmatprep.mubr.bf16.mxu0 0
        %4343 = vmatmul.mubr.bf16.gmra.mrb[0].mxu0 %v4243
        %v4344 = vpop.f32.mrb[0].mxu0
        %v4345 = vadd.f32 0.0, %v4344
        %v4346 = vpop.f32.mrb[0].mxu0
        %v4347 = vpop.f32.mrb[0].mxu0
        %v4348 = vadd.f32 0.0, %v4347
        %v4349 = vpop.f32.mrb[0].mxu0
        %4350 = vmatprep.mubr.bf16.mxu0 0
        %4351 = vmatmul.mubr.bf16.gmra.mrb[0].mxu0 %v4246
        %v4352 = vpop.f32.mrb[0].mxu0
        %v4353 = vadd.f32 0.0, %v4352
        %v4354 = vpop.f32.mrb[0].mxu0
        %v4355 = vpop.f32.mrb[0].mxu0
        %v4356 = vadd.f32 0.0, %v4355
        %v4357 = vpop.f32.mrb[0].mxu0
        %4358 = vmatprep.mubr.bf16.mxu0 0
        %4359 = vmatmul.mubr.bf16.gmra.mrb[0].mxu0 %v4249
        %v4360 = vpop.f32.mrb[0].mxu0
        %v4361 = vadd.f32 0.0, %v4360
        %v4362 = vpop.f32.mrb[0].mxu0
        %v4363 = vpop.f32.mrb[0].mxu0
        %v4364 = vadd.f32 0.0, %v4363
        %v4365 = vpop.f32.mrb[0].mxu0
        %4366 = vmatprep.mubr.bf16.mxu0 0
        %4367 = vmatmul.mubr.bf16.gmra.mrb[0].mxu0 %v4252
        %v4368 = vpop.f32.mrb[0].mxu0
        %v4369 = vadd.f32 0.0, %v4368
        %v4370 = vpop.f32.mrb[0].mxu0
        %v4371 = vpop.f32.mrb[0].mxu0
        %v4372 = vadd.f32 0.0, %v4371
        %v4373 = vpop.f32.mrb[0].mxu0
        %4374 = vdwg.mxu0
        %4383 = vrot.lane.b32.xlu0 %v2115, 96
        %v4384 = vpop.permute.xlu0 %4383
        %4385 = vrot.lane.b32.xlu0 %v2116, 96
        %v4386 = vpop.permute.xlu0 %4385
        %4387 = vrot.lane.b32.xlu0 %v2117, 96
        %v4388 = vpop.permute.xlu0 %4387
        %4389 = vrot.lane.b32.xlu0 %v2118, 96
        %v4390 = vpop.permute.xlu0 %4389
        %4391 = vrot.lane.b32.xlu0 %v2119, 96
        %v4392 = vpop.permute.xlu0 %4391
        %4393 = vrot.lane.b32.xlu0 %v2120, 96
        %v4394 = vpop.permute.xlu0 %4393
        %4395 = vrot.lane.b32.xlu0 %v2121, 96
        %v4396 = vpop.permute.xlu0 %4395
        %4397 = vrot.lane.b32.xlu0 %v2122, 96
        %v4398 = vpop.permute.xlu0 %4397
        %4407 = vrot.lane.b32.xlu0 %v2147, 96
        %v4408 = vpop.permute.xlu0 %4407
        %4409 = vrot.lane.b32.xlu0 %v2148, 96
        %v4410 = vpop.permute.xlu0 %4409
        %4411 = vrot.lane.b32.xlu0 %v2149, 96
        %v4412 = vpop.permute.xlu0 %4411
        %4413 = vrot.lane.b32.xlu0 %v2150, 96
        %v4414 = vpop.permute.xlu0 %4413
        %4415 = vrot.lane.b32.xlu0 %v2151, 96
        %v4416 = vpop.permute.xlu0 %4415
        %4417 = vrot.lane.b32.xlu0 %v2152, 96
        %v4418 = vpop.permute.xlu0 %4417
        %4419 = vrot.lane.b32.xlu0 %v2153, 96
        %v4420 = vpop.permute.xlu0 %4419
        %4421 = vrot.lane.b32.xlu0 %v2154, 96
        %v4422 = vpop.permute.xlu0 %4421
        %v4424 = vsel %vm2187, %v4384, 0
        %v4427 = vsel %vm2187, %v4386, 0
        %v4430 = vsel %vm2187, %v4388, 0
        %v4433 = vsel %vm2187, %v4390, 0
        %v4436 = vsel %vm2187, %v4392, 0
        %v4439 = vsel %vm2187, %v4394, 0
        %v4442 = vsel %vm2187, %v4396, 0
        %v4445 = vsel %vm2187, %v4398, 0
        %v4448 = vsel %vm2187, %v4408, 0
        %v4451 = vsel %vm2187, %v4410, 0
        %v4454 = vsel %vm2187, %v4412, 0
        %v4457 = vsel %vm2187, %v4414, 0
        %v4460 = vsel %vm2187, %v4416, 0
        %v4463 = vsel %vm2187, %v4418, 0
        %v4466 = vsel %vm2187, %v4420, 0
        %v4469 = vsel %vm2187, %v4422, 0
        %4471 = vmatprep.subr.bf16.mxu0 0
        %4472 = vmatpush1.bf16.xpose.msra.mxu0 %v4448
        %4473 = vmatprep.subr.bf16.mxu0 0
        %4474 = vmatpush1.bf16.xpose.msra.mxu0 %v4451
        %4475 = vmatprep.subr.bf16.mxu0 0
        %4476 = vmatpush1.bf16.xpose.msra.mxu0 %v4454
        %4477 = vmatprep.subr.bf16.mxu0 0
        %4478 = vmatpush1.bf16.xpose.msra.mxu0 %v4457
        %4479 = vmatprep.subr.bf16.mxu0 0
        %4480 = vmatpush1.bf16.xpose.msra.mxu0 %v4460
        %4481 = vmatprep.subr.bf16.mxu0 0
        %4482 = vmatpush1.bf16.xpose.msra.mxu0 %v4463
        %4483 = vmatprep.subr.bf16.mxu0 0
        %4484 = vmatpush1.bf16.xpose.msra.mxu0 %v4466
        %4485 = vmatprep.subr.bf16.mxu0 0
        %4486 = vmatpush1.bf16.xpose.msra.mxu0 %v4469
        %4487 = vmatprep.subr.bf16.mxu0 0
        %4488 = vmatpush1.bf16.xpose.msra.mxu0 0
        %4489 = vmatprep.subr.bf16.mxu0 0
        %4490 = vmatpush1.bf16.xpose.msra.mxu0 0
        %4491 = vmatprep.subr.bf16.mxu0 0
        %4492 = vmatpush1.bf16.xpose.msra.mxu0 0
        %4493 = vmatprep.subr.bf16.mxu0 0
        %4494 = vmatpush1.bf16.xpose.msra.mxu0 0
        %4495 = vmatprep.subr.bf16.mxu0 0
        %4496 = vmatpush1.bf16.xpose.msra.mxu0 0
        %4497 = vmatprep.subr.bf16.mxu0 0
        %4498 = vmatpush1.bf16.xpose.msra.mxu0 0
        %4499 = vmatprep.subr.bf16.mxu0 0
        %4500 = vmatpush1.bf16.xpose.msra.mxu0 0
        %4501 = vmatprep.subr.bf16.mxu0 0
        %4502 = vmatpush1.bf16.xpose.msra.mxu0 0
        %4503 = vmatprep.mubr.bf16.mxu0 0
        %4504 = vmatmul.mubr.bf16.gmra.mrb[0].mxu0 %v4424
        %v4505 = vpop.f32.mrb[0].mxu0
        %v4506 = vadd.f32 0.0, %v4505
        %v4507 = vpop.f32.mrb[0].mxu0
        %v4508 = vpop.f32.mrb[0].mxu0
        %v4509 = vadd.f32 0.0, %v4508
        %v4510 = vpop.f32.mrb[0].mxu0
        %4511 = vmatprep.mubr.bf16.mxu0 0
        %4512 = vmatmul.mubr.bf16.gmra.mrb[0].mxu0 %v4427
        %v4513 = vpop.f32.mrb[0].mxu0
        %v4514 = vadd.f32 0.0, %v4513
        %v4515 = vpop.f32.mrb[0].mxu0
        %v4516 = vpop.f32.mrb[0].mxu0
        %v4517 = vadd.f32 0.0, %v4516
        %v4518 = vpop.f32.mrb[0].mxu0
        %4519 = vmatprep.mubr.bf16.mxu0 0
        %4520 = vmatmul.mubr.bf16.gmra.mrb[0].mxu0 %v4430
        %v4521 = vpop.f32.mrb[0].mxu0
        %v4522 = vadd.f32 0.0, %v4521
        %v4523 = vpop.f32.mrb[0].mxu0
        %v4524 = vpop.f32.mrb[0].mxu0
        %v4525 = vadd.f32 0.0, %v4524
        %v4526 = vpop.f32.mrb[0].mxu0
        %4527 = vmatprep.mubr.bf16.mxu0 0
        %4528 = vmatmul.mubr.bf16.gmra.mrb[0].mxu0 %v4433
        %v4529 = vpop.f32.mrb[0].mxu0
        %v4530 = vadd.f32 0.0, %v4529
        %v4531 = vpop.f32.mrb[0].mxu0
        %v4532 = vpop.f32.mrb[0].mxu0
        %v4533 = vadd.f32 0.0, %v4532
        %v4534 = vpop.f32.mrb[0].mxu0
        %4535 = vmatprep.mubr.bf16.mxu0 0
        %4536 = vmatmul.mubr.bf16.gmra.mrb[0].mxu0 %v4436
        %v4537 = vpop.f32.mrb[0].mxu0
        %v4538 = vadd.f32 0.0, %v4537
        %v4539 = vpop.f32.mrb[0].mxu0
        %v4540 = vpop.f32.mrb[0].mxu0
        %v4541 = vadd.f32 0.0, %v4540
        %v4542 = vpop.f32.mrb[0].mxu0
        %4543 = vmatprep.mubr.bf16.mxu0 0
        %4544 = vmatmul.mubr.bf16.gmra.mrb[0].mxu0 %v4439
        %v4545 = vpop.f32.mrb[0].mxu0
        %v4546 = vadd.f32 0.0, %v4545
        %v4547 = vpop.f32.mrb[0].mxu0
        %v4548 = vpop.f32.mrb[0].mxu0
        %v4549 = vadd.f32 0.0, %v4548
        %v4550 = vpop.f32.mrb[0].mxu0
        %4551 = vmatprep.mubr.bf16.mxu0 0
        %4552 = vmatmul.mubr.bf16.gmra.mrb[0].mxu0 %v4442
        %v4553 = vpop.f32.mrb[0].mxu0
        %v4554 = vadd.f32 0.0, %v4553
        %v4555 = vpop.f32.mrb[0].mxu0
        %v4556 = vpop.f32.mrb[0].mxu0
        %v4557 = vadd.f32 0.0, %v4556
        %v4558 = vpop.f32.mrb[0].mxu0
        %4559 = vmatprep.mubr.bf16.mxu0 0
        %4560 = vmatmul.mubr.bf16.gmra.mrb[0].mxu0 %v4445
        %v4561 = vpop.f32.mrb[0].mxu0
        %v4562 = vadd.f32 0.0, %v4561
        %v4563 = vpop.f32.mrb[0].mxu0
        %v4564 = vpop.f32.mrb[0].mxu0
        %v4565 = vadd.f32 0.0, %v4564
        %v4566 = vpop.f32.mrb[0].mxu0
        %4567 = vdwg.mxu0
        %4568 = vmax.xlane.f32.xlu0 %v3927
        %v4569 = vpop.xlane.xlu0 %4568
        %4570 = vmax.xlane.f32.xlu0 %v3930
        %v4571 = vpop.xlane.xlu0 %4570
        %4572 = vmax.xlane.f32.xlu0 %v3935
        %v4573 = vpop.xlane.xlu0 %4572
        %4574 = vmax.xlane.f32.xlu0 %v3938
        %v4575 = vpop.xlane.xlu0 %4574
        %4576 = vmax.xlane.f32.xlu0 %v3943
        %v4577 = vpop.xlane.xlu0 %4576
        %4578 = vmax.xlane.f32.xlu0 %v3946
        %v4579 = vpop.xlane.xlu0 %4578
        %4580 = vmax.xlane.f32.xlu0 %v3951
        %v4581 = vpop.xlane.xlu0 %4580
        %4582 = vmax.xlane.f32.xlu0 %v3954
        %v4583 = vpop.xlane.xlu0 %4582
        %4584 = vmax.xlane.f32.xlu0 %v3959
        %v4585 = vpop.xlane.xlu0 %4584
        %4586 = vmax.xlane.f32.xlu0 %v3962
        %v4587 = vpop.xlane.xlu0 %4586
        %4588 = vmax.xlane.f32.xlu0 %v3967
        %v4589 = vpop.xlane.xlu0 %4588
        %4590 = vmax.xlane.f32.xlu0 %v3970
        %v4591 = vpop.xlane.xlu0 %4590
        %4592 = vmax.xlane.f32.xlu0 %v3975
        %v4593 = vpop.xlane.xlu0 %4592
        %4594 = vmax.xlane.f32.xlu0 %v3978
        %v4595 = vpop.xlane.xlu0 %4594
        %4596 = vmax.xlane.f32.xlu0 %v3983
        %v4597 = vpop.xlane.xlu0 %4596
        %4598 = vmax.xlane.f32.xlu0 %v3986
        %v4599 = vpop.xlane.xlu0 %4598
        %4600 = vmax.xlane.f32.xlu0 %v4120
        %v4601 = vpop.xlane.xlu0 %4600
        %4602 = vmax.xlane.f32.xlu0 %v4123
        %v4603 = vpop.xlane.xlu0 %4602
        %4604 = vmax.xlane.f32.xlu0 %v4128
        %v4605 = vpop.xlane.xlu0 %4604
        %4606 = vmax.xlane.f32.xlu0 %v4131
        %v4607 = vpop.xlane.xlu0 %4606
        %4608 = vmax.xlane.f32.xlu0 %v4136
        %v4609 = vpop.xlane.xlu0 %4608
        %4610 = vmax.xlane.f32.xlu0 %v4139
        %v4611 = vpop.xlane.xlu0 %4610
        %4612 = vmax.xlane.f32.xlu0 %v4144
        %v4613 = vpop.xlane.xlu0 %4612
        %4614 = vmax.xlane.f32.xlu0 %v4147
        %v4615 = vpop.xlane.xlu0 %4614
        %4616 = vmax.xlane.f32.xlu0 %v4152
        %v4617 = vpop.xlane.xlu0 %4616
        %4618 = vmax.xlane.f32.xlu0 %v4155
        %v4619 = vpop.xlane.xlu0 %4618
        %4620 = vmax.xlane.f32.xlu0 %v4160
        %v4621 = vpop.xlane.xlu0 %4620
        %4622 = vmax.xlane.f32.xlu0 %v4163
        %v4623 = vpop.xlane.xlu0 %4622
        %4624 = vmax.xlane.f32.xlu0 %v4168
        %v4625 = vpop.xlane.xlu0 %4624
        %4626 = vmax.xlane.f32.xlu0 %v4171
        %v4627 = vpop.xlane.xlu0 %4626
        %4628 = vmax.xlane.f32.xlu0 %v4176
        %v4629 = vpop.xlane.xlu0 %4628
        %4630 = vmax.xlane.f32.xlu0 %v4179
        %v4631 = vpop.xlane.xlu0 %4630
        %4632 = vmax.xlane.f32.xlu0 %v4313
        %v4633 = vpop.xlane.xlu0 %4632
        %4634 = vmax.xlane.f32.xlu0 %v4316
        %v4635 = vpop.xlane.xlu0 %4634
        %4636 = vmax.xlane.f32.xlu0 %v4321
        %v4637 = vpop.xlane.xlu0 %4636
        %4638 = vmax.xlane.f32.xlu0 %v4324
        %v4639 = vpop.xlane.xlu0 %4638
        %4640 = vmax.xlane.f32.xlu0 %v4329
        %v4641 = vpop.xlane.xlu0 %4640
        %4642 = vmax.xlane.f32.xlu0 %v4332
        %v4643 = vpop.xlane.xlu0 %4642
        %4644 = vmax.xlane.f32.xlu0 %v4337
        %v4645 = vpop.xlane.xlu0 %4644
        %4646 = vmax.xlane.f32.xlu0 %v4340
        %v4647 = vpop.xlane.xlu0 %4646
        %4648 = vmax.xlane.f32.xlu0 %v4345
        %v4649 = vpop.xlane.xlu0 %4648
        %4650 = vmax.xlane.f32.xlu0 %v4348
        %v4651 = vpop.xlane.xlu0 %4650
        %4652 = vmax.xlane.f32.xlu0 %v4353
        %v4653 = vpop.xlane.xlu0 %4652
        %4654 = vmax.xlane.f32.xlu0 %v4356
        %v4655 = vpop.xlane.xlu0 %4654
        %4656 = vmax.xlane.f32.xlu0 %v4361
        %v4657 = vpop.xlane.xlu0 %4656
        %4658 = vmax.xlane.f32.xlu0 %v4364
        %v4659 = vpop.xlane.xlu0 %4658
        %4660 = vmax.xlane.f32.xlu0 %v4369
        %v4661 = vpop.xlane.xlu0 %4660
        %4662 = vmax.xlane.f32.xlu0 %v4372
        %v4663 = vpop.xlane.xlu0 %4662
        %4664 = vmax.xlane.f32.xlu0 %v4506
        %v4665 = vpop.xlane.xlu0 %4664
        %4666 = vmax.xlane.f32.xlu0 %v4509
        %v4667 = vpop.xlane.xlu0 %4666
        %4668 = vmax.xlane.f32.xlu0 %v4514
        %v4669 = vpop.xlane.xlu0 %4668
        %4670 = vmax.xlane.f32.xlu0 %v4517
        %v4671 = vpop.xlane.xlu0 %4670
        %4672 = vmax.xlane.f32.xlu0 %v4522
        %v4673 = vpop.xlane.xlu0 %4672
        %4674 = vmax.xlane.f32.xlu0 %v4525
        %v4675 = vpop.xlane.xlu0 %4674
        %4676 = vmax.xlane.f32.xlu0 %v4530
        %v4677 = vpop.xlane.xlu0 %4676
        %4678 = vmax.xlane.f32.xlu0 %v4533
        %v4679 = vpop.xlane.xlu0 %4678
        %4680 = vmax.xlane.f32.xlu0 %v4538
        %v4681 = vpop.xlane.xlu0 %4680
        %4682 = vmax.xlane.f32.xlu0 %v4541
        %v4683 = vpop.xlane.xlu0 %4682
        %4684 = vmax.xlane.f32.xlu0 %v4546
        %v4685 = vpop.xlane.xlu0 %4684
        %4686 = vmax.xlane.f32.xlu0 %v4549
        %v4687 = vpop.xlane.xlu0 %4686
        %4688 = vmax.xlane.f32.xlu0 %v4554
        %v4689 = vpop.xlane.xlu0 %4688
        %4690 = vmax.xlane.f32.xlu0 %v4557
        %v4691 = vpop.xlane.xlu0 %4690
        %4692 = vmax.xlane.f32.xlu0 %v4562
        %v4693 = vpop.xlane.xlu0 %4692
        %4694 = vmax.xlane.f32.xlu0 %v4565
        %v4695 = vpop.xlane.xlu0 %4694
        %v4696 = vsub.f32 %v3927, %v4569
        %v4697 = vsub.f32 %v3930, %v4571
        %v4698 = vsub.f32 %v3935, %v4573
        %v4699 = vsub.f32 %v3938, %v4575
        %v4700 = vsub.f32 %v3943, %v4577
        %v4701 = vsub.f32 %v3946, %v4579
        %v4702 = vsub.f32 %v3951, %v4581
        %v4703 = vsub.f32 %v3954, %v4583
        %v4704 = vsub.f32 %v3959, %v4585
        %v4705 = vsub.f32 %v3962, %v4587
        %v4706 = vsub.f32 %v3967, %v4589
        %v4707 = vsub.f32 %v3970, %v4591
        %v4708 = vsub.f32 %v3975, %v4593
        %v4709 = vsub.f32 %v3978, %v4595
        %v4710 = vsub.f32 %v3983, %v4597
        %v4711 = vsub.f32 %v3986, %v4599
        %v4712 = vsub.f32 %v4120, %v4601
        %v4713 = vsub.f32 %v4123, %v4603
        %v4714 = vsub.f32 %v4128, %v4605
        %v4715 = vsub.f32 %v4131, %v4607
        %v4716 = vsub.f32 %v4136, %v4609
        %v4717 = vsub.f32 %v4139, %v4611
        %v4718 = vsub.f32 %v4144, %v4613
        %v4719 = vsub.f32 %v4147, %v4615
        %v4720 = vsub.f32 %v4152, %v4617
        %v4721 = vsub.f32 %v4155, %v4619
        %v4722 = vsub.f32 %v4160, %v4621
        %v4723 = vsub.f32 %v4163, %v4623
        %v4724 = vsub.f32 %v4168, %v4625
        %v4725 = vsub.f32 %v4171, %v4627
        %v4726 = vsub.f32 %v4176, %v4629
        %v4727 = vsub.f32 %v4179, %v4631
        %v4728 = vsub.f32 %v4313, %v4633
        %v4729 = vsub.f32 %v4316, %v4635
        %v4730 = vsub.f32 %v4321, %v4637
        %v4731 = vsub.f32 %v4324, %v4639
        %v4732 = vsub.f32 %v4329, %v4641
        %v4733 = vsub.f32 %v4332, %v4643
        %v4734 = vsub.f32 %v4337, %v4645
        %v4735 = vsub.f32 %v4340, %v4647
        %v4736 = vsub.f32 %v4345, %v4649
        %v4737 = vsub.f32 %v4348, %v4651
        %v4738 = vsub.f32 %v4353, %v4653
        %v4739 = vsub.f32 %v4356, %v4655
        %v4740 = vsub.f32 %v4361, %v4657
        %v4741 = vsub.f32 %v4364, %v4659
        %v4742 = vsub.f32 %v4369, %v4661
        %v4743 = vsub.f32 %v4372, %v4663
        %v4744 = vsub.f32 %v4506, %v4665
        %v4745 = vsub.f32 %v4509, %v4667
        %v4746 = vsub.f32 %v4514, %v4669
        %v4747 = vsub.f32 %v4517, %v4671
        %v4748 = vsub.f32 %v4522, %v4673
        %v4749 = vsub.f32 %v4525, %v4675
        %v4750 = vsub.f32 %v4530, %v4677
        %v4751 = vsub.f32 %v4533, %v4679
        %v4752 = vsub.f32 %v4538, %v4681
        %v4753 = vsub.f32 %v4541, %v4683
        %v4754 = vsub.f32 %v4546, %v4685
        %v4755 = vsub.f32 %v4549, %v4687
        %v4756 = vsub.f32 %v4554, %v4689
        %v4757 = vsub.f32 %v4557, %v4691
        %v4758 = vsub.f32 %v4562, %v4693
        %v4759 = vsub.f32 %v4565, %v4695
        %v4760 = vmul.f32 %v4696, 1.442695
        %v4761 = vpow.pop %v4760
        %v4762 = vmul.f32 %v4697, 1.442695
        %v4763 = vpow.pop %v4762
        %v4764 = vmul.f32 %v4698, 1.442695
        %v4765 = vpow.pop %v4764
        %v4766 = vmul.f32 %v4699, 1.442695
        %v4767 = vpow.pop %v4766
        %v4768 = vmul.f32 %v4700, 1.442695
        %v4769 = vpow.pop %v4768
        %v4770 = vmul.f32 %v4701, 1.442695
        %v4771 = vpow.pop %v4770
        %v4772 = vmul.f32 %v4702, 1.442695
        %v4773 = vpow.pop %v4772
        %v4774 = vmul.f32 %v4703, 1.442695
        %v4775 = vpow.pop %v4774
        %v4776 = vmul.f32 %v4704, 1.442695
        %v4777 = vpow.pop %v4776
        %v4778 = vmul.f32 %v4705, 1.442695
        %v4779 = vpow.pop %v4778
        %v4780 = vmul.f32 %v4706, 1.442695
        %v4781 = vpow.pop %v4780
        %v4782 = vmul.f32 %v4707, 1.442695
        %v4783 = vpow.pop %v4782
        %v4784 = vmul.f32 %v4708, 1.442695
        %v4785 = vpow.pop %v4784
        %v4786 = vmul.f32 %v4709, 1.442695
        %v4787 = vpow.pop %v4786
        %v4788 = vmul.f32 %v4710, 1.442695
        %v4789 = vpow.pop %v4788
        %v4790 = vmul.f32 %v4711, 1.442695
        %v4791 = vpow.pop %v4790
        %v4792 = vmul.f32 %v4712, 1.442695
        %v4793 = vpow.pop %v4792
        %v4794 = vmul.f32 %v4713, 1.442695
        %v4795 = vpow.pop %v4794
        %v4796 = vmul.f32 %v4714, 1.442695
        %v4797 = vpow.pop %v4796
        %v4798 = vmul.f32 %v4715, 1.442695
        %v4799 = vpow.pop %v4798
        %v4800 = vmul.f32 %v4716, 1.442695
        %v4801 = vpow.pop %v4800
        %v4802 = vmul.f32 %v4717, 1.442695
        %v4803 = vpow.pop %v4802
        %v4804 = vmul.f32 %v4718, 1.442695
        %v4805 = vpow.pop %v4804
        %v4806 = vmul.f32 %v4719, 1.442695
        %v4807 = vpow.pop %v4806
        %v4808 = vmul.f32 %v4720, 1.442695
        %v4809 = vpow.pop %v4808
        %v4810 = vmul.f32 %v4721, 1.442695
        %v4811 = vpow.pop %v4810
        %v4812 = vmul.f32 %v4722, 1.442695
        %v4813 = vpow.pop %v4812
        %v4814 = vmul.f32 %v4723, 1.442695
        %v4815 = vpow.pop %v4814
        %v4816 = vmul.f32 %v4724, 1.442695
        %v4817 = vpow.pop %v4816
        %v4818 = vmul.f32 %v4725, 1.442695
        %v4819 = vpow.pop %v4818
        %v4820 = vmul.f32 %v4726, 1.442695
        %v4821 = vpow.pop %v4820
        %v4822 = vmul.f32 %v4727, 1.442695
        %v4823 = vpow.pop %v4822
        %v4824 = vmul.f32 %v4728, 1.442695
        %v4825 = vpow.pop %v4824
        %v4826 = vmul.f32 %v4729, 1.442695
        %v4827 = vpow.pop %v4826
        %v4828 = vmul.f32 %v4730, 1.442695
        %v4829 = vpow.pop %v4828
        %v4830 = vmul.f32 %v4731, 1.442695
        %v4831 = vpow.pop %v4830
        %v4832 = vmul.f32 %v4732, 1.442695
        %v4833 = vpow.pop %v4832
        %v4834 = vmul.f32 %v4733, 1.442695
        %v4835 = vpow.pop %v4834
        %v4836 = vmul.f32 %v4734, 1.442695
        %v4837 = vpow.pop %v4836
        %v4838 = vmul.f32 %v4735, 1.442695
        %v4839 = vpow.pop %v4838
        %v4840 = vmul.f32 %v4736, 1.442695
        %v4841 = vpow.pop %v4840
        %v4842 = vmul.f32 %v4737, 1.442695
        %v4843 = vpow.pop %v4842
        %v4844 = vmul.f32 %v4738, 1.442695
        %v4845 = vpow.pop %v4844
        %v4846 = vmul.f32 %v4739, 1.442695
        %v4847 = vpow.pop %v4846
        %v4848 = vmul.f32 %v4740, 1.442695
        %v4849 = vpow.pop %v4848
        %v4850 = vmul.f32 %v4741, 1.442695
        %v4851 = vpow.pop %v4850
        %v4852 = vmul.f32 %v4742, 1.442695
        %v4853 = vpow.pop %v4852
        %v4854 = vmul.f32 %v4743, 1.442695
        %v4855 = vpow.pop %v4854
        %v4856 = vmul.f32 %v4744, 1.442695
        %v4857 = vpow.pop %v4856
        %v4858 = vmul.f32 %v4745, 1.442695
        %v4859 = vpow.pop %v4858
        %v4860 = vmul.f32 %v4746, 1.442695
        %v4861 = vpow.pop %v4860
        %v4862 = vmul.f32 %v4747, 1.442695
        %v4863 = vpow.pop %v4862
        %v4864 = vmul.f32 %v4748, 1.442695
        %v4865 = vpow.pop %v4864
        %v4866 = vmul.f32 %v4749, 1.442695
        %v4867 = vpow.pop %v4866
        %v4868 = vmul.f32 %v4750, 1.442695
        %v4869 = vpow.pop %v4868
        %v4870 = vmul.f32 %v4751, 1.442695
        %v4871 = vpow.pop %v4870
        %v4872 = vmul.f32 %v4752, 1.442695
        %v4873 = vpow.pop %v4872
        %v4874 = vmul.f32 %v4753, 1.442695
        %v4875 = vpow.pop %v4874
        %v4876 = vmul.f32 %v4754, 1.442695
        %v4877 = vpow.pop %v4876
        %v4878 = vmul.f32 %v4755, 1.442695
        %v4879 = vpow.pop %v4878
        %v4880 = vmul.f32 %v4756, 1.442695
        %v4881 = vpow.pop %v4880
        %v4882 = vmul.f32 %v4757, 1.442695
        %v4883 = vpow.pop %v4882
        %v4884 = vmul.f32 %v4758, 1.442695
        %v4885 = vpow.pop %v4884
        %v4886 = vmul.f32 %v4759, 1.442695
        %v4887 = vpow.pop %v4886
        %4888 = vadd.xlane.f32.xlu0 %v4761
        %v4889 = vpop.xlane.xlu0 %4888
        %4890 = vadd.xlane.f32.xlu0 %v4763
        %v4891 = vpop.xlane.xlu0 %4890
        %4892 = vadd.xlane.f32.xlu0 %v4765
        %v4893 = vpop.xlane.xlu0 %4892
        %4894 = vadd.xlane.f32.xlu0 %v4767
        %v4895 = vpop.xlane.xlu0 %4894
        %4896 = vadd.xlane.f32.xlu0 %v4769
        %v4897 = vpop.xlane.xlu0 %4896
        %4898 = vadd.xlane.f32.xlu0 %v4771
        %v4899 = vpop.xlane.xlu0 %4898
        %4900 = vadd.xlane.f32.xlu0 %v4773
        %v4901 = vpop.xlane.xlu0 %4900
        %4902 = vadd.xlane.f32.xlu0 %v4775
        %v4903 = vpop.xlane.xlu0 %4902
        %4904 = vadd.xlane.f32.xlu0 %v4777
        %v4905 = vpop.xlane.xlu0 %4904
        %4906 = vadd.xlane.f32.xlu0 %v4779
        %v4907 = vpop.xlane.xlu0 %4906
        %4908 = vadd.xlane.f32.xlu0 %v4781
        %v4909 = vpop.xlane.xlu0 %4908
        %4910 = vadd.xlane.f32.xlu0 %v4783
        %v4911 = vpop.xlane.xlu0 %4910
        %4912 = vadd.xlane.f32.xlu0 %v4785
        %v4913 = vpop.xlane.xlu0 %4912
        %4914 = vadd.xlane.f32.xlu0 %v4787
        %v4915 = vpop.xlane.xlu0 %4914
        %4916 = vadd.xlane.f32.xlu0 %v4789
        %v4917 = vpop.xlane.xlu0 %4916
        %4918 = vadd.xlane.f32.xlu0 %v4791
        %v4919 = vpop.xlane.xlu0 %4918
        %4920 = vadd.xlane.f32.xlu0 %v4793
        %v4921 = vpop.xlane.xlu0 %4920
        %4922 = vadd.xlane.f32.xlu0 %v4795
        %v4923 = vpop.xlane.xlu0 %4922
        %4924 = vadd.xlane.f32.xlu0 %v4797
        %v4925 = vpop.xlane.xlu0 %4924
        %4926 = vadd.xlane.f32.xlu0 %v4799
        %v4927 = vpop.xlane.xlu0 %4926
        %4928 = vadd.xlane.f32.xlu0 %v4801
        %v4929 = vpop.xlane.xlu0 %4928
        %4930 = vadd.xlane.f32.xlu0 %v4803
        %v4931 = vpop.xlane.xlu0 %4930
        %4932 = vadd.xlane.f32.xlu0 %v4805
        %v4933 = vpop.xlane.xlu0 %4932
        %4934 = vadd.xlane.f32.xlu0 %v4807
        %v4935 = vpop.xlane.xlu0 %4934
        %4936 = vadd.xlane.f32.xlu0 %v4809
        %v4937 = vpop.xlane.xlu0 %4936
        %4938 = vadd.xlane.f32.xlu0 %v4811
        %v4939 = vpop.xlane.xlu0 %4938
        %4940 = vadd.xlane.f32.xlu0 %v4813
        %v4941 = vpop.xlane.xlu0 %4940
        %4942 = vadd.xlane.f32.xlu0 %v4815
        %v4943 = vpop.xlane.xlu0 %4942
        %4944 = vadd.xlane.f32.xlu0 %v4817
        %v4945 = vpop.xlane.xlu0 %4944
        %4946 = vadd.xlane.f32.xlu0 %v4819
        %v4947 = vpop.xlane.xlu0 %4946
        %4948 = vadd.xlane.f32.xlu0 %v4821
        %v4949 = vpop.xlane.xlu0 %4948
        %4950 = vadd.xlane.f32.xlu0 %v4823
        %v4951 = vpop.xlane.xlu0 %4950
        %4952 = vadd.xlane.f32.xlu0 %v4825
        %v4953 = vpop.xlane.xlu0 %4952
        %4954 = vadd.xlane.f32.xlu0 %v4827
        %v4955 = vpop.xlane.xlu0 %4954
        %4956 = vadd.xlane.f32.xlu0 %v4829
        %v4957 = vpop.xlane.xlu0 %4956
        %4958 = vadd.xlane.f32.xlu0 %v4831
        %v4959 = vpop.xlane.xlu0 %4958
        %4960 = vadd.xlane.f32.xlu0 %v4833
        %v4961 = vpop.xlane.xlu0 %4960
        %4962 = vadd.xlane.f32.xlu0 %v4835
        %v4963 = vpop.xlane.xlu0 %4962
        %4964 = vadd.xlane.f32.xlu0 %v4837
        %v4965 = vpop.xlane.xlu0 %4964
        %4966 = vadd.xlane.f32.xlu0 %v4839
        %v4967 = vpop.xlane.xlu0 %4966
        %4968 = vadd.xlane.f32.xlu0 %v4841
        %v4969 = vpop.xlane.xlu0 %4968
        %4970 = vadd.xlane.f32.xlu0 %v4843
        %v4971 = vpop.xlane.xlu0 %4970
        %4972 = vadd.xlane.f32.xlu0 %v4845
        %v4973 = vpop.xlane.xlu0 %4972
        %4974 = vadd.xlane.f32.xlu0 %v4847
        %v4975 = vpop.xlane.xlu0 %4974
        %4976 = vadd.xlane.f32.xlu0 %v4849
        %v4977 = vpop.xlane.xlu0 %4976
        %4978 = vadd.xlane.f32.xlu0 %v4851
        %v4979 = vpop.xlane.xlu0 %4978
        %4980 = vadd.xlane.f32.xlu0 %v4853
        %v4981 = vpop.xlane.xlu0 %4980
        %4982 = vadd.xlane.f32.xlu0 %v4855
        %v4983 = vpop.xlane.xlu0 %4982
        %4984 = vadd.xlane.f32.xlu0 %v4857
        %v4985 = vpop.xlane.xlu0 %4984
        %4986 = vadd.xlane.f32.xlu0 %v4859
        %v4987 = vpop.xlane.xlu0 %4986
        %4988 = vadd.xlane.f32.xlu0 %v4861
        %v4989 = vpop.xlane.xlu0 %4988
        %4990 = vadd.xlane.f32.xlu0 %v4863
        %v4991 = vpop.xlane.xlu0 %4990
        %4992 = vadd.xlane.f32.xlu0 %v4865
        %v4993 = vpop.xlane.xlu0 %4992
        %4994 = vadd.xlane.f32.xlu0 %v4867
        %v4995 = vpop.xlane.xlu0 %4994
        %4996 = vadd.xlane.f32.xlu0 %v4869
        %v4997 = vpop.xlane.xlu0 %4996
        %4998 = vadd.xlane.f32.xlu0 %v4871
        %v4999 = vpop.xlane.xlu0 %4998
        %5000 = vadd.xlane.f32.xlu0 %v4873
        %v5001 = vpop.xlane.xlu0 %5000
        %5002 = vadd.xlane.f32.xlu0 %v4875
        %v5003 = vpop.xlane.xlu0 %5002
        %5004 = vadd.xlane.f32.xlu0 %v4877
        %v5005 = vpop.xlane.xlu0 %5004
        %5006 = vadd.xlane.f32.xlu0 %v4879
        %v5007 = vpop.xlane.xlu0 %5006
        %5008 = vadd.xlane.f32.xlu0 %v4881
        %v5009 = vpop.xlane.xlu0 %5008
        %5010 = vadd.xlane.f32.xlu0 %v4883
        %v5011 = vpop.xlane.xlu0 %5010
        %5012 = vadd.xlane.f32.xlu0 %v4885
        %v5013 = vpop.xlane.xlu0 %5012
        %5014 = vadd.xlane.f32.xlu0 %v4887
        %v5015 = vpop.xlane.xlu0 %5014
        %v5016 = vrcp.pop %v4889
        %v5017 = vrcp.pop %v4891
        %v5018 = vrcp.pop %v4893
        %v5019 = vrcp.pop %v4895
        %v5020 = vrcp.pop %v4897
        %v5021 = vrcp.pop %v4899
        %v5022 = vrcp.pop %v4901
        %v5023 = vrcp.pop %v4903
        %v5024 = vrcp.pop %v4905
        %v5025 = vrcp.pop %v4907
        %v5026 = vrcp.pop %v4909
        %v5027 = vrcp.pop %v4911
        %v5028 = vrcp.pop %v4913
        %v5029 = vrcp.pop %v4915
        %v5030 = vrcp.pop %v4917
        %v5031 = vrcp.pop %v4919
        %v5032 = vrcp.pop %v4921
        %v5033 = vrcp.pop %v4923
        %v5034 = vrcp.pop %v4925
        %v5035 = vrcp.pop %v4927
        %v5036 = vrcp.pop %v4929
        %v5037 = vrcp.pop %v4931
        %v5038 = vrcp.pop %v4933
        %v5039 = vrcp.pop %v4935
        %v5040 = vrcp.pop %v4937
        %v5041 = vrcp.pop %v4939
        %v5042 = vrcp.pop %v4941
        %v5043 = vrcp.pop %v4943
        %v5044 = vrcp.pop %v4945
        %v5045 = vrcp.pop %v4947
        %v5046 = vrcp.pop %v4949
        %v5047 = vrcp.pop %v4951
        %v5048 = vrcp.pop %v4953
        %v5049 = vrcp.pop %v4955
        %v5050 = vrcp.pop %v4957
        %v5051 = vrcp.pop %v4959
        %v5052 = vrcp.pop %v4961
        %v5053 = vrcp.pop %v4963
        %v5054 = vrcp.pop %v4965
        %v5055 = vrcp.pop %v4967
        %v5056 = vrcp.pop %v4969
        %v5057 = vrcp.pop %v4971
        %v5058 = vrcp.pop %v4973
        %v5059 = vrcp.pop %v4975
        %v5060 = vrcp.pop %v4977
        %v5061 = vrcp.pop %v4979
        %v5062 = vrcp.pop %v4981
        %v5063 = vrcp.pop %v4983
        %v5064 = vrcp.pop %v4985
        %v5065 = vrcp.pop %v4987
        %v5066 = vrcp.pop %v4989
        %v5067 = vrcp.pop %v4991
        %v5068 = vrcp.pop %v4993
        %v5069 = vrcp.pop %v4995
        %v5070 = vrcp.pop %v4997
        %v5071 = vrcp.pop %v4999
        %v5072 = vrcp.pop %v5001
        %v5073 = vrcp.pop %v5003
        %v5074 = vrcp.pop %v5005
        %v5075 = vrcp.pop %v5007
        %v5076 = vrcp.pop %v5009
        %v5077 = vrcp.pop %v5011
        %v5078 = vrcp.pop %v5013
        %v5079 = vrcp.pop %v5015
        %v5080 = vmul.f32 %v4761, %v5016
        %v5081 = vmul.f32 %v4763, %v5017
        %v5082 = vmul.f32 %v4765, %v5018
        %v5083 = vmul.f32 %v4767, %v5019
        %v5084 = vmul.f32 %v4769, %v5020
        %v5085 = vmul.f32 %v4771, %v5021
        %v5086 = vmul.f32 %v4773, %v5022
        %v5087 = vmul.f32 %v4775, %v5023
        %v5088 = vmul.f32 %v4777, %v5024
        %v5089 = vmul.f32 %v4779, %v5025
        %v5090 = vmul.f32 %v4781, %v5026
        %v5091 = vmul.f32 %v4783, %v5027
        %v5092 = vmul.f32 %v4785, %v5028
        %v5093 = vmul.f32 %v4787, %v5029
        %v5094 = vmul.f32 %v4789, %v5030
        %v5095 = vmul.f32 %v4791, %v5031
        %v5096 = vmul.f32 %v4793, %v5032
        %v5097 = vmul.f32 %v4795, %v5033
        %v5098 = vmul.f32 %v4797, %v5034
        %v5099 = vmul.f32 %v4799, %v5035
        %v5100 = vmul.f32 %v4801, %v5036
        %v5101 = vmul.f32 %v4803, %v5037
        %v5102 = vmul.f32 %v4805, %v5038
        %v5103 = vmul.f32 %v4807, %v5039
        %v5104 = vmul.f32 %v4809, %v5040
        %v5105 = vmul.f32 %v4811, %v5041
        %v5106 = vmul.f32 %v4813, %v5042
        %v5107 = vmul.f32 %v4815, %v5043
        %v5108 = vmul.f32 %v4817, %v5044
        %v5109 = vmul.f32 %v4819, %v5045
        %v5110 = vmul.f32 %v4821, %v5046
        %v5111 = vmul.f32 %v4823, %v5047
        %v5112 = vmul.f32 %v4825, %v5048
        %v5113 = vmul.f32 %v4827, %v5049
        %v5114 = vmul.f32 %v4829, %v5050
        %v5115 = vmul.f32 %v4831, %v5051
        %v5116 = vmul.f32 %v4833, %v5052
        %v5117 = vmul.f32 %v4835, %v5053
        %v5118 = vmul.f32 %v4837, %v5054
        %v5119 = vmul.f32 %v4839, %v5055
        %v5120 = vmul.f32 %v4841, %v5056
        %v5121 = vmul.f32 %v4843, %v5057
        %v5122 = vmul.f32 %v4845, %v5058
        %v5123 = vmul.f32 %v4847, %v5059
        %v5124 = vmul.f32 %v4849, %v5060
        %v5125 = vmul.f32 %v4851, %v5061
        %v5126 = vmul.f32 %v4853, %v5062
        %v5127 = vmul.f32 %v4855, %v5063
        %v5128 = vmul.f32 %v4857, %v5064
        %v5129 = vmul.f32 %v4859, %v5065
        %v5130 = vmul.f32 %v4861, %v5066
        %v5131 = vmul.f32 %v4863, %v5067
        %v5132 = vmul.f32 %v4865, %v5068
        %v5133 = vmul.f32 %v4867, %v5069
        %v5134 = vmul.f32 %v4869, %v5070
        %v5135 = vmul.f32 %v4871, %v5071
        %v5136 = vmul.f32 %v4873, %v5072
        %v5137 = vmul.f32 %v4875, %v5073
        %v5138 = vmul.f32 %v4877, %v5074
        %v5139 = vmul.f32 %v4879, %v5075
        %v5140 = vmul.f32 %v4881, %v5076
        %v5141 = vmul.f32 %v4883, %v5077
        %v5142 = vmul.f32 %v4885, %v5078
        %v5143 = vmul.f32 %v4887, %v5079
        %v5144 = vpack.c.bf16 %v5081, %v5080
        %v5145 = vpack.c.bf16 %v5083, %v5082
        %v5146 = vpack.c.bf16 %v5085, %v5084
        %v5147 = vpack.c.bf16 %v5087, %v5086
        %v5148 = vpack.c.bf16 %v5089, %v5088
        %v5149 = vpack.c.bf16 %v5091, %v5090
        %v5150 = vpack.c.bf16 %v5093, %v5092
        %v5151 = vpack.c.bf16 %v5095, %v5094
        %v5152 = vpack.c.bf16 %v5097, %v5096
        %v5153 = vpack.c.bf16 %v5099, %v5098
        %v5154 = vpack.c.bf16 %v5101, %v5100
        %v5155 = vpack.c.bf16 %v5103, %v5102
        %v5156 = vpack.c.bf16 %v5105, %v5104
        %v5157 = vpack.c.bf16 %v5107, %v5106
        %v5158 = vpack.c.bf16 %v5109, %v5108
        %v5159 = vpack.c.bf16 %v5111, %v5110
        %v5160 = vpack.c.bf16 %v5113, %v5112
        %v5161 = vpack.c.bf16 %v5115, %v5114
        %v5162 = vpack.c.bf16 %v5117, %v5116
        %v5163 = vpack.c.bf16 %v5119, %v5118
        %v5164 = vpack.c.bf16 %v5121, %v5120
        %v5165 = vpack.c.bf16 %v5123, %v5122
        %v5166 = vpack.c.bf16 %v5125, %v5124
        %v5167 = vpack.c.bf16 %v5127, %v5126
        %v5168 = vpack.c.bf16 %v5129, %v5128
        %v5169 = vpack.c.bf16 %v5131, %v5130
        %v5170 = vpack.c.bf16 %v5133, %v5132
        %v5171 = vpack.c.bf16 %v5135, %v5134
        %v5172 = vpack.c.bf16 %v5137, %v5136
        %v5173 = vpack.c.bf16 %v5139, %v5138
        %v5174 = vpack.c.bf16 %v5141, %v5140
        %v5175 = vpack.c.bf16 %v5143, %v5142
        %5184 = vrot.lane.b32.xlu0 %v2155, 96
        %v5185 = vpop.permute.xlu0 %5184
        %5186 = vrot.lane.b32.xlu0 %v2156, 96
        %v5187 = vpop.permute.xlu0 %5186
        %5188 = vrot.lane.b32.xlu0 %v2157, 96
        %v5189 = vpop.permute.xlu0 %5188
        %5190 = vrot.lane.b32.xlu0 %v2158, 96
        %v5191 = vpop.permute.xlu0 %5190
        %5192 = vrot.lane.b32.xlu0 %v2159, 96
        %v5193 = vpop.permute.xlu0 %5192
        %5194 = vrot.lane.b32.xlu0 %v2160, 96
        %v5195 = vpop.permute.xlu0 %5194
        %5196 = vrot.lane.b32.xlu0 %v2161, 96
        %v5197 = vpop.permute.xlu0 %5196
        %5198 = vrot.lane.b32.xlu0 %v2162, 96
        %v5199 = vpop.permute.xlu0 %5198
        %5208 = vmatprep.subr.bf16.mxu0 0
        %5209 = vmatpush1.bf16.msra.mxu0 %v5185
        %5210 = vmatprep.subr.bf16.mxu0 0
        %5211 = vmatpush1.bf16.msra.mxu0 %v5187
        %5212 = vmatprep.subr.bf16.mxu0 0
        %5213 = vmatpush1.bf16.msra.mxu0 %v5189
        %5214 = vmatprep.subr.bf16.mxu0 0
        %5215 = vmatpush1.bf16.msra.mxu0 %v5191
        %5216 = vmatprep.subr.bf16.mxu0 0
        %5217 = vmatpush1.bf16.msra.mxu0 %v5193
        %5218 = vmatprep.subr.bf16.mxu0 0
        %5219 = vmatpush1.bf16.msra.mxu0 %v5195
        %5220 = vmatprep.subr.bf16.mxu0 0
        %5221 = vmatpush1.bf16.msra.mxu0 %v5197
        %5222 = vmatprep.subr.bf16.mxu0 0
        %5223 = vmatpush1.bf16.msra.mxu0 %v5199
        %5224 = vmatprep.subr.bf16.mxu0 0
        %5225 = vmatpush1.bf16.msra.mxu0 0
        %5226 = vmatprep.subr.bf16.mxu0 0
        %5227 = vmatpush1.bf16.msra.mxu0 0
        %5228 = vmatprep.subr.bf16.mxu0 0
        %5229 = vmatpush1.bf16.msra.mxu0 0
        %5230 = vmatprep.subr.bf16.mxu0 0
        %5231 = vmatpush1.bf16.msra.mxu0 0
        %5232 = vmatprep.subr.bf16.mxu0 0
        %5233 = vmatpush1.bf16.msra.mxu0 0
        %5234 = vmatprep.subr.bf16.mxu0 0
        %5235 = vmatpush1.bf16.msra.mxu0 0
        %5236 = vmatprep.subr.bf16.mxu0 0
        %5237 = vmatpush1.bf16.msra.mxu0 0
        %5238 = vmatprep.subr.bf16.mxu0 0
        %5239 = vmatpush1.bf16.msra.mxu0 0
        %5240 = vmatprep.mubr.bf16.mxu0 0
        %5241 = vmatmul.mubr.bf16.gmra.mrb[0].mxu0 %v5144
        %v5242 = vpop.f32.mrb[0].mxu0
        %v5243 = vadd.f32 0.0, %v5242
        %v5244 = vpop.f32.mrb[0].mxu0
        %v5245 = vpop.f32.mrb[0].mxu0
        %v5246 = vadd.f32 0.0, %v5245
        %v5247 = vpop.f32.mrb[0].mxu0
        %5248 = vmatprep.mubr.bf16.mxu0 0
        %5249 = vmatmul.mubr.bf16.gmra.mrb[0].mxu0 %v5145
        %v5250 = vpop.f32.mrb[0].mxu0
        %v5251 = vadd.f32 0.0, %v5250
        %v5252 = vpop.f32.mrb[0].mxu0
        %v5253 = vpop.f32.mrb[0].mxu0
        %v5254 = vadd.f32 0.0, %v5253
        %v5255 = vpop.f32.mrb[0].mxu0
        %5256 = vmatprep.mubr.bf16.mxu0 0
        %5257 = vmatmul.mubr.bf16.gmra.mrb[0].mxu0 %v5146
        %v5258 = vpop.f32.mrb[0].mxu0
        %v5259 = vadd.f32 0.0, %v5258
        %v5260 = vpop.f32.mrb[0].mxu0
        %v5261 = vpop.f32.mrb[0].mxu0
        %v5262 = vadd.f32 0.0, %v5261
        %v5263 = vpop.f32.mrb[0].mxu0
        %5264 = vmatprep.mubr.bf16.mxu0 0
        %5265 = vmatmul.mubr.bf16.gmra.mrb[0].mxu0 %v5147
        %v5266 = vpop.f32.mrb[0].mxu0
        %v5267 = vadd.f32 0.0, %v5266
        %v5268 = vpop.f32.mrb[0].mxu0
        %v5269 = vpop.f32.mrb[0].mxu0
        %v5270 = vadd.f32 0.0, %v5269
        %v5271 = vpop.f32.mrb[0].mxu0
        %5272 = vmatprep.mubr.bf16.mxu0 0
        %5273 = vmatmul.mubr.bf16.gmra.mrb[0].mxu0 %v5148
        %v5274 = vpop.f32.mrb[0].mxu0
        %v5275 = vadd.f32 0.0, %v5274
        %v5276 = vpop.f32.mrb[0].mxu0
        %v5277 = vpop.f32.mrb[0].mxu0
        %v5278 = vadd.f32 0.0, %v5277
        %v5279 = vpop.f32.mrb[0].mxu0
        %5280 = vmatprep.mubr.bf16.mxu0 0
        %5281 = vmatmul.mubr.bf16.gmra.mrb[0].mxu0 %v5149
        %v5282 = vpop.f32.mrb[0].mxu0
        %v5283 = vadd.f32 0.0, %v5282
        %v5284 = vpop.f32.mrb[0].mxu0
        %v5285 = vpop.f32.mrb[0].mxu0
        %v5286 = vadd.f32 0.0, %v5285
        %v5287 = vpop.f32.mrb[0].mxu0
        %5288 = vmatprep.mubr.bf16.mxu0 0
        %5289 = vmatmul.mubr.bf16.gmra.mrb[0].mxu0 %v5150
        %v5290 = vpop.f32.mrb[0].mxu0
        %v5291 = vadd.f32 0.0, %v5290
        %v5292 = vpop.f32.mrb[0].mxu0
        %v5293 = vpop.f32.mrb[0].mxu0
        %v5294 = vadd.f32 0.0, %v5293
        %v5295 = vpop.f32.mrb[0].mxu0
        %5296 = vmatprep.mubr.bf16.mxu0 0
        %5297 = vmatmul.mubr.bf16.gmra.mrb[0].mxu0 %v5151
        %v5298 = vpop.f32.mrb[0].mxu0
        %v5299 = vadd.f32 0.0, %v5298
        %v5300 = vpop.f32.mrb[0].mxu0
        %v5301 = vpop.f32.mrb[0].mxu0
        %v5302 = vadd.f32 0.0, %v5301
        %v5303 = vpop.f32.mrb[0].mxu0
        %5304 = vdwg.mxu0
        %5313 = vrot.lane.b32.xlu0 %v2163, 96
        %v5314 = vpop.permute.xlu0 %5313
        %5315 = vrot.lane.b32.xlu0 %v2164, 96
        %v5316 = vpop.permute.xlu0 %5315
        %5317 = vrot.lane.b32.xlu0 %v2165, 96
        %v5318 = vpop.permute.xlu0 %5317
        %5319 = vrot.lane.b32.xlu0 %v2166, 96
        %v5320 = vpop.permute.xlu0 %5319
        %5321 = vrot.lane.b32.xlu0 %v2167, 96
        %v5322 = vpop.permute.xlu0 %5321
        %5323 = vrot.lane.b32.xlu0 %v2168, 96
        %v5324 = vpop.permute.xlu0 %5323
        %5325 = vrot.lane.b32.xlu0 %v2169, 96
        %v5326 = vpop.permute.xlu0 %5325
        %5327 = vrot.lane.b32.xlu0 %v2170, 96
        %v5328 = vpop.permute.xlu0 %5327
        %5337 = vmatprep.subr.bf16.mxu0 0
        %5338 = vmatpush1.bf16.msra.mxu0 %v5314
        %5339 = vmatprep.subr.bf16.mxu0 0
        %5340 = vmatpush1.bf16.msra.mxu0 %v5316
        %5341 = vmatprep.subr.bf16.mxu0 0
        %5342 = vmatpush1.bf16.msra.mxu0 %v5318
        %5343 = vmatprep.subr.bf16.mxu0 0
        %5344 = vmatpush1.bf16.msra.mxu0 %v5320
        %5345 = vmatprep.subr.bf16.mxu0 0
        %5346 = vmatpush1.bf16.msra.mxu0 %v5322
        %5347 = vmatprep.subr.bf16.mxu0 0
        %5348 = vmatpush1.bf16.msra.mxu0 %v5324
        %5349 = vmatprep.subr.bf16.mxu0 0
        %5350 = vmatpush1.bf16.msra.mxu0 %v5326
        %5351 = vmatprep.subr.bf16.mxu0 0
        %5352 = vmatpush1.bf16.msra.mxu0 %v5328
        %5353 = vmatprep.subr.bf16.mxu0 0
        %5354 = vmatpush1.bf16.msra.mxu0 0
        %5355 = vmatprep.subr.bf16.mxu0 0
        %5356 = vmatpush1.bf16.msra.mxu0 0
        %5357 = vmatprep.subr.bf16.mxu0 0
        %5358 = vmatpush1.bf16.msra.mxu0 0
        %5359 = vmatprep.subr.bf16.mxu0 0
        %5360 = vmatpush1.bf16.msra.mxu0 0
        %5361 = vmatprep.subr.bf16.mxu0 0
        %5362 = vmatpush1.bf16.msra.mxu0 0
        %5363 = vmatprep.subr.bf16.mxu0 0
        %5364 = vmatpush1.bf16.msra.mxu0 0
        %5365 = vmatprep.subr.bf16.mxu0 0
        %5366 = vmatpush1.bf16.msra.mxu0 0
        %5367 = vmatprep.subr.bf16.mxu0 0
        %5368 = vmatpush1.bf16.msra.mxu0 0
        %5369 = vmatprep.mubr.bf16.mxu0 0
        %5370 = vmatmul.mubr.bf16.gmra.mrb[0].mxu0 %v5152
        %v5371 = vpop.f32.mrb[0].mxu0
        %v5372 = vadd.f32 0.0, %v5371
        %v5373 = vpop.f32.mrb[0].mxu0
        %v5374 = vpop.f32.mrb[0].mxu0
        %v5375 = vadd.f32 0.0, %v5374
        %v5376 = vpop.f32.mrb[0].mxu0
        %5377 = vmatprep.mubr.bf16.mxu0 0
        %5378 = vmatmul.mubr.bf16.gmra.mrb[0].mxu0 %v5153
        %v5379 = vpop.f32.mrb[0].mxu0
        %v5380 = vadd.f32 0.0, %v5379
        %v5381 = vpop.f32.mrb[0].mxu0
        %v5382 = vpop.f32.mrb[0].mxu0
        %v5383 = vadd.f32 0.0, %v5382
        %v5384 = vpop.f32.mrb[0].mxu0
        %5385 = vmatprep.mubr.bf16.mxu0 0
        %5386 = vmatmul.mubr.bf16.gmra.mrb[0].mxu0 %v5154
        %v5387 = vpop.f32.mrb[0].mxu0
        %v5388 = vadd.f32 0.0, %v5387
        %v5389 = vpop.f32.mrb[0].mxu0
        %v5390 = vpop.f32.mrb[0].mxu0
        %v5391 = vadd.f32 0.0, %v5390
        %v5392 = vpop.f32.mrb[0].mxu0
        %5393 = vmatprep.mubr.bf16.mxu0 0
        %5394 = vmatmul.mubr.bf16.gmra.mrb[0].mxu0 %v5155
        %v5395 = vpop.f32.mrb[0].mxu0
        %v5396 = vadd.f32 0.0, %v5395
        %v5397 = vpop.f32.mrb[0].mxu0
        %v5398 = vpop.f32.mrb[0].mxu0
        %v5399 = vadd.f32 0.0, %v5398
        %v5400 = vpop.f32.mrb[0].mxu0
        %5401 = vmatprep.mubr.bf16.mxu0 0
        %5402 = vmatmul.mubr.bf16.gmra.mrb[0].mxu0 %v5156
        %v5403 = vpop.f32.mrb[0].mxu0
        %v5404 = vadd.f32 0.0, %v5403
        %v5405 = vpop.f32.mrb[0].mxu0
        %v5406 = vpop.f32.mrb[0].mxu0
        %v5407 = vadd.f32 0.0, %v5406
        %v5408 = vpop.f32.mrb[0].mxu0
        %5409 = vmatprep.mubr.bf16.mxu0 0
        %5410 = vmatmul.mubr.bf16.gmra.mrb[0].mxu0 %v5157
        %v5411 = vpop.f32.mrb[0].mxu0
        %v5412 = vadd.f32 0.0, %v5411
        %v5413 = vpop.f32.mrb[0].mxu0
        %v5414 = vpop.f32.mrb[0].mxu0
        %v5415 = vadd.f32 0.0, %v5414
        %v5416 = vpop.f32.mrb[0].mxu0
        %5417 = vmatprep.mubr.bf16.mxu0 0
        %5418 = vmatmul.mubr.bf16.gmra.mrb[0].mxu0 %v5158
        %v5419 = vpop.f32.mrb[0].mxu0
        %v5420 = vadd.f32 0.0, %v5419
        %v5421 = vpop.f32.mrb[0].mxu0
        %v5422 = vpop.f32.mrb[0].mxu0
        %v5423 = vadd.f32 0.0, %v5422
        %v5424 = vpop.f32.mrb[0].mxu0
        %5425 = vmatprep.mubr.bf16.mxu0 0
        %5426 = vmatmul.mubr.bf16.gmra.mrb[0].mxu0 %v5159
        %v5427 = vpop.f32.mrb[0].mxu0
        %v5428 = vadd.f32 0.0, %v5427
        %v5429 = vpop.f32.mrb[0].mxu0
        %v5430 = vpop.f32.mrb[0].mxu0
        %v5431 = vadd.f32 0.0, %v5430
        %v5432 = vpop.f32.mrb[0].mxu0
        %5433 = vdwg.mxu0
        %5442 = vrot.lane.b32.xlu0 %v2171, 96
        %v5443 = vpop.permute.xlu0 %5442
        %5444 = vrot.lane.b32.xlu0 %v2172, 96
        %v5445 = vpop.permute.xlu0 %5444
        %5446 = vrot.lane.b32.xlu0 %v2173, 96
        %v5447 = vpop.permute.xlu0 %5446
        %5448 = vrot.lane.b32.xlu0 %v2174, 96
        %v5449 = vpop.permute.xlu0 %5448
        %5450 = vrot.lane.b32.xlu0 %v2175, 96
        %v5451 = vpop.permute.xlu0 %5450
        %5452 = vrot.lane.b32.xlu0 %v2176, 96
        %v5453 = vpop.permute.xlu0 %5452
        %5454 = vrot.lane.b32.xlu0 %v2177, 96
        %v5455 = vpop.permute.xlu0 %5454
        %5456 = vrot.lane.b32.xlu0 %v2178, 96
        %v5457 = vpop.permute.xlu0 %5456
        %5466 = vmatprep.subr.bf16.mxu0 0
        %5467 = vmatpush1.bf16.msra.mxu0 %v5443
        %5468 = vmatprep.subr.bf16.mxu0 0
        %5469 = vmatpush1.bf16.msra.mxu0 %v5445
        %5470 = vmatprep.subr.bf16.mxu0 0
        %5471 = vmatpush1.bf16.msra.mxu0 %v5447
        %5472 = vmatprep.subr.bf16.mxu0 0
        %5473 = vmatpush1.bf16.msra.mxu0 %v5449
        %5474 = vmatprep.subr.bf16.mxu0 0
        %5475 = vmatpush1.bf16.msra.mxu0 %v5451
        %5476 = vmatprep.subr.bf16.mxu0 0
        %5477 = vmatpush1.bf16.msra.mxu0 %v5453
        %5478 = vmatprep.subr.bf16.mxu0 0
        %5479 = vmatpush1.bf16.msra.mxu0 %v5455
        %5480 = vmatprep.subr.bf16.mxu0 0
        %5481 = vmatpush1.bf16.msra.mxu0 %v5457
        %5482 = vmatprep.subr.bf16.mxu0 0
        %5483 = vmatpush1.bf16.msra.mxu0 0
        %5484 = vmatprep.subr.bf16.mxu0 0
        %5485 = vmatpush1.bf16.msra.mxu0 0
        %5486 = vmatprep.subr.bf16.mxu0 0
        %5487 = vmatpush1.bf16.msra.mxu0 0
        %5488 = vmatprep.subr.bf16.mxu0 0
        %5489 = vmatpush1.bf16.msra.mxu0 0
        %5490 = vmatprep.subr.bf16.mxu0 0
        %5491 = vmatpush1.bf16.msra.mxu0 0
        %5492 = vmatprep.subr.bf16.mxu0 0
        %5493 = vmatpush1.bf16.msra.mxu0 0
        %5494 = vmatprep.subr.bf16.mxu0 0
        %5495 = vmatpush1.bf16.msra.mxu0 0
        %5496 = vmatprep.subr.bf16.mxu0 0
        %5497 = vmatpush1.bf16.msra.mxu0 0
        %5498 = vmatprep.mubr.bf16.mxu0 0
        %5499 = vmatmul.mubr.bf16.gmra.mrb[0].mxu0 %v5160
        %v5500 = vpop.f32.mrb[0].mxu0
        %v5501 = vadd.f32 0.0, %v5500
        %v5502 = vpop.f32.mrb[0].mxu0
        %v5503 = vpop.f32.mrb[0].mxu0
        %v5504 = vadd.f32 0.0, %v5503
        %v5505 = vpop.f32.mrb[0].mxu0
        %5506 = vmatprep.mubr.bf16.mxu0 0
        %5507 = vmatmul.mubr.bf16.gmra.mrb[0].mxu0 %v5161
        %v5508 = vpop.f32.mrb[0].mxu0
        %v5509 = vadd.f32 0.0, %v5508
        %v5510 = vpop.f32.mrb[0].mxu0
        %v5511 = vpop.f32.mrb[0].mxu0
        %v5512 = vadd.f32 0.0, %v5511
        %v5513 = vpop.f32.mrb[0].mxu0
        %5514 = vmatprep.mubr.bf16.mxu0 0
        %5515 = vmatmul.mubr.bf16.gmra.mrb[0].mxu0 %v5162
        %v5516 = vpop.f32.mrb[0].mxu0
        %v5517 = vadd.f32 0.0, %v5516
        %v5518 = vpop.f32.mrb[0].mxu0
        %v5519 = vpop.f32.mrb[0].mxu0
        %v5520 = vadd.f32 0.0, %v5519
        %v5521 = vpop.f32.mrb[0].mxu0
        %5522 = vmatprep.mubr.bf16.mxu0 0
        %5523 = vmatmul.mubr.bf16.gmra.mrb[0].mxu0 %v5163
        %v5524 = vpop.f32.mrb[0].mxu0
        %v5525 = vadd.f32 0.0, %v5524
        %v5526 = vpop.f32.mrb[0].mxu0
        %v5527 = vpop.f32.mrb[0].mxu0
        %v5528 = vadd.f32 0.0, %v5527
        %v5529 = vpop.f32.mrb[0].mxu0
        %5530 = vmatprep.mubr.bf16.mxu0 0
        %5531 = vmatmul.mubr.bf16.gmra.mrb[0].mxu0 %v5164
        %v5532 = vpop.f32.mrb[0].mxu0
        %v5533 = vadd.f32 0.0, %v5532
        %v5534 = vpop.f32.mrb[0].mxu0
        %v5535 = vpop.f32.mrb[0].mxu0
        %v5536 = vadd.f32 0.0, %v5535
        %v5537 = vpop.f32.mrb[0].mxu0
        %5538 = vmatprep.mubr.bf16.mxu0 0
        %5539 = vmatmul.mubr.bf16.gmra.mrb[0].mxu0 %v5165
        %v5540 = vpop.f32.mrb[0].mxu0
        %v5541 = vadd.f32 0.0, %v5540
        %v5542 = vpop.f32.mrb[0].mxu0
        %v5543 = vpop.f32.mrb[0].mxu0
        %v5544 = vadd.f32 0.0, %v5543
        %v5545 = vpop.f32.mrb[0].mxu0
        %5546 = vmatprep.mubr.bf16.mxu0 0
        %5547 = vmatmul.mubr.bf16.gmra.mrb[0].mxu0 %v5166
        %v5548 = vpop.f32.mrb[0].mxu0
        %v5549 = vadd.f32 0.0, %v5548
        %v5550 = vpop.f32.mrb[0].mxu0
        %v5551 = vpop.f32.mrb[0].mxu0
        %v5552 = vadd.f32 0.0, %v5551
        %v5553 = vpop.f32.mrb[0].mxu0
        %5554 = vmatprep.mubr.bf16.mxu0 0
        %5555 = vmatmul.mubr.bf16.gmra.mrb[0].mxu0 %v5167
        %v5556 = vpop.f32.mrb[0].mxu0
        %v5557 = vadd.f32 0.0, %v5556
        %v5558 = vpop.f32.mrb[0].mxu0
        %v5559 = vpop.f32.mrb[0].mxu0
        %v5560 = vadd.f32 0.0, %v5559
        %v5561 = vpop.f32.mrb[0].mxu0
        %5562 = vdwg.mxu0
        %5571 = vrot.lane.b32.xlu0 %v2179, 96
        %v5572 = vpop.permute.xlu0 %5571
        %5573 = vrot.lane.b32.xlu0 %v2180, 96
        %v5574 = vpop.permute.xlu0 %5573
        %5575 = vrot.lane.b32.xlu0 %v2181, 96
        %v5576 = vpop.permute.xlu0 %5575
        %5577 = vrot.lane.b32.xlu0 %v2182, 96
        %v5578 = vpop.permute.xlu0 %5577
        %5579 = vrot.lane.b32.xlu0 %v2183, 96
        %v5580 = vpop.permute.xlu0 %5579
        %5581 = vrot.lane.b32.xlu0 %v2184, 96
        %v5582 = vpop.permute.xlu0 %5581
        %5583 = vrot.lane.b32.xlu0 %v2185, 96
        %v5584 = vpop.permute.xlu0 %5583
        %5585 = vrot.lane.b32.xlu0 %v2186, 96
        %v5586 = vpop.permute.xlu0 %5585
        %5595 = vmatprep.subr.bf16.mxu0 0
        %5596 = vmatpush1.bf16.msra.mxu0 %v5572
        %5597 = vmatprep.subr.bf16.mxu0 0
        %5598 = vmatpush1.bf16.msra.mxu0 %v5574
        %5599 = vmatprep.subr.bf16.mxu0 0
        %5600 = vmatpush1.bf16.msra.mxu0 %v5576
        %5601 = vmatprep.subr.bf16.mxu0 0
        %5602 = vmatpush1.bf16.msra.mxu0 %v5578
        %5603 = vmatprep.subr.bf16.mxu0 0
        %5604 = vmatpush1.bf16.msra.mxu0 %v5580
        %5605 = vmatprep.subr.bf16.mxu0 0
        %5606 = vmatpush1.bf16.msra.mxu0 %v5582
        %5607 = vmatprep.subr.bf16.mxu0 0
        %5608 = vmatpush1.bf16.msra.mxu0 %v5584
        %5609 = vmatprep.subr.bf16.mxu0 0
        %5610 = vmatpush1.bf16.msra.mxu0 %v5586
        %5611 = vmatprep.subr.bf16.mxu0 0
        %5612 = vmatpush1.bf16.msra.mxu0 0
        %5613 = vmatprep.subr.bf16.mxu0 0
        %5614 = vmatpush1.bf16.msra.mxu0 0
        %5615 = vmatprep.subr.bf16.mxu0 0
        %5616 = vmatpush1.bf16.msra.mxu0 0
        %5617 = vmatprep.subr.bf16.mxu0 0
        %5618 = vmatpush1.bf16.msra.mxu0 0
        %5619 = vmatprep.subr.bf16.mxu0 0
        %5620 = vmatpush1.bf16.msra.mxu0 0
        %5621 = vmatprep.subr.bf16.mxu0 0
        %5622 = vmatpush1.bf16.msra.mxu0 0
        %5623 = vmatprep.subr.bf16.mxu0 0
        %5624 = vmatpush1.bf16.msra.mxu0 0
        %5625 = vmatprep.subr.bf16.mxu0 0
        %5626 = vmatpush1.bf16.msra.mxu0 0
        %5627 = vmatprep.mubr.bf16.mxu0 0
        %5628 = vmatmul.mubr.bf16.gmra.mrb[0].mxu0 %v5168
        %v5629 = vpop.f32.mrb[0].mxu0
        %v5630 = vadd.f32 0.0, %v5629
        %v5631 = vpop.f32.mrb[0].mxu0
        %v5632 = vpop.f32.mrb[0].mxu0
        %v5633 = vadd.f32 0.0, %v5632
        %v5634 = vpop.f32.mrb[0].mxu0
        %5635 = vmatprep.mubr.bf16.mxu0 0
        %5636 = vmatmul.mubr.bf16.gmra.mrb[0].mxu0 %v5169
        %v5637 = vpop.f32.mrb[0].mxu0
        %v5638 = vadd.f32 0.0, %v5637
        %v5639 = vpop.f32.mrb[0].mxu0
        %v5640 = vpop.f32.mrb[0].mxu0
        %v5641 = vadd.f32 0.0, %v5640
        %v5642 = vpop.f32.mrb[0].mxu0
        %5643 = vmatprep.mubr.bf16.mxu0 0
        %5644 = vmatmul.mubr.bf16.gmra.mrb[0].mxu0 %v5170
        %v5645 = vpop.f32.mrb[0].mxu0
        %v5646 = vadd.f32 0.0, %v5645
        %v5647 = vpop.f32.mrb[0].mxu0
        %v5648 = vpop.f32.mrb[0].mxu0
        %v5649 = vadd.f32 0.0, %v5648
        %v5650 = vpop.f32.mrb[0].mxu0
        %5651 = vmatprep.mubr.bf16.mxu0 0
        %5652 = vmatmul.mubr.bf16.gmra.mrb[0].mxu0 %v5171
        %v5653 = vpop.f32.mrb[0].mxu0
        %v5654 = vadd.f32 0.0, %v5653
        %v5655 = vpop.f32.mrb[0].mxu0
        %v5656 = vpop.f32.mrb[0].mxu0
        %v5657 = vadd.f32 0.0, %v5656
        %v5658 = vpop.f32.mrb[0].mxu0
        %5659 = vmatprep.mubr.bf16.mxu0 0
        %5660 = vmatmul.mubr.bf16.gmra.mrb[0].mxu0 %v5172
        %v5661 = vpop.f32.mrb[0].mxu0
        %v5662 = vadd.f32 0.0, %v5661
        %v5663 = vpop.f32.mrb[0].mxu0
        %v5664 = vpop.f32.mrb[0].mxu0
        %v5665 = vadd.f32 0.0, %v5664
        %v5666 = vpop.f32.mrb[0].mxu0
        %5667 = vmatprep.mubr.bf16.mxu0 0
        %5668 = vmatmul.mubr.bf16.gmra.mrb[0].mxu0 %v5173
        %v5669 = vpop.f32.mrb[0].mxu0
        %v5670 = vadd.f32 0.0, %v5669
        %v5671 = vpop.f32.mrb[0].mxu0
        %v5672 = vpop.f32.mrb[0].mxu0
        %v5673 = vadd.f32 0.0, %v5672
        %v5674 = vpop.f32.mrb[0].mxu0
        %5675 = vmatprep.mubr.bf16.mxu0 0
        %5676 = vmatmul.mubr.bf16.gmra.mrb[0].mxu0 %v5174
        %v5677 = vpop.f32.mrb[0].mxu0
        %v5678 = vadd.f32 0.0, %v5677
        %v5679 = vpop.f32.mrb[0].mxu0
        %v5680 = vpop.f32.mrb[0].mxu0
        %v5681 = vadd.f32 0.0, %v5680
        %v5682 = vpop.f32.mrb[0].mxu0
        %5683 = vmatprep.mubr.bf16.mxu0 0
        %5684 = vmatmul.mubr.bf16.gmra.mrb[0].mxu0 %v5175
        %v5685 = vpop.f32.mrb[0].mxu0
        %v5686 = vadd.f32 0.0, %v5685
        %v5687 = vpop.f32.mrb[0].mxu0
        %v5688 = vpop.f32.mrb[0].mxu0
        %v5689 = vadd.f32 0.0, %v5688
        %v5690 = vpop.f32.mrb[0].mxu0
        %5691 = vdwg.mxu0
        %v5692 = vpack.c.bf16 %v5246, %v5243
        %v5693 = vpack.c.bf16 %v5254, %v5251
        %v5694 = vpack.c.bf16 %v5262, %v5259
        %v5695 = vpack.c.bf16 %v5270, %v5267
        %v5696 = vpack.c.bf16 %v5278, %v5275
        %v5697 = vpack.c.bf16 %v5286, %v5283
        %v5698 = vpack.c.bf16 %v5294, %v5291
        %v5699 = vpack.c.bf16 %v5302, %v5299
        %v5700 = vpack.c.bf16 %v5375, %v5372
        %v5701 = vpack.c.bf16 %v5383, %v5380
        %v5702 = vpack.c.bf16 %v5391, %v5388
        %v5703 = vpack.c.bf16 %v5399, %v5396
        %v5704 = vpack.c.bf16 %v5407, %v5404
        %v5705 = vpack.c.bf16 %v5415, %v5412
        %v5706 = vpack.c.bf16 %v5423, %v5420
        %v5707 = vpack.c.bf16 %v5431, %v5428
        %v5708 = vpack.c.bf16 %v5504, %v5501
        %v5709 = vpack.c.bf16 %v5512, %v5509
        %v5710 = vpack.c.bf16 %v5520, %v5517
        %v5711 = vpack.c.bf16 %v5528, %v5525
        %v5712 = vpack.c.bf16 %v5536, %v5533
        %v5713 = vpack.c.bf16 %v5544, %v5541
        %v5714 = vpack.c.bf16 %v5552, %v5549
        %v5715 = vpack.c.bf16 %v5560, %v5557
        %v5716 = vpack.c.bf16 %v5633, %v5630
        %v5717 = vpack.c.bf16 %v5641, %v5638
        %v5718 = vpack.c.bf16 %v5649, %v5646
        %v5719 = vpack.c.bf16 %v5657, %v5654
        %v5720 = vpack.c.bf16 %v5665, %v5662
        %v5721 = vpack.c.bf16 %v5673, %v5670
        %v5722 = vpack.c.bf16 %v5681, %v5678
        %v5723 = vpack.c.bf16 %v5689, %v5686
        %5724 = vrot.lane.b32.xlu0 %v2091, 64
        %v5725 = vpop.permute.xlu0 %5724
        %5726 = vrot.lane.b32.xlu0 %v2092, 64
        %v5727 = vpop.permute.xlu0 %5726
        %5728 = vrot.lane.b32.xlu0 %v2093, 64
        %v5729 = vpop.permute.xlu0 %5728
        %5730 = vrot.lane.b32.xlu0 %v2094, 64
        %v5731 = vpop.permute.xlu0 %5730
        %5732 = vrot.lane.b32.xlu0 %v2095, 64
        %v5733 = vpop.permute.xlu0 %5732
        %5734 = vrot.lane.b32.xlu0 %v2096, 64
        %v5735 = vpop.permute.xlu0 %5734
        %5736 = vrot.lane.b32.xlu0 %v2097, 64
        %v5737 = vpop.permute.xlu0 %5736
        %5738 = vrot.lane.b32.xlu0 %v2098, 64
        %v5739 = vpop.permute.xlu0 %5738
        %5740 = vrot.lane.b32.xlu0 %v2123, 64
        %v5741 = vpop.permute.xlu0 %5740
        %5742 = vrot.lane.b32.xlu0 %v2124, 64
        %v5743 = vpop.permute.xlu0 %5742
        %5744 = vrot.lane.b32.xlu0 %v2125, 64
        %v5745 = vpop.permute.xlu0 %5744
        %5746 = vrot.lane.b32.xlu0 %v2126, 64
        %v5747 = vpop.permute.xlu0 %5746
        %5748 = vrot.lane.b32.xlu0 %v2127, 64
        %v5749 = vpop.permute.xlu0 %5748
        %5750 = vrot.lane.b32.xlu0 %v2128, 64
        %v5751 = vpop.permute.xlu0 %5750
        %5752 = vrot.lane.b32.xlu0 %v2129, 64
        %v5753 = vpop.permute.xlu0 %5752
        %5754 = vrot.lane.b32.xlu0 %v2130, 64
        %v5755 = vpop.permute.xlu0 %5754
        %v5757 = vsel %vm2187, %v5725, 0
        %v5760 = vsel %vm2187, %v5727, 0
        %v5763 = vsel %vm2187, %v5729, 0
        %v5766 = vsel %vm2187, %v5731, 0
        %v5769 = vsel %vm2187, %v5733, 0
        %v5772 = vsel %vm2187, %v5735, 0
        %v5775 = vsel %vm2187, %v5737, 0
        %v5778 = vsel %vm2187, %v5739, 0
        %v5781 = vsel %vm2187, %v5741, 0
        %v5784 = vsel %vm2187, %v5743, 0
        %v5787 = vsel %vm2187, %v5745, 0
        %v5790 = vsel %vm2187, %v5747, 0
        %v5793 = vsel %vm2187, %v5749, 0
        %v5796 = vsel %vm2187, %v5751, 0
        %v5799 = vsel %vm2187, %v5753, 0
        %v5802 = vsel %vm2187, %v5755, 0
        %5804 = vmatprep.subr.bf16.mxu0 0
        %5805 = vmatpush1.bf16.xpose.msra.mxu0 %v5781
        %5806 = vmatprep.subr.bf16.mxu0 0
        %5807 = vmatpush1.bf16.xpose.msra.mxu0 %v5784
        %5808 = vmatprep.subr.bf16.mxu0 0
        %5809 = vmatpush1.bf16.xpose.msra.mxu0 %v5787
        %5810 = vmatprep.subr.bf16.mxu0 0
        %5811 = vmatpush1.bf16.xpose.msra.mxu0 %v5790
        %5812 = vmatprep.subr.bf16.mxu0 0
        %5813 = vmatpush1.bf16.xpose.msra.mxu0 %v5793
        %5814 = vmatprep.subr.bf16.mxu0 0
        %5815 = vmatpush1.bf16.xpose.msra.mxu0 %v5796
        %5816 = vmatprep.subr.bf16.mxu0 0
        %5817 = vmatpush1.bf16.xpose.msra.mxu0 %v5799
        %5818 = vmatprep.subr.bf16.mxu0 0
        %5819 = vmatpush1.bf16.xpose.msra.mxu0 %v5802
        %5820 = vmatprep.subr.bf16.mxu0 0
        %5821 = vmatpush1.bf16.xpose.msra.mxu0 0
        %5822 = vmatprep.subr.bf16.mxu0 0
        %5823 = vmatpush1.bf16.xpose.msra.mxu0 0
        %5824 = vmatprep.subr.bf16.mxu0 0
        %5825 = vmatpush1.bf16.xpose.msra.mxu0 0
        %5826 = vmatprep.subr.bf16.mxu0 0
        %5827 = vmatpush1.bf16.xpose.msra.mxu0 0
        %5828 = vmatprep.subr.bf16.mxu0 0
        %5829 = vmatpush1.bf16.xpose.msra.mxu0 0
        %5830 = vmatprep.subr.bf16.mxu0 0
        %5831 = vmatpush1.bf16.xpose.msra.mxu0 0
        %5832 = vmatprep.subr.bf16.mxu0 0
        %5833 = vmatpush1.bf16.xpose.msra.mxu0 0
        %5834 = vmatprep.subr.bf16.mxu0 0
        %5835 = vmatpush1.bf16.xpose.msra.mxu0 0
        %5836 = vmatprep.mubr.bf16.mxu0 0
        %5837 = vmatmul.mubr.bf16.gmra.mrb[0].mxu0 %v5757
        %v5838 = vpop.f32.mrb[0].mxu0
        %v5839 = vadd.f32 0.0, %v5838
        %v5840 = vpop.f32.mrb[0].mxu0
        %v5841 = vpop.f32.mrb[0].mxu0
        %v5842 = vadd.f32 0.0, %v5841
        %v5843 = vpop.f32.mrb[0].mxu0
        %5844 = vmatprep.mubr.bf16.mxu0 0
        %5845 = vmatmul.mubr.bf16.gmra.mrb[0].mxu0 %v5760
        %v5846 = vpop.f32.mrb[0].mxu0
        %v5847 = vadd.f32 0.0, %v5846
        %v5848 = vpop.f32.mrb[0].mxu0
        %v5849 = vpop.f32.mrb[0].mxu0
        %v5850 = vadd.f32 0.0, %v5849
        %v5851 = vpop.f32.mrb[0].mxu0
        %5852 = vmatprep.mubr.bf16.mxu0 0
        %5853 = vmatmul.mubr.bf16.gmra.mrb[0].mxu0 %v5763
        %v5854 = vpop.f32.mrb[0].mxu0
        %v5855 = vadd.f32 0.0, %v5854
        %v5856 = vpop.f32.mrb[0].mxu0
        %v5857 = vpop.f32.mrb[0].mxu0
        %v5858 = vadd.f32 0.0, %v5857
        %v5859 = vpop.f32.mrb[0].mxu0
        %5860 = vmatprep.mubr.bf16.mxu0 0
        %5861 = vmatmul.mubr.bf16.gmra.mrb[0].mxu0 %v5766
        %v5862 = vpop.f32.mrb[0].mxu0
        %v5863 = vadd.f32 0.0, %v5862
        %v5864 = vpop.f32.mrb[0].mxu0
        %v5865 = vpop.f32.mrb[0].mxu0
        %v5866 = vadd.f32 0.0, %v5865
        %v5867 = vpop.f32.mrb[0].mxu0
        %5868 = vmatprep.mubr.bf16.mxu0 0
        %5869 = vmatmul.mubr.bf16.gmra.mrb[0].mxu0 %v5769
        %v5870 = vpop.f32.mrb[0].mxu0
        %v5871 = vadd.f32 0.0, %v5870
        %v5872 = vpop.f32.mrb[0].mxu0
        %v5873 = vpop.f32.mrb[0].mxu0
        %v5874 = vadd.f32 0.0, %v5873
        %v5875 = vpop.f32.mrb[0].mxu0
        %5876 = vmatprep.mubr.bf16.mxu0 0
        %5877 = vmatmul.mubr.bf16.gmra.mrb[0].mxu0 %v5772
        %v5878 = vpop.f32.mrb[0].mxu0
        %v5879 = vadd.f32 0.0, %v5878
        %v5880 = vpop.f32.mrb[0].mxu0
        %v5881 = vpop.f32.mrb[0].mxu0
        %v5882 = vadd.f32 0.0, %v5881
        %v5883 = vpop.f32.mrb[0].mxu0
        %5884 = vmatprep.mubr.bf16.mxu0 0
        %5885 = vmatmul.mubr.bf16.gmra.mrb[0].mxu0 %v5775
        %v5886 = vpop.f32.mrb[0].mxu0
        %v5887 = vadd.f32 0.0, %v5886
        %v5888 = vpop.f32.mrb[0].mxu0
        %v5889 = vpop.f32.mrb[0].mxu0
        %v5890 = vadd.f32 0.0, %v5889
        %v5891 = vpop.f32.mrb[0].mxu0
        %5892 = vmatprep.mubr.bf16.mxu0 0
        %5893 = vmatmul.mubr.bf16.gmra.mrb[0].mxu0 %v5778
        %v5894 = vpop.f32.mrb[0].mxu0
        %v5895 = vadd.f32 0.0, %v5894
        %v5896 = vpop.f32.mrb[0].mxu0
        %v5897 = vpop.f32.mrb[0].mxu0
        %v5898 = vadd.f32 0.0, %v5897
        %v5899 = vpop.f32.mrb[0].mxu0
        %5900 = vdwg.mxu0
        %5901 = vrot.lane.b32.xlu0 %v2099, 64
        %v5902 = vpop.permute.xlu0 %5901
        %5903 = vrot.lane.b32.xlu0 %v2100, 64
        %v5904 = vpop.permute.xlu0 %5903
        %5905 = vrot.lane.b32.xlu0 %v2101, 64
        %v5906 = vpop.permute.xlu0 %5905
        %5907 = vrot.lane.b32.xlu0 %v2102, 64
        %v5908 = vpop.permute.xlu0 %5907
        %5909 = vrot.lane.b32.xlu0 %v2103, 64
        %v5910 = vpop.permute.xlu0 %5909
        %5911 = vrot.lane.b32.xlu0 %v2104, 64
        %v5912 = vpop.permute.xlu0 %5911
        %5913 = vrot.lane.b32.xlu0 %v2105, 64
        %v5914 = vpop.permute.xlu0 %5913
        %5915 = vrot.lane.b32.xlu0 %v2106, 64
        %v5916 = vpop.permute.xlu0 %5915
        %5917 = vrot.lane.b32.xlu0 %v2131, 64
        %v5918 = vpop.permute.xlu0 %5917
        %5919 = vrot.lane.b32.xlu0 %v2132, 64
        %v5920 = vpop.permute.xlu0 %5919
        %5921 = vrot.lane.b32.xlu0 %v2133, 64
        %v5922 = vpop.permute.xlu0 %5921
        %5923 = vrot.lane.b32.xlu0 %v2134, 64
        %v5924 = vpop.permute.xlu0 %5923
        %5925 = vrot.lane.b32.xlu0 %v2135, 64
        %v5926 = vpop.permute.xlu0 %5925
        %5927 = vrot.lane.b32.xlu0 %v2136, 64
        %v5928 = vpop.permute.xlu0 %5927
        %5929 = vrot.lane.b32.xlu0 %v2137, 64
        %v5930 = vpop.permute.xlu0 %5929
        %5931 = vrot.lane.b32.xlu0 %v2138, 64
        %v5932 = vpop.permute.xlu0 %5931
        %v5934 = vsel %vm2187, %v5902, 0
        %v5937 = vsel %vm2187, %v5904, 0
        %v5940 = vsel %vm2187, %v5906, 0
        %v5943 = vsel %vm2187, %v5908, 0
        %v5946 = vsel %vm2187, %v5910, 0
        %v5949 = vsel %vm2187, %v5912, 0
        %v5952 = vsel %vm2187, %v5914, 0
        %v5955 = vsel %vm2187, %v5916, 0
        %v5958 = vsel %vm2187, %v5918, 0
        %v5961 = vsel %vm2187, %v5920, 0
        %v5964 = vsel %vm2187, %v5922, 0
        %v5967 = vsel %vm2187, %v5924, 0
        %v5970 = vsel %vm2187, %v5926, 0
        %v5973 = vsel %vm2187, %v5928, 0
        %v5976 = vsel %vm2187, %v5930, 0
        %v5979 = vsel %vm2187, %v5932, 0
        %5981 = vmatprep.subr.bf16.mxu0 0
        %5982 = vmatpush1.bf16.xpose.msra.mxu0 %v5958
        %5983 = vmatprep.subr.bf16.mxu0 0
        %5984 = vmatpush1.bf16.xpose.msra.mxu0 %v5961
        %5985 = vmatprep.subr.bf16.mxu0 0
        %5986 = vmatpush1.bf16.xpose.msra.mxu0 %v5964
        %5987 = vmatprep.subr.bf16.mxu0 0
        %5988 = vmatpush1.bf16.xpose.msra.mxu0 %v5967
        %5989 = vmatprep.subr.bf16.mxu0 0
        %5990 = vmatpush1.bf16.xpose.msra.mxu0 %v5970
        %5991 = vmatprep.subr.bf16.mxu0 0
        %5992 = vmatpush1.bf16.xpose.msra.mxu0 %v5973
        %5993 = vmatprep.subr.bf16.mxu0 0
        %5994 = vmatpush1.bf16.xpose.msra.mxu0 %v5976
        %5995 = vmatprep.subr.bf16.mxu0 0
        %5996 = vmatpush1.bf16.xpose.msra.mxu0 %v5979
        %5997 = vmatprep.subr.bf16.mxu0 0
        %5998 = vmatpush1.bf16.xpose.msra.mxu0 0
        %5999 = vmatprep.subr.bf16.mxu0 0
        %6000 = vmatpush1.bf16.xpose.msra.mxu0 0
        %6001 = vmatprep.subr.bf16.mxu0 0
        %6002 = vmatpush1.bf16.xpose.msra.mxu0 0
        %6003 = vmatprep.subr.bf16.mxu0 0
        %6004 = vmatpush1.bf16.xpose.msra.mxu0 0
        %6005 = vmatprep.subr.bf16.mxu0 0
        %6006 = vmatpush1.bf16.xpose.msra.mxu0 0
        %6007 = vmatprep.subr.bf16.mxu0 0
        %6008 = vmatpush1.bf16.xpose.msra.mxu0 0
        %6009 = vmatprep.subr.bf16.mxu0 0
        %6010 = vmatpush1.bf16.xpose.msra.mxu0 0
        %6011 = vmatprep.subr.bf16.mxu0 0
        %6012 = vmatpush1.bf16.xpose.msra.mxu0 0
        %6013 = vmatprep.mubr.bf16.mxu0 0
        %6014 = vmatmul.mubr.bf16.gmra.mrb[0].mxu0 %v5934
        %v6015 = vpop.f32.mrb[0].mxu0
        %v6016 = vadd.f32 0.0, %v6015
        %v6017 = vpop.f32.mrb[0].mxu0
        %v6018 = vpop.f32.mrb[0].mxu0
        %v6019 = vadd.f32 0.0, %v6018
        %v6020 = vpop.f32.mrb[0].mxu0
        %6021 = vmatprep.mubr.bf16.mxu0 0
        %6022 = vmatmul.mubr.bf16.gmra.mrb[0].mxu0 %v5937
        %v6023 = vpop.f32.mrb[0].mxu0
        %v6024 = vadd.f32 0.0, %v6023
        %v6025 = vpop.f32.mrb[0].mxu0
        %v6026 = vpop.f32.mrb[0].mxu0
        %v6027 = vadd.f32 0.0, %v6026
        %v6028 = vpop.f32.mrb[0].mxu0
        %6029 = vmatprep.mubr.bf16.mxu0 0
        %6030 = vmatmul.mubr.bf16.gmra.mrb[0].mxu0 %v5940
        %v6031 = vpop.f32.mrb[0].mxu0
        %v6032 = vadd.f32 0.0, %v6031
        %v6033 = vpop.f32.mrb[0].mxu0
        %v6034 = vpop.f32.mrb[0].mxu0
        %v6035 = vadd.f32 0.0, %v6034
        %v6036 = vpop.f32.mrb[0].mxu0
        %6037 = vmatprep.mubr.bf16.mxu0 0
        %6038 = vmatmul.mubr.bf16.gmra.mrb[0].mxu0 %v5943
        %v6039 = vpop.f32.mrb[0].mxu0
        %v6040 = vadd.f32 0.0, %v6039
        %v6041 = vpop.f32.mrb[0].mxu0
        %v6042 = vpop.f32.mrb[0].mxu0
        %v6043 = vadd.f32 0.0, %v6042
        %v6044 = vpop.f32.mrb[0].mxu0
        %6045 = vmatprep.mubr.bf16.mxu0 0
        %6046 = vmatmul.mubr.bf16.gmra.mrb[0].mxu0 %v5946
        %v6047 = vpop.f32.mrb[0].mxu0
        %v6048 = vadd.f32 0.0, %v6047
        %v6049 = vpop.f32.mrb[0].mxu0
        %v6050 = vpop.f32.mrb[0].mxu0
        %v6051 = vadd.f32 0.0, %v6050
        %v6052 = vpop.f32.mrb[0].mxu0
        %6053 = vmatprep.mubr.bf16.mxu0 0
        %6054 = vmatmul.mubr.bf16.gmra.mrb[0].mxu0 %v5949
        %v6055 = vpop.f32.mrb[0].mxu0
        %v6056 = vadd.f32 0.0, %v6055
        %v6057 = vpop.f32.mrb[0].mxu0
        %v6058 = vpop.f32.mrb[0].mxu0
        %v6059 = vadd.f32 0.0, %v6058
        %v6060 = vpop.f32.mrb[0].mxu0
        %6061 = vmatprep.mubr.bf16.mxu0 0
        %6062 = vmatmul.mubr.bf16.gmra.mrb[0].mxu0 %v5952
        %v6063 = vpop.f32.mrb[0].mxu0
        %v6064 = vadd.f32 0.0, %v6063
        %v6065 = vpop.f32.mrb[0].mxu0
        %v6066 = vpop.f32.mrb[0].mxu0
        %v6067 = vadd.f32 0.0, %v6066
        %v6068 = vpop.f32.mrb[0].mxu0
        %6069 = vmatprep.mubr.bf16.mxu0 0
        %6070 = vmatmul.mubr.bf16.gmra.mrb[0].mxu0 %v5955
        %v6071 = vpop.f32.mrb[0].mxu0
        %v6072 = vadd.f32 0.0, %v6071
        %v6073 = vpop.f32.mrb[0].mxu0
        %v6074 = vpop.f32.mrb[0].mxu0
        %v6075 = vadd.f32 0.0, %v6074
        %v6076 = vpop.f32.mrb[0].mxu0
        %6077 = vdwg.mxu0
        %6078 = vrot.lane.b32.xlu0 %v2107, 64
        %v6079 = vpop.permute.xlu0 %6078
        %6080 = vrot.lane.b32.xlu0 %v2108, 64
        %v6081 = vpop.permute.xlu0 %6080
        %6082 = vrot.lane.b32.xlu0 %v2109, 64
        %v6083 = vpop.permute.xlu0 %6082
        %6084 = vrot.lane.b32.xlu0 %v2110, 64
        %v6085 = vpop.permute.xlu0 %6084
        %6086 = vrot.lane.b32.xlu0 %v2111, 64
        %v6087 = vpop.permute.xlu0 %6086
        %6088 = vrot.lane.b32.xlu0 %v2112, 64
        %v6089 = vpop.permute.xlu0 %6088
        %6090 = vrot.lane.b32.xlu0 %v2113, 64
        %v6091 = vpop.permute.xlu0 %6090
        %6092 = vrot.lane.b32.xlu0 %v2114, 64
        %v6093 = vpop.permute.xlu0 %6092
        %6094 = vrot.lane.b32.xlu0 %v2139, 64
        %v6095 = vpop.permute.xlu0 %6094
        %6096 = vrot.lane.b32.xlu0 %v2140, 64
        %v6097 = vpop.permute.xlu0 %6096
        %6098 = vrot.lane.b32.xlu0 %v2141, 64
        %v6099 = vpop.permute.xlu0 %6098
        %6100 = vrot.lane.b32.xlu0 %v2142, 64
        %v6101 = vpop.permute.xlu0 %6100
        %6102 = vrot.lane.b32.xlu0 %v2143, 64
        %v6103 = vpop.permute.xlu0 %6102
        %6104 = vrot.lane.b32.xlu0 %v2144, 64
        %v6105 = vpop.permute.xlu0 %6104
        %6106 = vrot.lane.b32.xlu0 %v2145, 64
        %v6107 = vpop.permute.xlu0 %6106
        %6108 = vrot.lane.b32.xlu0 %v2146, 64
        %v6109 = vpop.permute.xlu0 %6108
        %v6111 = vsel %vm2187, %v6079, 0
        %v6114 = vsel %vm2187, %v6081, 0
        %v6117 = vsel %vm2187, %v6083, 0
        %v6120 = vsel %vm2187, %v6085, 0
        %v6123 = vsel %vm2187, %v6087, 0
        %v6126 = vsel %vm2187, %v6089, 0
        %v6129 = vsel %vm2187, %v6091, 0
        %v6132 = vsel %vm2187, %v6093, 0
        %v6135 = vsel %vm2187, %v6095, 0
        %v6138 = vsel %vm2187, %v6097, 0
        %v6141 = vsel %vm2187, %v6099, 0
        %v6144 = vsel %vm2187, %v6101, 0
        %v6147 = vsel %vm2187, %v6103, 0
        %v6150 = vsel %vm2187, %v6105, 0
        %v6153 = vsel %vm2187, %v6107, 0
        %v6156 = vsel %vm2187, %v6109, 0
        %6158 = vmatprep.subr.bf16.mxu0 0
        %6159 = vmatpush1.bf16.xpose.msra.mxu0 %v6135
        %6160 = vmatprep.subr.bf16.mxu0 0
        %6161 = vmatpush1.bf16.xpose.msra.mxu0 %v6138
        %6162 = vmatprep.subr.bf16.mxu0 0
        %6163 = vmatpush1.bf16.xpose.msra.mxu0 %v6141
        %6164 = vmatprep.subr.bf16.mxu0 0
        %6165 = vmatpush1.bf16.xpose.msra.mxu0 %v6144
        %6166 = vmatprep.subr.bf16.mxu0 0
        %6167 = vmatpush1.bf16.xpose.msra.mxu0 %v6147
        %6168 = vmatprep.subr.bf16.mxu0 0
        %6169 = vmatpush1.bf16.xpose.msra.mxu0 %v6150
        %6170 = vmatprep.subr.bf16.mxu0 0
        %6171 = vmatpush1.bf16.xpose.msra.mxu0 %v6153
        %6172 = vmatprep.subr.bf16.mxu0 0
        %6173 = vmatpush1.bf16.xpose.msra.mxu0 %v6156
        %6174 = vmatprep.subr.bf16.mxu0 0
        %6175 = vmatpush1.bf16.xpose.msra.mxu0 0
        %6176 = vmatprep.subr.bf16.mxu0 0
        %6177 = vmatpush1.bf16.xpose.msra.mxu0 0
        %6178 = vmatprep.subr.bf16.mxu0 0
        %6179 = vmatpush1.bf16.xpose.msra.mxu0 0
        %6180 = vmatprep.subr.bf16.mxu0 0
        %6181 = vmatpush1.bf16.xpose.msra.mxu0 0
        %6182 = vmatprep.subr.bf16.mxu0 0
        %6183 = vmatpush1.bf16.xpose.msra.mxu0 0
        %6184 = vmatprep.subr.bf16.mxu0 0
        %6185 = vmatpush1.bf16.xpose.msra.mxu0 0
        %6186 = vmatprep.subr.bf16.mxu0 0
        %6187 = vmatpush1.bf16.xpose.msra.mxu0 0
        %6188 = vmatprep.subr.bf16.mxu0 0
        %6189 = vmatpush1.bf16.xpose.msra.mxu0 0
        %6190 = vmatprep.mubr.bf16.mxu0 0
        %6191 = vmatmul.mubr.bf16.gmra.mrb[0].mxu0 %v6111
        %v6192 = vpop.f32.mrb[0].mxu0
        %v6193 = vadd.f32 0.0, %v6192
        %v6194 = vpop.f32.mrb[0].mxu0
        %v6195 = vpop.f32.mrb[0].mxu0
        %v6196 = vadd.f32 0.0, %v6195
        %v6197 = vpop.f32.mrb[0].mxu0
        %6198 = vmatprep.mubr.bf16.mxu0 0
        %6199 = vmatmul.mubr.bf16.gmra.mrb[0].mxu0 %v6114
        %v6200 = vpop.f32.mrb[0].mxu0
        %v6201 = vadd.f32 0.0, %v6200
        %v6202 = vpop.f32.mrb[0].mxu0
        %v6203 = vpop.f32.mrb[0].mxu0
        %v6204 = vadd.f32 0.0, %v6203
        %v6205 = vpop.f32.mrb[0].mxu0
        %6206 = vmatprep.mubr.bf16.mxu0 0
        %6207 = vmatmul.mubr.bf16.gmra.mrb[0].mxu0 %v6117
        %v6208 = vpop.f32.mrb[0].mxu0
        %v6209 = vadd.f32 0.0, %v6208
        %v6210 = vpop.f32.mrb[0].mxu0
        %v6211 = vpop.f32.mrb[0].mxu0
        %v6212 = vadd.f32 0.0, %v6211
        %v6213 = vpop.f32.mrb[0].mxu0
        %6214 = vmatprep.mubr.bf16.mxu0 0
        %6215 = vmatmul.mubr.bf16.gmra.mrb[0].mxu0 %v6120
        %v6216 = vpop.f32.mrb[0].mxu0
        %v6217 = vadd.f32 0.0, %v6216
        %v6218 = vpop.f32.mrb[0].mxu0
        %v6219 = vpop.f32.mrb[0].mxu0
        %v6220 = vadd.f32 0.0, %v6219
        %v6221 = vpop.f32.mrb[0].mxu0
        %6222 = vmatprep.mubr.bf16.mxu0 0
        %6223 = vmatmul.mubr.bf16.gmra.mrb[0].mxu0 %v6123
        %v6224 = vpop.f32.mrb[0].mxu0
        %v6225 = vadd.f32 0.0, %v6224
        %v6226 = vpop.f32.mrb[0].mxu0
        %v6227 = vpop.f32.mrb[0].mxu0
        %v6228 = vadd.f32 0.0, %v6227
        %v6229 = vpop.f32.mrb[0].mxu0
        %6230 = vmatprep.mubr.bf16.mxu0 0
        %6231 = vmatmul.mubr.bf16.gmra.mrb[0].mxu0 %v6126
        %v6232 = vpop.f32.mrb[0].mxu0
        %v6233 = vadd.f32 0.0, %v6232
        %v6234 = vpop.f32.mrb[0].mxu0
        %v6235 = vpop.f32.mrb[0].mxu0
        %v6236 = vadd.f32 0.0, %v6235
        %v6237 = vpop.f32.mrb[0].mxu0
        %6238 = vmatprep.mubr.bf16.mxu0 0
        %6239 = vmatmul.mubr.bf16.gmra.mrb[0].mxu0 %v6129
        %v6240 = vpop.f32.mrb[0].mxu0
        %v6241 = vadd.f32 0.0, %v6240
        %v6242 = vpop.f32.mrb[0].mxu0
        %v6243 = vpop.f32.mrb[0].mxu0
        %v6244 = vadd.f32 0.0, %v6243
        %v6245 = vpop.f32.mrb[0].mxu0
        %6246 = vmatprep.mubr.bf16.mxu0 0
        %6247 = vmatmul.mubr.bf16.gmra.mrb[0].mxu0 %v6132
        %v6248 = vpop.f32.mrb[0].mxu0
        %v6249 = vadd.f32 0.0, %v6248
        %v6250 = vpop.f32.mrb[0].mxu0
        %v6251 = vpop.f32.mrb[0].mxu0
        %v6252 = vadd.f32 0.0, %v6251
        %v6253 = vpop.f32.mrb[0].mxu0
        %6254 = vdwg.mxu0
        %6255 = vrot.lane.b32.xlu0 %v2115, 64
        %v6256 = vpop.permute.xlu0 %6255
        %6257 = vrot.lane.b32.xlu0 %v2116, 64
        %v6258 = vpop.permute.xlu0 %6257
        %6259 = vrot.lane.b32.xlu0 %v2117, 64
        %v6260 = vpop.permute.xlu0 %6259
        %6261 = vrot.lane.b32.xlu0 %v2118, 64
        %v6262 = vpop.permute.xlu0 %6261
        %6263 = vrot.lane.b32.xlu0 %v2119, 64
        %v6264 = vpop.permute.xlu0 %6263
        %6265 = vrot.lane.b32.xlu0 %v2120, 64
        %v6266 = vpop.permute.xlu0 %6265
        %6267 = vrot.lane.b32.xlu0 %v2121, 64
        %v6268 = vpop.permute.xlu0 %6267
        %6269 = vrot.lane.b32.xlu0 %v2122, 64
        %v6270 = vpop.permute.xlu0 %6269
        %6271 = vrot.lane.b32.xlu0 %v2147, 64
        %v6272 = vpop.permute.xlu0 %6271
        %6273 = vrot.lane.b32.xlu0 %v2148, 64
        %v6274 = vpop.permute.xlu0 %6273
        %6275 = vrot.lane.b32.xlu0 %v2149, 64
        %v6276 = vpop.permute.xlu0 %6275
        %6277 = vrot.lane.b32.xlu0 %v2150, 64
        %v6278 = vpop.permute.xlu0 %6277
        %6279 = vrot.lane.b32.xlu0 %v2151, 64
        %v6280 = vpop.permute.xlu0 %6279
        %6281 = vrot.lane.b32.xlu0 %v2152, 64
        %v6282 = vpop.permute.xlu0 %6281
        %6283 = vrot.lane.b32.xlu0 %v2153, 64
        %v6284 = vpop.permute.xlu0 %6283
        %6285 = vrot.lane.b32.xlu0 %v2154, 64
        %v6286 = vpop.permute.xlu0 %6285
        %v6288 = vsel %vm2187, %v6256, 0
        %v6291 = vsel %vm2187, %v6258, 0
        %v6294 = vsel %vm2187, %v6260, 0
        %v6297 = vsel %vm2187, %v6262, 0
        %v6300 = vsel %vm2187, %v6264, 0
        %v6303 = vsel %vm2187, %v6266, 0
        %v6306 = vsel %vm2187, %v6268, 0
        %v6309 = vsel %vm2187, %v6270, 0
        %v6312 = vsel %vm2187, %v6272, 0
        %v6315 = vsel %vm2187, %v6274, 0
        %v6318 = vsel %vm2187, %v6276, 0
        %v6321 = vsel %vm2187, %v6278, 0
        %v6324 = vsel %vm2187, %v6280, 0
        %v6327 = vsel %vm2187, %v6282, 0
        %v6330 = vsel %vm2187, %v6284, 0
        %v6333 = vsel %vm2187, %v6286, 0
        %6335 = vmatprep.subr.bf16.mxu0 0
        %6336 = vmatpush1.bf16.xpose.msra.mxu0 %v6312
        %6337 = vmatprep.subr.bf16.mxu0 0
        %6338 = vmatpush1.bf16.xpose.msra.mxu0 %v6315
        %6339 = vmatprep.subr.bf16.mxu0 0
        %6340 = vmatpush1.bf16.xpose.msra.mxu0 %v6318
        %6341 = vmatprep.subr.bf16.mxu0 0
        %6342 = vmatpush1.bf16.xpose.msra.mxu0 %v6321
        %6343 = vmatprep.subr.bf16.mxu0 0
        %6344 = vmatpush1.bf16.xpose.msra.mxu0 %v6324
        %6345 = vmatprep.subr.bf16.mxu0 0
        %6346 = vmatpush1.bf16.xpose.msra.mxu0 %v6327
        %6347 = vmatprep.subr.bf16.mxu0 0
        %6348 = vmatpush1.bf16.xpose.msra.mxu0 %v6330
        %6349 = vmatprep.subr.bf16.mxu0 0
        %6350 = vmatpush1.bf16.xpose.msra.mxu0 %v6333
        %6351 = vmatprep.subr.bf16.mxu0 0
        %6352 = vmatpush1.bf16.xpose.msra.mxu0 0
        %6353 = vmatprep.subr.bf16.mxu0 0
        %6354 = vmatpush1.bf16.xpose.msra.mxu0 0
        %6355 = vmatprep.subr.bf16.mxu0 0
        %6356 = vmatpush1.bf16.xpose.msra.mxu0 0
        %6357 = vmatprep.subr.bf16.mxu0 0
        %6358 = vmatpush1.bf16.xpose.msra.mxu0 0
        %6359 = vmatprep.subr.bf16.mxu0 0
        %6360 = vmatpush1.bf16.xpose.msra.mxu0 0
        %6361 = vmatprep.subr.bf16.mxu0 0
        %6362 = vmatpush1.bf16.xpose.msra.mxu0 0
        %6363 = vmatprep.subr.bf16.mxu0 0
        %6364 = vmatpush1.bf16.xpose.msra.mxu0 0
        %6365 = vmatprep.subr.bf16.mxu0 0
        %6366 = vmatpush1.bf16.xpose.msra.mxu0 0
        %6367 = vmatprep.mubr.bf16.mxu0 0
        %6368 = vmatmul.mubr.bf16.gmra.mrb[0].mxu0 %v6288
        %v6369 = vpop.f32.mrb[0].mxu0
        %v6370 = vadd.f32 0.0, %v6369
        %v6371 = vpop.f32.mrb[0].mxu0
        %v6372 = vpop.f32.mrb[0].mxu0
        %v6373 = vadd.f32 0.0, %v6372
        %v6374 = vpop.f32.mrb[0].mxu0
        %6375 = vmatprep.mubr.bf16.mxu0 0
        %6376 = vmatmul.mubr.bf16.gmra.mrb[0].mxu0 %v6291
        %v6377 = vpop.f32.mrb[0].mxu0
        %v6378 = vadd.f32 0.0, %v6377
        %v6379 = vpop.f32.mrb[0].mxu0
        %v6380 = vpop.f32.mrb[0].mxu0
        %v6381 = vadd.f32 0.0, %v6380
        %v6382 = vpop.f32.mrb[0].mxu0
        %6383 = vmatprep.mubr.bf16.mxu0 0
        %6384 = vmatmul.mubr.bf16.gmra.mrb[0].mxu0 %v6294
        %v6385 = vpop.f32.mrb[0].mxu0
        %v6386 = vadd.f32 0.0, %v6385
        %v6387 = vpop.f32.mrb[0].mxu0
        %v6388 = vpop.f32.mrb[0].mxu0
        %v6389 = vadd.f32 0.0, %v6388
        %v6390 = vpop.f32.mrb[0].mxu0
        %6391 = vmatprep.mubr.bf16.mxu0 0
        %6392 = vmatmul.mubr.bf16.gmra.mrb[0].mxu0 %v6297
        %v6393 = vpop.f32.mrb[0].mxu0
        %v6394 = vadd.f32 0.0, %v6393
        %v6395 = vpop.f32.mrb[0].mxu0
        %v6396 = vpop.f32.mrb[0].mxu0
        %v6397 = vadd.f32 0.0, %v6396
        %v6398 = vpop.f32.mrb[0].mxu0
        %6399 = vmatprep.mubr.bf16.mxu0 0
        %6400 = vmatmul.mubr.bf16.gmra.mrb[0].mxu0 %v6300
        %v6401 = vpop.f32.mrb[0].mxu0
        %v6402 = vadd.f32 0.0, %v6401
        %v6403 = vpop.f32.mrb[0].mxu0
        %v6404 = vpop.f32.mrb[0].mxu0
        %v6405 = vadd.f32 0.0, %v6404
        %v6406 = vpop.f32.mrb[0].mxu0
        %6407 = vmatprep.mubr.bf16.mxu0 0
        %6408 = vmatmul.mubr.bf16.gmra.mrb[0].mxu0 %v6303
        %v6409 = vpop.f32.mrb[0].mxu0
        %v6410 = vadd.f32 0.0, %v6409
        %v6411 = vpop.f32.mrb[0].mxu0
        %v6412 = vpop.f32.mrb[0].mxu0
        %v6413 = vadd.f32 0.0, %v6412
        %v6414 = vpop.f32.mrb[0].mxu0
        %6415 = vmatprep.mubr.bf16.mxu0 0
        %6416 = vmatmul.mubr.bf16.gmra.mrb[0].mxu0 %v6306
        %v6417 = vpop.f32.mrb[0].mxu0
        %v6418 = vadd.f32 0.0, %v6417
        %v6419 = vpop.f32.mrb[0].mxu0
        %v6420 = vpop.f32.mrb[0].mxu0
        %v6421 = vadd.f32 0.0, %v6420
        %v6422 = vpop.f32.mrb[0].mxu0
        %6423 = vmatprep.mubr.bf16.mxu0 0
        %6424 = vmatmul.mubr.bf16.gmra.mrb[0].mxu0 %v6309
        %v6425 = vpop.f32.mrb[0].mxu0
        %v6426 = vadd.f32 0.0, %v6425
        %v6427 = vpop.f32.mrb[0].mxu0
        %v6428 = vpop.f32.mrb[0].mxu0
        %v6429 = vadd.f32 0.0, %v6428
        %v6430 = vpop.f32.mrb[0].mxu0
        %6431 = vdwg.mxu0
        %6432 = vmax.xlane.f32.xlu0 %v5839
        %v6433 = vpop.xlane.xlu0 %6432
        %6434 = vmax.xlane.f32.xlu0 %v5842
        %v6435 = vpop.xlane.xlu0 %6434
        %6436 = vmax.xlane.f32.xlu0 %v5847
        %v6437 = vpop.xlane.xlu0 %6436
        %6438 = vmax.xlane.f32.xlu0 %v5850
        %v6439 = vpop.xlane.xlu0 %6438
        %6440 = vmax.xlane.f32.xlu0 %v5855
        %v6441 = vpop.xlane.xlu0 %6440
        %6442 = vmax.xlane.f32.xlu0 %v5858
        %v6443 = vpop.xlane.xlu0 %6442
        %6444 = vmax.xlane.f32.xlu0 %v5863
        %v6445 = vpop.xlane.xlu0 %6444
        %6446 = vmax.xlane.f32.xlu0 %v5866
        %v6447 = vpop.xlane.xlu0 %6446
        %6448 = vmax.xlane.f32.xlu0 %v5871
        %v6449 = vpop.xlane.xlu0 %6448
        %6450 = vmax.xlane.f32.xlu0 %v5874
        %v6451 = vpop.xlane.xlu0 %6450
        %6452 = vmax.xlane.f32.xlu0 %v5879
        %v6453 = vpop.xlane.xlu0 %6452
        %6454 = vmax.xlane.f32.xlu0 %v5882
        %v6455 = vpop.xlane.xlu0 %6454
        %6456 = vmax.xlane.f32.xlu0 %v5887
        %v6457 = vpop.xlane.xlu0 %6456
        %6458 = vmax.xlane.f32.xlu0 %v5890
        %v6459 = vpop.xlane.xlu0 %6458
        %6460 = vmax.xlane.f32.xlu0 %v5895
        %v6461 = vpop.xlane.xlu0 %6460
        %6462 = vmax.xlane.f32.xlu0 %v5898
        %v6463 = vpop.xlane.xlu0 %6462
        %6464 = vmax.xlane.f32.xlu0 %v6016
        %v6465 = vpop.xlane.xlu0 %6464
        %6466 = vmax.xlane.f32.xlu0 %v6019
        %v6467 = vpop.xlane.xlu0 %6466
        %6468 = vmax.xlane.f32.xlu0 %v6024
        %v6469 = vpop.xlane.xlu0 %6468
        %6470 = vmax.xlane.f32.xlu0 %v6027
        %v6471 = vpop.xlane.xlu0 %6470
        %6472 = vmax.xlane.f32.xlu0 %v6032
        %v6473 = vpop.xlane.xlu0 %6472
        %6474 = vmax.xlane.f32.xlu0 %v6035
        %v6475 = vpop.xlane.xlu0 %6474
        %6476 = vmax.xlane.f32.xlu0 %v6040
        %v6477 = vpop.xlane.xlu0 %6476
        %6478 = vmax.xlane.f32.xlu0 %v6043
        %v6479 = vpop.xlane.xlu0 %6478
        %6480 = vmax.xlane.f32.xlu0 %v6048
        %v6481 = vpop.xlane.xlu0 %6480
        %6482 = vmax.xlane.f32.xlu0 %v6051
        %v6483 = vpop.xlane.xlu0 %6482
        %6484 = vmax.xlane.f32.xlu0 %v6056
        %v6485 = vpop.xlane.xlu0 %6484
        %6486 = vmax.xlane.f32.xlu0 %v6059
        %v6487 = vpop.xlane.xlu0 %6486
        %6488 = vmax.xlane.f32.xlu0 %v6064
        %v6489 = vpop.xlane.xlu0 %6488
        %6490 = vmax.xlane.f32.xlu0 %v6067
        %v6491 = vpop.xlane.xlu0 %6490
        %6492 = vmax.xlane.f32.xlu0 %v6072
        %v6493 = vpop.xlane.xlu0 %6492
        %6494 = vmax.xlane.f32.xlu0 %v6075
        %v6495 = vpop.xlane.xlu0 %6494
        %6496 = vmax.xlane.f32.xlu0 %v6193
        %v6497 = vpop.xlane.xlu0 %6496
        %6498 = vmax.xlane.f32.xlu0 %v6196
        %v6499 = vpop.xlane.xlu0 %6498
        %6500 = vmax.xlane.f32.xlu0 %v6201
        %v6501 = vpop.xlane.xlu0 %6500
        %6502 = vmax.xlane.f32.xlu0 %v6204
        %v6503 = vpop.xlane.xlu0 %6502
        %6504 = vmax.xlane.f32.xlu0 %v6209
        %v6505 = vpop.xlane.xlu0 %6504
        %6506 = vmax.xlane.f32.xlu0 %v6212
        %v6507 = vpop.xlane.xlu0 %6506
        %6508 = vmax.xlane.f32.xlu0 %v6217
        %v6509 = vpop.xlane.xlu0 %6508
        %6510 = vmax.xlane.f32.xlu0 %v6220
        %v6511 = vpop.xlane.xlu0 %6510
        %6512 = vmax.xlane.f32.xlu0 %v6225
        %v6513 = vpop.xlane.xlu0 %6512
        %6514 = vmax.xlane.f32.xlu0 %v6228
        %v6515 = vpop.xlane.xlu0 %6514
        %6516 = vmax.xlane.f32.xlu0 %v6233
        %v6517 = vpop.xlane.xlu0 %6516
        %6518 = vmax.xlane.f32.xlu0 %v6236
        %v6519 = vpop.xlane.xlu0 %6518
        %6520 = vmax.xlane.f32.xlu0 %v6241
        %v6521 = vpop.xlane.xlu0 %6520
        %6522 = vmax.xlane.f32.xlu0 %v6244
        %v6523 = vpop.xlane.xlu0 %6522
        %6524 = vmax.xlane.f32.xlu0 %v6249
        %v6525 = vpop.xlane.xlu0 %6524
        %6526 = vmax.xlane.f32.xlu0 %v6252
        %v6527 = vpop.xlane.xlu0 %6526
        %6528 = vmax.xlane.f32.xlu0 %v6370
        %v6529 = vpop.xlane.xlu0 %6528
        %6530 = vmax.xlane.f32.xlu0 %v6373
        %v6531 = vpop.xlane.xlu0 %6530
        %6532 = vmax.xlane.f32.xlu0 %v6378
        %v6533 = vpop.xlane.xlu0 %6532
        %6534 = vmax.xlane.f32.xlu0 %v6381
        %v6535 = vpop.xlane.xlu0 %6534
        %6536 = vmax.xlane.f32.xlu0 %v6386
        %v6537 = vpop.xlane.xlu0 %6536
        %6538 = vmax.xlane.f32.xlu0 %v6389
        %v6539 = vpop.xlane.xlu0 %6538
        %6540 = vmax.xlane.f32.xlu0 %v6394
        %v6541 = vpop.xlane.xlu0 %6540
        %6542 = vmax.xlane.f32.xlu0 %v6397
        %v6543 = vpop.xlane.xlu0 %6542
        %6544 = vmax.xlane.f32.xlu0 %v6402
        %v6545 = vpop.xlane.xlu0 %6544
        %6546 = vmax.xlane.f32.xlu0 %v6405
        %v6547 = vpop.xlane.xlu0 %6546
        %6548 = vmax.xlane.f32.xlu0 %v6410
        %v6549 = vpop.xlane.xlu0 %6548
        %6550 = vmax.xlane.f32.xlu0 %v6413
        %v6551 = vpop.xlane.xlu0 %6550
        %6552 = vmax.xlane.f32.xlu0 %v6418
        %v6553 = vpop.xlane.xlu0 %6552
        %6554 = vmax.xlane.f32.xlu0 %v6421
        %v6555 = vpop.xlane.xlu0 %6554
        %6556 = vmax.xlane.f32.xlu0 %v6426
        %v6557 = vpop.xlane.xlu0 %6556
        %6558 = vmax.xlane.f32.xlu0 %v6429
        %v6559 = vpop.xlane.xlu0 %6558
        %v6560 = vsub.f32 %v5839, %v6433
        %v6561 = vsub.f32 %v5842, %v6435
        %v6562 = vsub.f32 %v5847, %v6437
        %v6563 = vsub.f32 %v5850, %v6439
        %v6564 = vsub.f32 %v5855, %v6441
        %v6565 = vsub.f32 %v5858, %v6443
        %v6566 = vsub.f32 %v5863, %v6445
        %v6567 = vsub.f32 %v5866, %v6447
        %v6568 = vsub.f32 %v5871, %v6449
        %v6569 = vsub.f32 %v5874, %v6451
        %v6570 = vsub.f32 %v5879, %v6453
        %v6571 = vsub.f32 %v5882, %v6455
        %v6572 = vsub.f32 %v5887, %v6457
        %v6573 = vsub.f32 %v5890, %v6459
        %v6574 = vsub.f32 %v5895, %v6461
        %v6575 = vsub.f32 %v5898, %v6463
        %v6576 = vsub.f32 %v6016, %v6465
        %v6577 = vsub.f32 %v6019, %v6467
        %v6578 = vsub.f32 %v6024, %v6469
        %v6579 = vsub.f32 %v6027, %v6471
        %v6580 = vsub.f32 %v6032, %v6473
        %v6581 = vsub.f32 %v6035, %v6475
        %v6582 = vsub.f32 %v6040, %v6477
        %v6583 = vsub.f32 %v6043, %v6479
        %v6584 = vsub.f32 %v6048, %v6481
        %v6585 = vsub.f32 %v6051, %v6483
        %v6586 = vsub.f32 %v6056, %v6485
        %v6587 = vsub.f32 %v6059, %v6487
        %v6588 = vsub.f32 %v6064, %v6489
        %v6589 = vsub.f32 %v6067, %v6491
        %v6590 = vsub.f32 %v6072, %v6493
        %v6591 = vsub.f32 %v6075, %v6495
        %v6592 = vsub.f32 %v6193, %v6497
        %v6593 = vsub.f32 %v6196, %v6499
        %v6594 = vsub.f32 %v6201, %v6501
        %v6595 = vsub.f32 %v6204, %v6503
        %v6596 = vsub.f32 %v6209, %v6505
        %v6597 = vsub.f32 %v6212, %v6507
        %v6598 = vsub.f32 %v6217, %v6509
        %v6599 = vsub.f32 %v6220, %v6511
        %v6600 = vsub.f32 %v6225, %v6513
        %v6601 = vsub.f32 %v6228, %v6515
        %v6602 = vsub.f32 %v6233, %v6517
        %v6603 = vsub.f32 %v6236, %v6519
        %v6604 = vsub.f32 %v6241, %v6521
        %v6605 = vsub.f32 %v6244, %v6523
        %v6606 = vsub.f32 %v6249, %v6525
        %v6607 = vsub.f32 %v6252, %v6527
        %v6608 = vsub.f32 %v6370, %v6529
        %v6609 = vsub.f32 %v6373, %v6531
        %v6610 = vsub.f32 %v6378, %v6533
        %v6611 = vsub.f32 %v6381, %v6535
        %v6612 = vsub.f32 %v6386, %v6537
        %v6613 = vsub.f32 %v6389, %v6539
        %v6614 = vsub.f32 %v6394, %v6541
        %v6615 = vsub.f32 %v6397, %v6543
        %v6616 = vsub.f32 %v6402, %v6545
        %v6617 = vsub.f32 %v6405, %v6547
        %v6618 = vsub.f32 %v6410, %v6549
        %v6619 = vsub.f32 %v6413, %v6551
        %v6620 = vsub.f32 %v6418, %v6553
        %v6621 = vsub.f32 %v6421, %v6555
        %v6622 = vsub.f32 %v6426, %v6557
        %v6623 = vsub.f32 %v6429, %v6559
        %v6624 = vmul.f32 %v6560, 1.442695
        %v6625 = vpow.pop %v6624
        %v6626 = vmul.f32 %v6561, 1.442695
        %v6627 = vpow.pop %v6626
        %v6628 = vmul.f32 %v6562, 1.442695
        %v6629 = vpow.pop %v6628
        %v6630 = vmul.f32 %v6563, 1.442695
        %v6631 = vpow.pop %v6630
        %v6632 = vmul.f32 %v6564, 1.442695
        %v6633 = vpow.pop %v6632
        %v6634 = vmul.f32 %v6565, 1.442695
        %v6635 = vpow.pop %v6634
        %v6636 = vmul.f32 %v6566, 1.442695
        %v6637 = vpow.pop %v6636
        %v6638 = vmul.f32 %v6567, 1.442695
        %v6639 = vpow.pop %v6638
        %v6640 = vmul.f32 %v6568, 1.442695
        %v6641 = vpow.pop %v6640
        %v6642 = vmul.f32 %v6569, 1.442695
        %v6643 = vpow.pop %v6642
        %v6644 = vmul.f32 %v6570, 1.442695
        %v6645 = vpow.pop %v6644
        %v6646 = vmul.f32 %v6571, 1.442695
        %v6647 = vpow.pop %v6646
        %v6648 = vmul.f32 %v6572, 1.442695
        %v6649 = vpow.pop %v6648
        %v6650 = vmul.f32 %v6573, 1.442695
        %v6651 = vpow.pop %v6650
        %v6652 = vmul.f32 %v6574, 1.442695
        %v6653 = vpow.pop %v6652
        %v6654 = vmul.f32 %v6575, 1.442695
        %v6655 = vpow.pop %v6654
        %v6656 = vmul.f32 %v6576, 1.442695
        %v6657 = vpow.pop %v6656
        %v6658 = vmul.f32 %v6577, 1.442695
        %v6659 = vpow.pop %v6658
        %v6660 = vmul.f32 %v6578, 1.442695
        %v6661 = vpow.pop %v6660
        %v6662 = vmul.f32 %v6579, 1.442695
        %v6663 = vpow.pop %v6662
        %v6664 = vmul.f32 %v6580, 1.442695
        %v6665 = vpow.pop %v6664
        %v6666 = vmul.f32 %v6581, 1.442695
        %v6667 = vpow.pop %v6666
        %v6668 = vmul.f32 %v6582, 1.442695
        %v6669 = vpow.pop %v6668
        %v6670 = vmul.f32 %v6583, 1.442695
        %v6671 = vpow.pop %v6670
        %v6672 = vmul.f32 %v6584, 1.442695
        %v6673 = vpow.pop %v6672
        %v6674 = vmul.f32 %v6585, 1.442695
        %v6675 = vpow.pop %v6674
        %v6676 = vmul.f32 %v6586, 1.442695
        %v6677 = vpow.pop %v6676
        %v6678 = vmul.f32 %v6587, 1.442695
        %v6679 = vpow.pop %v6678
        %v6680 = vmul.f32 %v6588, 1.442695
        %v6681 = vpow.pop %v6680
        %v6682 = vmul.f32 %v6589, 1.442695
        %v6683 = vpow.pop %v6682
        %v6684 = vmul.f32 %v6590, 1.442695
        %v6685 = vpow.pop %v6684
        %v6686 = vmul.f32 %v6591, 1.442695
        %v6687 = vpow.pop %v6686
        %v6688 = vmul.f32 %v6592, 1.442695
        %v6689 = vpow.pop %v6688
        %v6690 = vmul.f32 %v6593, 1.442695
        %v6691 = vpow.pop %v6690
        %v6692 = vmul.f32 %v6594, 1.442695
        %v6693 = vpow.pop %v6692
        %v6694 = vmul.f32 %v6595, 1.442695
        %v6695 = vpow.pop %v6694
        %v6696 = vmul.f32 %v6596, 1.442695
        %v6697 = vpow.pop %v6696
        %v6698 = vmul.f32 %v6597, 1.442695
        %v6699 = vpow.pop %v6698
        %v6700 = vmul.f32 %v6598, 1.442695
        %v6701 = vpow.pop %v6700
        %v6702 = vmul.f32 %v6599, 1.442695
        %v6703 = vpow.pop %v6702
        %v6704 = vmul.f32 %v6600, 1.442695
        %v6705 = vpow.pop %v6704
        %v6706 = vmul.f32 %v6601, 1.442695
        %v6707 = vpow.pop %v6706
        %v6708 = vmul.f32 %v6602, 1.442695
        %v6709 = vpow.pop %v6708
        %v6710 = vmul.f32 %v6603, 1.442695
        %v6711 = vpow.pop %v6710
        %v6712 = vmul.f32 %v6604, 1.442695
        %v6713 = vpow.pop %v6712
        %v6714 = vmul.f32 %v6605, 1.442695
        %v6715 = vpow.pop %v6714
        %v6716 = vmul.f32 %v6606, 1.442695
        %v6717 = vpow.pop %v6716
        %v6718 = vmul.f32 %v6607, 1.442695
        %v6719 = vpow.pop %v6718
        %v6720 = vmul.f32 %v6608, 1.442695
        %v6721 = vpow.pop %v6720
        %v6722 = vmul.f32 %v6609, 1.442695
        %v6723 = vpow.pop %v6722
        %v6724 = vmul.f32 %v6610, 1.442695
        %v6725 = vpow.pop %v6724
        %v6726 = vmul.f32 %v6611, 1.442695
        %v6727 = vpow.pop %v6726
        %v6728 = vmul.f32 %v6612, 1.442695
        %v6729 = vpow.pop %v6728
        %v6730 = vmul.f32 %v6613, 1.442695
        %v6731 = vpow.pop %v6730
        %v6732 = vmul.f32 %v6614, 1.442695
        %v6733 = vpow.pop %v6732
        %v6734 = vmul.f32 %v6615, 1.442695
        %v6735 = vpow.pop %v6734
        %v6736 = vmul.f32 %v6616, 1.442695
        %v6737 = vpow.pop %v6736
        %v6738 = vmul.f32 %v6617, 1.442695
        %v6739 = vpow.pop %v6738
        %v6740 = vmul.f32 %v6618, 1.442695
        %v6741 = vpow.pop %v6740
        %v6742 = vmul.f32 %v6619, 1.442695
        %v6743 = vpow.pop %v6742
        %v6744 = vmul.f32 %v6620, 1.442695
        %v6745 = vpow.pop %v6744
        %v6746 = vmul.f32 %v6621, 1.442695
        %v6747 = vpow.pop %v6746
        %v6748 = vmul.f32 %v6622, 1.442695
        %v6749 = vpow.pop %v6748
        %v6750 = vmul.f32 %v6623, 1.442695
        %v6751 = vpow.pop %v6750
        %6752 = vadd.xlane.f32.xlu0 %v6625
        %v6753 = vpop.xlane.xlu0 %6752
        %6754 = vadd.xlane.f32.xlu0 %v6627
        %v6755 = vpop.xlane.xlu0 %6754
        %6756 = vadd.xlane.f32.xlu0 %v6629
        %v6757 = vpop.xlane.xlu0 %6756
        %6758 = vadd.xlane.f32.xlu0 %v6631
        %v6759 = vpop.xlane.xlu0 %6758
        %6760 = vadd.xlane.f32.xlu0 %v6633
        %v6761 = vpop.xlane.xlu0 %6760
        %6762 = vadd.xlane.f32.xlu0 %v6635
        %v6763 = vpop.xlane.xlu0 %6762
        %6764 = vadd.xlane.f32.xlu0 %v6637
        %v6765 = vpop.xlane.xlu0 %6764
        %6766 = vadd.xlane.f32.xlu0 %v6639
        %v6767 = vpop.xlane.xlu0 %6766
        %6768 = vadd.xlane.f32.xlu0 %v6641
        %v6769 = vpop.xlane.xlu0 %6768
        %6770 = vadd.xlane.f32.xlu0 %v6643
        %v6771 = vpop.xlane.xlu0 %6770
        %6772 = vadd.xlane.f32.xlu0 %v6645
        %v6773 = vpop.xlane.xlu0 %6772
        %6774 = vadd.xlane.f32.xlu0 %v6647
        %v6775 = vpop.xlane.xlu0 %6774
        %6776 = vadd.xlane.f32.xlu0 %v6649
        %v6777 = vpop.xlane.xlu0 %6776
        %6778 = vadd.xlane.f32.xlu0 %v6651
        %v6779 = vpop.xlane.xlu0 %6778
        %6780 = vadd.xlane.f32.xlu0 %v6653
        %v6781 = vpop.xlane.xlu0 %6780
        %6782 = vadd.xlane.f32.xlu0 %v6655
        %v6783 = vpop.xlane.xlu0 %6782
        %6784 = vadd.xlane.f32.xlu0 %v6657
        %v6785 = vpop.xlane.xlu0 %6784
        %6786 = vadd.xlane.f32.xlu0 %v6659
        %v6787 = vpop.xlane.xlu0 %6786
        %6788 = vadd.xlane.f32.xlu0 %v6661
        %v6789 = vpop.xlane.xlu0 %6788
        %6790 = vadd.xlane.f32.xlu0 %v6663
        %v6791 = vpop.xlane.xlu0 %6790
        %6792 = vadd.xlane.f32.xlu0 %v6665
        %v6793 = vpop.xlane.xlu0 %6792
        %6794 = vadd.xlane.f32.xlu0 %v6667
        %v6795 = vpop.xlane.xlu0 %6794
        %6796 = vadd.xlane.f32.xlu0 %v6669
        %v6797 = vpop.xlane.xlu0 %6796
        %6798 = vadd.xlane.f32.xlu0 %v6671
        %v6799 = vpop.xlane.xlu0 %6798
        %6800 = vadd.xlane.f32.xlu0 %v6673
        %v6801 = vpop.xlane.xlu0 %6800
        %6802 = vadd.xlane.f32.xlu0 %v6675
        %v6803 = vpop.xlane.xlu0 %6802
        %6804 = vadd.xlane.f32.xlu0 %v6677
        %v6805 = vpop.xlane.xlu0 %6804
        %6806 = vadd.xlane.f32.xlu0 %v6679
        %v6807 = vpop.xlane.xlu0 %6806
        %6808 = vadd.xlane.f32.xlu0 %v6681
        %v6809 = vpop.xlane.xlu0 %6808
        %6810 = vadd.xlane.f32.xlu0 %v6683
        %v6811 = vpop.xlane.xlu0 %6810
        %6812 = vadd.xlane.f32.xlu0 %v6685
        %v6813 = vpop.xlane.xlu0 %6812
        %6814 = vadd.xlane.f32.xlu0 %v6687
        %v6815 = vpop.xlane.xlu0 %6814
        %6816 = vadd.xlane.f32.xlu0 %v6689
        %v6817 = vpop.xlane.xlu0 %6816
        %6818 = vadd.xlane.f32.xlu0 %v6691
        %v6819 = vpop.xlane.xlu0 %6818
        %6820 = vadd.xlane.f32.xlu0 %v6693
        %v6821 = vpop.xlane.xlu0 %6820
        %6822 = vadd.xlane.f32.xlu0 %v6695
        %v6823 = vpop.xlane.xlu0 %6822
        %6824 = vadd.xlane.f32.xlu0 %v6697
        %v6825 = vpop.xlane.xlu0 %6824
        %6826 = vadd.xlane.f32.xlu0 %v6699
        %v6827 = vpop.xlane.xlu0 %6826
        %6828 = vadd.xlane.f32.xlu0 %v6701
        %v6829 = vpop.xlane.xlu0 %6828
        %6830 = vadd.xlane.f32.xlu0 %v6703
        %v6831 = vpop.xlane.xlu0 %6830
        %6832 = vadd.xlane.f32.xlu0 %v6705
        %v6833 = vpop.xlane.xlu0 %6832
        %6834 = vadd.xlane.f32.xlu0 %v6707
        %v6835 = vpop.xlane.xlu0 %6834
        %6836 = vadd.xlane.f32.xlu0 %v6709
        %v6837 = vpop.xlane.xlu0 %6836
        %6838 = vadd.xlane.f32.xlu0 %v6711
        %v6839 = vpop.xlane.xlu0 %6838
        %6840 = vadd.xlane.f32.xlu0 %v6713
        %v6841 = vpop.xlane.xlu0 %6840
        %6842 = vadd.xlane.f32.xlu0 %v6715
        %v6843 = vpop.xlane.xlu0 %6842
        %6844 = vadd.xlane.f32.xlu0 %v6717
        %v6845 = vpop.xlane.xlu0 %6844
        %6846 = vadd.xlane.f32.xlu0 %v6719
        %v6847 = vpop.xlane.xlu0 %6846
        %6848 = vadd.xlane.f32.xlu0 %v6721
        %v6849 = vpop.xlane.xlu0 %6848
        %6850 = vadd.xlane.f32.xlu0 %v6723
        %v6851 = vpop.xlane.xlu0 %6850
        %6852 = vadd.xlane.f32.xlu0 %v6725
        %v6853 = vpop.xlane.xlu0 %6852
        %6854 = vadd.xlane.f32.xlu0 %v6727
        %v6855 = vpop.xlane.xlu0 %6854
        %6856 = vadd.xlane.f32.xlu0 %v6729
        %v6857 = vpop.xlane.xlu0 %6856
        %6858 = vadd.xlane.f32.xlu0 %v6731
        %v6859 = vpop.xlane.xlu0 %6858
        %6860 = vadd.xlane.f32.xlu0 %v6733
        %v6861 = vpop.xlane.xlu0 %6860
        %6862 = vadd.xlane.f32.xlu0 %v6735
        %v6863 = vpop.xlane.xlu0 %6862
        %6864 = vadd.xlane.f32.xlu0 %v6737
        %v6865 = vpop.xlane.xlu0 %6864
        %6866 = vadd.xlane.f32.xlu0 %v6739
        %v6867 = vpop.xlane.xlu0 %6866
        %6868 = vadd.xlane.f32.xlu0 %v6741
        %v6869 = vpop.xlane.xlu0 %6868
        %6870 = vadd.xlane.f32.xlu0 %v6743
        %v6871 = vpop.xlane.xlu0 %6870
        %6872 = vadd.xlane.f32.xlu0 %v6745
        %v6873 = vpop.xlane.xlu0 %6872
        %6874 = vadd.xlane.f32.xlu0 %v6747
        %v6875 = vpop.xlane.xlu0 %6874
        %6876 = vadd.xlane.f32.xlu0 %v6749
        %v6877 = vpop.xlane.xlu0 %6876
        %6878 = vadd.xlane.f32.xlu0 %v6751
        %v6879 = vpop.xlane.xlu0 %6878
        %v6880 = vrcp.pop %v6753
        %v6881 = vrcp.pop %v6755
        %v6882 = vrcp.pop %v6757
        %v6883 = vrcp.pop %v6759
        %v6884 = vrcp.pop %v6761
        %v6885 = vrcp.pop %v6763
        %v6886 = vrcp.pop %v6765
        %v6887 = vrcp.pop %v6767
        %v6888 = vrcp.pop %v6769
        %v6889 = vrcp.pop %v6771
        %v6890 = vrcp.pop %v6773
        %v6891 = vrcp.pop %v6775
        %v6892 = vrcp.pop %v6777
        %v6893 = vrcp.pop %v6779
        %v6894 = vrcp.pop %v6781
        %v6895 = vrcp.pop %v6783
        %v6896 = vrcp.pop %v6785
        %v6897 = vrcp.pop %v6787
        %v6898 = vrcp.pop %v6789
        %v6899 = vrcp.pop %v6791
        %v6900 = vrcp.pop %v6793
        %v6901 = vrcp.pop %v6795
        %v6902 = vrcp.pop %v6797
        %v6903 = vrcp.pop %v6799
        %v6904 = vrcp.pop %v6801
        %v6905 = vrcp.pop %v6803
        %v6906 = vrcp.pop %v6805
        %v6907 = vrcp.pop %v6807
        %v6908 = vrcp.pop %v6809
        %v6909 = vrcp.pop %v6811
        %v6910 = vrcp.pop %v6813
        %v6911 = vrcp.pop %v6815
        %v6912 = vrcp.pop %v6817
        %v6913 = vrcp.pop %v6819
        %v6914 = vrcp.pop %v6821
        %v6915 = vrcp.pop %v6823
        %v6916 = vrcp.pop %v6825
        %v6917 = vrcp.pop %v6827
        %v6918 = vrcp.pop %v6829
        %v6919 = vrcp.pop %v6831
        %v6920 = vrcp.pop %v6833
        %v6921 = vrcp.pop %v6835
        %v6922 = vrcp.pop %v6837
        %v6923 = vrcp.pop %v6839
        %v6924 = vrcp.pop %v6841
        %v6925 = vrcp.pop %v6843
        %v6926 = vrcp.pop %v6845
        %v6927 = vrcp.pop %v6847
        %v6928 = vrcp.pop %v6849
        %v6929 = vrcp.pop %v6851
        %v6930 = vrcp.pop %v6853
        %v6931 = vrcp.pop %v6855
        %v6932 = vrcp.pop %v6857
        %v6933 = vrcp.pop %v6859
        %v6934 = vrcp.pop %v6861
        %v6935 = vrcp.pop %v6863
        %v6936 = vrcp.pop %v6865
        %v6937 = vrcp.pop %v6867
        %v6938 = vrcp.pop %v6869
        %v6939 = vrcp.pop %v6871
        %v6940 = vrcp.pop %v6873
        %v6941 = vrcp.pop %v6875
        %v6942 = vrcp.pop %v6877
        %v6943 = vrcp.pop %v6879
        %v6944 = vmul.f32 %v6625, %v6880
        %v6945 = vmul.f32 %v6627, %v6881
        %v6946 = vmul.f32 %v6629, %v6882
        %v6947 = vmul.f32 %v6631, %v6883
        %v6948 = vmul.f32 %v6633, %v6884
        %v6949 = vmul.f32 %v6635, %v6885
        %v6950 = vmul.f32 %v6637, %v6886
        %v6951 = vmul.f32 %v6639, %v6887
        %v6952 = vmul.f32 %v6641, %v6888
        %v6953 = vmul.f32 %v6643, %v6889
        %v6954 = vmul.f32 %v6645, %v6890
        %v6955 = vmul.f32 %v6647, %v6891
        %v6956 = vmul.f32 %v6649, %v6892
        %v6957 = vmul.f32 %v6651, %v6893
        %v6958 = vmul.f32 %v6653, %v6894
        %v6959 = vmul.f32 %v6655, %v6895
        %v6960 = vmul.f32 %v6657, %v6896
        %v6961 = vmul.f32 %v6659, %v6897
        %v6962 = vmul.f32 %v6661, %v6898
        %v6963 = vmul.f32 %v6663, %v6899
        %v6964 = vmul.f32 %v6665, %v6900
        %v6965 = vmul.f32 %v6667, %v6901
        %v6966 = vmul.f32 %v6669, %v6902
        %v6967 = vmul.f32 %v6671, %v6903
        %v6968 = vmul.f32 %v6673, %v6904
        %v6969 = vmul.f32 %v6675, %v6905
        %v6970 = vmul.f32 %v6677, %v6906
        %v6971 = vmul.f32 %v6679, %v6907
        %v6972 = vmul.f32 %v6681, %v6908
        %v6973 = vmul.f32 %v6683, %v6909
        %v6974 = vmul.f32 %v6685, %v6910
        %v6975 = vmul.f32 %v6687, %v6911
        %v6976 = vmul.f32 %v6689, %v6912
        %v6977 = vmul.f32 %v6691, %v6913
        %v6978 = vmul.f32 %v6693, %v6914
        %v6979 = vmul.f32 %v6695, %v6915
        %v6980 = vmul.f32 %v6697, %v6916
        %v6981 = vmul.f32 %v6699, %v6917
        %v6982 = vmul.f32 %v6701, %v6918
        %v6983 = vmul.f32 %v6703, %v6919
        %v6984 = vmul.f32 %v6705, %v6920
        %v6985 = vmul.f32 %v6707, %v6921
        %v6986 = vmul.f32 %v6709, %v6922
        %v6987 = vmul.f32 %v6711, %v6923
        %v6988 = vmul.f32 %v6713, %v6924
        %v6989 = vmul.f32 %v6715, %v6925
        %v6990 = vmul.f32 %v6717, %v6926
        %v6991 = vmul.f32 %v6719, %v6927
        %v6992 = vmul.f32 %v6721, %v6928
        %v6993 = vmul.f32 %v6723, %v6929
        %v6994 = vmul.f32 %v6725, %v6930
        %v6995 = vmul.f32 %v6727, %v6931
        %v6996 = vmul.f32 %v6729, %v6932
        %v6997 = vmul.f32 %v6731, %v6933
        %v6998 = vmul.f32 %v6733, %v6934
        %v6999 = vmul.f32 %v6735, %v6935
        %v7000 = vmul.f32 %v6737, %v6936
        %v7001 = vmul.f32 %v6739, %v6937
        %v7002 = vmul.f32 %v6741, %v6938
        %v7003 = vmul.f32 %v6743, %v6939
        %v7004 = vmul.f32 %v6745, %v6940
        %v7005 = vmul.f32 %v6747, %v6941
        %v7006 = vmul.f32 %v6749, %v6942
        %v7007 = vmul.f32 %v6751, %v6943
        %v7008 = vpack.c.bf16 %v6945, %v6944
        %v7009 = vpack.c.bf16 %v6947, %v6946
        %v7010 = vpack.c.bf16 %v6949, %v6948
        %v7011 = vpack.c.bf16 %v6951, %v6950
        %v7012 = vpack.c.bf16 %v6953, %v6952
        %v7013 = vpack.c.bf16 %v6955, %v6954
        %v7014 = vpack.c.bf16 %v6957, %v6956
        %v7015 = vpack.c.bf16 %v6959, %v6958
        %v7016 = vpack.c.bf16 %v6961, %v6960
        %v7017 = vpack.c.bf16 %v6963, %v6962
        %v7018 = vpack.c.bf16 %v6965, %v6964
        %v7019 = vpack.c.bf16 %v6967, %v6966
        %v7020 = vpack.c.bf16 %v6969, %v6968
        %v7021 = vpack.c.bf16 %v6971, %v6970
        %v7022 = vpack.c.bf16 %v6973, %v6972
        %v7023 = vpack.c.bf16 %v6975, %v6974
        %v7024 = vpack.c.bf16 %v6977, %v6976
        %v7025 = vpack.c.bf16 %v6979, %v6978
        %v7026 = vpack.c.bf16 %v6981, %v6980
        %v7027 = vpack.c.bf16 %v6983, %v6982
        %v7028 = vpack.c.bf16 %v6985, %v6984
        %v7029 = vpack.c.bf16 %v6987, %v6986
        %v7030 = vpack.c.bf16 %v6989, %v6988
        %v7031 = vpack.c.bf16 %v6991, %v6990
        %v7032 = vpack.c.bf16 %v6993, %v6992
        %v7033 = vpack.c.bf16 %v6995, %v6994
        %v7034 = vpack.c.bf16 %v6997, %v6996
        %v7035 = vpack.c.bf16 %v6999, %v6998
        %v7036 = vpack.c.bf16 %v7001, %v7000
        %v7037 = vpack.c.bf16 %v7003, %v7002
        %v7038 = vpack.c.bf16 %v7005, %v7004
        %v7039 = vpack.c.bf16 %v7007, %v7006
        %7040 = vrot.lane.b32.xlu0 %v2155, 64
        %v7041 = vpop.permute.xlu0 %7040
        %7042 = vrot.lane.b32.xlu0 %v2156, 64
        %v7043 = vpop.permute.xlu0 %7042
        %7044 = vrot.lane.b32.xlu0 %v2157, 64
        %v7045 = vpop.permute.xlu0 %7044
        %7046 = vrot.lane.b32.xlu0 %v2158, 64
        %v7047 = vpop.permute.xlu0 %7046
        %7048 = vrot.lane.b32.xlu0 %v2159, 64
        %v7049 = vpop.permute.xlu0 %7048
        %7050 = vrot.lane.b32.xlu0 %v2160, 64
        %v7051 = vpop.permute.xlu0 %7050
        %7052 = vrot.lane.b32.xlu0 %v2161, 64
        %v7053 = vpop.permute.xlu0 %7052
        %7054 = vrot.lane.b32.xlu0 %v2162, 64
        %v7055 = vpop.permute.xlu0 %7054
        %7064 = vmatprep.subr.bf16.mxu0 0
        %7065 = vmatpush1.bf16.msra.mxu0 %v7041
        %7066 = vmatprep.subr.bf16.mxu0 0
        %7067 = vmatpush1.bf16.msra.mxu0 %v7043
        %7068 = vmatprep.subr.bf16.mxu0 0
        %7069 = vmatpush1.bf16.msra.mxu0 %v7045
        %7070 = vmatprep.subr.bf16.mxu0 0
        %7071 = vmatpush1.bf16.msra.mxu0 %v7047
        %7072 = vmatprep.subr.bf16.mxu0 0
        %7073 = vmatpush1.bf16.msra.mxu0 %v7049
        %7074 = vmatprep.subr.bf16.mxu0 0
        %7075 = vmatpush1.bf16.msra.mxu0 %v7051
        %7076 = vmatprep.subr.bf16.mxu0 0
        %7077 = vmatpush1.bf16.msra.mxu0 %v7053
        %7078 = vmatprep.subr.bf16.mxu0 0
        %7079 = vmatpush1.bf16.msra.mxu0 %v7055
        %7080 = vmatprep.subr.bf16.mxu0 0
        %7081 = vmatpush1.bf16.msra.mxu0 0
        %7082 = vmatprep.subr.bf16.mxu0 0
        %7083 = vmatpush1.bf16.msra.mxu0 0
        %7084 = vmatprep.subr.bf16.mxu0 0
        %7085 = vmatpush1.bf16.msra.mxu0 0
        %7086 = vmatprep.subr.bf16.mxu0 0
        %7087 = vmatpush1.bf16.msra.mxu0 0
        %7088 = vmatprep.subr.bf16.mxu0 0
        %7089 = vmatpush1.bf16.msra.mxu0 0
        %7090 = vmatprep.subr.bf16.mxu0 0
        %7091 = vmatpush1.bf16.msra.mxu0 0
        %7092 = vmatprep.subr.bf16.mxu0 0
        %7093 = vmatpush1.bf16.msra.mxu0 0
        %7094 = vmatprep.subr.bf16.mxu0 0
        %7095 = vmatpush1.bf16.msra.mxu0 0
        %7096 = vmatprep.mubr.bf16.mxu0 0
        %7097 = vmatmul.mubr.bf16.gmra.mrb[0].mxu0 %v7008
        %v7098 = vpop.f32.mrb[0].mxu0
        %v7099 = vadd.f32 0.0, %v7098
        %v7100 = vpop.f32.mrb[0].mxu0
        %v7101 = vpop.f32.mrb[0].mxu0
        %v7102 = vadd.f32 0.0, %v7101
        %v7103 = vpop.f32.mrb[0].mxu0
        %7104 = vmatprep.mubr.bf16.mxu0 0
        %7105 = vmatmul.mubr.bf16.gmra.mrb[0].mxu0 %v7009
        %v7106 = vpop.f32.mrb[0].mxu0
        %v7107 = vadd.f32 0.0, %v7106
        %v7108 = vpop.f32.mrb[0].mxu0
        %v7109 = vpop.f32.mrb[0].mxu0
        %v7110 = vadd.f32 0.0, %v7109
        %v7111 = vpop.f32.mrb[0].mxu0
        %7112 = vmatprep.mubr.bf16.mxu0 0
        %7113 = vmatmul.mubr.bf16.gmra.mrb[0].mxu0 %v7010
        %v7114 = vpop.f32.mrb[0].mxu0
        %v7115 = vadd.f32 0.0, %v7114
        %v7116 = vpop.f32.mrb[0].mxu0
        %v7117 = vpop.f32.mrb[0].mxu0
        %v7118 = vadd.f32 0.0, %v7117
        %v7119 = vpop.f32.mrb[0].mxu0
        %7120 = vmatprep.mubr.bf16.mxu0 0
        %7121 = vmatmul.mubr.bf16.gmra.mrb[0].mxu0 %v7011
        %v7122 = vpop.f32.mrb[0].mxu0
        %v7123 = vadd.f32 0.0, %v7122
        %v7124 = vpop.f32.mrb[0].mxu0
        %v7125 = vpop.f32.mrb[0].mxu0
        %v7126 = vadd.f32 0.0, %v7125
        %v7127 = vpop.f32.mrb[0].mxu0
        %7128 = vmatprep.mubr.bf16.mxu0 0
        %7129 = vmatmul.mubr.bf16.gmra.mrb[0].mxu0 %v7012
        %v7130 = vpop.f32.mrb[0].mxu0
        %v7131 = vadd.f32 0.0, %v7130
        %v7132 = vpop.f32.mrb[0].mxu0
        %v7133 = vpop.f32.mrb[0].mxu0
        %v7134 = vadd.f32 0.0, %v7133
        %v7135 = vpop.f32.mrb[0].mxu0
        %7136 = vmatprep.mubr.bf16.mxu0 0
        %7137 = vmatmul.mubr.bf16.gmra.mrb[0].mxu0 %v7013
        %v7138 = vpop.f32.mrb[0].mxu0
        %v7139 = vadd.f32 0.0, %v7138
        %v7140 = vpop.f32.mrb[0].mxu0
        %v7141 = vpop.f32.mrb[0].mxu0
        %v7142 = vadd.f32 0.0, %v7141
        %v7143 = vpop.f32.mrb[0].mxu0
        %7144 = vmatprep.mubr.bf16.mxu0 0
        %7145 = vmatmul.mubr.bf16.gmra.mrb[0].mxu0 %v7014
        %v7146 = vpop.f32.mrb[0].mxu0
        %v7147 = vadd.f32 0.0, %v7146
        %v7148 = vpop.f32.mrb[0].mxu0
        %v7149 = vpop.f32.mrb[0].mxu0
        %v7150 = vadd.f32 0.0, %v7149
        %v7151 = vpop.f32.mrb[0].mxu0
        %7152 = vmatprep.mubr.bf16.mxu0 0
        %7153 = vmatmul.mubr.bf16.gmra.mrb[0].mxu0 %v7015
        %v7154 = vpop.f32.mrb[0].mxu0
        %v7155 = vadd.f32 0.0, %v7154
        %v7156 = vpop.f32.mrb[0].mxu0
        %v7157 = vpop.f32.mrb[0].mxu0
        %v7158 = vadd.f32 0.0, %v7157
        %v7159 = vpop.f32.mrb[0].mxu0
        %7160 = vdwg.mxu0
        %7161 = vrot.lane.b32.xlu0 %v2163, 64
        %v7162 = vpop.permute.xlu0 %7161
        %7163 = vrot.lane.b32.xlu0 %v2164, 64
        %v7164 = vpop.permute.xlu0 %7163
        %7165 = vrot.lane.b32.xlu0 %v2165, 64
        %v7166 = vpop.permute.xlu0 %7165
        %7167 = vrot.lane.b32.xlu0 %v2166, 64
        %v7168 = vpop.permute.xlu0 %7167
        %7169 = vrot.lane.b32.xlu0 %v2167, 64
        %v7170 = vpop.permute.xlu0 %7169
        %7171 = vrot.lane.b32.xlu0 %v2168, 64
        %v7172 = vpop.permute.xlu0 %7171
        %7173 = vrot.lane.b32.xlu0 %v2169, 64
        %v7174 = vpop.permute.xlu0 %7173
        %7175 = vrot.lane.b32.xlu0 %v2170, 64
        %v7176 = vpop.permute.xlu0 %7175
        %7185 = vmatprep.subr.bf16.mxu0 0
        %7186 = vmatpush1.bf16.msra.mxu0 %v7162
        %7187 = vmatprep.subr.bf16.mxu0 0
        %7188 = vmatpush1.bf16.msra.mxu0 %v7164
        %7189 = vmatprep.subr.bf16.mxu0 0
        %7190 = vmatpush1.bf16.msra.mxu0 %v7166
        %7191 = vmatprep.subr.bf16.mxu0 0
        %7192 = vmatpush1.bf16.msra.mxu0 %v7168
        %7193 = vmatprep.subr.bf16.mxu0 0
        %7194 = vmatpush1.bf16.msra.mxu0 %v7170
        %7195 = vmatprep.subr.bf16.mxu0 0
        %7196 = vmatpush1.bf16.msra.mxu0 %v7172
        %7197 = vmatprep.subr.bf16.mxu0 0
        %7198 = vmatpush1.bf16.msra.mxu0 %v7174
        %7199 = vmatprep.subr.bf16.mxu0 0
        %7200 = vmatpush1.bf16.msra.mxu0 %v7176
        %7201 = vmatprep.subr.bf16.mxu0 0
        %7202 = vmatpush1.bf16.msra.mxu0 0
        %7203 = vmatprep.subr.bf16.mxu0 0
        %7204 = vmatpush1.bf16.msra.mxu0 0
        %7205 = vmatprep.subr.bf16.mxu0 0
        %7206 = vmatpush1.bf16.msra.mxu0 0
        %7207 = vmatprep.subr.bf16.mxu0 0
        %7208 = vmatpush1.bf16.msra.mxu0 0
        %7209 = vmatprep.subr.bf16.mxu0 0
        %7210 = vmatpush1.bf16.msra.mxu0 0
        %7211 = vmatprep.subr.bf16.mxu0 0
        %7212 = vmatpush1.bf16.msra.mxu0 0
        %7213 = vmatprep.subr.bf16.mxu0 0
        %7214 = vmatpush1.bf16.msra.mxu0 0
        %7215 = vmatprep.subr.bf16.mxu0 0
        %7216 = vmatpush1.bf16.msra.mxu0 0
        %7217 = vmatprep.mubr.bf16.mxu0 0
        %7218 = vmatmul.mubr.bf16.gmra.mrb[0].mxu0 %v7016
        %v7219 = vpop.f32.mrb[0].mxu0
        %v7220 = vadd.f32 0.0, %v7219
        %v7221 = vpop.f32.mrb[0].mxu0
        %v7222 = vpop.f32.mrb[0].mxu0
        %v7223 = vadd.f32 0.0, %v7222
        %v7224 = vpop.f32.mrb[0].mxu0
        %7225 = vmatprep.mubr.bf16.mxu0 0
        %7226 = vmatmul.mubr.bf16.gmra.mrb[0].mxu0 %v7017
        %v7227 = vpop.f32.mrb[0].mxu0
        %v7228 = vadd.f32 0.0, %v7227
        %v7229 = vpop.f32.mrb[0].mxu0
        %v7230 = vpop.f32.mrb[0].mxu0
        %v7231 = vadd.f32 0.0, %v7230
        %v7232 = vpop.f32.mrb[0].mxu0
        %7233 = vmatprep.mubr.bf16.mxu0 0
        %7234 = vmatmul.mubr.bf16.gmra.mrb[0].mxu0 %v7018
        %v7235 = vpop.f32.mrb[0].mxu0
        %v7236 = vadd.f32 0.0, %v7235
        %v7237 = vpop.f32.mrb[0].mxu0
        %v7238 = vpop.f32.mrb[0].mxu0
        %v7239 = vadd.f32 0.0, %v7238
        %v7240 = vpop.f32.mrb[0].mxu0
        %7241 = vmatprep.mubr.bf16.mxu0 0
        %7242 = vmatmul.mubr.bf16.gmra.mrb[0].mxu0 %v7019
        %v7243 = vpop.f32.mrb[0].mxu0
        %v7244 = vadd.f32 0.0, %v7243
        %v7245 = vpop.f32.mrb[0].mxu0
        %v7246 = vpop.f32.mrb[0].mxu0
        %v7247 = vadd.f32 0.0, %v7246
        %v7248 = vpop.f32.mrb[0].mxu0
        %7249 = vmatprep.mubr.bf16.mxu0 0
        %7250 = vmatmul.mubr.bf16.gmra.mrb[0].mxu0 %v7020
        %v7251 = vpop.f32.mrb[0].mxu0
        %v7252 = vadd.f32 0.0, %v7251
        %v7253 = vpop.f32.mrb[0].mxu0
        %v7254 = vpop.f32.mrb[0].mxu0
        %v7255 = vadd.f32 0.0, %v7254
        %v7256 = vpop.f32.mrb[0].mxu0
        %7257 = vmatprep.mubr.bf16.mxu0 0
        %7258 = vmatmul.mubr.bf16.gmra.mrb[0].mxu0 %v7021
        %v7259 = vpop.f32.mrb[0].mxu0
        %v7260 = vadd.f32 0.0, %v7259
        %v7261 = vpop.f32.mrb[0].mxu0
        %v7262 = vpop.f32.mrb[0].mxu0
        %v7263 = vadd.f32 0.0, %v7262
        %v7264 = vpop.f32.mrb[0].mxu0
        %7265 = vmatprep.mubr.bf16.mxu0 0
        %7266 = vmatmul.mubr.bf16.gmra.mrb[0].mxu0 %v7022
        %v7267 = vpop.f32.mrb[0].mxu0
        %v7268 = vadd.f32 0.0, %v7267
        %v7269 = vpop.f32.mrb[0].mxu0
        %v7270 = vpop.f32.mrb[0].mxu0
        %v7271 = vadd.f32 0.0, %v7270
        %v7272 = vpop.f32.mrb[0].mxu0
        %7273 = vmatprep.mubr.bf16.mxu0 0
        %7274 = vmatmul.mubr.bf16.gmra.mrb[0].mxu0 %v7023
        %v7275 = vpop.f32.mrb[0].mxu0
        %v7276 = vadd.f32 0.0, %v7275
        %v7277 = vpop.f32.mrb[0].mxu0
        %v7278 = vpop.f32.mrb[0].mxu0
        %v7279 = vadd.f32 0.0, %v7278
        %v7280 = vpop.f32.mrb[0].mxu0
        %7281 = vdwg.mxu0
        %7282 = vrot.lane.b32.xlu0 %v2171, 64
        %v7283 = vpop.permute.xlu0 %7282
        %7284 = vrot.lane.b32.xlu0 %v2172, 64
        %v7285 = vpop.permute.xlu0 %7284
        %7286 = vrot.lane.b32.xlu0 %v2173, 64
        %v7287 = vpop.permute.xlu0 %7286
        %7288 = vrot.lane.b32.xlu0 %v2174, 64
        %v7289 = vpop.permute.xlu0 %7288
        %7290 = vrot.lane.b32.xlu0 %v2175, 64
        %v7291 = vpop.permute.xlu0 %7290
        %7292 = vrot.lane.b32.xlu0 %v2176, 64
        %v7293 = vpop.permute.xlu0 %7292
        %7294 = vrot.lane.b32.xlu0 %v2177, 64
        %v7295 = vpop.permute.xlu0 %7294
        %7296 = vrot.lane.b32.xlu0 %v2178, 64
        %v7297 = vpop.permute.xlu0 %7296
        %7306 = vmatprep.subr.bf16.mxu0 0
        %7307 = vmatpush1.bf16.msra.mxu0 %v7283
        %7308 = vmatprep.subr.bf16.mxu0 0
        %7309 = vmatpush1.bf16.msra.mxu0 %v7285
        %7310 = vmatprep.subr.bf16.mxu0 0
        %7311 = vmatpush1.bf16.msra.mxu0 %v7287
        %7312 = vmatprep.subr.bf16.mxu0 0
        %7313 = vmatpush1.bf16.msra.mxu0 %v7289
        %7314 = vmatprep.subr.bf16.mxu0 0
        %7315 = vmatpush1.bf16.msra.mxu0 %v7291
        %7316 = vmatprep.subr.bf16.mxu0 0
        %7317 = vmatpush1.bf16.msra.mxu0 %v7293
        %7318 = vmatprep.subr.bf16.mxu0 0
        %7319 = vmatpush1.bf16.msra.mxu0 %v7295
        %7320 = vmatprep.subr.bf16.mxu0 0
        %7321 = vmatpush1.bf16.msra.mxu0 %v7297
        %7322 = vmatprep.subr.bf16.mxu0 0
        %7323 = vmatpush1.bf16.msra.mxu0 0
        %7324 = vmatprep.subr.bf16.mxu0 0
        %7325 = vmatpush1.bf16.msra.mxu0 0
        %7326 = vmatprep.subr.bf16.mxu0 0
        %7327 = vmatpush1.bf16.msra.mxu0 0
        %7328 = vmatprep.subr.bf16.mxu0 0
        %7329 = vmatpush1.bf16.msra.mxu0 0
        %7330 = vmatprep.subr.bf16.mxu0 0
        %7331 = vmatpush1.bf16.msra.mxu0 0
        %7332 = vmatprep.subr.bf16.mxu0 0
        %7333 = vmatpush1.bf16.msra.mxu0 0
        %7334 = vmatprep.subr.bf16.mxu0 0
        %7335 = vmatpush1.bf16.msra.mxu0 0
        %7336 = vmatprep.subr.bf16.mxu0 0
        %7337 = vmatpush1.bf16.msra.mxu0 0
        %7338 = vmatprep.mubr.bf16.mxu0 0
        %7339 = vmatmul.mubr.bf16.gmra.mrb[0].mxu0 %v7024
        %v7340 = vpop.f32.mrb[0].mxu0
        %v7341 = vadd.f32 0.0, %v7340
        %v7342 = vpop.f32.mrb[0].mxu0
        %v7343 = vpop.f32.mrb[0].mxu0
        %v7344 = vadd.f32 0.0, %v7343
        %v7345 = vpop.f32.mrb[0].mxu0
        %7346 = vmatprep.mubr.bf16.mxu0 0
        %7347 = vmatmul.mubr.bf16.gmra.mrb[0].mxu0 %v7025
        %v7348 = vpop.f32.mrb[0].mxu0
        %v7349 = vadd.f32 0.0, %v7348
        %v7350 = vpop.f32.mrb[0].mxu0
        %v7351 = vpop.f32.mrb[0].mxu0
        %v7352 = vadd.f32 0.0, %v7351
        %v7353 = vpop.f32.mrb[0].mxu0
        %7354 = vmatprep.mubr.bf16.mxu0 0
        %7355 = vmatmul.mubr.bf16.gmra.mrb[0].mxu0 %v7026
        %v7356 = vpop.f32.mrb[0].mxu0
        %v7357 = vadd.f32 0.0, %v7356
        %v7358 = vpop.f32.mrb[0].mxu0
        %v7359 = vpop.f32.mrb[0].mxu0
        %v7360 = vadd.f32 0.0, %v7359
        %v7361 = vpop.f32.mrb[0].mxu0
        %7362 = vmatprep.mubr.bf16.mxu0 0
        %7363 = vmatmul.mubr.bf16.gmra.mrb[0].mxu0 %v7027
        %v7364 = vpop.f32.mrb[0].mxu0
        %v7365 = vadd.f32 0.0, %v7364
        %v7366 = vpop.f32.mrb[0].mxu0
        %v7367 = vpop.f32.mrb[0].mxu0
        %v7368 = vadd.f32 0.0, %v7367
        %v7369 = vpop.f32.mrb[0].mxu0
        %7370 = vmatprep.mubr.bf16.mxu0 0
        %7371 = vmatmul.mubr.bf16.gmra.mrb[0].mxu0 %v7028
        %v7372 = vpop.f32.mrb[0].mxu0
        %v7373 = vadd.f32 0.0, %v7372
        %v7374 = vpop.f32.mrb[0].mxu0
        %v7375 = vpop.f32.mrb[0].mxu0
        %v7376 = vadd.f32 0.0, %v7375
        %v7377 = vpop.f32.mrb[0].mxu0
        %7378 = vmatprep.mubr.bf16.mxu0 0
        %7379 = vmatmul.mubr.bf16.gmra.mrb[0].mxu0 %v7029
        %v7380 = vpop.f32.mrb[0].mxu0
        %v7381 = vadd.f32 0.0, %v7380
        %v7382 = vpop.f32.mrb[0].mxu0
        %v7383 = vpop.f32.mrb[0].mxu0
        %v7384 = vadd.f32 0.0, %v7383
        %v7385 = vpop.f32.mrb[0].mxu0
        %7386 = vmatprep.mubr.bf16.mxu0 0
        %7387 = vmatmul.mubr.bf16.gmra.mrb[0].mxu0 %v7030
        %v7388 = vpop.f32.mrb[0].mxu0
        %v7389 = vadd.f32 0.0, %v7388
        %v7390 = vpop.f32.mrb[0].mxu0
        %v7391 = vpop.f32.mrb[0].mxu0
        %v7392 = vadd.f32 0.0, %v7391
        %v7393 = vpop.f32.mrb[0].mxu0
        %7394 = vmatprep.mubr.bf16.mxu0 0
        %7395 = vmatmul.mubr.bf16.gmra.mrb[0].mxu0 %v7031
        %v7396 = vpop.f32.mrb[0].mxu0
        %v7397 = vadd.f32 0.0, %v7396
        %v7398 = vpop.f32.mrb[0].mxu0
        %v7399 = vpop.f32.mrb[0].mxu0
        %v7400 = vadd.f32 0.0, %v7399
        %v7401 = vpop.f32.mrb[0].mxu0
        %7402 = vdwg.mxu0
        %7403 = vrot.lane.b32.xlu0 %v2179, 64
        %v7404 = vpop.permute.xlu0 %7403
        %7405 = vrot.lane.b32.xlu0 %v2180, 64
        %v7406 = vpop.permute.xlu0 %7405
        %7407 = vrot.lane.b32.xlu0 %v2181, 64
        %v7408 = vpop.permute.xlu0 %7407
        %7409 = vrot.lane.b32.xlu0 %v2182, 64
        %v7410 = vpop.permute.xlu0 %7409
        %7411 = vrot.lane.b32.xlu0 %v2183, 64
        %v7412 = vpop.permute.xlu0 %7411
        %7413 = vrot.lane.b32.xlu0 %v2184, 64
        %v7414 = vpop.permute.xlu0 %7413
        %7415 = vrot.lane.b32.xlu0 %v2185, 64
        %v7416 = vpop.permute.xlu0 %7415
        %7417 = vrot.lane.b32.xlu0 %v2186, 64
        %v7418 = vpop.permute.xlu0 %7417
        %7427 = vmatprep.subr.bf16.mxu0 0
        %7428 = vmatpush1.bf16.msra.mxu0 %v7404
        %7429 = vmatprep.subr.bf16.mxu0 0
        %7430 = vmatpush1.bf16.msra.mxu0 %v7406
        %7431 = vmatprep.subr.bf16.mxu0 0
        %7432 = vmatpush1.bf16.msra.mxu0 %v7408
        %7433 = vmatprep.subr.bf16.mxu0 0
        %7434 = vmatpush1.bf16.msra.mxu0 %v7410
        %7435 = vmatprep.subr.bf16.mxu0 0
        %7436 = vmatpush1.bf16.msra.mxu0 %v7412
        %7437 = vmatprep.subr.bf16.mxu0 0
        %7438 = vmatpush1.bf16.msra.mxu0 %v7414
        %7439 = vmatprep.subr.bf16.mxu0 0
        %7440 = vmatpush1.bf16.msra.mxu0 %v7416
        %7441 = vmatprep.subr.bf16.mxu0 0
        %7442 = vmatpush1.bf16.msra.mxu0 %v7418
        %7443 = vmatprep.subr.bf16.mxu0 0
        %7444 = vmatpush1.bf16.msra.mxu0 0
        %7445 = vmatprep.subr.bf16.mxu0 0
        %7446 = vmatpush1.bf16.msra.mxu0 0
        %7447 = vmatprep.subr.bf16.mxu0 0
        %7448 = vmatpush1.bf16.msra.mxu0 0
        %7449 = vmatprep.subr.bf16.mxu0 0
        %7450 = vmatpush1.bf16.msra.mxu0 0
        %7451 = vmatprep.subr.bf16.mxu0 0
        %7452 = vmatpush1.bf16.msra.mxu0 0
        %7453 = vmatprep.subr.bf16.mxu0 0
        %7454 = vmatpush1.bf16.msra.mxu0 0
        %7455 = vmatprep.subr.bf16.mxu0 0
        %7456 = vmatpush1.bf16.msra.mxu0 0
        %7457 = vmatprep.subr.bf16.mxu0 0
        %7458 = vmatpush1.bf16.msra.mxu0 0
        %7459 = vmatprep.mubr.bf16.mxu0 0
        %7460 = vmatmul.mubr.bf16.gmra.mrb[0].mxu0 %v7032
        %v7461 = vpop.f32.mrb[0].mxu0
        %v7462 = vadd.f32 0.0, %v7461
        %v7463 = vpop.f32.mrb[0].mxu0
        %v7464 = vpop.f32.mrb[0].mxu0
        %v7465 = vadd.f32 0.0, %v7464
        %v7466 = vpop.f32.mrb[0].mxu0
        %7467 = vmatprep.mubr.bf16.mxu0 0
        %7468 = vmatmul.mubr.bf16.gmra.mrb[0].mxu0 %v7033
        %v7469 = vpop.f32.mrb[0].mxu0
        %v7470 = vadd.f32 0.0, %v7469
        %v7471 = vpop.f32.mrb[0].mxu0
        %v7472 = vpop.f32.mrb[0].mxu0
        %v7473 = vadd.f32 0.0, %v7472
        %v7474 = vpop.f32.mrb[0].mxu0
        %7475 = vmatprep.mubr.bf16.mxu0 0
        %7476 = vmatmul.mubr.bf16.gmra.mrb[0].mxu0 %v7034
        %v7477 = vpop.f32.mrb[0].mxu0
        %v7478 = vadd.f32 0.0, %v7477
        %v7479 = vpop.f32.mrb[0].mxu0
        %v7480 = vpop.f32.mrb[0].mxu0
        %v7481 = vadd.f32 0.0, %v7480
        %v7482 = vpop.f32.mrb[0].mxu0
        %7483 = vmatprep.mubr.bf16.mxu0 0
        %7484 = vmatmul.mubr.bf16.gmra.mrb[0].mxu0 %v7035
        %v7485 = vpop.f32.mrb[0].mxu0
        %v7486 = vadd.f32 0.0, %v7485
        %v7487 = vpop.f32.mrb[0].mxu0
        %v7488 = vpop.f32.mrb[0].mxu0
        %v7489 = vadd.f32 0.0, %v7488
        %v7490 = vpop.f32.mrb[0].mxu0
        %7491 = vmatprep.mubr.bf16.mxu0 0
        %7492 = vmatmul.mubr.bf16.gmra.mrb[0].mxu0 %v7036
        %v7493 = vpop.f32.mrb[0].mxu0
        %v7494 = vadd.f32 0.0, %v7493
        %v7495 = vpop.f32.mrb[0].mxu0
        %v7496 = vpop.f32.mrb[0].mxu0
        %v7497 = vadd.f32 0.0, %v7496
        %v7498 = vpop.f32.mrb[0].mxu0
        %7499 = vmatprep.mubr.bf16.mxu0 0
        %7500 = vmatmul.mubr.bf16.gmra.mrb[0].mxu0 %v7037
        %v7501 = vpop.f32.mrb[0].mxu0
        %v7502 = vadd.f32 0.0, %v7501
        %v7503 = vpop.f32.mrb[0].mxu0
        %v7504 = vpop.f32.mrb[0].mxu0
        %v7505 = vadd.f32 0.0, %v7504
        %v7506 = vpop.f32.mrb[0].mxu0
        %7507 = vmatprep.mubr.bf16.mxu0 0
        %7508 = vmatmul.mubr.bf16.gmra.mrb[0].mxu0 %v7038
        %v7509 = vpop.f32.mrb[0].mxu0
        %v7510 = vadd.f32 0.0, %v7509
        %v7511 = vpop.f32.mrb[0].mxu0
        %v7512 = vpop.f32.mrb[0].mxu0
        %v7513 = vadd.f32 0.0, %v7512
        %v7514 = vpop.f32.mrb[0].mxu0
        %7515 = vmatprep.mubr.bf16.mxu0 0
        %7516 = vmatmul.mubr.bf16.gmra.mrb[0].mxu0 %v7039
        %v7517 = vpop.f32.mrb[0].mxu0
        %v7518 = vadd.f32 0.0, %v7517
        %v7519 = vpop.f32.mrb[0].mxu0
        %v7520 = vpop.f32.mrb[0].mxu0
        %v7521 = vadd.f32 0.0, %v7520
        %v7522 = vpop.f32.mrb[0].mxu0
        %7523 = vdwg.mxu0
        %v7524 = vpack.c.bf16 %v7102, %v7099
        %v7525 = vpack.c.bf16 %v7110, %v7107
        %v7526 = vpack.c.bf16 %v7118, %v7115
        %v7527 = vpack.c.bf16 %v7126, %v7123
        %v7528 = vpack.c.bf16 %v7134, %v7131
        %v7529 = vpack.c.bf16 %v7142, %v7139
        %v7530 = vpack.c.bf16 %v7150, %v7147
        %v7531 = vpack.c.bf16 %v7158, %v7155
        %v7532 = vpack.c.bf16 %v7223, %v7220
        %v7533 = vpack.c.bf16 %v7231, %v7228
        %v7534 = vpack.c.bf16 %v7239, %v7236
        %v7535 = vpack.c.bf16 %v7247, %v7244
        %v7536 = vpack.c.bf16 %v7255, %v7252
        %v7537 = vpack.c.bf16 %v7263, %v7260
        %v7538 = vpack.c.bf16 %v7271, %v7268
        %v7539 = vpack.c.bf16 %v7279, %v7276
        %v7540 = vpack.c.bf16 %v7344, %v7341
        %v7541 = vpack.c.bf16 %v7352, %v7349
        %v7542 = vpack.c.bf16 %v7360, %v7357
        %v7543 = vpack.c.bf16 %v7368, %v7365
        %v7544 = vpack.c.bf16 %v7376, %v7373
        %v7545 = vpack.c.bf16 %v7384, %v7381
        %v7546 = vpack.c.bf16 %v7392, %v7389
        %v7547 = vpack.c.bf16 %v7400, %v7397
        %v7548 = vpack.c.bf16 %v7465, %v7462
        %v7549 = vpack.c.bf16 %v7473, %v7470
        %v7550 = vpack.c.bf16 %v7481, %v7478
        %v7551 = vpack.c.bf16 %v7489, %v7486
        %v7552 = vpack.c.bf16 %v7497, %v7494
        %v7553 = vpack.c.bf16 %v7505, %v7502
        %v7554 = vpack.c.bf16 %v7513, %v7510
        %v7555 = vpack.c.bf16 %v7521, %v7518
        %7556 = vrot.lane.b32.xlu0 %v2091, 32
        %v7557 = vpop.permute.xlu0 %7556
        %7558 = vrot.lane.b32.xlu0 %v2092, 32
        %v7559 = vpop.permute.xlu0 %7558
        %7560 = vrot.lane.b32.xlu0 %v2093, 32
        %v7561 = vpop.permute.xlu0 %7560
        %7562 = vrot.lane.b32.xlu0 %v2094, 32
        %v7563 = vpop.permute.xlu0 %7562
        %7564 = vrot.lane.b32.xlu0 %v2095, 32
        %v7565 = vpop.permute.xlu0 %7564
        %7566 = vrot.lane.b32.xlu0 %v2096, 32
        %v7567 = vpop.permute.xlu0 %7566
        %7568 = vrot.lane.b32.xlu0 %v2097, 32
        %v7569 = vpop.permute.xlu0 %7568
        %7570 = vrot.lane.b32.xlu0 %v2098, 32
        %v7571 = vpop.permute.xlu0 %7570
        %7572 = vrot.lane.b32.xlu0 %v2123, 32
        %v7573 = vpop.permute.xlu0 %7572
        %7574 = vrot.lane.b32.xlu0 %v2124, 32
        %v7575 = vpop.permute.xlu0 %7574
        %7576 = vrot.lane.b32.xlu0 %v2125, 32
        %v7577 = vpop.permute.xlu0 %7576
        %7578 = vrot.lane.b32.xlu0 %v2126, 32
        %v7579 = vpop.permute.xlu0 %7578
        %7580 = vrot.lane.b32.xlu0 %v2127, 32
        %v7581 = vpop.permute.xlu0 %7580
        %7582 = vrot.lane.b32.xlu0 %v2128, 32
        %v7583 = vpop.permute.xlu0 %7582
        %7584 = vrot.lane.b32.xlu0 %v2129, 32
        %v7585 = vpop.permute.xlu0 %7584
        %7586 = vrot.lane.b32.xlu0 %v2130, 32
        %v7587 = vpop.permute.xlu0 %7586
        %v7589 = vsel %vm2187, %v7557, 0
        %v7592 = vsel %vm2187, %v7559, 0
        %v7595 = vsel %vm2187, %v7561, 0
        %v7598 = vsel %vm2187, %v7563, 0
        %v7601 = vsel %vm2187, %v7565, 0
        %v7604 = vsel %vm2187, %v7567, 0
        %v7607 = vsel %vm2187, %v7569, 0
        %v7610 = vsel %vm2187, %v7571, 0
        %v7613 = vsel %vm2187, %v7573, 0
        %v7616 = vsel %vm2187, %v7575, 0
        %v7619 = vsel %vm2187, %v7577, 0
        %v7622 = vsel %vm2187, %v7579, 0
        %v7625 = vsel %vm2187, %v7581, 0
        %v7628 = vsel %vm2187, %v7583, 0
        %v7631 = vsel %vm2187, %v7585, 0
        %v7634 = vsel %vm2187, %v7587, 0
        %7636 = vmatprep.subr.bf16.mxu0 0
        %7637 = vmatpush1.bf16.xpose.msra.mxu0 %v7613
        %7638 = vmatprep.subr.bf16.mxu0 0
        %7639 = vmatpush1.bf16.xpose.msra.mxu0 %v7616
        %7640 = vmatprep.subr.bf16.mxu0 0
        %7641 = vmatpush1.bf16.xpose.msra.mxu0 %v7619
        %7642 = vmatprep.subr.bf16.mxu0 0
        %7643 = vmatpush1.bf16.xpose.msra.mxu0 %v7622
        %7644 = vmatprep.subr.bf16.mxu0 0
        %7645 = vmatpush1.bf16.xpose.msra.mxu0 %v7625
        %7646 = vmatprep.subr.bf16.mxu0 0
        %7647 = vmatpush1.bf16.xpose.msra.mxu0 %v7628
        %7648 = vmatprep.subr.bf16.mxu0 0
        %7649 = vmatpush1.bf16.xpose.msra.mxu0 %v7631
        %7650 = vmatprep.subr.bf16.mxu0 0
        %7651 = vmatpush1.bf16.xpose.msra.mxu0 %v7634
        %7652 = vmatprep.subr.bf16.mxu0 0
        %7653 = vmatpush1.bf16.xpose.msra.mxu0 0
        %7654 = vmatprep.subr.bf16.mxu0 0
        %7655 = vmatpush1.bf16.xpose.msra.mxu0 0
        %7656 = vmatprep.subr.bf16.mxu0 0
        %7657 = vmatpush1.bf16.xpose.msra.mxu0 0
        %7658 = vmatprep.subr.bf16.mxu0 0
        %7659 = vmatpush1.bf16.xpose.msra.mxu0 0
        %7660 = vmatprep.subr.bf16.mxu0 0
        %7661 = vmatpush1.bf16.xpose.msra.mxu0 0
        %7662 = vmatprep.subr.bf16.mxu0 0
        %7663 = vmatpush1.bf16.xpose.msra.mxu0 0
        %7664 = vmatprep.subr.bf16.mxu0 0
        %7665 = vmatpush1.bf16.xpose.msra.mxu0 0
        %7666 = vmatprep.subr.bf16.mxu0 0
        %7667 = vmatpush1.bf16.xpose.msra.mxu0 0
        %7668 = vmatprep.mubr.bf16.mxu0 0
        %7669 = vmatmul.mubr.bf16.gmra.mrb[0].mxu0 %v7589
        %v7670 = vpop.f32.mrb[0].mxu0
        %v7671 = vadd.f32 0.0, %v7670
        %v7672 = vpop.f32.mrb[0].mxu0
        %v7673 = vpop.f32.mrb[0].mxu0
        %v7674 = vadd.f32 0.0, %v7673
        %v7675 = vpop.f32.mrb[0].mxu0
        %7676 = vmatprep.mubr.bf16.mxu0 0
        %7677 = vmatmul.mubr.bf16.gmra.mrb[0].mxu0 %v7592
        %v7678 = vpop.f32.mrb[0].mxu0
        %v7679 = vadd.f32 0.0, %v7678
        %v7680 = vpop.f32.mrb[0].mxu0
        %v7681 = vpop.f32.mrb[0].mxu0
        %v7682 = vadd.f32 0.0, %v7681
        %v7683 = vpop.f32.mrb[0].mxu0
        %7684 = vmatprep.mubr.bf16.mxu0 0
        %7685 = vmatmul.mubr.bf16.gmra.mrb[0].mxu0 %v7595
        %v7686 = vpop.f32.mrb[0].mxu0
        %v7687 = vadd.f32 0.0, %v7686
        %v7688 = vpop.f32.mrb[0].mxu0
        %v7689 = vpop.f32.mrb[0].mxu0
        %v7690 = vadd.f32 0.0, %v7689
        %v7691 = vpop.f32.mrb[0].mxu0
        %7692 = vmatprep.mubr.bf16.mxu0 0
        %7693 = vmatmul.mubr.bf16.gmra.mrb[0].mxu0 %v7598
        %v7694 = vpop.f32.mrb[0].mxu0
        %v7695 = vadd.f32 0.0, %v7694
        %v7696 = vpop.f32.mrb[0].mxu0
        %v7697 = vpop.f32.mrb[0].mxu0
        %v7698 = vadd.f32 0.0, %v7697
        %v7699 = vpop.f32.mrb[0].mxu0
        %7700 = vmatprep.mubr.bf16.mxu0 0
        %7701 = vmatmul.mubr.bf16.gmra.mrb[0].mxu0 %v7601
        %v7702 = vpop.f32.mrb[0].mxu0
        %v7703 = vadd.f32 0.0, %v7702
        %v7704 = vpop.f32.mrb[0].mxu0
        %v7705 = vpop.f32.mrb[0].mxu0
        %v7706 = vadd.f32 0.0, %v7705
        %v7707 = vpop.f32.mrb[0].mxu0
        %7708 = vmatprep.mubr.bf16.mxu0 0
        %7709 = vmatmul.mubr.bf16.gmra.mrb[0].mxu0 %v7604
        %v7710 = vpop.f32.mrb[0].mxu0
        %v7711 = vadd.f32 0.0, %v7710
        %v7712 = vpop.f32.mrb[0].mxu0
        %v7713 = vpop.f32.mrb[0].mxu0
        %v7714 = vadd.f32 0.0, %v7713
        %v7715 = vpop.f32.mrb[0].mxu0
        %7716 = vmatprep.mubr.bf16.mxu0 0
        %7717 = vmatmul.mubr.bf16.gmra.mrb[0].mxu0 %v7607
        %v7718 = vpop.f32.mrb[0].mxu0
        %v7719 = vadd.f32 0.0, %v7718
        %v7720 = vpop.f32.mrb[0].mxu0
        %v7721 = vpop.f32.mrb[0].mxu0
        %v7722 = vadd.f32 0.0, %v7721
        %v7723 = vpop.f32.mrb[0].mxu0
        %7724 = vmatprep.mubr.bf16.mxu0 0
        %7725 = vmatmul.mubr.bf16.gmra.mrb[0].mxu0 %v7610
        %v7726 = vpop.f32.mrb[0].mxu0
        %v7727 = vadd.f32 0.0, %v7726
        %v7728 = vpop.f32.mrb[0].mxu0
        %v7729 = vpop.f32.mrb[0].mxu0
        %v7730 = vadd.f32 0.0, %v7729
        %v7731 = vpop.f32.mrb[0].mxu0
        %7732 = vdwg.mxu0
        %7733 = vrot.lane.b32.xlu0 %v2099, 32
        %v7734 = vpop.permute.xlu0 %7733
        %7735 = vrot.lane.b32.xlu0 %v2100, 32
        %v7736 = vpop.permute.xlu0 %7735
        %7737 = vrot.lane.b32.xlu0 %v2101, 32
        %v7738 = vpop.permute.xlu0 %7737
        %7739 = vrot.lane.b32.xlu0 %v2102, 32
        %v7740 = vpop.permute.xlu0 %7739
        %7741 = vrot.lane.b32.xlu0 %v2103, 32
        %v7742 = vpop.permute.xlu0 %7741
        %7743 = vrot.lane.b32.xlu0 %v2104, 32
        %v7744 = vpop.permute.xlu0 %7743
        %7745 = vrot.lane.b32.xlu0 %v2105, 32
        %v7746 = vpop.permute.xlu0 %7745
        %7747 = vrot.lane.b32.xlu0 %v2106, 32
        %v7748 = vpop.permute.xlu0 %7747
        %7749 = vrot.lane.b32.xlu0 %v2131, 32
        %v7750 = vpop.permute.xlu0 %7749
        %7751 = vrot.lane.b32.xlu0 %v2132, 32
        %v7752 = vpop.permute.xlu0 %7751
        %7753 = vrot.lane.b32.xlu0 %v2133, 32
        %v7754 = vpop.permute.xlu0 %7753
        %7755 = vrot.lane.b32.xlu0 %v2134, 32
        %v7756 = vpop.permute.xlu0 %7755
        %7757 = vrot.lane.b32.xlu0 %v2135, 32
        %v7758 = vpop.permute.xlu0 %7757
        %7759 = vrot.lane.b32.xlu0 %v2136, 32
        %v7760 = vpop.permute.xlu0 %7759
        %7761 = vrot.lane.b32.xlu0 %v2137, 32
        %v7762 = vpop.permute.xlu0 %7761
        %7763 = vrot.lane.b32.xlu0 %v2138, 32
        %v7764 = vpop.permute.xlu0 %7763
        %v7766 = vsel %vm2187, %v7734, 0
        %v7769 = vsel %vm2187, %v7736, 0
        %v7772 = vsel %vm2187, %v7738, 0
        %v7775 = vsel %vm2187, %v7740, 0
        %v7778 = vsel %vm2187, %v7742, 0
        %v7781 = vsel %vm2187, %v7744, 0
        %v7784 = vsel %vm2187, %v7746, 0
        %v7787 = vsel %vm2187, %v7748, 0
        %v7790 = vsel %vm2187, %v7750, 0
        %v7793 = vsel %vm2187, %v7752, 0
        %v7796 = vsel %vm2187, %v7754, 0
        %v7799 = vsel %vm2187, %v7756, 0
        %v7802 = vsel %vm2187, %v7758, 0
        %v7805 = vsel %vm2187, %v7760, 0
        %v7808 = vsel %vm2187, %v7762, 0
        %v7811 = vsel %vm2187, %v7764, 0
        %7813 = vmatprep.subr.bf16.mxu0 0
        %7814 = vmatpush1.bf16.xpose.msra.mxu0 %v7790
        %7815 = vmatprep.subr.bf16.mxu0 0
        %7816 = vmatpush1.bf16.xpose.msra.mxu0 %v7793
        %7817 = vmatprep.subr.bf16.mxu0 0
        %7818 = vmatpush1.bf16.xpose.msra.mxu0 %v7796
        %7819 = vmatprep.subr.bf16.mxu0 0
        %7820 = vmatpush1.bf16.xpose.msra.mxu0 %v7799
        %7821 = vmatprep.subr.bf16.mxu0 0
        %7822 = vmatpush1.bf16.xpose.msra.mxu0 %v7802
        %7823 = vmatprep.subr.bf16.mxu0 0
        %7824 = vmatpush1.bf16.xpose.msra.mxu0 %v7805
        %7825 = vmatprep.subr.bf16.mxu0 0
        %7826 = vmatpush1.bf16.xpose.msra.mxu0 %v7808
        %7827 = vmatprep.subr.bf16.mxu0 0
        %7828 = vmatpush1.bf16.xpose.msra.mxu0 %v7811
        %7829 = vmatprep.subr.bf16.mxu0 0
        %7830 = vmatpush1.bf16.xpose.msra.mxu0 0
        %7831 = vmatprep.subr.bf16.mxu0 0
        %7832 = vmatpush1.bf16.xpose.msra.mxu0 0
        %7833 = vmatprep.subr.bf16.mxu0 0
        %7834 = vmatpush1.bf16.xpose.msra.mxu0 0
        %7835 = vmatprep.subr.bf16.mxu0 0
        %7836 = vmatpush1.bf16.xpose.msra.mxu0 0
        %7837 = vmatprep.subr.bf16.mxu0 0
        %7838 = vmatpush1.bf16.xpose.msra.mxu0 0
        %7839 = vmatprep.subr.bf16.mxu0 0
        %7840 = vmatpush1.bf16.xpose.msra.mxu0 0
        %7841 = vmatprep.subr.bf16.mxu0 0
        %7842 = vmatpush1.bf16.xpose.msra.mxu0 0
        %7843 = vmatprep.subr.bf16.mxu0 0
        %7844 = vmatpush1.bf16.xpose.msra.mxu0 0
        %7845 = vmatprep.mubr.bf16.mxu0 0
        %7846 = vmatmul.mubr.bf16.gmra.mrb[0].mxu0 %v7766
        %v7847 = vpop.f32.mrb[0].mxu0
        %v7848 = vadd.f32 0.0, %v7847
        %v7849 = vpop.f32.mrb[0].mxu0
        %v7850 = vpop.f32.mrb[0].mxu0
        %v7851 = vadd.f32 0.0, %v7850
        %v7852 = vpop.f32.mrb[0].mxu0
        %7853 = vmatprep.mubr.bf16.mxu0 0
        %7854 = vmatmul.mubr.bf16.gmra.mrb[0].mxu0 %v7769
        %v7855 = vpop.f32.mrb[0].mxu0
        %v7856 = vadd.f32 0.0, %v7855
        %v7857 = vpop.f32.mrb[0].mxu0
        %v7858 = vpop.f32.mrb[0].mxu0
        %v7859 = vadd.f32 0.0, %v7858
        %v7860 = vpop.f32.mrb[0].mxu0
        %7861 = vmatprep.mubr.bf16.mxu0 0
        %7862 = vmatmul.mubr.bf16.gmra.mrb[0].mxu0 %v7772
        %v7863 = vpop.f32.mrb[0].mxu0
        %v7864 = vadd.f32 0.0, %v7863
        %v7865 = vpop.f32.mrb[0].mxu0
        %v7866 = vpop.f32.mrb[0].mxu0
        %v7867 = vadd.f32 0.0, %v7866
        %v7868 = vpop.f32.mrb[0].mxu0
        %7869 = vmatprep.mubr.bf16.mxu0 0
        %7870 = vmatmul.mubr.bf16.gmra.mrb[0].mxu0 %v7775
        %v7871 = vpop.f32.mrb[0].mxu0
        %v7872 = vadd.f32 0.0, %v7871
        %v7873 = vpop.f32.mrb[0].mxu0
        %v7874 = vpop.f32.mrb[0].mxu0
        %v7875 = vadd.f32 0.0, %v7874
        %v7876 = vpop.f32.mrb[0].mxu0
        %7877 = vmatprep.mubr.bf16.mxu0 0
        %7878 = vmatmul.mubr.bf16.gmra.mrb[0].mxu0 %v7778
        %v7879 = vpop.f32.mrb[0].mxu0
        %v7880 = vadd.f32 0.0, %v7879
        %v7881 = vpop.f32.mrb[0].mxu0
        %v7882 = vpop.f32.mrb[0].mxu0
        %v7883 = vadd.f32 0.0, %v7882
        %v7884 = vpop.f32.mrb[0].mxu0
        %7885 = vmatprep.mubr.bf16.mxu0 0
        %7886 = vmatmul.mubr.bf16.gmra.mrb[0].mxu0 %v7781
        %v7887 = vpop.f32.mrb[0].mxu0
        %v7888 = vadd.f32 0.0, %v7887
        %v7889 = vpop.f32.mrb[0].mxu0
        %v7890 = vpop.f32.mrb[0].mxu0
        %v7891 = vadd.f32 0.0, %v7890
        %v7892 = vpop.f32.mrb[0].mxu0
        %7893 = vmatprep.mubr.bf16.mxu0 0
        %7894 = vmatmul.mubr.bf16.gmra.mrb[0].mxu0 %v7784
        %v7895 = vpop.f32.mrb[0].mxu0
        %v7896 = vadd.f32 0.0, %v7895
        %v7897 = vpop.f32.mrb[0].mxu0
        %v7898 = vpop.f32.mrb[0].mxu0
        %v7899 = vadd.f32 0.0, %v7898
        %v7900 = vpop.f32.mrb[0].mxu0
        %7901 = vmatprep.mubr.bf16.mxu0 0
        %7902 = vmatmul.mubr.bf16.gmra.mrb[0].mxu0 %v7787
        %v7903 = vpop.f32.mrb[0].mxu0
        %v7904 = vadd.f32 0.0, %v7903
        %v7905 = vpop.f32.mrb[0].mxu0
        %v7906 = vpop.f32.mrb[0].mxu0
        %v7907 = vadd.f32 0.0, %v7906
        %v7908 = vpop.f32.mrb[0].mxu0
        %7909 = vdwg.mxu0
        %7910 = vrot.lane.b32.xlu0 %v2107, 32
        %v7911 = vpop.permute.xlu0 %7910
        %7912 = vrot.lane.b32.xlu0 %v2108, 32
        %v7913 = vpop.permute.xlu0 %7912
        %7914 = vrot.lane.b32.xlu0 %v2109, 32
        %v7915 = vpop.permute.xlu0 %7914
        %7916 = vrot.lane.b32.xlu0 %v2110, 32
        %v7917 = vpop.permute.xlu0 %7916
        %7918 = vrot.lane.b32.xlu0 %v2111, 32
        %v7919 = vpop.permute.xlu0 %7918
        %7920 = vrot.lane.b32.xlu0 %v2112, 32
        %v7921 = vpop.permute.xlu0 %7920
        %7922 = vrot.lane.b32.xlu0 %v2113, 32
        %v7923 = vpop.permute.xlu0 %7922
        %7924 = vrot.lane.b32.xlu0 %v2114, 32
        %v7925 = vpop.permute.xlu0 %7924
        %7926 = vrot.lane.b32.xlu0 %v2139, 32
        %v7927 = vpop.permute.xlu0 %7926
        %7928 = vrot.lane.b32.xlu0 %v2140, 32
        %v7929 = vpop.permute.xlu0 %7928
        %7930 = vrot.lane.b32.xlu0 %v2141, 32
        %v7931 = vpop.permute.xlu0 %7930
        %7932 = vrot.lane.b32.xlu0 %v2142, 32
        %v7933 = vpop.permute.xlu0 %7932
        %7934 = vrot.lane.b32.xlu0 %v2143, 32
        %v7935 = vpop.permute.xlu0 %7934
        %7936 = vrot.lane.b32.xlu0 %v2144, 32
        %v7937 = vpop.permute.xlu0 %7936
        %7938 = vrot.lane.b32.xlu0 %v2145, 32
        %v7939 = vpop.permute.xlu0 %7938
        %7940 = vrot.lane.b32.xlu0 %v2146, 32
        %v7941 = vpop.permute.xlu0 %7940
        %v7943 = vsel %vm2187, %v7911, 0
        %v7946 = vsel %vm2187, %v7913, 0
        %v7949 = vsel %vm2187, %v7915, 0
        %v7952 = vsel %vm2187, %v7917, 0
        %v7955 = vsel %vm2187, %v7919, 0
        %v7958 = vsel %vm2187, %v7921, 0
        %v7961 = vsel %vm2187, %v7923, 0
        %v7964 = vsel %vm2187, %v7925, 0
        %v7967 = vsel %vm2187, %v7927, 0
        %v7970 = vsel %vm2187, %v7929, 0
        %v7973 = vsel %vm2187, %v7931, 0
        %v7976 = vsel %vm2187, %v7933, 0
        %v7979 = vsel %vm2187, %v7935, 0
        %v7982 = vsel %vm2187, %v7937, 0
        %v7985 = vsel %vm2187, %v7939, 0
        %v7988 = vsel %vm2187, %v7941, 0
        %7990 = vmatprep.subr.bf16.mxu0 0
        %7991 = vmatpush1.bf16.xpose.msra.mxu0 %v7967
        %7992 = vmatprep.subr.bf16.mxu0 0
        %7993 = vmatpush1.bf16.xpose.msra.mxu0 %v7970
        %7994 = vmatprep.subr.bf16.mxu0 0
        %7995 = vmatpush1.bf16.xpose.msra.mxu0 %v7973
        %7996 = vmatprep.subr.bf16.mxu0 0
        %7997 = vmatpush1.bf16.xpose.msra.mxu0 %v7976
        %7998 = vmatprep.subr.bf16.mxu0 0
        %7999 = vmatpush1.bf16.xpose.msra.mxu0 %v7979
        %8000 = vmatprep.subr.bf16.mxu0 0
        %8001 = vmatpush1.bf16.xpose.msra.mxu0 %v7982
        %8002 = vmatprep.subr.bf16.mxu0 0
        %8003 = vmatpush1.bf16.xpose.msra.mxu0 %v7985
        %8004 = vmatprep.subr.bf16.mxu0 0
        %8005 = vmatpush1.bf16.xpose.msra.mxu0 %v7988
        %8006 = vmatprep.subr.bf16.mxu0 0
        %8007 = vmatpush1.bf16.xpose.msra.mxu0 0
        %8008 = vmatprep.subr.bf16.mxu0 0
        %8009 = vmatpush1.bf16.xpose.msra.mxu0 0
        %8010 = vmatprep.subr.bf16.mxu0 0
        %8011 = vmatpush1.bf16.xpose.msra.mxu0 0
        %8012 = vmatprep.subr.bf16.mxu0 0
        %8013 = vmatpush1.bf16.xpose.msra.mxu0 0
        %8014 = vmatprep.subr.bf16.mxu0 0
        %8015 = vmatpush1.bf16.xpose.msra.mxu0 0
        %8016 = vmatprep.subr.bf16.mxu0 0
        %8017 = vmatpush1.bf16.xpose.msra.mxu0 0
        %8018 = vmatprep.subr.bf16.mxu0 0
        %8019 = vmatpush1.bf16.xpose.msra.mxu0 0
        %8020 = vmatprep.subr.bf16.mxu0 0
        %8021 = vmatpush1.bf16.xpose.msra.mxu0 0
        %8022 = vmatprep.mubr.bf16.mxu0 0
        %8023 = vmatmul.mubr.bf16.gmra.mrb[0].mxu0 %v7943
        %v8024 = vpop.f32.mrb[0].mxu0
        %v8025 = vadd.f32 0.0, %v8024
        %v8026 = vpop.f32.mrb[0].mxu0
        %v8027 = vpop.f32.mrb[0].mxu0
        %v8028 = vadd.f32 0.0, %v8027
        %v8029 = vpop.f32.mrb[0].mxu0
        %8030 = vmatprep.mubr.bf16.mxu0 0
        %8031 = vmatmul.mubr.bf16.gmra.mrb[0].mxu0 %v7946
        %v8032 = vpop.f32.mrb[0].mxu0
        %v8033 = vadd.f32 0.0, %v8032
        %v8034 = vpop.f32.mrb[0].mxu0
        %v8035 = vpop.f32.mrb[0].mxu0
        %v8036 = vadd.f32 0.0, %v8035
        %v8037 = vpop.f32.mrb[0].mxu0
        %8038 = vmatprep.mubr.bf16.mxu0 0
        %8039 = vmatmul.mubr.bf16.gmra.mrb[0].mxu0 %v7949
        %v8040 = vpop.f32.mrb[0].mxu0
        %v8041 = vadd.f32 0.0, %v8040
        %v8042 = vpop.f32.mrb[0].mxu0
        %v8043 = vpop.f32.mrb[0].mxu0
        %v8044 = vadd.f32 0.0, %v8043
        %v8045 = vpop.f32.mrb[0].mxu0
        %8046 = vmatprep.mubr.bf16.mxu0 0
        %8047 = vmatmul.mubr.bf16.gmra.mrb[0].mxu0 %v7952
        %v8048 = vpop.f32.mrb[0].mxu0
        %v8049 = vadd.f32 0.0, %v8048
        %v8050 = vpop.f32.mrb[0].mxu0
        %v8051 = vpop.f32.mrb[0].mxu0
        %v8052 = vadd.f32 0.0, %v8051
        %v8053 = vpop.f32.mrb[0].mxu0
        %8054 = vmatprep.mubr.bf16.mxu0 0
        %8055 = vmatmul.mubr.bf16.gmra.mrb[0].mxu0 %v7955
        %v8056 = vpop.f32.mrb[0].mxu0
        %v8057 = vadd.f32 0.0, %v8056
        %v8058 = vpop.f32.mrb[0].mxu0
        %v8059 = vpop.f32.mrb[0].mxu0
        %v8060 = vadd.f32 0.0, %v8059
        %v8061 = vpop.f32.mrb[0].mxu0
        %8062 = vmatprep.mubr.bf16.mxu0 0
        %8063 = vmatmul.mubr.bf16.gmra.mrb[0].mxu0 %v7958
        %v8064 = vpop.f32.mrb[0].mxu0
        %v8065 = vadd.f32 0.0, %v8064
        %v8066 = vpop.f32.mrb[0].mxu0
        %v8067 = vpop.f32.mrb[0].mxu0
        %v8068 = vadd.f32 0.0, %v8067
        %v8069 = vpop.f32.mrb[0].mxu0
        %8070 = vmatprep.mubr.bf16.mxu0 0
        %8071 = vmatmul.mubr.bf16.gmra.mrb[0].mxu0 %v7961
        %v8072 = vpop.f32.mrb[0].mxu0
        %v8073 = vadd.f32 0.0, %v8072
        %v8074 = vpop.f32.mrb[0].mxu0
        %v8075 = vpop.f32.mrb[0].mxu0
        %v8076 = vadd.f32 0.0, %v8075
        %v8077 = vpop.f32.mrb[0].mxu0
        %8078 = vmatprep.mubr.bf16.mxu0 0
        %8079 = vmatmul.mubr.bf16.gmra.mrb[0].mxu0 %v7964
        %v8080 = vpop.f32.mrb[0].mxu0
        %v8081 = vadd.f32 0.0, %v8080
        %v8082 = vpop.f32.mrb[0].mxu0
        %v8083 = vpop.f32.mrb[0].mxu0
        %v8084 = vadd.f32 0.0, %v8083
        %v8085 = vpop.f32.mrb[0].mxu0
        %8086 = vdwg.mxu0
        %8087 = vrot.lane.b32.xlu0 %v2115, 32
        %v8088 = vpop.permute.xlu0 %8087
        %8089 = vrot.lane.b32.xlu0 %v2116, 32
        %v8090 = vpop.permute.xlu0 %8089
        %8091 = vrot.lane.b32.xlu0 %v2117, 32
        %v8092 = vpop.permute.xlu0 %8091
        %8093 = vrot.lane.b32.xlu0 %v2118, 32
        %v8094 = vpop.permute.xlu0 %8093
        %8095 = vrot.lane.b32.xlu0 %v2119, 32
        %v8096 = vpop.permute.xlu0 %8095
        %8097 = vrot.lane.b32.xlu0 %v2120, 32
        %v8098 = vpop.permute.xlu0 %8097
        %8099 = vrot.lane.b32.xlu0 %v2121, 32
        %v8100 = vpop.permute.xlu0 %8099
        %8101 = vrot.lane.b32.xlu0 %v2122, 32
        %v8102 = vpop.permute.xlu0 %8101
        %8103 = vrot.lane.b32.xlu0 %v2147, 32
        %v8104 = vpop.permute.xlu0 %8103
        %8105 = vrot.lane.b32.xlu0 %v2148, 32
        %v8106 = vpop.permute.xlu0 %8105
        %8107 = vrot.lane.b32.xlu0 %v2149, 32
        %v8108 = vpop.permute.xlu0 %8107
        %8109 = vrot.lane.b32.xlu0 %v2150, 32
        %v8110 = vpop.permute.xlu0 %8109
        %8111 = vrot.lane.b32.xlu0 %v2151, 32
        %v8112 = vpop.permute.xlu0 %8111
        %8113 = vrot.lane.b32.xlu0 %v2152, 32
        %v8114 = vpop.permute.xlu0 %8113
        %8115 = vrot.lane.b32.xlu0 %v2153, 32
        %v8116 = vpop.permute.xlu0 %8115
        %8117 = vrot.lane.b32.xlu0 %v2154, 32
        %v8118 = vpop.permute.xlu0 %8117
        %v8120 = vsel %vm2187, %v8088, 0
        %v8123 = vsel %vm2187, %v8090, 0
        %v8126 = vsel %vm2187, %v8092, 0
        %v8129 = vsel %vm2187, %v8094, 0
        %v8132 = vsel %vm2187, %v8096, 0
        %v8135 = vsel %vm2187, %v8098, 0
        %v8138 = vsel %vm2187, %v8100, 0
        %v8141 = vsel %vm2187, %v8102, 0
        %v8144 = vsel %vm2187, %v8104, 0
        %v8147 = vsel %vm2187, %v8106, 0
        %v8150 = vsel %vm2187, %v8108, 0
        %v8153 = vsel %vm2187, %v8110, 0
        %v8156 = vsel %vm2187, %v8112, 0
        %v8159 = vsel %vm2187, %v8114, 0
        %v8162 = vsel %vm2187, %v8116, 0
        %v8165 = vsel %vm2187, %v8118, 0
        %8167 = vmatprep.subr.bf16.mxu0 0
        %8168 = vmatpush1.bf16.xpose.msra.mxu0 %v8144
        %8169 = vmatprep.subr.bf16.mxu0 0
        %8170 = vmatpush1.bf16.xpose.msra.mxu0 %v8147
        %8171 = vmatprep.subr.bf16.mxu0 0
        %8172 = vmatpush1.bf16.xpose.msra.mxu0 %v8150
        %8173 = vmatprep.subr.bf16.mxu0 0
        %8174 = vmatpush1.bf16.xpose.msra.mxu0 %v8153
        %8175 = vmatprep.subr.bf16.mxu0 0
        %8176 = vmatpush1.bf16.xpose.msra.mxu0 %v8156
        %8177 = vmatprep.subr.bf16.mxu0 0
        %8178 = vmatpush1.bf16.xpose.msra.mxu0 %v8159
        %8179 = vmatprep.subr.bf16.mxu0 0
        %8180 = vmatpush1.bf16.xpose.msra.mxu0 %v8162
        %8181 = vmatprep.subr.bf16.mxu0 0
        %8182 = vmatpush1.bf16.xpose.msra.mxu0 %v8165
        %8183 = vmatprep.subr.bf16.mxu0 0
        %8184 = vmatpush1.bf16.xpose.msra.mxu0 0
        %8185 = vmatprep.subr.bf16.mxu0 0
        %8186 = vmatpush1.bf16.xpose.msra.mxu0 0
        %8187 = vmatprep.subr.bf16.mxu0 0
        %8188 = vmatpush1.bf16.xpose.msra.mxu0 0
        %8189 = vmatprep.subr.bf16.mxu0 0
        %8190 = vmatpush1.bf16.xpose.msra.mxu0 0
        %8191 = vmatprep.subr.bf16.mxu0 0
        %8192 = vmatpush1.bf16.xpose.msra.mxu0 0
        %8193 = vmatprep.subr.bf16.mxu0 0
        %8194 = vmatpush1.bf16.xpose.msra.mxu0 0
        %8195 = vmatprep.subr.bf16.mxu0 0
        %8196 = vmatpush1.bf16.xpose.msra.mxu0 0
        %8197 = vmatprep.subr.bf16.mxu0 0
        %8198 = vmatpush1.bf16.xpose.msra.mxu0 0
        %8199 = vmatprep.mubr.bf16.mxu0 0
        %8200 = vmatmul.mubr.bf16.gmra.mrb[0].mxu0 %v8120
        %v8201 = vpop.f32.mrb[0].mxu0
        %v8202 = vadd.f32 0.0, %v8201
        %v8203 = vpop.f32.mrb[0].mxu0
        %v8204 = vpop.f32.mrb[0].mxu0
        %v8205 = vadd.f32 0.0, %v8204
        %v8206 = vpop.f32.mrb[0].mxu0
        %8207 = vmatprep.mubr.bf16.mxu0 0
        %8208 = vmatmul.mubr.bf16.gmra.mrb[0].mxu0 %v8123
        %v8209 = vpop.f32.mrb[0].mxu0
        %v8210 = vadd.f32 0.0, %v8209
        %v8211 = vpop.f32.mrb[0].mxu0
        %v8212 = vpop.f32.mrb[0].mxu0
        %v8213 = vadd.f32 0.0, %v8212
        %v8214 = vpop.f32.mrb[0].mxu0
        %8215 = vmatprep.mubr.bf16.mxu0 0
        %8216 = vmatmul.mubr.bf16.gmra.mrb[0].mxu0 %v8126
        %v8217 = vpop.f32.mrb[0].mxu0
        %v8218 = vadd.f32 0.0, %v8217
        %v8219 = vpop.f32.mrb[0].mxu0
        %v8220 = vpop.f32.mrb[0].mxu0
        %v8221 = vadd.f32 0.0, %v8220
        %v8222 = vpop.f32.mrb[0].mxu0
        %8223 = vmatprep.mubr.bf16.mxu0 0
        %8224 = vmatmul.mubr.bf16.gmra.mrb[0].mxu0 %v8129
        %v8225 = vpop.f32.mrb[0].mxu0
        %v8226 = vadd.f32 0.0, %v8225
        %v8227 = vpop.f32.mrb[0].mxu0
        %v8228 = vpop.f32.mrb[0].mxu0
        %v8229 = vadd.f32 0.0, %v8228
        %v8230 = vpop.f32.mrb[0].mxu0
        %8231 = vmatprep.mubr.bf16.mxu0 0
        %8232 = vmatmul.mubr.bf16.gmra.mrb[0].mxu0 %v8132
        %v8233 = vpop.f32.mrb[0].mxu0
        %v8234 = vadd.f32 0.0, %v8233
        %v8235 = vpop.f32.mrb[0].mxu0
        %v8236 = vpop.f32.mrb[0].mxu0
        %v8237 = vadd.f32 0.0, %v8236
        %v8238 = vpop.f32.mrb[0].mxu0
        %8239 = vmatprep.mubr.bf16.mxu0 0
        %8240 = vmatmul.mubr.bf16.gmra.mrb[0].mxu0 %v8135
        %v8241 = vpop.f32.mrb[0].mxu0
        %v8242 = vadd.f32 0.0, %v8241
        %v8243 = vpop.f32.mrb[0].mxu0
        %v8244 = vpop.f32.mrb[0].mxu0
        %v8245 = vadd.f32 0.0, %v8244
        %v8246 = vpop.f32.mrb[0].mxu0
        %8247 = vmatprep.mubr.bf16.mxu0 0
        %8248 = vmatmul.mubr.bf16.gmra.mrb[0].mxu0 %v8138
        %v8249 = vpop.f32.mrb[0].mxu0
        %v8250 = vadd.f32 0.0, %v8249
        %v8251 = vpop.f32.mrb[0].mxu0
        %v8252 = vpop.f32.mrb[0].mxu0
        %v8253 = vadd.f32 0.0, %v8252
        %v8254 = vpop.f32.mrb[0].mxu0
        %8255 = vmatprep.mubr.bf16.mxu0 0
        %8256 = vmatmul.mubr.bf16.gmra.mrb[0].mxu0 %v8141
        %v8257 = vpop.f32.mrb[0].mxu0
        %v8258 = vadd.f32 0.0, %v8257
        %v8259 = vpop.f32.mrb[0].mxu0
        %v8260 = vpop.f32.mrb[0].mxu0
        %v8261 = vadd.f32 0.0, %v8260
        %v8262 = vpop.f32.mrb[0].mxu0
        %8263 = vdwg.mxu0
        %8264 = vmax.xlane.f32.xlu0 %v7671
        %v8265 = vpop.xlane.xlu0 %8264
        %8266 = vmax.xlane.f32.xlu0 %v7674
        %v8267 = vpop.xlane.xlu0 %8266
        %8268 = vmax.xlane.f32.xlu0 %v7679
        %v8269 = vpop.xlane.xlu0 %8268
        %8270 = vmax.xlane.f32.xlu0 %v7682
        %v8271 = vpop.xlane.xlu0 %8270
        %8272 = vmax.xlane.f32.xlu0 %v7687
        %v8273 = vpop.xlane.xlu0 %8272
        %8274 = vmax.xlane.f32.xlu0 %v7690
        %v8275 = vpop.xlane.xlu0 %8274
        %8276 = vmax.xlane.f32.xlu0 %v7695
        %v8277 = vpop.xlane.xlu0 %8276
        %8278 = vmax.xlane.f32.xlu0 %v7698
        %v8279 = vpop.xlane.xlu0 %8278
        %8280 = vmax.xlane.f32.xlu0 %v7703
        %v8281 = vpop.xlane.xlu0 %8280
        %8282 = vmax.xlane.f32.xlu0 %v7706
        %v8283 = vpop.xlane.xlu0 %8282
        %8284 = vmax.xlane.f32.xlu0 %v7711
        %v8285 = vpop.xlane.xlu0 %8284
        %8286 = vmax.xlane.f32.xlu0 %v7714
        %v8287 = vpop.xlane.xlu0 %8286
        %8288 = vmax.xlane.f32.xlu0 %v7719
        %v8289 = vpop.xlane.xlu0 %8288
        %8290 = vmax.xlane.f32.xlu0 %v7722
        %v8291 = vpop.xlane.xlu0 %8290
        %8292 = vmax.xlane.f32.xlu0 %v7727
        %v8293 = vpop.xlane.xlu0 %8292
        %8294 = vmax.xlane.f32.xlu0 %v7730
        %v8295 = vpop.xlane.xlu0 %8294
        %8296 = vmax.xlane.f32.xlu0 %v7848
        %v8297 = vpop.xlane.xlu0 %8296
        %8298 = vmax.xlane.f32.xlu0 %v7851
        %v8299 = vpop.xlane.xlu0 %8298
        %8300 = vmax.xlane.f32.xlu0 %v7856
        %v8301 = vpop.xlane.xlu0 %8300
        %8302 = vmax.xlane.f32.xlu0 %v7859
        %v8303 = vpop.xlane.xlu0 %8302
        %8304 = vmax.xlane.f32.xlu0 %v7864
        %v8305 = vpop.xlane.xlu0 %8304
        %8306 = vmax.xlane.f32.xlu0 %v7867
        %v8307 = vpop.xlane.xlu0 %8306
        %8308 = vmax.xlane.f32.xlu0 %v7872
        %v8309 = vpop.xlane.xlu0 %8308
        %8310 = vmax.xlane.f32.xlu0 %v7875
        %v8311 = vpop.xlane.xlu0 %8310
        %8312 = vmax.xlane.f32.xlu0 %v7880
        %v8313 = vpop.xlane.xlu0 %8312
        %8314 = vmax.xlane.f32.xlu0 %v7883
        %v8315 = vpop.xlane.xlu0 %8314
        %8316 = vmax.xlane.f32.xlu0 %v7888
        %v8317 = vpop.xlane.xlu0 %8316
        %8318 = vmax.xlane.f32.xlu0 %v7891
        %v8319 = vpop.xlane.xlu0 %8318
        %8320 = vmax.xlane.f32.xlu0 %v7896
        %v8321 = vpop.xlane.xlu0 %8320
        %8322 = vmax.xlane.f32.xlu0 %v7899
        %v8323 = vpop.xlane.xlu0 %8322
        %8324 = vmax.xlane.f32.xlu0 %v7904
        %v8325 = vpop.xlane.xlu0 %8324
        %8326 = vmax.xlane.f32.xlu0 %v7907
        %v8327 = vpop.xlane.xlu0 %8326
        %8328 = vmax.xlane.f32.xlu0 %v8025
        %v8329 = vpop.xlane.xlu0 %8328
        %8330 = vmax.xlane.f32.xlu0 %v8028
        %v8331 = vpop.xlane.xlu0 %8330
        %8332 = vmax.xlane.f32.xlu0 %v8033
        %v8333 = vpop.xlane.xlu0 %8332
        %8334 = vmax.xlane.f32.xlu0 %v8036
        %v8335 = vpop.xlane.xlu0 %8334
        %8336 = vmax.xlane.f32.xlu0 %v8041
        %v8337 = vpop.xlane.xlu0 %8336
        %8338 = vmax.xlane.f32.xlu0 %v8044
        %v8339 = vpop.xlane.xlu0 %8338
        %8340 = vmax.xlane.f32.xlu0 %v8049
        %v8341 = vpop.xlane.xlu0 %8340
        %8342 = vmax.xlane.f32.xlu0 %v8052
        %v8343 = vpop.xlane.xlu0 %8342
        %8344 = vmax.xlane.f32.xlu0 %v8057
        %v8345 = vpop.xlane.xlu0 %8344
        %8346 = vmax.xlane.f32.xlu0 %v8060
        %v8347 = vpop.xlane.xlu0 %8346
        %8348 = vmax.xlane.f32.xlu0 %v8065
        %v8349 = vpop.xlane.xlu0 %8348
        %8350 = vmax.xlane.f32.xlu0 %v8068
        %v8351 = vpop.xlane.xlu0 %8350
        %8352 = vmax.xlane.f32.xlu0 %v8073
        %v8353 = vpop.xlane.xlu0 %8352
        %8354 = vmax.xlane.f32.xlu0 %v8076
        %v8355 = vpop.xlane.xlu0 %8354
        %8356 = vmax.xlane.f32.xlu0 %v8081
        %v8357 = vpop.xlane.xlu0 %8356
        %8358 = vmax.xlane.f32.xlu0 %v8084
        %v8359 = vpop.xlane.xlu0 %8358
        %8360 = vmax.xlane.f32.xlu0 %v8202
        %v8361 = vpop.xlane.xlu0 %8360
        %8362 = vmax.xlane.f32.xlu0 %v8205
        %v8363 = vpop.xlane.xlu0 %8362
        %8364 = vmax.xlane.f32.xlu0 %v8210
        %v8365 = vpop.xlane.xlu0 %8364
        %8366 = vmax.xlane.f32.xlu0 %v8213
        %v8367 = vpop.xlane.xlu0 %8366
        %8368 = vmax.xlane.f32.xlu0 %v8218
        %v8369 = vpop.xlane.xlu0 %8368
        %8370 = vmax.xlane.f32.xlu0 %v8221
        %v8371 = vpop.xlane.xlu0 %8370
        %8372 = vmax.xlane.f32.xlu0 %v8226
        %v8373 = vpop.xlane.xlu0 %8372
        %8374 = vmax.xlane.f32.xlu0 %v8229
        %v8375 = vpop.xlane.xlu0 %8374
        %8376 = vmax.xlane.f32.xlu0 %v8234
        %v8377 = vpop.xlane.xlu0 %8376
        %8378 = vmax.xlane.f32.xlu0 %v8237
        %v8379 = vpop.xlane.xlu0 %8378
        %8380 = vmax.xlane.f32.xlu0 %v8242
        %v8381 = vpop.xlane.xlu0 %8380
        %8382 = vmax.xlane.f32.xlu0 %v8245
        %v8383 = vpop.xlane.xlu0 %8382
        %8384 = vmax.xlane.f32.xlu0 %v8250
        %v8385 = vpop.xlane.xlu0 %8384
        %8386 = vmax.xlane.f32.xlu0 %v8253
        %v8387 = vpop.xlane.xlu0 %8386
        %8388 = vmax.xlane.f32.xlu0 %v8258
        %v8389 = vpop.xlane.xlu0 %8388
        %8390 = vmax.xlane.f32.xlu0 %v8261
        %v8391 = vpop.xlane.xlu0 %8390
        %v8392 = vsub.f32 %v7671, %v8265
        %v8393 = vsub.f32 %v7674, %v8267
        %v8394 = vsub.f32 %v7679, %v8269
        %v8395 = vsub.f32 %v7682, %v8271
        %v8396 = vsub.f32 %v7687, %v8273
        %v8397 = vsub.f32 %v7690, %v8275
        %v8398 = vsub.f32 %v7695, %v8277
        %v8399 = vsub.f32 %v7698, %v8279
        %v8400 = vsub.f32 %v7703, %v8281
        %v8401 = vsub.f32 %v7706, %v8283
        %v8402 = vsub.f32 %v7711, %v8285
        %v8403 = vsub.f32 %v7714, %v8287
        %v8404 = vsub.f32 %v7719, %v8289
        %v8405 = vsub.f32 %v7722, %v8291
        %v8406 = vsub.f32 %v7727, %v8293
        %v8407 = vsub.f32 %v7730, %v8295
        %v8408 = vsub.f32 %v7848, %v8297
        %v8409 = vsub.f32 %v7851, %v8299
        %v8410 = vsub.f32 %v7856, %v8301
        %v8411 = vsub.f32 %v7859, %v8303
        %v8412 = vsub.f32 %v7864, %v8305
        %v8413 = vsub.f32 %v7867, %v8307
        %v8414 = vsub.f32 %v7872, %v8309
        %v8415 = vsub.f32 %v7875, %v8311
        %v8416 = vsub.f32 %v7880, %v8313
        %v8417 = vsub.f32 %v7883, %v8315
        %v8418 = vsub.f32 %v7888, %v8317
        %v8419 = vsub.f32 %v7891, %v8319
        %v8420 = vsub.f32 %v7896, %v8321
        %v8421 = vsub.f32 %v7899, %v8323
        %v8422 = vsub.f32 %v7904, %v8325
        %v8423 = vsub.f32 %v7907, %v8327
        %v8424 = vsub.f32 %v8025, %v8329
        %v8425 = vsub.f32 %v8028, %v8331
        %v8426 = vsub.f32 %v8033, %v8333
        %v8427 = vsub.f32 %v8036, %v8335
        %v8428 = vsub.f32 %v8041, %v8337
        %v8429 = vsub.f32 %v8044, %v8339
        %v8430 = vsub.f32 %v8049, %v8341
        %v8431 = vsub.f32 %v8052, %v8343
        %v8432 = vsub.f32 %v8057, %v8345
        %v8433 = vsub.f32 %v8060, %v8347
        %v8434 = vsub.f32 %v8065, %v8349
        %v8435 = vsub.f32 %v8068, %v8351
        %v8436 = vsub.f32 %v8073, %v8353
        %v8437 = vsub.f32 %v8076, %v8355
        %v8438 = vsub.f32 %v8081, %v8357
        %v8439 = vsub.f32 %v8084, %v8359
        %v8440 = vsub.f32 %v8202, %v8361
        %v8441 = vsub.f32 %v8205, %v8363
        %v8442 = vsub.f32 %v8210, %v8365
        %v8443 = vsub.f32 %v8213, %v8367
        %v8444 = vsub.f32 %v8218, %v8369
        %v8445 = vsub.f32 %v8221, %v8371
        %v8446 = vsub.f32 %v8226, %v8373
        %v8447 = vsub.f32 %v8229, %v8375
        %v8448 = vsub.f32 %v8234, %v8377
        %v8449 = vsub.f32 %v8237, %v8379
        %v8450 = vsub.f32 %v8242, %v8381
        %v8451 = vsub.f32 %v8245, %v8383
        %v8452 = vsub.f32 %v8250, %v8385
        %v8453 = vsub.f32 %v8253, %v8387
        %v8454 = vsub.f32 %v8258, %v8389
        %v8455 = vsub.f32 %v8261, %v8391
        %v8456 = vmul.f32 %v8392, 1.442695
        %v8457 = vpow.pop %v8456
        %v8458 = vmul.f32 %v8393, 1.442695
        %v8459 = vpow.pop %v8458
        %v8460 = vmul.f32 %v8394, 1.442695
        %v8461 = vpow.pop %v8460
        %v8462 = vmul.f32 %v8395, 1.442695
        %v8463 = vpow.pop %v8462
        %v8464 = vmul.f32 %v8396, 1.442695
        %v8465 = vpow.pop %v8464
        %v8466 = vmul.f32 %v8397, 1.442695
        %v8467 = vpow.pop %v8466
        %v8468 = vmul.f32 %v8398, 1.442695
        %v8469 = vpow.pop %v8468
        %v8470 = vmul.f32 %v8399, 1.442695
        %v8471 = vpow.pop %v8470
        %v8472 = vmul.f32 %v8400, 1.442695
        %v8473 = vpow.pop %v8472
        %v8474 = vmul.f32 %v8401, 1.442695
        %v8475 = vpow.pop %v8474
        %v8476 = vmul.f32 %v8402, 1.442695
        %v8477 = vpow.pop %v8476
        %v8478 = vmul.f32 %v8403, 1.442695
        %v8479 = vpow.pop %v8478
        %v8480 = vmul.f32 %v8404, 1.442695
        %v8481 = vpow.pop %v8480
        %v8482 = vmul.f32 %v8405, 1.442695
        %v8483 = vpow.pop %v8482
        %v8484 = vmul.f32 %v8406, 1.442695
        %v8485 = vpow.pop %v8484
        %v8486 = vmul.f32 %v8407, 1.442695
        %v8487 = vpow.pop %v8486
        %v8488 = vmul.f32 %v8408, 1.442695
        %v8489 = vpow.pop %v8488
        %v8490 = vmul.f32 %v8409, 1.442695
        %v8491 = vpow.pop %v8490
        %v8492 = vmul.f32 %v8410, 1.442695
        %v8493 = vpow.pop %v8492
        %v8494 = vmul.f32 %v8411, 1.442695
        %v8495 = vpow.pop %v8494
        %v8496 = vmul.f32 %v8412, 1.442695
        %v8497 = vpow.pop %v8496
        %v8498 = vmul.f32 %v8413, 1.442695
        %v8499 = vpow.pop %v8498
        %v8500 = vmul.f32 %v8414, 1.442695
        %v8501 = vpow.pop %v8500
        %v8502 = vmul.f32 %v8415, 1.442695
        %v8503 = vpow.pop %v8502
        %v8504 = vmul.f32 %v8416, 1.442695
        %v8505 = vpow.pop %v8504
        %v8506 = vmul.f32 %v8417, 1.442695
        %v8507 = vpow.pop %v8506
        %v8508 = vmul.f32 %v8418, 1.442695
        %v8509 = vpow.pop %v8508
        %v8510 = vmul.f32 %v8419, 1.442695
        %v8511 = vpow.pop %v8510
        %v8512 = vmul.f32 %v8420, 1.442695
        %v8513 = vpow.pop %v8512
        %v8514 = vmul.f32 %v8421, 1.442695
        %v8515 = vpow.pop %v8514
        %v8516 = vmul.f32 %v8422, 1.442695
        %v8517 = vpow.pop %v8516
        %v8518 = vmul.f32 %v8423, 1.442695
        %v8519 = vpow.pop %v8518
        %v8520 = vmul.f32 %v8424, 1.442695
        %v8521 = vpow.pop %v8520
        %v8522 = vmul.f32 %v8425, 1.442695
        %v8523 = vpow.pop %v8522
        %v8524 = vmul.f32 %v8426, 1.442695
        %v8525 = vpow.pop %v8524
        %v8526 = vmul.f32 %v8427, 1.442695
        %v8527 = vpow.pop %v8526
        %v8528 = vmul.f32 %v8428, 1.442695
        %v8529 = vpow.pop %v8528
        %v8530 = vmul.f32 %v8429, 1.442695
        %v8531 = vpow.pop %v8530
        %v8532 = vmul.f32 %v8430, 1.442695
        %v8533 = vpow.pop %v8532
        %v8534 = vmul.f32 %v8431, 1.442695
        %v8535 = vpow.pop %v8534
        %v8536 = vmul.f32 %v8432, 1.442695
        %v8537 = vpow.pop %v8536
        %v8538 = vmul.f32 %v8433, 1.442695
        %v8539 = vpow.pop %v8538
        %v8540 = vmul.f32 %v8434, 1.442695
        %v8541 = vpow.pop %v8540
        %v8542 = vmul.f32 %v8435, 1.442695
        %v8543 = vpow.pop %v8542
        %v8544 = vmul.f32 %v8436, 1.442695
        %v8545 = vpow.pop %v8544
        %v8546 = vmul.f32 %v8437, 1.442695
        %v8547 = vpow.pop %v8546
        %v8548 = vmul.f32 %v8438, 1.442695
        %v8549 = vpow.pop %v8548
        %v8550 = vmul.f32 %v8439, 1.442695
        %v8551 = vpow.pop %v8550
        %v8552 = vmul.f32 %v8440, 1.442695
        %v8553 = vpow.pop %v8552
        %v8554 = vmul.f32 %v8441, 1.442695
        %v8555 = vpow.pop %v8554
        %v8556 = vmul.f32 %v8442, 1.442695
        %v8557 = vpow.pop %v8556
        %v8558 = vmul.f32 %v8443, 1.442695
        %v8559 = vpow.pop %v8558
        %v8560 = vmul.f32 %v8444, 1.442695
        %v8561 = vpow.pop %v8560
        %v8562 = vmul.f32 %v8445, 1.442695
        %v8563 = vpow.pop %v8562
        %v8564 = vmul.f32 %v8446, 1.442695
        %v8565 = vpow.pop %v8564
        %v8566 = vmul.f32 %v8447, 1.442695
        %v8567 = vpow.pop %v8566
        %v8568 = vmul.f32 %v8448, 1.442695
        %v8569 = vpow.pop %v8568
        %v8570 = vmul.f32 %v8449, 1.442695
        %v8571 = vpow.pop %v8570
        %v8572 = vmul.f32 %v8450, 1.442695
        %v8573 = vpow.pop %v8572
        %v8574 = vmul.f32 %v8451, 1.442695
        %v8575 = vpow.pop %v8574
        %v8576 = vmul.f32 %v8452, 1.442695
        %v8577 = vpow.pop %v8576
        %v8578 = vmul.f32 %v8453, 1.442695
        %v8579 = vpow.pop %v8578
        %v8580 = vmul.f32 %v8454, 1.442695
        %v8581 = vpow.pop %v8580
        %v8582 = vmul.f32 %v8455, 1.442695
        %v8583 = vpow.pop %v8582
        %8584 = vadd.xlane.f32.xlu0 %v8457
        %v8585 = vpop.xlane.xlu0 %8584
        %8586 = vadd.xlane.f32.xlu0 %v8459
        %v8587 = vpop.xlane.xlu0 %8586
        %8588 = vadd.xlane.f32.xlu0 %v8461
        %v8589 = vpop.xlane.xlu0 %8588
        %8590 = vadd.xlane.f32.xlu0 %v8463
        %v8591 = vpop.xlane.xlu0 %8590
        %8592 = vadd.xlane.f32.xlu0 %v8465
        %v8593 = vpop.xlane.xlu0 %8592
        %8594 = vadd.xlane.f32.xlu0 %v8467
        %v8595 = vpop.xlane.xlu0 %8594
        %8596 = vadd.xlane.f32.xlu0 %v8469
        %v8597 = vpop.xlane.xlu0 %8596
        %8598 = vadd.xlane.f32.xlu0 %v8471
        %v8599 = vpop.xlane.xlu0 %8598
        %8600 = vadd.xlane.f32.xlu0 %v8473
        %v8601 = vpop.xlane.xlu0 %8600
        %8602 = vadd.xlane.f32.xlu0 %v8475
        %v8603 = vpop.xlane.xlu0 %8602
        %8604 = vadd.xlane.f32.xlu0 %v8477
        %v8605 = vpop.xlane.xlu0 %8604
        %8606 = vadd.xlane.f32.xlu0 %v8479
        %v8607 = vpop.xlane.xlu0 %8606
        %8608 = vadd.xlane.f32.xlu0 %v8481
        %v8609 = vpop.xlane.xlu0 %8608
        %8610 = vadd.xlane.f32.xlu0 %v8483
        %v8611 = vpop.xlane.xlu0 %8610
        %8612 = vadd.xlane.f32.xlu0 %v8485
        %v8613 = vpop.xlane.xlu0 %8612
        %8614 = vadd.xlane.f32.xlu0 %v8487
        %v8615 = vpop.xlane.xlu0 %8614
        %8616 = vadd.xlane.f32.xlu0 %v8489
        %v8617 = vpop.xlane.xlu0 %8616
        %8618 = vadd.xlane.f32.xlu0 %v8491
        %v8619 = vpop.xlane.xlu0 %8618
        %8620 = vadd.xlane.f32.xlu0 %v8493
        %v8621 = vpop.xlane.xlu0 %8620
        %8622 = vadd.xlane.f32.xlu0 %v8495
        %v8623 = vpop.xlane.xlu0 %8622
        %8624 = vadd.xlane.f32.xlu0 %v8497
        %v8625 = vpop.xlane.xlu0 %8624
        %8626 = vadd.xlane.f32.xlu0 %v8499
        %v8627 = vpop.xlane.xlu0 %8626
        %8628 = vadd.xlane.f32.xlu0 %v8501
        %v8629 = vpop.xlane.xlu0 %8628
        %8630 = vadd.xlane.f32.xlu0 %v8503
        %v8631 = vpop.xlane.xlu0 %8630
        %8632 = vadd.xlane.f32.xlu0 %v8505
        %v8633 = vpop.xlane.xlu0 %8632
        %8634 = vadd.xlane.f32.xlu0 %v8507
        %v8635 = vpop.xlane.xlu0 %8634
        %8636 = vadd.xlane.f32.xlu0 %v8509
        %v8637 = vpop.xlane.xlu0 %8636
        %8638 = vadd.xlane.f32.xlu0 %v8511
        %v8639 = vpop.xlane.xlu0 %8638
        %8640 = vadd.xlane.f32.xlu0 %v8513
        %v8641 = vpop.xlane.xlu0 %8640
        %8642 = vadd.xlane.f32.xlu0 %v8515
        %v8643 = vpop.xlane.xlu0 %8642
        %8644 = vadd.xlane.f32.xlu0 %v8517
        %v8645 = vpop.xlane.xlu0 %8644
        %8646 = vadd.xlane.f32.xlu0 %v8519
        %v8647 = vpop.xlane.xlu0 %8646
        %8648 = vadd.xlane.f32.xlu0 %v8521
        %v8649 = vpop.xlane.xlu0 %8648
        %8650 = vadd.xlane.f32.xlu0 %v8523
        %v8651 = vpop.xlane.xlu0 %8650
        %8652 = vadd.xlane.f32.xlu0 %v8525
        %v8653 = vpop.xlane.xlu0 %8652
        %8654 = vadd.xlane.f32.xlu0 %v8527
        %v8655 = vpop.xlane.xlu0 %8654
        %8656 = vadd.xlane.f32.xlu0 %v8529
        %v8657 = vpop.xlane.xlu0 %8656
        %8658 = vadd.xlane.f32.xlu0 %v8531
        %v8659 = vpop.xlane.xlu0 %8658
        %8660 = vadd.xlane.f32.xlu0 %v8533
        %v8661 = vpop.xlane.xlu0 %8660
        %8662 = vadd.xlane.f32.xlu0 %v8535
        %v8663 = vpop.xlane.xlu0 %8662
        %8664 = vadd.xlane.f32.xlu0 %v8537
        %v8665 = vpop.xlane.xlu0 %8664
        %8666 = vadd.xlane.f32.xlu0 %v8539
        %v8667 = vpop.xlane.xlu0 %8666
        %8668 = vadd.xlane.f32.xlu0 %v8541
        %v8669 = vpop.xlane.xlu0 %8668
        %8670 = vadd.xlane.f32.xlu0 %v8543
        %v8671 = vpop.xlane.xlu0 %8670
        %8672 = vadd.xlane.f32.xlu0 %v8545
        %v8673 = vpop.xlane.xlu0 %8672
        %8674 = vadd.xlane.f32.xlu0 %v8547
        %v8675 = vpop.xlane.xlu0 %8674
        %8676 = vadd.xlane.f32.xlu0 %v8549
        %v8677 = vpop.xlane.xlu0 %8676
        %8678 = vadd.xlane.f32.xlu0 %v8551
        %v8679 = vpop.xlane.xlu0 %8678
        %8680 = vadd.xlane.f32.xlu0 %v8553
        %v8681 = vpop.xlane.xlu0 %8680
        %8682 = vadd.xlane.f32.xlu0 %v8555
        %v8683 = vpop.xlane.xlu0 %8682
        %8684 = vadd.xlane.f32.xlu0 %v8557
        %v8685 = vpop.xlane.xlu0 %8684
        %8686 = vadd.xlane.f32.xlu0 %v8559
        %v8687 = vpop.xlane.xlu0 %8686
        %8688 = vadd.xlane.f32.xlu0 %v8561
        %v8689 = vpop.xlane.xlu0 %8688
        %8690 = vadd.xlane.f32.xlu0 %v8563
        %v8691 = vpop.xlane.xlu0 %8690
        %8692 = vadd.xlane.f32.xlu0 %v8565
        %v8693 = vpop.xlane.xlu0 %8692
        %8694 = vadd.xlane.f32.xlu0 %v8567
        %v8695 = vpop.xlane.xlu0 %8694
        %8696 = vadd.xlane.f32.xlu0 %v8569
        %v8697 = vpop.xlane.xlu0 %8696
        %8698 = vadd.xlane.f32.xlu0 %v8571
        %v8699 = vpop.xlane.xlu0 %8698
        %8700 = vadd.xlane.f32.xlu0 %v8573
        %v8701 = vpop.xlane.xlu0 %8700
        %8702 = vadd.xlane.f32.xlu0 %v8575
        %v8703 = vpop.xlane.xlu0 %8702
        %8704 = vadd.xlane.f32.xlu0 %v8577
        %v8705 = vpop.xlane.xlu0 %8704
        %8706 = vadd.xlane.f32.xlu0 %v8579
        %v8707 = vpop.xlane.xlu0 %8706
        %8708 = vadd.xlane.f32.xlu0 %v8581
        %v8709 = vpop.xlane.xlu0 %8708
        %8710 = vadd.xlane.f32.xlu0 %v8583
        %v8711 = vpop.xlane.xlu0 %8710
        %v8712 = vrcp.pop %v8585
        %v8713 = vrcp.pop %v8587
        %v8714 = vrcp.pop %v8589
        %v8715 = vrcp.pop %v8591
        %v8716 = vrcp.pop %v8593
        %v8717 = vrcp.pop %v8595
        %v8718 = vrcp.pop %v8597
        %v8719 = vrcp.pop %v8599
        %v8720 = vrcp.pop %v8601
        %v8721 = vrcp.pop %v8603
        %v8722 = vrcp.pop %v8605
        %v8723 = vrcp.pop %v8607
        %v8724 = vrcp.pop %v8609
        %v8725 = vrcp.pop %v8611
        %v8726 = vrcp.pop %v8613
        %v8727 = vrcp.pop %v8615
        %v8728 = vrcp.pop %v8617
        %v8729 = vrcp.pop %v8619
        %v8730 = vrcp.pop %v8621
        %v8731 = vrcp.pop %v8623
        %v8732 = vrcp.pop %v8625
        %v8733 = vrcp.pop %v8627
        %v8734 = vrcp.pop %v8629
        %v8735 = vrcp.pop %v8631
        %v8736 = vrcp.pop %v8633
        %v8737 = vrcp.pop %v8635
        %v8738 = vrcp.pop %v8637
        %v8739 = vrcp.pop %v8639
        %v8740 = vrcp.pop %v8641
        %v8741 = vrcp.pop %v8643
        %v8742 = vrcp.pop %v8645
        %v8743 = vrcp.pop %v8647
        %v8744 = vrcp.pop %v8649
        %v8745 = vrcp.pop %v8651
        %v8746 = vrcp.pop %v8653
        %v8747 = vrcp.pop %v8655
        %v8748 = vrcp.pop %v8657
        %v8749 = vrcp.pop %v8659
        %v8750 = vrcp.pop %v8661
        %v8751 = vrcp.pop %v8663
        %v8752 = vrcp.pop %v8665
        %v8753 = vrcp.pop %v8667
        %v8754 = vrcp.pop %v8669
        %v8755 = vrcp.pop %v8671
        %v8756 = vrcp.pop %v8673
        %v8757 = vrcp.pop %v8675
        %v8758 = vrcp.pop %v8677
        %v8759 = vrcp.pop %v8679
        %v8760 = vrcp.pop %v8681
        %v8761 = vrcp.pop %v8683
        %v8762 = vrcp.pop %v8685
        %v8763 = vrcp.pop %v8687
        %v8764 = vrcp.pop %v8689
        %v8765 = vrcp.pop %v8691
        %v8766 = vrcp.pop %v8693
        %v8767 = vrcp.pop %v8695
        %v8768 = vrcp.pop %v8697
        %v8769 = vrcp.pop %v8699
        %v8770 = vrcp.pop %v8701
        %v8771 = vrcp.pop %v8703
        %v8772 = vrcp.pop %v8705
        %v8773 = vrcp.pop %v8707
        %v8774 = vrcp.pop %v8709
        %v8775 = vrcp.pop %v8711
        %v8776 = vmul.f32 %v8457, %v8712
        %v8777 = vmul.f32 %v8459, %v8713
        %v8778 = vmul.f32 %v8461, %v8714
        %v8779 = vmul.f32 %v8463, %v8715
        %v8780 = vmul.f32 %v8465, %v8716
        %v8781 = vmul.f32 %v8467, %v8717
        %v8782 = vmul.f32 %v8469, %v8718
        %v8783 = vmul.f32 %v8471, %v8719
        %v8784 = vmul.f32 %v8473, %v8720
        %v8785 = vmul.f32 %v8475, %v8721
        %v8786 = vmul.f32 %v8477, %v8722
        %v8787 = vmul.f32 %v8479, %v8723
        %v8788 = vmul.f32 %v8481, %v8724
        %v8789 = vmul.f32 %v8483, %v8725
        %v8790 = vmul.f32 %v8485, %v8726
        %v8791 = vmul.f32 %v8487, %v8727
        %v8792 = vmul.f32 %v8489, %v8728
        %v8793 = vmul.f32 %v8491, %v8729
        %v8794 = vmul.f32 %v8493, %v8730
        %v8795 = vmul.f32 %v8495, %v8731
        %v8796 = vmul.f32 %v8497, %v8732
        %v8797 = vmul.f32 %v8499, %v8733
        %v8798 = vmul.f32 %v8501, %v8734
        %v8799 = vmul.f32 %v8503, %v8735
        %v8800 = vmul.f32 %v8505, %v8736
        %v8801 = vmul.f32 %v8507, %v8737
        %v8802 = vmul.f32 %v8509, %v8738
        %v8803 = vmul.f32 %v8511, %v8739
        %v8804 = vmul.f32 %v8513, %v8740
        %v8805 = vmul.f32 %v8515, %v8741
        %v8806 = vmul.f32 %v8517, %v8742
        %v8807 = vmul.f32 %v8519, %v8743
        %v8808 = vmul.f32 %v8521, %v8744
        %v8809 = vmul.f32 %v8523, %v8745
        %v8810 = vmul.f32 %v8525, %v8746
        %v8811 = vmul.f32 %v8527, %v8747
        %v8812 = vmul.f32 %v8529, %v8748
        %v8813 = vmul.f32 %v8531, %v8749
        %v8814 = vmul.f32 %v8533, %v8750
        %v8815 = vmul.f32 %v8535, %v8751
        %v8816 = vmul.f32 %v8537, %v8752
        %v8817 = vmul.f32 %v8539, %v8753
        %v8818 = vmul.f32 %v8541, %v8754
        %v8819 = vmul.f32 %v8543, %v8755
        %v8820 = vmul.f32 %v8545, %v8756
        %v8821 = vmul.f32 %v8547, %v8757
        %v8822 = vmul.f32 %v8549, %v8758
        %v8823 = vmul.f32 %v8551, %v8759
        %v8824 = vmul.f32 %v8553, %v8760
        %v8825 = vmul.f32 %v8555, %v8761
        %v8826 = vmul.f32 %v8557, %v8762
        %v8827 = vmul.f32 %v8559, %v8763
        %v8828 = vmul.f32 %v8561, %v8764
        %v8829 = vmul.f32 %v8563, %v8765
        %v8830 = vmul.f32 %v8565, %v8766
        %v8831 = vmul.f32 %v8567, %v8767
        %v8832 = vmul.f32 %v8569, %v8768
        %v8833 = vmul.f32 %v8571, %v8769
        %v8834 = vmul.f32 %v8573, %v8770
        %v8835 = vmul.f32 %v8575, %v8771
        %v8836 = vmul.f32 %v8577, %v8772
        %v8837 = vmul.f32 %v8579, %v8773
        %v8838 = vmul.f32 %v8581, %v8774
        %v8839 = vmul.f32 %v8583, %v8775
        %v8840 = vpack.c.bf16 %v8777, %v8776
        %v8841 = vpack.c.bf16 %v8779, %v8778
        %v8842 = vpack.c.bf16 %v8781, %v8780
        %v8843 = vpack.c.bf16 %v8783, %v8782
        %v8844 = vpack.c.bf16 %v8785, %v8784
        %v8845 = vpack.c.bf16 %v8787, %v8786
        %v8846 = vpack.c.bf16 %v8789, %v8788
        %v8847 = vpack.c.bf16 %v8791, %v8790
        %v8848 = vpack.c.bf16 %v8793, %v8792
        %v8849 = vpack.c.bf16 %v8795, %v8794
        %v8850 = vpack.c.bf16 %v8797, %v8796
        %v8851 = vpack.c.bf16 %v8799, %v8798
        %v8852 = vpack.c.bf16 %v8801, %v8800
        %v8853 = vpack.c.bf16 %v8803, %v8802
        %v8854 = vpack.c.bf16 %v8805, %v8804
        %v8855 = vpack.c.bf16 %v8807, %v8806
        %v8856 = vpack.c.bf16 %v8809, %v8808
        %v8857 = vpack.c.bf16 %v8811, %v8810
        %v8858 = vpack.c.bf16 %v8813, %v8812
        %v8859 = vpack.c.bf16 %v8815, %v8814
        %v8860 = vpack.c.bf16 %v8817, %v8816
        %v8861 = vpack.c.bf16 %v8819, %v8818
        %v8862 = vpack.c.bf16 %v8821, %v8820
        %v8863 = vpack.c.bf16 %v8823, %v8822
        %v8864 = vpack.c.bf16 %v8825, %v8824
        %v8865 = vpack.c.bf16 %v8827, %v8826
        %v8866 = vpack.c.bf16 %v8829, %v8828
        %v8867 = vpack.c.bf16 %v8831, %v8830
        %v8868 = vpack.c.bf16 %v8833, %v8832
        %v8869 = vpack.c.bf16 %v8835, %v8834
        %v8870 = vpack.c.bf16 %v8837, %v8836
        %v8871 = vpack.c.bf16 %v8839, %v8838
        %8872 = vrot.lane.b32.xlu0 %v2155, 32
        %v8873 = vpop.permute.xlu0 %8872
        %8874 = vrot.lane.b32.xlu0 %v2156, 32
        %v8875 = vpop.permute.xlu0 %8874
        %8876 = vrot.lane.b32.xlu0 %v2157, 32
        %v8877 = vpop.permute.xlu0 %8876
        %8878 = vrot.lane.b32.xlu0 %v2158, 32
        %v8879 = vpop.permute.xlu0 %8878
        %8880 = vrot.lane.b32.xlu0 %v2159, 32
        %v8881 = vpop.permute.xlu0 %8880
        %8882 = vrot.lane.b32.xlu0 %v2160, 32
        %v8883 = vpop.permute.xlu0 %8882
        %8884 = vrot.lane.b32.xlu0 %v2161, 32
        %v8885 = vpop.permute.xlu0 %8884
        %8886 = vrot.lane.b32.xlu0 %v2162, 32
        %v8887 = vpop.permute.xlu0 %8886
        %8896 = vmatprep.subr.bf16.mxu0 0
        %8897 = vmatpush1.bf16.msra.mxu0 %v8873
        %8898 = vmatprep.subr.bf16.mxu0 0
        %8899 = vmatpush1.bf16.msra.mxu0 %v8875
        %8900 = vmatprep.subr.bf16.mxu0 0
        %8901 = vmatpush1.bf16.msra.mxu0 %v8877
        %8902 = vmatprep.subr.bf16.mxu0 0
        %8903 = vmatpush1.bf16.msra.mxu0 %v8879
        %8904 = vmatprep.subr.bf16.mxu0 0
        %8905 = vmatpush1.bf16.msra.mxu0 %v8881
        %8906 = vmatprep.subr.bf16.mxu0 0
        %8907 = vmatpush1.bf16.msra.mxu0 %v8883
        %8908 = vmatprep.subr.bf16.mxu0 0
        %8909 = vmatpush1.bf16.msra.mxu0 %v8885
        %8910 = vmatprep.subr.bf16.mxu0 0
        %8911 = vmatpush1.bf16.msra.mxu0 %v8887
        %8912 = vmatprep.subr.bf16.mxu0 0
        %8913 = vmatpush1.bf16.msra.mxu0 0
        %8914 = vmatprep.subr.bf16.mxu0 0
        %8915 = vmatpush1.bf16.msra.mxu0 0
        %8916 = vmatprep.subr.bf16.mxu0 0
        %8917 = vmatpush1.bf16.msra.mxu0 0
        %8918 = vmatprep.subr.bf16.mxu0 0
        %8919 = vmatpush1.bf16.msra.mxu0 0
        %8920 = vmatprep.subr.bf16.mxu0 0
        %8921 = vmatpush1.bf16.msra.mxu0 0
        %8922 = vmatprep.subr.bf16.mxu0 0
        %8923 = vmatpush1.bf16.msra.mxu0 0
        %8924 = vmatprep.subr.bf16.mxu0 0
        %8925 = vmatpush1.bf16.msra.mxu0 0
        %8926 = vmatprep.subr.bf16.mxu0 0
        %8927 = vmatpush1.bf16.msra.mxu0 0
        %8928 = vmatprep.mubr.bf16.mxu0 0
        %8929 = vmatmul.mubr.bf16.gmra.mrb[0].mxu0 %v8840
        %v8930 = vpop.f32.mrb[0].mxu0
        %v8931 = vadd.f32 0.0, %v8930
        %v8932 = vpop.f32.mrb[0].mxu0
        %v8933 = vpop.f32.mrb[0].mxu0
        %v8934 = vadd.f32 0.0, %v8933
        %v8935 = vpop.f32.mrb[0].mxu0
        %8936 = vmatprep.mubr.bf16.mxu0 0
        %8937 = vmatmul.mubr.bf16.gmra.mrb[0].mxu0 %v8841
        %v8938 = vpop.f32.mrb[0].mxu0
        %v8939 = vadd.f32 0.0, %v8938
        %v8940 = vpop.f32.mrb[0].mxu0
        %v8941 = vpop.f32.mrb[0].mxu0
        %v8942 = vadd.f32 0.0, %v8941
        %v8943 = vpop.f32.mrb[0].mxu0
        %8944 = vmatprep.mubr.bf16.mxu0 0
        %8945 = vmatmul.mubr.bf16.gmra.mrb[0].mxu0 %v8842
        %v8946 = vpop.f32.mrb[0].mxu0
        %v8947 = vadd.f32 0.0, %v8946
        %v8948 = vpop.f32.mrb[0].mxu0
        %v8949 = vpop.f32.mrb[0].mxu0
        %v8950 = vadd.f32 0.0, %v8949
        %v8951 = vpop.f32.mrb[0].mxu0
        %8952 = vmatprep.mubr.bf16.mxu0 0
        %8953 = vmatmul.mubr.bf16.gmra.mrb[0].mxu0 %v8843
        %v8954 = vpop.f32.mrb[0].mxu0
        %v8955 = vadd.f32 0.0, %v8954
        %v8956 = vpop.f32.mrb[0].mxu0
        %v8957 = vpop.f32.mrb[0].mxu0
        %v8958 = vadd.f32 0.0, %v8957
        %v8959 = vpop.f32.mrb[0].mxu0
        %8960 = vmatprep.mubr.bf16.mxu0 0
        %8961 = vmatmul.mubr.bf16.gmra.mrb[0].mxu0 %v8844
        %v8962 = vpop.f32.mrb[0].mxu0
        %v8963 = vadd.f32 0.0, %v8962
        %v8964 = vpop.f32.mrb[0].mxu0
        %v8965 = vpop.f32.mrb[0].mxu0
        %v8966 = vadd.f32 0.0, %v8965
        %v8967 = vpop.f32.mrb[0].mxu0
        %8968 = vmatprep.mubr.bf16.mxu0 0
        %8969 = vmatmul.mubr.bf16.gmra.mrb[0].mxu0 %v8845
        %v8970 = vpop.f32.mrb[0].mxu0
        %v8971 = vadd.f32 0.0, %v8970
        %v8972 = vpop.f32.mrb[0].mxu0
        %v8973 = vpop.f32.mrb[0].mxu0
        %v8974 = vadd.f32 0.0, %v8973
        %v8975 = vpop.f32.mrb[0].mxu0
        %8976 = vmatprep.mubr.bf16.mxu0 0
        %8977 = vmatmul.mubr.bf16.gmra.mrb[0].mxu0 %v8846
        %v8978 = vpop.f32.mrb[0].mxu0
        %v8979 = vadd.f32 0.0, %v8978
        %v8980 = vpop.f32.mrb[0].mxu0
        %v8981 = vpop.f32.mrb[0].mxu0
        %v8982 = vadd.f32 0.0, %v8981
        %v8983 = vpop.f32.mrb[0].mxu0
        %8984 = vmatprep.mubr.bf16.mxu0 0
        %8985 = vmatmul.mubr.bf16.gmra.mrb[0].mxu0 %v8847
        %v8986 = vpop.f32.mrb[0].mxu0
        %v8987 = vadd.f32 0.0, %v8986
        %v8988 = vpop.f32.mrb[0].mxu0
        %v8989 = vpop.f32.mrb[0].mxu0
        %v8990 = vadd.f32 0.0, %v8989
        %v8991 = vpop.f32.mrb[0].mxu0
        %8992 = vdwg.mxu0
        %8993 = vrot.lane.b32.xlu0 %v2163, 32
        %v8994 = vpop.permute.xlu0 %8993
        %8995 = vrot.lane.b32.xlu0 %v2164, 32
        %v8996 = vpop.permute.xlu0 %8995
        %8997 = vrot.lane.b32.xlu0 %v2165, 32
        %v8998 = vpop.permute.xlu0 %8997
        %8999 = vrot.lane.b32.xlu0 %v2166, 32
        %v9000 = vpop.permute.xlu0 %8999
        %9001 = vrot.lane.b32.xlu0 %v2167, 32
        %v9002 = vpop.permute.xlu0 %9001
        %9003 = vrot.lane.b32.xlu0 %v2168, 32
        %v9004 = vpop.permute.xlu0 %9003
        %9005 = vrot.lane.b32.xlu0 %v2169, 32
        %v9006 = vpop.permute.xlu0 %9005
        %9007 = vrot.lane.b32.xlu0 %v2170, 32
        %v9008 = vpop.permute.xlu0 %9007
        %9017 = vmatprep.subr.bf16.mxu0 0
        %9018 = vmatpush1.bf16.msra.mxu0 %v8994
        %9019 = vmatprep.subr.bf16.mxu0 0
        %9020 = vmatpush1.bf16.msra.mxu0 %v8996
        %9021 = vmatprep.subr.bf16.mxu0 0
        %9022 = vmatpush1.bf16.msra.mxu0 %v8998
        %9023 = vmatprep.subr.bf16.mxu0 0
        %9024 = vmatpush1.bf16.msra.mxu0 %v9000
        %9025 = vmatprep.subr.bf16.mxu0 0
        %9026 = vmatpush1.bf16.msra.mxu0 %v9002
        %9027 = vmatprep.subr.bf16.mxu0 0
        %9028 = vmatpush1.bf16.msra.mxu0 %v9004
        %9029 = vmatprep.subr.bf16.mxu0 0
        %9030 = vmatpush1.bf16.msra.mxu0 %v9006
        %9031 = vmatprep.subr.bf16.mxu0 0
        %9032 = vmatpush1.bf16.msra.mxu0 %v9008
        %9033 = vmatprep.subr.bf16.mxu0 0
        %9034 = vmatpush1.bf16.msra.mxu0 0
        %9035 = vmatprep.subr.bf16.mxu0 0
        %9036 = vmatpush1.bf16.msra.mxu0 0
        %9037 = vmatprep.subr.bf16.mxu0 0
        %9038 = vmatpush1.bf16.msra.mxu0 0
        %9039 = vmatprep.subr.bf16.mxu0 0
        %9040 = vmatpush1.bf16.msra.mxu0 0
        %9041 = vmatprep.subr.bf16.mxu0 0
        %9042 = vmatpush1.bf16.msra.mxu0 0
        %9043 = vmatprep.subr.bf16.mxu0 0
        %9044 = vmatpush1.bf16.msra.mxu0 0
        %9045 = vmatprep.subr.bf16.mxu0 0
        %9046 = vmatpush1.bf16.msra.mxu0 0
        %9047 = vmatprep.subr.bf16.mxu0 0
        %9048 = vmatpush1.bf16.msra.mxu0 0
        %9049 = vmatprep.mubr.bf16.mxu0 0
        %9050 = vmatmul.mubr.bf16.gmra.mrb[0].mxu0 %v8848
        %v9051 = vpop.f32.mrb[0].mxu0
        %v9052 = vadd.f32 0.0, %v9051
        %v9053 = vpop.f32.mrb[0].mxu0
        %v9054 = vpop.f32.mrb[0].mxu0
        %v9055 = vadd.f32 0.0, %v9054
        %v9056 = vpop.f32.mrb[0].mxu0
        %9057 = vmatprep.mubr.bf16.mxu0 0
        %9058 = vmatmul.mubr.bf16.gmra.mrb[0].mxu0 %v8849
        %v9059 = vpop.f32.mrb[0].mxu0
        %v9060 = vadd.f32 0.0, %v9059
        %v9061 = vpop.f32.mrb[0].mxu0
        %v9062 = vpop.f32.mrb[0].mxu0
        %v9063 = vadd.f32 0.0, %v9062
        %v9064 = vpop.f32.mrb[0].mxu0
        %9065 = vmatprep.mubr.bf16.mxu0 0
        %9066 = vmatmul.mubr.bf16.gmra.mrb[0].mxu0 %v8850
        %v9067 = vpop.f32.mrb[0].mxu0
        %v9068 = vadd.f32 0.0, %v9067
        %v9069 = vpop.f32.mrb[0].mxu0
        %v9070 = vpop.f32.mrb[0].mxu0
        %v9071 = vadd.f32 0.0, %v9070
        %v9072 = vpop.f32.mrb[0].mxu0
        %9073 = vmatprep.mubr.bf16.mxu0 0
        %9074 = vmatmul.mubr.bf16.gmra.mrb[0].mxu0 %v8851
        %v9075 = vpop.f32.mrb[0].mxu0
        %v9076 = vadd.f32 0.0, %v9075
        %v9077 = vpop.f32.mrb[0].mxu0
        %v9078 = vpop.f32.mrb[0].mxu0
        %v9079 = vadd.f32 0.0, %v9078
        %v9080 = vpop.f32.mrb[0].mxu0
        %9081 = vmatprep.mubr.bf16.mxu0 0
        %9082 = vmatmul.mubr.bf16.gmra.mrb[0].mxu0 %v8852
        %v9083 = vpop.f32.mrb[0].mxu0
        %v9084 = vadd.f32 0.0, %v9083
        %v9085 = vpop.f32.mrb[0].mxu0
        %v9086 = vpop.f32.mrb[0].mxu0
        %v9087 = vadd.f32 0.0, %v9086
        %v9088 = vpop.f32.mrb[0].mxu0
        %9089 = vmatprep.mubr.bf16.mxu0 0
        %9090 = vmatmul.mubr.bf16.gmra.mrb[0].mxu0 %v8853
        %v9091 = vpop.f32.mrb[0].mxu0
        %v9092 = vadd.f32 0.0, %v9091
        %v9093 = vpop.f32.mrb[0].mxu0
        %v9094 = vpop.f32.mrb[0].mxu0
        %v9095 = vadd.f32 0.0, %v9094
        %v9096 = vpop.f32.mrb[0].mxu0
        %9097 = vmatprep.mubr.bf16.mxu0 0
        %9098 = vmatmul.mubr.bf16.gmra.mrb[0].mxu0 %v8854
        %v9099 = vpop.f32.mrb[0].mxu0
        %v9100 = vadd.f32 0.0, %v9099
        %v9101 = vpop.f32.mrb[0].mxu0
        %v9102 = vpop.f32.mrb[0].mxu0
        %v9103 = vadd.f32 0.0, %v9102
        %v9104 = vpop.f32.mrb[0].mxu0
        %9105 = vmatprep.mubr.bf16.mxu0 0
        %9106 = vmatmul.mubr.bf16.gmra.mrb[0].mxu0 %v8855
        %v9107 = vpop.f32.mrb[0].mxu0
        %v9108 = vadd.f32 0.0, %v9107
        %v9109 = vpop.f32.mrb[0].mxu0
        %v9110 = vpop.f32.mrb[0].mxu0
        %v9111 = vadd.f32 0.0, %v9110
        %v9112 = vpop.f32.mrb[0].mxu0
        %9113 = vdwg.mxu0
        %9114 = vrot.lane.b32.xlu0 %v2171, 32
        %v9115 = vpop.permute.xlu0 %9114
        %9116 = vrot.lane.b32.xlu0 %v2172, 32
        %v9117 = vpop.permute.xlu0 %9116
        %9118 = vrot.lane.b32.xlu0 %v2173, 32
        %v9119 = vpop.permute.xlu0 %9118
        %9120 = vrot.lane.b32.xlu0 %v2174, 32
        %v9121 = vpop.permute.xlu0 %9120
        %9122 = vrot.lane.b32.xlu0 %v2175, 32
        %v9123 = vpop.permute.xlu0 %9122
        %9124 = vrot.lane.b32.xlu0 %v2176, 32
        %v9125 = vpop.permute.xlu0 %9124
        %9126 = vrot.lane.b32.xlu0 %v2177, 32
        %v9127 = vpop.permute.xlu0 %9126
        %9128 = vrot.lane.b32.xlu0 %v2178, 32
        %v9129 = vpop.permute.xlu0 %9128
        %9138 = vmatprep.subr.bf16.mxu0 0
        %9139 = vmatpush1.bf16.msra.mxu0 %v9115
        %9140 = vmatprep.subr.bf16.mxu0 0
        %9141 = vmatpush1.bf16.msra.mxu0 %v9117
        %9142 = vmatprep.subr.bf16.mxu0 0
        %9143 = vmatpush1.bf16.msra.mxu0 %v9119
        %9144 = vmatprep.subr.bf16.mxu0 0
        %9145 = vmatpush1.bf16.msra.mxu0 %v9121
        %9146 = vmatprep.subr.bf16.mxu0 0
        %9147 = vmatpush1.bf16.msra.mxu0 %v9123
        %9148 = vmatprep.subr.bf16.mxu0 0
        %9149 = vmatpush1.bf16.msra.mxu0 %v9125
        %9150 = vmatprep.subr.bf16.mxu0 0
        %9151 = vmatpush1.bf16.msra.mxu0 %v9127
        %9152 = vmatprep.subr.bf16.mxu0 0
        %9153 = vmatpush1.bf16.msra.mxu0 %v9129
        %9154 = vmatprep.subr.bf16.mxu0 0
        %9155 = vmatpush1.bf16.msra.mxu0 0
        %9156 = vmatprep.subr.bf16.mxu0 0
        %9157 = vmatpush1.bf16.msra.mxu0 0
        %9158 = vmatprep.subr.bf16.mxu0 0
        %9159 = vmatpush1.bf16.msra.mxu0 0
        %9160 = vmatprep.subr.bf16.mxu0 0
        %9161 = vmatpush1.bf16.msra.mxu0 0
        %9162 = vmatprep.subr.bf16.mxu0 0
        %9163 = vmatpush1.bf16.msra.mxu0 0
        %9164 = vmatprep.subr.bf16.mxu0 0
        %9165 = vmatpush1.bf16.msra.mxu0 0
        %9166 = vmatprep.subr.bf16.mxu0 0
        %9167 = vmatpush1.bf16.msra.mxu0 0
        %9168 = vmatprep.subr.bf16.mxu0 0
        %9169 = vmatpush1.bf16.msra.mxu0 0
        %9170 = vmatprep.mubr.bf16.mxu0 0
        %9171 = vmatmul.mubr.bf16.gmra.mrb[0].mxu0 %v8856
        %v9172 = vpop.f32.mrb[0].mxu0
        %v9173 = vadd.f32 0.0, %v9172
        %v9174 = vpop.f32.mrb[0].mxu0
        %v9175 = vpop.f32.mrb[0].mxu0
        %v9176 = vadd.f32 0.0, %v9175
        %v9177 = vpop.f32.mrb[0].mxu0
        %9178 = vmatprep.mubr.bf16.mxu0 0
        %9179 = vmatmul.mubr.bf16.gmra.mrb[0].mxu0 %v8857
        %v9180 = vpop.f32.mrb[0].mxu0
        %v9181 = vadd.f32 0.0, %v9180
        %v9182 = vpop.f32.mrb[0].mxu0
        %v9183 = vpop.f32.mrb[0].mxu0
        %v9184 = vadd.f32 0.0, %v9183
        %v9185 = vpop.f32.mrb[0].mxu0
        %9186 = vmatprep.mubr.bf16.mxu0 0
        %9187 = vmatmul.mubr.bf16.gmra.mrb[0].mxu0 %v8858
        %v9188 = vpop.f32.mrb[0].mxu0
        %v9189 = vadd.f32 0.0, %v9188
        %v9190 = vpop.f32.mrb[0].mxu0
        %v9191 = vpop.f32.mrb[0].mxu0
        %v9192 = vadd.f32 0.0, %v9191
        %v9193 = vpop.f32.mrb[0].mxu0
        %9194 = vmatprep.mubr.bf16.mxu0 0
        %9195 = vmatmul.mubr.bf16.gmra.mrb[0].mxu0 %v8859
        %v9196 = vpop.f32.mrb[0].mxu0
        %v9197 = vadd.f32 0.0, %v9196
        %v9198 = vpop.f32.mrb[0].mxu0
        %v9199 = vpop.f32.mrb[0].mxu0
        %v9200 = vadd.f32 0.0, %v9199
        %v9201 = vpop.f32.mrb[0].mxu0
        %9202 = vmatprep.mubr.bf16.mxu0 0
        %9203 = vmatmul.mubr.bf16.gmra.mrb[0].mxu0 %v8860
        %v9204 = vpop.f32.mrb[0].mxu0
        %v9205 = vadd.f32 0.0, %v9204
        %v9206 = vpop.f32.mrb[0].mxu0
        %v9207 = vpop.f32.mrb[0].mxu0
        %v9208 = vadd.f32 0.0, %v9207
        %v9209 = vpop.f32.mrb[0].mxu0
        %9210 = vmatprep.mubr.bf16.mxu0 0
        %9211 = vmatmul.mubr.bf16.gmra.mrb[0].mxu0 %v8861
        %v9212 = vpop.f32.mrb[0].mxu0
        %v9213 = vadd.f32 0.0, %v9212
        %v9214 = vpop.f32.mrb[0].mxu0
        %v9215 = vpop.f32.mrb[0].mxu0
        %v9216 = vadd.f32 0.0, %v9215
        %v9217 = vpop.f32.mrb[0].mxu0
        %9218 = vmatprep.mubr.bf16.mxu0 0
        %9219 = vmatmul.mubr.bf16.gmra.mrb[0].mxu0 %v8862
        %v9220 = vpop.f32.mrb[0].mxu0
        %v9221 = vadd.f32 0.0, %v9220
        %v9222 = vpop.f32.mrb[0].mxu0
        %v9223 = vpop.f32.mrb[0].mxu0
        %v9224 = vadd.f32 0.0, %v9223
        %v9225 = vpop.f32.mrb[0].mxu0
        %9226 = vmatprep.mubr.bf16.mxu0 0
        %9227 = vmatmul.mubr.bf16.gmra.mrb[0].mxu0 %v8863
        %v9228 = vpop.f32.mrb[0].mxu0
        %v9229 = vadd.f32 0.0, %v9228
        %v9230 = vpop.f32.mrb[0].mxu0
        %v9231 = vpop.f32.mrb[0].mxu0
        %v9232 = vadd.f32 0.0, %v9231
        %v9233 = vpop.f32.mrb[0].mxu0
        %9234 = vdwg.mxu0
        %9235 = vrot.lane.b32.xlu0 %v2179, 32
        %v9236 = vpop.permute.xlu0 %9235
        %9237 = vrot.lane.b32.xlu0 %v2180, 32
        %v9238 = vpop.permute.xlu0 %9237
        %9239 = vrot.lane.b32.xlu0 %v2181, 32
        %v9240 = vpop.permute.xlu0 %9239
        %9241 = vrot.lane.b32.xlu0 %v2182, 32
        %v9242 = vpop.permute.xlu0 %9241
        %9243 = vrot.lane.b32.xlu0 %v2183, 32
        %v9244 = vpop.permute.xlu0 %9243
        %9245 = vrot.lane.b32.xlu0 %v2184, 32
        %v9246 = vpop.permute.xlu0 %9245
        %9247 = vrot.lane.b32.xlu0 %v2185, 32
        %v9248 = vpop.permute.xlu0 %9247
        %9249 = vrot.lane.b32.xlu0 %v2186, 32
        %v9250 = vpop.permute.xlu0 %9249
        %9259 = vmatprep.subr.bf16.mxu0 0
        %9260 = vmatpush1.bf16.msra.mxu0 %v9236
        %9261 = vmatprep.subr.bf16.mxu0 0
        %9262 = vmatpush1.bf16.msra.mxu0 %v9238
        %9263 = vmatprep.subr.bf16.mxu0 0
        %9264 = vmatpush1.bf16.msra.mxu0 %v9240
        %9265 = vmatprep.subr.bf16.mxu0 0
        %9266 = vmatpush1.bf16.msra.mxu0 %v9242
        %9267 = vmatprep.subr.bf16.mxu0 0
        %9268 = vmatpush1.bf16.msra.mxu0 %v9244
        %9269 = vmatprep.subr.bf16.mxu0 0
        %9270 = vmatpush1.bf16.msra.mxu0 %v9246
        %9271 = vmatprep.subr.bf16.mxu0 0
        %9272 = vmatpush1.bf16.msra.mxu0 %v9248
        %9273 = vmatprep.subr.bf16.mxu0 0
        %9274 = vmatpush1.bf16.msra.mxu0 %v9250
        %9275 = vmatprep.subr.bf16.mxu0 0
        %9276 = vmatpush1.bf16.msra.mxu0 0
        %9277 = vmatprep.subr.bf16.mxu0 0
        %9278 = vmatpush1.bf16.msra.mxu0 0
        %9279 = vmatprep.subr.bf16.mxu0 0
        %9280 = vmatpush1.bf16.msra.mxu0 0
        %9281 = vmatprep.subr.bf16.mxu0 0
        %9282 = vmatpush1.bf16.msra.mxu0 0
        %9283 = vmatprep.subr.bf16.mxu0 0
        %9284 = vmatpush1.bf16.msra.mxu0 0
        %9285 = vmatprep.subr.bf16.mxu0 0
        %9286 = vmatpush1.bf16.msra.mxu0 0
        %9287 = vmatprep.subr.bf16.mxu0 0
        %9288 = vmatpush1.bf16.msra.mxu0 0
        %9289 = vmatprep.subr.bf16.mxu0 0
        %9290 = vmatpush1.bf16.msra.mxu0 0
        %9291 = vmatprep.mubr.bf16.mxu0 0
        %9292 = vmatmul.mubr.bf16.gmra.mrb[0].mxu0 %v8864
        %v9293 = vpop.f32.mrb[0].mxu0
        %v9294 = vadd.f32 0.0, %v9293
        %v9295 = vpop.f32.mrb[0].mxu0
        %v9296 = vpop.f32.mrb[0].mxu0
        %v9297 = vadd.f32 0.0, %v9296
        %v9298 = vpop.f32.mrb[0].mxu0
        %9299 = vmatprep.mubr.bf16.mxu0 0
        %9300 = vmatmul.mubr.bf16.gmra.mrb[0].mxu0 %v8865
        %v9301 = vpop.f32.mrb[0].mxu0
        %v9302 = vadd.f32 0.0, %v9301
        %v9303 = vpop.f32.mrb[0].mxu0
        %v9304 = vpop.f32.mrb[0].mxu0
        %v9305 = vadd.f32 0.0, %v9304
        %v9306 = vpop.f32.mrb[0].mxu0
        %9307 = vmatprep.mubr.bf16.mxu0 0
        %9308 = vmatmul.mubr.bf16.gmra.mrb[0].mxu0 %v8866
        %v9309 = vpop.f32.mrb[0].mxu0
        %v9310 = vadd.f32 0.0, %v9309
        %v9311 = vpop.f32.mrb[0].mxu0
        %v9312 = vpop.f32.mrb[0].mxu0
        %v9313 = vadd.f32 0.0, %v9312
        %v9314 = vpop.f32.mrb[0].mxu0
        %9315 = vmatprep.mubr.bf16.mxu0 0
        %9316 = vmatmul.mubr.bf16.gmra.mrb[0].mxu0 %v8867
        %v9317 = vpop.f32.mrb[0].mxu0
        %v9318 = vadd.f32 0.0, %v9317
        %v9319 = vpop.f32.mrb[0].mxu0
        %v9320 = vpop.f32.mrb[0].mxu0
        %v9321 = vadd.f32 0.0, %v9320
        %v9322 = vpop.f32.mrb[0].mxu0
        %9323 = vmatprep.mubr.bf16.mxu0 0
        %9324 = vmatmul.mubr.bf16.gmra.mrb[0].mxu0 %v8868
        %v9325 = vpop.f32.mrb[0].mxu0
        %v9326 = vadd.f32 0.0, %v9325
        %v9327 = vpop.f32.mrb[0].mxu0
        %v9328 = vpop.f32.mrb[0].mxu0
        %v9329 = vadd.f32 0.0, %v9328
        %v9330 = vpop.f32.mrb[0].mxu0
        %9331 = vmatprep.mubr.bf16.mxu0 0
        %9332 = vmatmul.mubr.bf16.gmra.mrb[0].mxu0 %v8869
        %v9333 = vpop.f32.mrb[0].mxu0
        %v9334 = vadd.f32 0.0, %v9333
        %v9335 = vpop.f32.mrb[0].mxu0
        %v9336 = vpop.f32.mrb[0].mxu0
        %v9337 = vadd.f32 0.0, %v9336
        %v9338 = vpop.f32.mrb[0].mxu0
        %9339 = vmatprep.mubr.bf16.mxu0 0
        %9340 = vmatmul.mubr.bf16.gmra.mrb[0].mxu0 %v8870
        %v9341 = vpop.f32.mrb[0].mxu0
        %v9342 = vadd.f32 0.0, %v9341
        %v9343 = vpop.f32.mrb[0].mxu0
        %v9344 = vpop.f32.mrb[0].mxu0
        %v9345 = vadd.f32 0.0, %v9344
        %v9346 = vpop.f32.mrb[0].mxu0
        %9347 = vmatprep.mubr.bf16.mxu0 0
        %9348 = vmatmul.mubr.bf16.gmra.mrb[0].mxu0 %v8871
        %v9349 = vpop.f32.mrb[0].mxu0
        %v9350 = vadd.f32 0.0, %v9349
        %v9351 = vpop.f32.mrb[0].mxu0
        %v9352 = vpop.f32.mrb[0].mxu0
        %v9353 = vadd.f32 0.0, %v9352
        %v9354 = vpop.f32.mrb[0].mxu0
        %9355 = vdwg.mxu0
        %v9356 = vpack.c.bf16 %v8934, %v8931
        %v9357 = vpack.c.bf16 %v8942, %v8939
        %v9358 = vpack.c.bf16 %v8950, %v8947
        %v9359 = vpack.c.bf16 %v8958, %v8955
        %v9360 = vpack.c.bf16 %v8966, %v8963
        %v9361 = vpack.c.bf16 %v8974, %v8971
        %v9362 = vpack.c.bf16 %v8982, %v8979
        %v9363 = vpack.c.bf16 %v8990, %v8987
        %v9364 = vpack.c.bf16 %v9055, %v9052
        %v9365 = vpack.c.bf16 %v9063, %v9060
        %v9366 = vpack.c.bf16 %v9071, %v9068
        %v9367 = vpack.c.bf16 %v9079, %v9076
        %v9368 = vpack.c.bf16 %v9087, %v9084
        %v9369 = vpack.c.bf16 %v9095, %v9092
        %v9370 = vpack.c.bf16 %v9103, %v9100
        %v9371 = vpack.c.bf16 %v9111, %v9108
        %v9372 = vpack.c.bf16 %v9176, %v9173
        %v9373 = vpack.c.bf16 %v9184, %v9181
        %v9374 = vpack.c.bf16 %v9192, %v9189
        %v9375 = vpack.c.bf16 %v9200, %v9197
        %v9376 = vpack.c.bf16 %v9208, %v9205
        %v9377 = vpack.c.bf16 %v9216, %v9213
        %v9378 = vpack.c.bf16 %v9224, %v9221
        %v9379 = vpack.c.bf16 %v9232, %v9229
        %v9380 = vpack.c.bf16 %v9297, %v9294
        %v9381 = vpack.c.bf16 %v9305, %v9302
        %v9382 = vpack.c.bf16 %v9313, %v9310
        %v9383 = vpack.c.bf16 %v9321, %v9318
        %v9384 = vpack.c.bf16 %v9329, %v9326
        %v9385 = vpack.c.bf16 %v9337, %v9334
        %v9386 = vpack.c.bf16 %v9345, %v9342
        %v9387 = vpack.c.bf16 %v9353, %v9350
        %9420 = vrot.lane.b32.xlu0 %v5692, 32
        %v9421 = vpop.permute.xlu0 %9420
        %9422 = vrot.lane.b32.xlu0 %v5693, 32
        %v9423 = vpop.permute.xlu0 %9422
        %9424 = vrot.lane.b32.xlu0 %v5694, 32
        %v9425 = vpop.permute.xlu0 %9424
        %9426 = vrot.lane.b32.xlu0 %v5695, 32
        %v9427 = vpop.permute.xlu0 %9426
        %9428 = vrot.lane.b32.xlu0 %v5696, 32
        %v9429 = vpop.permute.xlu0 %9428
        %9430 = vrot.lane.b32.xlu0 %v5697, 32
        %v9431 = vpop.permute.xlu0 %9430
        %9432 = vrot.lane.b32.xlu0 %v5698, 32
        %v9433 = vpop.permute.xlu0 %9432
        %9434 = vrot.lane.b32.xlu0 %v5699, 32
        %v9435 = vpop.permute.xlu0 %9434
        %9436 = vrot.lane.b32.xlu0 %v5700, 32
        %v9437 = vpop.permute.xlu0 %9436
        %9438 = vrot.lane.b32.xlu0 %v5701, 32
        %v9439 = vpop.permute.xlu0 %9438
        %9440 = vrot.lane.b32.xlu0 %v5702, 32
        %v9441 = vpop.permute.xlu0 %9440
        %9442 = vrot.lane.b32.xlu0 %v5703, 32
        %v9443 = vpop.permute.xlu0 %9442
        %9444 = vrot.lane.b32.xlu0 %v5704, 32
        %v9445 = vpop.permute.xlu0 %9444
        %9446 = vrot.lane.b32.xlu0 %v5705, 32
        %v9447 = vpop.permute.xlu0 %9446
        %9448 = vrot.lane.b32.xlu0 %v5706, 32
        %v9449 = vpop.permute.xlu0 %9448
        %9450 = vrot.lane.b32.xlu0 %v5707, 32
        %v9451 = vpop.permute.xlu0 %9450
        %9452 = vrot.lane.b32.xlu0 %v5708, 32
        %v9453 = vpop.permute.xlu0 %9452
        %9454 = vrot.lane.b32.xlu0 %v5709, 32
        %v9455 = vpop.permute.xlu0 %9454
        %9456 = vrot.lane.b32.xlu0 %v5710, 32
        %v9457 = vpop.permute.xlu0 %9456
        %9458 = vrot.lane.b32.xlu0 %v5711, 32
        %v9459 = vpop.permute.xlu0 %9458
        %9460 = vrot.lane.b32.xlu0 %v5712, 32
        %v9461 = vpop.permute.xlu0 %9460
        %9462 = vrot.lane.b32.xlu0 %v5713, 32
        %v9463 = vpop.permute.xlu0 %9462
        %9464 = vrot.lane.b32.xlu0 %v5714, 32
        %v9465 = vpop.permute.xlu0 %9464
        %9466 = vrot.lane.b32.xlu0 %v5715, 32
        %v9467 = vpop.permute.xlu0 %9466
        %9468 = vrot.lane.b32.xlu0 %v5716, 32
        %v9469 = vpop.permute.xlu0 %9468
        %9470 = vrot.lane.b32.xlu0 %v5717, 32
        %v9471 = vpop.permute.xlu0 %9470
        %9472 = vrot.lane.b32.xlu0 %v5718, 32
        %v9473 = vpop.permute.xlu0 %9472
        %9474 = vrot.lane.b32.xlu0 %v5719, 32
        %v9475 = vpop.permute.xlu0 %9474
        %9476 = vrot.lane.b32.xlu0 %v5720, 32
        %v9477 = vpop.permute.xlu0 %9476
        %9478 = vrot.lane.b32.xlu0 %v5721, 32
        %v9479 = vpop.permute.xlu0 %9478
        %9480 = vrot.lane.b32.xlu0 %v5722, 32
        %v9481 = vpop.permute.xlu0 %9480
        %9482 = vrot.lane.b32.xlu0 %v5723, 32
        %v9483 = vpop.permute.xlu0 %9482
        %9516 = vrot.lane.b32.xlu0 %v7524, 64
        %v9517 = vpop.permute.xlu0 %9516
        %9518 = vrot.lane.b32.xlu0 %v7525, 64
        %v9519 = vpop.permute.xlu0 %9518
        %9520 = vrot.lane.b32.xlu0 %v7526, 64
        %v9521 = vpop.permute.xlu0 %9520
        %9522 = vrot.lane.b32.xlu0 %v7527, 64
        %v9523 = vpop.permute.xlu0 %9522
        %9524 = vrot.lane.b32.xlu0 %v7528, 64
        %v9525 = vpop.permute.xlu0 %9524
        %9526 = vrot.lane.b32.xlu0 %v7529, 64
        %v9527 = vpop.permute.xlu0 %9526
        %9528 = vrot.lane.b32.xlu0 %v7530, 64
        %v9529 = vpop.permute.xlu0 %9528
        %9530 = vrot.lane.b32.xlu0 %v7531, 64
        %v9531 = vpop.permute.xlu0 %9530
        %9532 = vrot.lane.b32.xlu0 %v7532, 64
        %v9533 = vpop.permute.xlu0 %9532
        %9534 = vrot.lane.b32.xlu0 %v7533, 64
        %v9535 = vpop.permute.xlu0 %9534
        %9536 = vrot.lane.b32.xlu0 %v7534, 64
        %v9537 = vpop.permute.xlu0 %9536
        %9538 = vrot.lane.b32.xlu0 %v7535, 64
        %v9539 = vpop.permute.xlu0 %9538
        %9540 = vrot.lane.b32.xlu0 %v7536, 64
        %v9541 = vpop.permute.xlu0 %9540
        %9542 = vrot.lane.b32.xlu0 %v7537, 64
        %v9543 = vpop.permute.xlu0 %9542
        %9544 = vrot.lane.b32.xlu0 %v7538, 64
        %v9545 = vpop.permute.xlu0 %9544
        %9546 = vrot.lane.b32.xlu0 %v7539, 64
        %v9547 = vpop.permute.xlu0 %9546
        %9548 = vrot.lane.b32.xlu0 %v7540, 64
        %v9549 = vpop.permute.xlu0 %9548
        %9550 = vrot.lane.b32.xlu0 %v7541, 64
        %v9551 = vpop.permute.xlu0 %9550
        %9552 = vrot.lane.b32.xlu0 %v7542, 64
        %v9553 = vpop.permute.xlu0 %9552
        %9554 = vrot.lane.b32.xlu0 %v7543, 64
        %v9555 = vpop.permute.xlu0 %9554
        %9556 = vrot.lane.b32.xlu0 %v7544, 64
        %v9557 = vpop.permute.xlu0 %9556
        %9558 = vrot.lane.b32.xlu0 %v7545, 64
        %v9559 = vpop.permute.xlu0 %9558
        %9560 = vrot.lane.b32.xlu0 %v7546, 64
        %v9561 = vpop.permute.xlu0 %9560
        %9562 = vrot.lane.b32.xlu0 %v7547, 64
        %v9563 = vpop.permute.xlu0 %9562
        %9564 = vrot.lane.b32.xlu0 %v7548, 64
        %v9565 = vpop.permute.xlu0 %9564
        %9566 = vrot.lane.b32.xlu0 %v7549, 64
        %v9567 = vpop.permute.xlu0 %9566
        %9568 = vrot.lane.b32.xlu0 %v7550, 64
        %v9569 = vpop.permute.xlu0 %9568
        %9570 = vrot.lane.b32.xlu0 %v7551, 64
        %v9571 = vpop.permute.xlu0 %9570
        %9572 = vrot.lane.b32.xlu0 %v7552, 64
        %v9573 = vpop.permute.xlu0 %9572
        %9574 = vrot.lane.b32.xlu0 %v7553, 64
        %v9575 = vpop.permute.xlu0 %9574
        %9576 = vrot.lane.b32.xlu0 %v7554, 64
        %v9577 = vpop.permute.xlu0 %9576
        %9578 = vrot.lane.b32.xlu0 %v7555, 64
        %v9579 = vpop.permute.xlu0 %9578
        %9612 = vrot.lane.b32.xlu0 %v9356, 96
        %v9613 = vpop.permute.xlu0 %9612
        %9614 = vrot.lane.b32.xlu0 %v9357, 96
        %v9615 = vpop.permute.xlu0 %9614
        %9616 = vrot.lane.b32.xlu0 %v9358, 96
        %v9617 = vpop.permute.xlu0 %9616
        %9618 = vrot.lane.b32.xlu0 %v9359, 96
        %v9619 = vpop.permute.xlu0 %9618
        %9620 = vrot.lane.b32.xlu0 %v9360, 96
        %v9621 = vpop.permute.xlu0 %9620
        %9622 = vrot.lane.b32.xlu0 %v9361, 96
        %v9623 = vpop.permute.xlu0 %9622
        %9624 = vrot.lane.b32.xlu0 %v9362, 96
        %v9625 = vpop.permute.xlu0 %9624
        %9626 = vrot.lane.b32.xlu0 %v9363, 96
        %v9627 = vpop.permute.xlu0 %9626
        %9628 = vrot.lane.b32.xlu0 %v9364, 96
        %v9629 = vpop.permute.xlu0 %9628
        %9630 = vrot.lane.b32.xlu0 %v9365, 96
        %v9631 = vpop.permute.xlu0 %9630
        %9632 = vrot.lane.b32.xlu0 %v9366, 96
        %v9633 = vpop.permute.xlu0 %9632
        %9634 = vrot.lane.b32.xlu0 %v9367, 96
        %v9635 = vpop.permute.xlu0 %9634
        %9636 = vrot.lane.b32.xlu0 %v9368, 96
        %v9637 = vpop.permute.xlu0 %9636
        %9638 = vrot.lane.b32.xlu0 %v9369, 96
        %v9639 = vpop.permute.xlu0 %9638
        %9640 = vrot.lane.b32.xlu0 %v9370, 96
        %v9641 = vpop.permute.xlu0 %9640
        %9642 = vrot.lane.b32.xlu0 %v9371, 96
        %v9643 = vpop.permute.xlu0 %9642
        %9644 = vrot.lane.b32.xlu0 %v9372, 96
        %v9645 = vpop.permute.xlu0 %9644
        %9646 = vrot.lane.b32.xlu0 %v9373, 96
        %v9647 = vpop.permute.xlu0 %9646
        %9648 = vrot.lane.b32.xlu0 %v9374, 96
        %v9649 = vpop.permute.xlu0 %9648
        %9650 = vrot.lane.b32.xlu0 %v9375, 96
        %v9651 = vpop.permute.xlu0 %9650
        %9652 = vrot.lane.b32.xlu0 %v9376, 96
        %v9653 = vpop.permute.xlu0 %9652
        %9654 = vrot.lane.b32.xlu0 %v9377, 96
        %v9655 = vpop.permute.xlu0 %9654
        %9656 = vrot.lane.b32.xlu0 %v9378, 96
        %v9657 = vpop.permute.xlu0 %9656
        %9658 = vrot.lane.b32.xlu0 %v9379, 96
        %v9659 = vpop.permute.xlu0 %9658
        %9660 = vrot.lane.b32.xlu0 %v9380, 96
        %v9661 = vpop.permute.xlu0 %9660
        %9662 = vrot.lane.b32.xlu0 %v9381, 96
        %v9663 = vpop.permute.xlu0 %9662
        %9664 = vrot.lane.b32.xlu0 %v9382, 96
        %v9665 = vpop.permute.xlu0 %9664
        %9666 = vrot.lane.b32.xlu0 %v9383, 96
        %v9667 = vpop.permute.xlu0 %9666
        %9668 = vrot.lane.b32.xlu0 %v9384, 96
        %v9669 = vpop.permute.xlu0 %9668
        %9670 = vrot.lane.b32.xlu0 %v9385, 96
        %v9671 = vpop.permute.xlu0 %9670
        %9672 = vrot.lane.b32.xlu0 %v9386, 96
        %v9673 = vpop.permute.xlu0 %9672
        %9674 = vrot.lane.b32.xlu0 %v9387, 96
        %v9675 = vpop.permute.xlu0 %9674
        %v9678 = vsel %vm2187, %v3764, %v9421
        %v9681 = vsel %vm2187, %v3765, %v9423
        %v9684 = vsel %vm2187, %v3766, %v9425
        %v9687 = vsel %vm2187, %v3767, %v9427
        %v9690 = vsel %vm2187, %v3768, %v9429
        %v9693 = vsel %vm2187, %v3769, %v9431
        %v9696 = vsel %vm2187, %v3770, %v9433
        %v9699 = vsel %vm2187, %v3771, %v9435
        %v9702 = vsel %vm2187, %v3772, %v9437
        %v9705 = vsel %vm2187, %v3773, %v9439
        %v9708 = vsel %vm2187, %v3774, %v9441
        %v9711 = vsel %vm2187, %v3775, %v9443
        %v9714 = vsel %vm2187, %v3776, %v9445
        %v9717 = vsel %vm2187, %v3777, %v9447
        %v9720 = vsel %vm2187, %v3778, %v9449
        %v9723 = vsel %vm2187, %v3779, %v9451
        %v9726 = vsel %vm2187, %v3780, %v9453
        %v9729 = vsel %vm2187, %v3781, %v9455
        %v9732 = vsel %vm2187, %v3782, %v9457
        %v9735 = vsel %vm2187, %v3783, %v9459
        %v9738 = vsel %vm2187, %v3784, %v9461
        %v9741 = vsel %vm2187, %v3785, %v9463
        %v9744 = vsel %vm2187, %v3786, %v9465
        %v9747 = vsel %vm2187, %v3787, %v9467
        %v9750 = vsel %vm2187, %v3788, %v9469
        %v9753 = vsel %vm2187, %v3789, %v9471
        %v9756 = vsel %vm2187, %v3790, %v9473
        %v9759 = vsel %vm2187, %v3791, %v9475
        %v9762 = vsel %vm2187, %v3792, %v9477
        %v9765 = vsel %vm2187, %v3793, %v9479
        %v9768 = vsel %vm2187, %v3794, %v9481
        %v9771 = vsel %vm2187, %v3795, %v9483
        %vm9772 = vcmask 523264
        %v9774 = vsel %vm9772, %v9678, %v9517
        %v9776 = vsel %vm9772, %v9681, %v9519
        %v9778 = vsel %vm9772, %v9684, %v9521
        %v9780 = vsel %vm9772, %v9687, %v9523
        %v9782 = vsel %vm9772, %v9690, %v9525
        %v9784 = vsel %vm9772, %v9693, %v9527
        %v9786 = vsel %vm9772, %v9696, %v9529
        %v9788 = vsel %vm9772, %v9699, %v9531
        %v9790 = vsel %vm9772, %v9702, %v9533
        %v9792 = vsel %vm9772, %v9705, %v9535
        %v9794 = vsel %vm9772, %v9708, %v9537
        %v9796 = vsel %vm9772, %v9711, %v9539
        %v9798 = vsel %vm9772, %v9714, %v9541
        %v9800 = vsel %vm9772, %v9717, %v9543
        %v9802 = vsel %vm9772, %v9720, %v9545
        %v9804 = vsel %vm9772, %v9723, %v9547
        %v9806 = vsel %vm9772, %v9726, %v9549
        %v9808 = vsel %vm9772, %v9729, %v9551
        %v9810 = vsel %vm9772, %v9732, %v9553
        %v9812 = vsel %vm9772, %v9735, %v9555
        %v9814 = vsel %vm9772, %v9738, %v9557
        %v9816 = vsel %vm9772, %v9741, %v9559
        %v9818 = vsel %vm9772, %v9744, %v9561
        %v9820 = vsel %vm9772, %v9747, %v9563
        %v9822 = vsel %vm9772, %v9750, %v9565
        %v9824 = vsel %vm9772, %v9753, %v9567
        %v9826 = vsel %vm9772, %v9756, %v9569
        %v9828 = vsel %vm9772, %v9759, %v9571
        %v9830 = vsel %vm9772, %v9762, %v9573
        %v9832 = vsel %vm9772, %v9765, %v9575
        %v9834 = vsel %vm9772, %v9768, %v9577
        %v9836 = vsel %vm9772, %v9771, %v9579
        %vm9837 = vcmask 785408
        %v9839 = vsel %vm9837, %v9774, %v9613
        %v9842 = vsel %vm9837, %v9776, %v9615
        %v9845 = vsel %vm9837, %v9778, %v9617
        %v9848 = vsel %vm9837, %v9780, %v9619
        %v9851 = vsel %vm9837, %v9782, %v9621
        %v9854 = vsel %vm9837, %v9784, %v9623
        %v9857 = vsel %vm9837, %v9786, %v9625
        %v9860 = vsel %vm9837, %v9788, %v9627
        %v9863 = vsel %vm9837, %v9790, %v9629
        %v9866 = vsel %vm9837, %v9792, %v9631
        %v9869 = vsel %vm9837, %v9794, %v9633
        %v9872 = vsel %vm9837, %v9796, %v9635
        %v9875 = vsel %vm9837, %v9798, %v9637
        %v9878 = vsel %vm9837, %v9800, %v9639
        %v9881 = vsel %vm9837, %v9802, %v9641
        %v9884 = vsel %vm9837, %v9804, %v9643
        %v9887 = vsel %vm9837, %v9806, %v9645
        %v9890 = vsel %vm9837, %v9808, %v9647
        %v9893 = vsel %vm9837, %v9810, %v9649
        %v9896 = vsel %vm9837, %v9812, %v9651
        %v9899 = vsel %vm9837, %v9814, %v9653
        %v9902 = vsel %vm9837, %v9816, %v9655
        %v9905 = vsel %vm9837, %v9818, %v9657
        %v9908 = vsel %vm9837, %v9820, %v9659
        %v9911 = vsel %vm9837, %v9822, %v9661
        %v9914 = vsel %vm9837, %v9824, %v9663
        %v9917 = vsel %vm9837, %v9826, %v9665
        %v9920 = vsel %vm9837, %v9828, %v9667
        %v9923 = vsel %vm9837, %v9830, %v9669
        %v9926 = vsel %vm9837, %v9832, %v9671
        %v9929 = vsel %vm9837, %v9834, %v9673
        %v9932 = vsel %vm9837, %v9836, %v9675
        %v9934 = vld [vmem:[#allocation7] sm:$0xf]
        %v9935 = vld [vmem:[#allocation7 + $0x4] sm:$0xf]
        %v9936 = vld [vmem:[#allocation7 + $0x8] sm:$0xf]
        %v9937 = vld [vmem:[#allocation7 + $0xc] sm:$0xf]
        %v9938 = vld [vmem:[#allocation7 + $0x10] sm:$0xf]
        %v9939 = vld [vmem:[#allocation7 + $0x14] sm:$0xf]
        %v9940 = vld [vmem:[#allocation7 + $0x18] sm:$0xf]
        %v9941 = vld [vmem:[#allocation7 + $0x1c] sm:$0xf]
        %v9942 = vld [vmem:[#allocation7 + $0x20] sm:$0xf]
        %v9943 = vld [vmem:[#allocation7 + $0x24] sm:$0xf]
        %v9944 = vld [vmem:[#allocation7 + $0x28] sm:$0xf]
        %v9945 = vld [vmem:[#allocation7 + $0x2c] sm:$0xf]
        %v9946 = vld [vmem:[#allocation7 + $0x30] sm:$0xf]
        %v9947 = vld [vmem:[#allocation7 + $0x34] sm:$0xf]
        %v9948 = vld [vmem:[#allocation7 + $0x38] sm:$0xf]
        %v9949 = vld [vmem:[#allocation7 + $0x3c] sm:$0xf]
        %v9950 = vld [vmem:[%s6] sm:$0x1]
        %v9952 = vlaneseq
        %v9953 = vshrl.u32 %v9952, 7
        %v9954 = vsub.s32 0, %v9953
        %v9955 = vrot.slane %v9950, %v9954
        %v9973 = vunpack.c.l.b16 %v9934
        %v9974 = vunpack.c.l.b16 %v9935
        %v9975 = vunpack.c.l.b16 %v9936
        %v9976 = vunpack.c.l.b16 %v9937
        %v9977 = vunpack.c.l.b16 %v9938
        %v9978 = vunpack.c.l.b16 %v9939
        %v9979 = vunpack.c.l.b16 %v9940
        %v9980 = vunpack.c.l.b16 %v9941
        %v9981 = vunpack.c.l.b16 %v9942
        %v9982 = vunpack.c.l.b16 %v9943
        %v9983 = vunpack.c.l.b16 %v9944
        %v9984 = vunpack.c.l.b16 %v9945
        %v9985 = vunpack.c.l.b16 %v9946
        %v9986 = vunpack.c.l.b16 %v9947
        %v9987 = vunpack.c.l.b16 %v9948
        %v9988 = vunpack.c.l.b16 %v9949
        %v9989 = vpack.c.b16 %v9974, %v9973
        %v9990 = vpack.c.b16 %v9976, %v9975
        %v9991 = vpack.c.b16 %v9978, %v9977
        %v9992 = vpack.c.b16 %v9980, %v9979
        %v9993 = vpack.c.b16 %v9982, %v9981
        %v9994 = vpack.c.b16 %v9984, %v9983
        %v9995 = vpack.c.b16 %v9986, %v9985
        %v9996 = vpack.c.b16 %v9988, %v9987
        %10005 = vmatprep.subr.bf16.mxu0 0
        %10006 = vmatpush1.bf16.msra.mxu0 %v9989
        %10007 = vmatprep.subr.bf16.mxu0 0
        %10008 = vmatpush1.bf16.msra.mxu0 %v9990
        %10009 = vmatprep.subr.bf16.mxu0 0
        %10010 = vmatpush1.bf16.msra.mxu0 %v9991
        %10011 = vmatprep.subr.bf16.mxu0 0
        %10012 = vmatpush1.bf16.msra.mxu0 %v9992
        %10013 = vmatprep.subr.bf16.mxu0 0
        %10014 = vmatpush1.bf16.msra.mxu0 %v9993
        %10015 = vmatprep.subr.bf16.mxu0 0
        %10016 = vmatpush1.bf16.msra.mxu0 %v9994
        %10017 = vmatprep.subr.bf16.mxu0 0
        %10018 = vmatpush1.bf16.msra.mxu0 %v9995
        %10019 = vmatprep.subr.bf16.mxu0 0
        %10020 = vmatpush1.bf16.msra.mxu0 %v9996
        %10021 = vmatprep.subr.bf16.mxu0 0
        %10022 = vmatpush1.bf16.msra.mxu0 0
        %10023 = vmatprep.subr.bf16.mxu0 0
        %10024 = vmatpush1.bf16.msra.mxu0 0
        %10025 = vmatprep.subr.bf16.mxu0 0
        %10026 = vmatpush1.bf16.msra.mxu0 0
        %10027 = vmatprep.subr.bf16.mxu0 0
        %10028 = vmatpush1.bf16.msra.mxu0 0
        %10029 = vmatprep.subr.bf16.mxu0 0
        %10030 = vmatpush1.bf16.msra.mxu0 0
        %10031 = vmatprep.subr.bf16.mxu0 0
        %10032 = vmatpush1.bf16.msra.mxu0 0
        %10033 = vmatprep.subr.bf16.mxu0 0
        %10034 = vmatpush1.bf16.msra.mxu0 0
        %10035 = vmatprep.subr.bf16.mxu0 0
        %10036 = vmatpush1.bf16.msra.mxu0 0
        %10037 = vmatprep.mubr.bf16.mxu0 0
        %10038 = vmatmul.mubr.bf16.gmra.mrb[0].mxu0 %v9839
        %v10039 = vpop.f32.mrb[0].mxu0
        %v10040 = vadd.f32 %v9955, %v10039
        %v10041 = vpop.f32.mrb[0].mxu0
        %v10042 = vpop.f32.mrb[0].mxu0
        %v10043 = vadd.f32 %v9955, %v10042
        %v10044 = vpop.f32.mrb[0].mxu0
        %10045 = vmatprep.mubr.bf16.mxu0 0
        %10046 = vmatmul.mubr.bf16.gmra.mrb[0].mxu0 %v9842
        %v10047 = vpop.f32.mrb[0].mxu0
        %v10048 = vadd.f32 %v9955, %v10047
        %v10049 = vpop.f32.mrb[0].mxu0
        %v10050 = vpop.f32.mrb[0].mxu0
        %v10051 = vadd.f32 %v9955, %v10050
        %v10052 = vpop.f32.mrb[0].mxu0
        %10053 = vmatprep.mubr.bf16.mxu0 0
        %10054 = vmatmul.mubr.bf16.gmra.mrb[0].mxu0 %v9845
        %v10055 = vpop.f32.mrb[0].mxu0
        %v10056 = vadd.f32 %v9955, %v10055
        %v10057 = vpop.f32.mrb[0].mxu0
        %v10058 = vpop.f32.mrb[0].mxu0
        %v10059 = vadd.f32 %v9955, %v10058
        %v10060 = vpop.f32.mrb[0].mxu0
        %10061 = vmatprep.mubr.bf16.mxu0 0
        %10062 = vmatmul.mubr.bf16.gmra.mrb[0].mxu0 %v9848
        %v10063 = vpop.f32.mrb[0].mxu0
        %v10064 = vadd.f32 %v9955, %v10063
        %v10065 = vpop.f32.mrb[0].mxu0
        %v10066 = vpop.f32.mrb[0].mxu0
        %v10067 = vadd.f32 %v9955, %v10066
        %v10068 = vpop.f32.mrb[0].mxu0
        %10069 = vmatprep.mubr.bf16.mxu0 0
        %10070 = vmatmul.mubr.bf16.gmra.mrb[0].mxu0 %v9851
        %v10071 = vpop.f32.mrb[0].mxu0
        %v10072 = vadd.f32 %v9955, %v10071
        %v10073 = vpop.f32.mrb[0].mxu0
        %v10074 = vpop.f32.mrb[0].mxu0
        %v10075 = vadd.f32 %v9955, %v10074
        %v10076 = vpop.f32.mrb[0].mxu0
        %10077 = vmatprep.mubr.bf16.mxu0 0
        %10078 = vmatmul.mubr.bf16.gmra.mrb[0].mxu0 %v9854
        %v10079 = vpop.f32.mrb[0].mxu0
        %v10080 = vadd.f32 %v9955, %v10079
        %v10081 = vpop.f32.mrb[0].mxu0
        %v10082 = vpop.f32.mrb[0].mxu0
        %v10083 = vadd.f32 %v9955, %v10082
        %v10084 = vpop.f32.mrb[0].mxu0
        %10085 = vmatprep.mubr.bf16.mxu0 0
        %10086 = vmatmul.mubr.bf16.gmra.mrb[0].mxu0 %v9857
        %v10087 = vpop.f32.mrb[0].mxu0
        %v10088 = vadd.f32 %v9955, %v10087
        %v10089 = vpop.f32.mrb[0].mxu0
        %v10090 = vpop.f32.mrb[0].mxu0
        %v10091 = vadd.f32 %v9955, %v10090
        %v10092 = vpop.f32.mrb[0].mxu0
        %10093 = vmatprep.mubr.bf16.mxu0 0
        %10094 = vmatmul.mubr.bf16.gmra.mrb[0].mxu0 %v9860
        %v10095 = vpop.f32.mrb[0].mxu0
        %v10096 = vadd.f32 %v9955, %v10095
        %v10097 = vpop.f32.mrb[0].mxu0
        %v10098 = vpop.f32.mrb[0].mxu0
        %v10099 = vadd.f32 %v9955, %v10098
        %v10100 = vpop.f32.mrb[0].mxu0
        %10101 = vmatprep.mubr.bf16.mxu0 0
        %10102 = vmatmul.mubr.bf16.gmra.mrb[0].mxu0 %v9863
        %v10103 = vpop.f32.mrb[0].mxu0
        %v10104 = vadd.f32 %v9955, %v10103
        %v10105 = vpop.f32.mrb[0].mxu0
        %v10106 = vpop.f32.mrb[0].mxu0
        %v10107 = vadd.f32 %v9955, %v10106
        %v10108 = vpop.f32.mrb[0].mxu0
        %10109 = vmatprep.mubr.bf16.mxu0 0
        %10110 = vmatmul.mubr.bf16.gmra.mrb[0].mxu0 %v9866
        %v10111 = vpop.f32.mrb[0].mxu0
        %v10112 = vadd.f32 %v9955, %v10111
        %v10113 = vpop.f32.mrb[0].mxu0
        %v10114 = vpop.f32.mrb[0].mxu0
        %v10115 = vadd.f32 %v9955, %v10114
        %v10116 = vpop.f32.mrb[0].mxu0
        %10117 = vmatprep.mubr.bf16.mxu0 0
        %10118 = vmatmul.mubr.bf16.gmra.mrb[0].mxu0 %v9869
        %v10119 = vpop.f32.mrb[0].mxu0
        %v10120 = vadd.f32 %v9955, %v10119
        %v10121 = vpop.f32.mrb[0].mxu0
        %v10122 = vpop.f32.mrb[0].mxu0
        %v10123 = vadd.f32 %v9955, %v10122
        %v10124 = vpop.f32.mrb[0].mxu0
        %10125 = vmatprep.mubr.bf16.mxu0 0
        %10126 = vmatmul.mubr.bf16.gmra.mrb[0].mxu0 %v9872
        %v10127 = vpop.f32.mrb[0].mxu0
        %v10128 = vadd.f32 %v9955, %v10127
        %v10129 = vpop.f32.mrb[0].mxu0
        %v10130 = vpop.f32.mrb[0].mxu0
        %v10131 = vadd.f32 %v9955, %v10130
        %v10132 = vpop.f32.mrb[0].mxu0
        %10133 = vmatprep.mubr.bf16.mxu0 0
        %10134 = vmatmul.mubr.bf16.gmra.mrb[0].mxu0 %v9875
        %v10135 = vpop.f32.mrb[0].mxu0
        %v10136 = vadd.f32 %v9955, %v10135
        %v10137 = vpop.f32.mrb[0].mxu0
        %v10138 = vpop.f32.mrb[0].mxu0
        %v10139 = vadd.f32 %v9955, %v10138
        %v10140 = vpop.f32.mrb[0].mxu0
        %10141 = vmatprep.mubr.bf16.mxu0 0
        %10142 = vmatmul.mubr.bf16.gmra.mrb[0].mxu0 %v9878
        %v10143 = vpop.f32.mrb[0].mxu0
        %v10144 = vadd.f32 %v9955, %v10143
        %v10145 = vpop.f32.mrb[0].mxu0
        %v10146 = vpop.f32.mrb[0].mxu0
        %v10147 = vadd.f32 %v9955, %v10146
        %v10148 = vpop.f32.mrb[0].mxu0
        %10149 = vmatprep.mubr.bf16.mxu0 0
        %10150 = vmatmul.mubr.bf16.gmra.mrb[0].mxu0 %v9881
        %v10151 = vpop.f32.mrb[0].mxu0
        %v10152 = vadd.f32 %v9955, %v10151
        %v10153 = vpop.f32.mrb[0].mxu0
        %v10154 = vpop.f32.mrb[0].mxu0
        %v10155 = vadd.f32 %v9955, %v10154
        %v10156 = vpop.f32.mrb[0].mxu0
        %10157 = vmatprep.mubr.bf16.mxu0 0
        %10158 = vmatmul.mubr.bf16.gmra.mrb[0].mxu0 %v9884
        %v10159 = vpop.f32.mrb[0].mxu0
        %v10160 = vadd.f32 %v9955, %v10159
        %v10161 = vpop.f32.mrb[0].mxu0
        %v10162 = vpop.f32.mrb[0].mxu0
        %v10163 = vadd.f32 %v9955, %v10162
        %v10164 = vpop.f32.mrb[0].mxu0
        %10165 = vmatprep.mubr.bf16.mxu0 0
        %10166 = vmatmul.mubr.bf16.gmra.mrb[0].mxu0 %v9887
        %v10167 = vpop.f32.mrb[0].mxu0
        %v10168 = vadd.f32 %v9955, %v10167
        %v10169 = vpop.f32.mrb[0].mxu0
        %v10170 = vpop.f32.mrb[0].mxu0
        %v10171 = vadd.f32 %v9955, %v10170
        %v10172 = vpop.f32.mrb[0].mxu0
        %10173 = vmatprep.mubr.bf16.mxu0 0
        %10174 = vmatmul.mubr.bf16.gmra.mrb[0].mxu0 %v9890
        %v10175 = vpop.f32.mrb[0].mxu0
        %v10176 = vadd.f32 %v9955, %v10175
        %v10177 = vpop.f32.mrb[0].mxu0
        %v10178 = vpop.f32.mrb[0].mxu0
        %v10179 = vadd.f32 %v9955, %v10178
        %v10180 = vpop.f32.mrb[0].mxu0
        %10181 = vmatprep.mubr.bf16.mxu0 0
        %10182 = vmatmul.mubr.bf16.gmra.mrb[0].mxu0 %v9893
        %v10183 = vpop.f32.mrb[0].mxu0
        %v10184 = vadd.f32 %v9955, %v10183
        %v10185 = vpop.f32.mrb[0].mxu0
        %v10186 = vpop.f32.mrb[0].mxu0
        %v10187 = vadd.f32 %v9955, %v10186
        %v10188 = vpop.f32.mrb[0].mxu0
        %10189 = vmatprep.mubr.bf16.mxu0 0
        %10190 = vmatmul.mubr.bf16.gmra.mrb[0].mxu0 %v9896
        %v10191 = vpop.f32.mrb[0].mxu0
        %v10192 = vadd.f32 %v9955, %v10191
        %v10193 = vpop.f32.mrb[0].mxu0
        %v10194 = vpop.f32.mrb[0].mxu0
        %v10195 = vadd.f32 %v9955, %v10194
        %v10196 = vpop.f32.mrb[0].mxu0
        %10197 = vmatprep.mubr.bf16.mxu0 0
        %10198 = vmatmul.mubr.bf16.gmra.mrb[0].mxu0 %v9899
        %v10199 = vpop.f32.mrb[0].mxu0
        %v10200 = vadd.f32 %v9955, %v10199
        %v10201 = vpop.f32.mrb[0].mxu0
        %v10202 = vpop.f32.mrb[0].mxu0
        %v10203 = vadd.f32 %v9955, %v10202
        %v10204 = vpop.f32.mrb[0].mxu0
        %10205 = vmatprep.mubr.bf16.mxu0 0
        %10206 = vmatmul.mubr.bf16.gmra.mrb[0].mxu0 %v9902
        %v10207 = vpop.f32.mrb[0].mxu0
        %v10208 = vadd.f32 %v9955, %v10207
        %v10209 = vpop.f32.mrb[0].mxu0
        %v10210 = vpop.f32.mrb[0].mxu0
        %v10211 = vadd.f32 %v9955, %v10210
        %v10212 = vpop.f32.mrb[0].mxu0
        %10213 = vmatprep.mubr.bf16.mxu0 0
        %10214 = vmatmul.mubr.bf16.gmra.mrb[0].mxu0 %v9905
        %v10215 = vpop.f32.mrb[0].mxu0
        %v10216 = vadd.f32 %v9955, %v10215
        %v10217 = vpop.f32.mrb[0].mxu0
        %v10218 = vpop.f32.mrb[0].mxu0
        %v10219 = vadd.f32 %v9955, %v10218
        %v10220 = vpop.f32.mrb[0].mxu0
        %10221 = vmatprep.mubr.bf16.mxu0 0
        %10222 = vmatmul.mubr.bf16.gmra.mrb[0].mxu0 %v9908
        %v10223 = vpop.f32.mrb[0].mxu0
        %v10224 = vadd.f32 %v9955, %v10223
        %v10225 = vpop.f32.mrb[0].mxu0
        %v10226 = vpop.f32.mrb[0].mxu0
        %v10227 = vadd.f32 %v9955, %v10226
        %v10228 = vpop.f32.mrb[0].mxu0
        %10229 = vmatprep.mubr.bf16.mxu0 0
        %10230 = vmatmul.mubr.bf16.gmra.mrb[0].mxu0 %v9911
        %v10231 = vpop.f32.mrb[0].mxu0
        %v10232 = vadd.f32 %v9955, %v10231
        %v10233 = vpop.f32.mrb[0].mxu0
        %v10234 = vpop.f32.mrb[0].mxu0
        %v10235 = vadd.f32 %v9955, %v10234
        %v10236 = vpop.f32.mrb[0].mxu0
        %10237 = vmatprep.mubr.bf16.mxu0 0
        %10238 = vmatmul.mubr.bf16.gmra.mrb[0].mxu0 %v9914
        %v10239 = vpop.f32.mrb[0].mxu0
        %v10240 = vadd.f32 %v9955, %v10239
        %v10241 = vpop.f32.mrb[0].mxu0
        %v10242 = vpop.f32.mrb[0].mxu0
        %v10243 = vadd.f32 %v9955, %v10242
        %v10244 = vpop.f32.mrb[0].mxu0
        %10245 = vmatprep.mubr.bf16.mxu0 0
        %10246 = vmatmul.mubr.bf16.gmra.mrb[0].mxu0 %v9917
        %v10247 = vpop.f32.mrb[0].mxu0
        %v10248 = vadd.f32 %v9955, %v10247
        %v10249 = vpop.f32.mrb[0].mxu0
        %v10250 = vpop.f32.mrb[0].mxu0
        %v10251 = vadd.f32 %v9955, %v10250
        %v10252 = vpop.f32.mrb[0].mxu0
        %10253 = vmatprep.mubr.bf16.mxu0 0
        %10254 = vmatmul.mubr.bf16.gmra.mrb[0].mxu0 %v9920
        %v10255 = vpop.f32.mrb[0].mxu0
        %v10256 = vadd.f32 %v9955, %v10255
        %v10257 = vpop.f32.mrb[0].mxu0
        %v10258 = vpop.f32.mrb[0].mxu0
        %v10259 = vadd.f32 %v9955, %v10258
        %v10260 = vpop.f32.mrb[0].mxu0
        %10261 = vmatprep.mubr.bf16.mxu0 0
        %10262 = vmatmul.mubr.bf16.gmra.mrb[0].mxu0 %v9923
        %v10263 = vpop.f32.mrb[0].mxu0
        %v10264 = vadd.f32 %v9955, %v10263
        %v10265 = vpop.f32.mrb[0].mxu0
        %v10266 = vpop.f32.mrb[0].mxu0
        %v10267 = vadd.f32 %v9955, %v10266
        %v10268 = vpop.f32.mrb[0].mxu0
        %10269 = vmatprep.mubr.bf16.mxu0 0
        %10270 = vmatmul.mubr.bf16.gmra.mrb[0].mxu0 %v9926
        %v10271 = vpop.f32.mrb[0].mxu0
        %v10272 = vadd.f32 %v9955, %v10271
        %v10273 = vpop.f32.mrb[0].mxu0
        %v10274 = vpop.f32.mrb[0].mxu0
        %v10275 = vadd.f32 %v9955, %v10274
        %v10276 = vpop.f32.mrb[0].mxu0
        %10277 = vmatprep.mubr.bf16.mxu0 0
        %10278 = vmatmul.mubr.bf16.gmra.mrb[0].mxu0 %v9929
        %v10279 = vpop.f32.mrb[0].mxu0
        %v10280 = vadd.f32 %v9955, %v10279
        %v10281 = vpop.f32.mrb[0].mxu0
        %v10282 = vpop.f32.mrb[0].mxu0
        %v10283 = vadd.f32 %v9955, %v10282
        %v10284 = vpop.f32.mrb[0].mxu0
        %10285 = vmatprep.mubr.bf16.mxu0 0
        %10286 = vmatmul.mubr.bf16.gmra.mrb[0].mxu0 %v9932
        %v10287 = vpop.f32.mrb[0].mxu0
        %v10288 = vadd.f32 %v9955, %v10287
        %v10289 = vpop.f32.mrb[0].mxu0
        %v10290 = vpop.f32.mrb[0].mxu0
        %v10291 = vadd.f32 %v9955, %v10290
        %v10292 = vpop.f32.mrb[0].mxu0
        %10293 = vdwg.mxu0
        %10294 = vst [vmem:[%s325] sm:$0xff] %v10040
        %10295 = vst [vmem:[%s325 + $0x8] sm:$0xff] %v10043
        %10296 = vst [vmem:[%s325 + $0x10] sm:$0xff] %v10048
        %10297 = vst [vmem:[%s325 + $0x18] sm:$0xff] %v10051
        %10298 = vst [vmem:[%s325 + $0x20] sm:$0xff] %v10056
        %10299 = vst [vmem:[%s325 + $0x28] sm:$0xff] %v10059
        %10300 = vst [vmem:[%s325 + $0x30] sm:$0xff] %v10064
        %10301 = vst [vmem:[%s325 + $0x38] sm:$0xff] %v10067
        %10302 = vst [vmem:[%s325 + $0x40] sm:$0xff] %v10072
        %10303 = vst [vmem:[%s325 + $0x48] sm:$0xff] %v10075
        %10304 = vst [vmem:[%s325 + $0x50] sm:$0xff] %v10080
        %10305 = vst [vmem:[%s325 + $0x58] sm:$0xff] %v10083
        %10306 = vst [vmem:[%s325 + $0x60] sm:$0xff] %v10088
        %10307 = vst [vmem:[%s325 + $0x68] sm:$0xff] %v10091
        %10308 = vst [vmem:[%s325 + $0x70] sm:$0xff] %v10096
        %10309 = vst [vmem:[%s325 + $0x78] sm:$0xff] %v10099
        %10310 = vst [vmem:[%s325 + $0x80] sm:$0xff] %v10104
        %10311 = vst [vmem:[%s325 + $0x88] sm:$0xff] %v10107
        %10312 = vst [vmem:[%s325 + $0x90] sm:$0xff] %v10112
        %10313 = vst [vmem:[%s325 + $0x98] sm:$0xff] %v10115
        %10314 = vst [vmem:[%s325 + $0xa0] sm:$0xff] %v10120
        %10315 = vst [vmem:[%s325 + $0xa8] sm:$0xff] %v10123
        %10316 = vst [vmem:[%s325 + $0xb0] sm:$0xff] %v10128
        %10317 = vst [vmem:[%s325 + $0xb8] sm:$0xff] %v10131
        %10318 = vst [vmem:[%s325 + $0xc0] sm:$0xff] %v10136
        %10319 = vst [vmem:[%s325 + $0xc8] sm:$0xff] %v10139
        %10320 = vst [vmem:[%s325 + $0xd0] sm:$0xff] %v10144
        %10321 = vst [vmem:[%s325 + $0xd8] sm:$0xff] %v10147
        %10322 = vst [vmem:[%s325 + $0xe0] sm:$0xff] %v10152
        %10323 = vst [vmem:[%s325 + $0xe8] sm:$0xff] %v10155
        %10324 = vst [vmem:[%s325 + $0xf0] sm:$0xff] %v10160
        %10325 = vst [vmem:[%s325 + $0xf8] sm:$0xff] %v10163
        %10326 = vst [vmem:[%s325 + $0x100] sm:$0xff] %v10168
        %10327 = vst [vmem:[%s325 + $0x108] sm:$0xff] %v10171
        %10328 = vst [vmem:[%s325 + $0x110] sm:$0xff] %v10176
        %10329 = vst [vmem:[%s325 + $0x118] sm:$0xff] %v10179
        %10330 = vst [vmem:[%s325 + $0x120] sm:$0xff] %v10184
        %10331 = vst [vmem:[%s325 + $0x128] sm:$0xff] %v10187
        %10332 = vst [vmem:[%s325 + $0x130] sm:$0xff] %v10192
        %10333 = vst [vmem:[%s325 + $0x138] sm:$0xff] %v10195
        %10334 = vst [vmem:[%s325 + $0x140] sm:$0xff] %v10200
        %10335 = vst [vmem:[%s325 + $0x148] sm:$0xff] %v10203
        %10336 = vst [vmem:[%s325 + $0x150] sm:$0xff] %v10208
        %10337 = vst [vmem:[%s325 + $0x158] sm:$0xff] %v10211
        %10338 = vst [vmem:[%s325 + $0x160] sm:$0xff] %v10216
        %10339 = vst [vmem:[%s325 + $0x168] sm:$0xff] %v10219
        %10340 = vst [vmem:[%s325 + $0x170] sm:$0xff] %v10224
        %10341 = vst [vmem:[%s325 + $0x178] sm:$0xff] %v10227
        %10342 = vst [vmem:[%s325 + $0x180] sm:$0xff] %v10232
        %10343 = vst [vmem:[%s325 + $0x188] sm:$0xff] %v10235
        %10344 = vst [vmem:[%s325 + $0x190] sm:$0xff] %v10240
        %10345 = vst [vmem:[%s325 + $0x198] sm:$0xff] %v10243
        %10346 = vst [vmem:[%s325 + $0x1a0] sm:$0xff] %v10248
        %10347 = vst [vmem:[%s325 + $0x1a8] sm:$0xff] %v10251
        %10348 = vst [vmem:[%s325 + $0x1b0] sm:$0xff] %v10256
        %10349 = vst [vmem:[%s325 + $0x1b8] sm:$0xff] %v10259
        %10350 = vst [vmem:[%s325 + $0x1c0] sm:$0xff] %v10264
        %10351 = vst [vmem:[%s325 + $0x1c8] sm:$0xff] %v10267
        %10352 = vst [vmem:[%s325 + $0x1d0] sm:$0xff] %v10272
        %10353 = vst [vmem:[%s325 + $0x1d8] sm:$0xff] %v10275
        %10354 = vst [vmem:[%s325 + $0x1e0] sm:$0xff] %v10280
        %10355 = vst [vmem:[%s325 + $0x1e8] sm:$0xff] %v10283
        %10356 = vst [vmem:[%s325 + $0x1f0] sm:$0xff] %v10288
        %10357 = vst [vmem:[%s325 + $0x1f8] sm:$0xff] %v10291
        %s10358 = sand.u32 %s185, 1
        %s10359 = scalar_lea.sflag [#allocation4], %s10358
        %s10360 = sand.u32 %s185, 1
        %s10361 = smul.addr %s10360, 512
        %s10362 = scalar_lea.vmem [#allocation8], %s10361
        // Predicated region
        $region61: #{tpu_custom_call.1} parent=47 // pred_check
          %p10363 = pneg %p195
        $region62: #{tpu_custom_call.1} parent=47 // pred_check_branch
          %10365 = sbr.rel (%p10363) target = $region64
        $region63: #{tpu_custom_call.1} parent=47 // pred_region
          %s10366 = smul.u32 64, %s25
          %s10368 = ssub.s32 8192, 8192
          %10369 = vsyncadd %s10359, %s10368
          %s10370 = smul.addr %s10366, 128
          %s10371 = scalar_lea.hbm %s7, %s10370
          %s10372 = sshll.u32 %s10362, 4
          %s10373 = int_to_ptr.vmem [resolvable:$true] %s10372
          %10378 = dma.vmem_to_hbm [thread:$0]  %s10373, 8192, %s10371, %s10359, 128, 128, 8
        $region64: #{tpu_custom_call.1} parent=47 // pred_fallthru
          _
      $region48: #{tpu_custom_call.1} parent=5 // pred_fallthru
        _
      %p10379 = scmp.le.s32.totalorder 2, %s20
      // Predicated region
      $region65: #{tpu_custom_call.1} parent=5 // pred_check
        %p10380 = pneg %p10379
      $region66: #{tpu_custom_call.1} parent=5 // pred_check_branch
        %10382 = sbr.rel (%p10380) target = $region68
      $region67: #{tpu_custom_call.1} parent=5 // pred_region
        %s10383 = ssub.s32 %s20, 2
        // Predicated region
        $region69: #{tpu_custom_call.1} parent=67 // pred_check
          %p10384 = pneg %p201
        $region70: #{tpu_custom_call.1} parent=67 // pred_check_branch
          %10386 = sbr.rel (%p10384) target = $region72
        $region71: #{tpu_custom_call.1} parent=67 // pred_region
          %s10387 = sand.u32 %s186, 1
          %s10388 = scalar_lea.sflag [#allocation4], %s10387
          %s10389 = sand.u32 %s186, 1
          %s10390 = smul.addr %s10389, 512
          %s10391 = scalar_lea.vmem [#allocation8], %s10390
          %10392 = dma.done %s10388, 8192
        $region72: #{tpu_custom_call.1} parent=67 // pred_fallthru
          _
      $region68: #{tpu_custom_call.1} parent=5 // pred_fallthru
        _
    $region6: #{tpu_custom_call.1} parent=1 // loop_footer
      %s24 = sadd.s32 1, %s20
    $region7: #{tpu_custom_call.1} parent=1 // loop_footer_branch
      %19 = sbr.rel target = $region3
    $region8: #{tpu_custom_call.1} parent=1 // loop_exit
      _
    %10393 = vsyncpa [#allocation3], 1
    %s10394 = scalar_lea.sflag [#allocation3], 1
    %10395 = vsyncpa %s10394, 1
    %10396 = vsyncpa [#allocation6], 1
    %10397 = vsyncpa [#allocation4], 1
    %s10398 = scalar_lea.sflag [#allocation4], 1
    %10399 = vsyncpa %s10398, 1

</llo_original>
